<compile_context>
chip_gen: v7x
topology: tpu7x:2x2x1
jax: 0.10.0
libtpu: 0.0.40
codegen_flags: <defaults>
</compile_context>

<pallas_src>
import jax
import jax.numpy as jnp
from jax.experimental import pallas as pl
from jax.experimental.pallas import tpu as pltpu

FEAT_C = 1920          # DenseNet-201 feature channels (implied by nn.Linear(1920, nb_classes))
POOL_HW = 7            # AvgPool2d(kernel_size=7, stride=1) on a 7x7 map -> mean over 49
_HW = POOL_HW * POOL_HW


def _head_kernel(x_ref, w_ref, b_ref, f_ref, o_ref):
    # x_ref: (tn, 49, C)  channel-minor feature block (C = 1920, lane-dense)
    # w_ref: (C, Kp)      resident padded classifier weight (bf16 or f32)
    # b_ref: (1, Kp)      resident padded bias (f32)
    # f_ref: (tn, C)      pooled features out (f32)
    # o_ref: (tn, Kp)     logits out (f32; K zero-padded to Kp)
    #
    # AvgPool2d(7, stride=1) on a 7x7 map == mean over all 49 spatial positions.  With
    # channels on lanes this is 49 lane-dense (tn, C) adds, not a cross-lane XLU reduce.
    # dtype=f32 gives a widening accumulate (no full f32 copy of a bf16 block).
    f = jnp.sum(x_ref[...], axis=1, dtype=jnp.float32) * jnp.float32(1.0 / _HW)
    f_ref[...] = f
    # classifier: logits = f @ W^T + b  (MXU matmul in the weight's dtype, f32 accumulate)
    o_ref[...] = (
        jnp.dot(f.astype(w_ref.dtype), w_ref[...], preferred_element_type=jnp.float32)
        + b_ref[...]
    )


def prepare_classifier(w_kc, b_k, *, weight_dtype=jnp.bfloat16):
    """One-time (model-load) prep of nn.Linear(1920, K) params.

    Returns (wt, bp): wt (C, Kp) transposed weight, zero-padded so Kp is a multiple of 128
    (lane-dense logits store / MXU N-dim) and stored in `weight_dtype` (bf16 by default:
    halves its DMA + VMEM residency); bp (1, Kp) f32 zero-padded bias.  Hoisted out of the
    per-call path so the head wrapper adds no per-inference weight re-packing traffic.
    """
    k, c = w_kc.shape
    kp = ((k + 127) // 128) * 128
    wt = jnp.zeros((c, kp), weight_dtype).at[:, :k].set(w_kc.T.astype(weight_dtype))
    bp = jnp.zeros((1, kp), jnp.float32).at[0, :k].set(b_k.astype(jnp.float32))
    return wt, bp


def nchw_to_channel_minor(feat_nchw):
    """PyTorch-style NCHW (N, 1920, 7, 7) -> (N, 49, 1920).

    Costs one extra HBM read+write; prefer producing NHWC upstream (XLA's preferred conv
    layout on TPU), in which case the kernel input is free.
    """
    n, c, h, w = feat_nchw.shape
    return jnp.transpose(feat_nchw, (0, 2, 3, 1)).reshape(n, h * w, c)


def densenet_veri_head(feat, wt_cp, bp, nb_classes, *, batch_tile=None):
    """Head of densenet_veri (AvgPool2d(7,1) -> flatten -> Linear(1920, K)).

    feat:   (N, 7, 7, 1920) NHWC or (N, 49, 1920) channel-minor backbone feature map
            (f32 or bf16).  Use nchw_to_channel_minor() for a fixed NCHW handoff.
    wt_cp:  (1920, Kp) padded/transposed classifier weight from prepare_classifier().
    bp:     (1, Kp) padded bias from prepare_classifier().
    Returns (f, logits): f (N, 1920) f32 pooled features, logits (N, nb_classes) f32.
    """
    if feat.ndim == 4:
        n, h, w, c = feat.shape
        assert (h, w) == (POOL_HW, POOL_HW)
        x = feat.reshape(n, h * w, c)          # contiguous -> free reshape
    else:
        n, hw_in, c = feat.shape
        assert hw_in == _HW
        x = feat
    assert c == FEAT_C
    cw, kp = wt_cp.shape
    assert cw == c and kp % 128 == 0 and 0 < nb_classes <= kp
    hw = _HW

    # ---- generation-aware VMEM budget & batch tile --------------------------------
    try:
        vmem_cap = int(pltpu.get_tpu_info().vmem_capacity_bytes)
        if vmem_cap < 32 * 1024 * 1024:
            vmem_cap = 64 * 1024 * 1024
    except Exception:
        vmem_cap = 64 * 1024 * 1024            # conservative (v7x per-core physical)
    # ~100 MiB on v5e/v6e (128 MiB physical), ~51 MiB on v7x (64 MiB physical).
    vmem_limit = min(int(0.80 * vmem_cap), vmem_cap - 8 * 1024 * 1024)

    x_item = jnp.dtype(x.dtype).itemsize
    w_item = jnp.dtype(wt_cp.dtype).itemsize
    per_sample = 2 * (hw * c * x_item + 4 * (c + kp))     # double-buffered streamed bytes
    resident = 2 * (c * kp * w_item + kp * 4)             # weight + bias (worst case 2 bufs)
    budget = int(0.85 * vmem_limit) - resident
    tn_cap = max(8, (int(budget // per_sample) // 8) * 8)  # largest tile the VMEM allows

    if batch_tile is not None:
        req = ((int(batch_tile) + 7) // 8) * 8              # round UP, never silently shrink
        tn = max(8, min(req, tn_cap))
    else:
        tn = min(tn_cap, 32)                                # 32 fits all generations lane-dense
    if tn >= n:
        if n > 8:
            # keep >=2 grid steps so ("parallel",) can split the batch across TensorCores
            tn = ((-(-n // 2) + 7) // 8) * 8
        else:
            tn = n                                          # whole (tiny) batch, one tile
    grid = (pl.cdiv(n, tn),)

    cost = pl.CostEstimate(
        flops=n * hw * c + 2 * n * c * kp,
        transcendentals=0,
        bytes_accessed=n * hw * c * x_item + c * kp * w_item + kp * 4   # reads
        + n * c * 4 + n * kp * 4,                                        # writes
    )

    def build(single_buffer_consts):
        const_kw = {"pipeline_mode": pl.Buffered(1)} if single_buffer_consts else {}
        return pl.pallas_call(
            _head_kernel,
            out_shape=(
                jax.ShapeDtypeStruct((n, c), jnp.float32),     # f (pooled, flattened)
                jax.ShapeDtypeStruct((n, kp), jnp.float32),    # logits (K padded to Kp)
            ),
            grid=grid,
            in_specs=[
                pl.BlockSpec((tn, hw, c), lambda i: (i, 0, 0)),           # streamed features
                pl.BlockSpec((c, kp), lambda i: (0, 0), **const_kw),      # resident weight
                pl.BlockSpec((1, kp), lambda i: (0, 0), **const_kw),      # resident bias
            ],
            out_specs=(
                pl.BlockSpec((tn, c), lambda i: (i, 0)),
                pl.BlockSpec((tn, kp), lambda i: (i, 0)),
            ),
            compiler_params=pltpu.CompilerParams(
                dimension_semantics=("parallel",),
                vmem_limit_bytes=vmem_limit,
            ),
            cost_estimate=cost,
        )

    try:
        f, logits_p = build(True)(x, wt_cp, bp)
    except Exception:
        # Fallback for jax versions that reject single-buffered pipeline_mode.
        f, logits_p = build(False)(x, wt_cp, bp)

    if kp == nb_classes:
        return f, logits_p
    return f, logits_p[:, :nb_classes]


if __name__ == "__main__":
    # TODO(synk): old_model.features (pretrained DenseNet-201 backbone) is not
    # reimplemented; the kernel consumes its (N, 7, 7, 1920) feature map directly
    # (channel-minor: free from a JAX/XLA backbone, one transpose away from NCHW).
    key = jax.random.PRNGKey(0)
    k_x, k_w, k_b = jax.random.split(key, 3)

    batch, nb_classes = 10, 100    # batch NOT a multiple of the tile -> exercises ragged block
    feat = jax.random.normal(k_x, (batch, POOL_HW, POOL_HW, FEAT_C), jnp.float32)
    # nn.Linear(1920, nb_classes): weight (K, 1920), bias (K,).
    w = jax.random.normal(k_w, (nb_classes, FEAT_C), jnp.float32) * 0.02
    b = jax.random.normal(k_b, (nb_classes,), jnp.float32) * 0.02

    wt, bpad = prepare_classifier(w, b)                 # once, at model-load time
    f, logits = densenet_veri_head(feat, wt, bpad, nb_classes)
    jax.block_until_ready((f, logits))

    # Pure-JAX references for the same forward pass.
    f_ref = jnp.mean(feat, axis=(1, 2))                 # AvgPool2d(7,1) on 7x7 -> (N, 1920)
    w_bf = w.astype(jnp.bfloat16).astype(jnp.float32)   # weight as stored by the kernel
    logits_ref_bf = f_ref @ w_bf.T + b
    logits_ref_f32 = f_ref @ w.T + b

    assert f.shape == (batch, FEAT_C) and logits.shape == (batch, nb_classes)
    assert jnp.allclose(f, f_ref, atol=1e-5, rtol=1e-5)
    assert jnp.allclose(logits, logits_ref_bf, atol=5e-3, rtol=5e-3)     # bf16-weight match
    assert jnp.allclose(logits, logits_ref_f32, atol=2e-2, rtol=2e-2)    # full-f32 sanity

    print("KERNEL_OK")
</pallas_src>

<mosaic_0001>
module attributes {stable_mosaic.version = 11 : i64} {
  func.func @_head_kernel(%arg0: i32, %arg1: memref<8x49x1920xf32, #tpu.memory_space<vmem>>, %arg2: memref<1920x128xbf16, #tpu.memory_space<vmem>>, %arg3: memref<1x128xf32, #tpu.memory_space<vmem>>, %arg4: memref<8x1920xf32, #tpu.memory_space<vmem>>, %arg5: memref<8x128xf32, #tpu.memory_space<vmem>>) attributes {dimension_semantics = [#tpu.dimension_semantics<parallel>], iteration_bounds = array<i64: 2>, scalar_prefetch = 0 : i64, scratch_operands = 0 : i64, tpu.core_type = #tpu.core_type<tc>, window_params = [{transform_indices = @transform_0, window_bounds = array<i64: 8, 49, 1920>}, {pipeline_mode = #tpu.pipeline_mode<synchronous>, transform_indices = @transform_1, window_bounds = array<i64: 1920, 128>}, {pipeline_mode = #tpu.pipeline_mode<synchronous>, transform_indices = @transform_2, window_bounds = array<i64: 1, 128>}, {transform_indices = @transform_3, window_bounds = array<i64: 8, 1920>}, {transform_indices = @transform_4, window_bounds = array<i64: 8, 128>}]} {
    %c0 = arith.constant 0 : index
    %c0_0 = arith.constant 0 : index
    %c0_1 = arith.constant 0 : index
    %0 = vector.load %arg1[%c0, %c0_0, %c0_1] : memref<8x49x1920xf32, #tpu.memory_space<vmem>>, vector<8x49x1920xf32>
    %cst = arith.constant dense<0.000000e+00> : vector<8x1920xf32>
    %1 = vector.multi_reduction <add>, %0, %cst [1] : vector<8x49x1920xf32> to vector<8x1920xf32>
    %cst_2 = arith.constant 0.0204081628 : f32
    %2 = vector.broadcast %cst_2 : f32 to vector<8x1920xf32>
    %3 = arith.mulf %1, %2 : vector<8x1920xf32>
    %c0_3 = arith.constant 0 : index
    %c0_4 = arith.constant 0 : index
    %4 = vector.load %arg4[%c0_3, %c0_4] : memref<8x1920xf32, #tpu.memory_space<vmem>>, vector<8x1920xf32>
    tpu.vector_store %arg4[%c0_3, %c0_4], %3 {strides = array<i32>} : memref<8x1920xf32, #tpu.memory_space<vmem>>, vector<8x1920xf32>,
    %5 = arith.truncf %3 : vector<8x1920xf32> to vector<8x1920xbf16>
    %c0_5 = arith.constant 0 : index
    %c0_6 = arith.constant 0 : index
    %6 = vector.load %arg2[%c0_5, %c0_6] : memref<1920x128xbf16, #tpu.memory_space<vmem>>, vector<1920x128xbf16>
    %cst_7 = arith.constant dense<0.000000e+00> : vector<8x128xf32>
    %7 = tpu.matmul %5, %6, %cst_7 {dimension_numbers = #tpu.dot_dimension_numbers<[1], [0], [0], [1], [0, 0, 1, 1], [], []>} : vector<8x1920xbf16>, vector<1920x128xbf16>, vector<8x128xf32> -> vector<8x128xf32>
    %c0_8 = arith.constant 0 : index
    %c0_9 = arith.constant 0 : index
    %8 = vector.load %arg3[%c0_8, %c0_9] : memref<1x128xf32, #tpu.memory_space<vmem>>, vector<1x128xf32>
    %9 = vector.broadcast %8 : vector<1x128xf32> to vector<8x128xf32>
    %10 = arith.addf %7, %9 : vector<8x128xf32>
    %c0_10 = arith.constant 0 : index
    %c0_11 = arith.constant 0 : index
    %11 = vector.load %arg5[%c0_10, %c0_11] : memref<8x128xf32, #tpu.memory_space<vmem>>, vector<8x128xf32>
    tpu.vector_store %arg5[%c0_10, %c0_11], %10 {strides = array<i32>} : memref<8x128xf32, #tpu.memory_space<vmem>>, vector<8x128xf32>,
    return
  }
  func.func @transform_0(%arg0: i32) -> (i32, i32, i32) {
    %c0_i32 = arith.constant 0 : i32
    %c0_i32_0 = arith.constant 0 : i32
    %c0_i32_1 = arith.constant 0 : i32
    return %arg0, %c0_i32, %c0_i32_0 : i32, i32, i32
  }
  func.func @transform_1(%arg0: i32) -> (i32, i32) {
    %c0_i32 = arith.constant 0 : i32
    %c0_i32_0 = arith.constant 0 : i32
    %c0_i32_1 = arith.constant 0 : i32
    return %c0_i32, %c0_i32_0 : i32, i32
  }
  func.func @transform_2(%arg0: i32) -> (i32, i32) {
    %c0_i32 = arith.constant 0 : i32
    %c0_i32_0 = arith.constant 0 : i32
    %c0_i32_1 = arith.constant 0 : i32
    return %c0_i32, %c0_i32_0 : i32, i32
  }
  func.func @transform_3(%arg0: i32) -> (i32, i32) {
    %c0_i32 = arith.constant 0 : i32
    %c0_i32_0 = arith.constant 0 : i32
    return %arg0, %c0_i32 : i32, i32
  }
  func.func @transform_4(%arg0: i32) -> (i32, i32) {
    %c0_i32 = arith.constant 0 : i32
    %c0_i32_0 = arith.constant 0 : i32
    return %arg0, %c0_i32 : i32, i32
  }
}

module attributes {stable_mosaic.version = 11 : i64} {
  func.func @_head_kernel(%arg0: i32, %arg1: memref<8x49x1920xf32, #tpu.memory_space<vmem>>, %arg2: memref<1920x128xbf16, #tpu.memory_space<vmem>>, %arg3: memref<1x128xf32, #tpu.memory_space<vmem>>, %arg4: memref<8x1920xf32, #tpu.memory_space<vmem>>, %arg5: memref<8x128xf32, #tpu.memory_space<vmem>>) attributes {dimension_semantics = [#tpu.dimension_semantics<parallel>], iteration_bounds = array<i64: 2>, scalar_prefetch = 0 : i64, scratch_operands = 0 : i64, tpu.core_type = #tpu.core_type<tc>, window_params = [{transform_indices = @transform_0, window_bounds = array<i64: 8, 49, 1920>}, {pipeline_mode = #tpu.pipeline_mode<synchronous>, transform_indices = @transform_1, window_bounds = array<i64: 1920, 128>}, {pipeline_mode = #tpu.pipeline_mode<synchronous>, transform_indices = @transform_2, window_bounds = array<i64: 1, 128>}, {transform_indices = @transform_3, window_bounds = array<i64: 8, 1920>}, {transform_indices = @transform_4, window_bounds = array<i64: 8, 128>}]} {
    %c0 = arith.constant 0 : index
    %c0_0 = arith.constant 0 : index
    %c0_1 = arith.constant 0 : index
    %0 = vector.load %arg1[%c0, %c0_0, %c0_1] : memref<8x49x1920xf32, #tpu.memory_space<vmem>>, vector<8x49x1920xf32>
    %cst = arith.constant dense<0.000000e+00> : vector<8x1920xf32>
    %1 = vector.multi_reduction <add>, %0, %cst [1] : vector<8x49x1920xf32> to vector<8x1920xf32>
    %cst_2 = arith.constant 0.0204081628 : f32
    %2 = vector.broadcast %cst_2 : f32 to vector<8x1920xf32>
    %3 = arith.mulf %1, %2 : vector<8x1920xf32>
    %c0_3 = arith.constant 0 : index
    %c0_4 = arith.constant 0 : index
    %4 = vector.load %arg4[%c0_3, %c0_4] : memref<8x1920xf32, #tpu.memory_space<vmem>>, vector<8x1920xf32>
    tpu.vector_store %arg4[%c0_3, %c0_4], %3 {strides = array<i32>} : memref<8x1920xf32, #tpu.memory_space<vmem>>, vector<8x1920xf32>,
    %5 = arith.truncf %3 : vector<8x1920xf32> to vector<8x1920xbf16>
    %c0_5 = arith.constant 0 : index
    %c0_6 = arith.constant 0 : index
    %6 = vector.load %arg2[%c0_5, %c0_6] : memref<1920x128xbf16, #tpu.memory_space<vmem>>, vector<1920x128xbf16>
    %cst_7 = arith.constant dense<0.000000e+00> : vector<8x128xf32>
    %7 = tpu.matmul %5, %6, %cst_7 {dimension_numbers = #tpu.dot_dimension_numbers<[1], [0], [0], [1], [0, 0, 1, 1], [], []>} : vector<8x1920xbf16>, vector<1920x128xbf16>, vector<8x128xf32> -> vector<8x128xf32>
    %c0_8 = arith.constant 0 : index
    %c0_9 = arith.constant 0 : index
    %8 = vector.load %arg3[%c0_8, %c0_9] : memref<1x128xf32, #tpu.memory_space<vmem>>, vector<1x128xf32>
    %9 = vector.broadcast %8 : vector<1x128xf32> to vector<8x128xf32>
    %10 = arith.addf %7, %9 : vector<8x128xf32>
    %c0_10 = arith.constant 0 : index
    %c0_11 = arith.constant 0 : index
    %11 = vector.load %arg5[%c0_10, %c0_11] : memref<8x128xf32, #tpu.memory_space<vmem>>, vector<8x128xf32>
    tpu.vector_store %arg5[%c0_10, %c0_11], %10 {strides = array<i32>} : memref<8x128xf32, #tpu.memory_space<vmem>>, vector<8x128xf32>,
    return
  }
  func.func @transform_0(%arg0: i32) -> (i32, i32, i32) {
    %c0_i32 = arith.constant 0 : i32
    %c0_i32_0 = arith.constant 0 : i32
    %c0_i32_1 = arith.constant 0 : i32
    return %arg0, %c0_i32, %c0_i32_0 : i32, i32, i32
  }
  func.func @transform_1(%arg0: i32) -> (i32, i32) {
    %c0_i32 = arith.constant 0 : i32
    %c0_i32_0 = arith.constant 0 : i32
    %c0_i32_1 = arith.constant 0 : i32
    return %c0_i32, %c0_i32_0 : i32, i32
  }
  func.func @transform_2(%arg0: i32) -> (i32, i32) {
    %c0_i32 = arith.constant 0 : i32
    %c0_i32_0 = arith.constant 0 : i32
    %c0_i32_1 = arith.constant 0 : i32
    return %c0_i32, %c0_i32_0 : i32, i32
  }
  func.func @transform_3(%arg0: i32) -> (i32, i32) {
    %c0_i32 = arith.constant 0 : i32
    %c0_i32_0 = arith.constant 0 : i32
    return %arg0, %c0_i32 : i32, i32
  }
  func.func @transform_4(%arg0: i32) -> (i32, i32) {
    %c0_i32 = arith.constant 0 : i32
    %c0_i32_0 = arith.constant 0 : i32
    return %arg0, %c0_i32 : i32, i32
  }
}

</mosaic_0001>

<llo_original>
// kernel: tpu_custom_call.1
$region0: #{tpu_custom_call.1}
  #allocation0 [shape = 'u32[]', space=smem, size = 0x4, offset = 0x4, fixed_abs, tag = 'smem constant byte address 0x4 - core index']
  #allocation1 [shape = 'u32[144,128]{1,0:T(1,128)}', space=vmem, size = 0x12000, scoped, tag = 'internal scratch']
  %s0 = inlined_call_operand.hbm [shape: f32[10,49,1920], index: 0, kind: input, shape index: {}]
  %s1 = inlined_call_operand.hbm [shape: bf16[1920,128], index: 1, kind: input, shape index: {}]
  %s2 = inlined_call_operand.hbm [shape: f32[1,128], index: 2, kind: input, shape index: {}]
  %s3 = inlined_call_operand.hbm [shape: f32[10,1920], index: 3, kind: output, shape index: {0}]
  %s4 = inlined_call_operand.hbm [shape: f32[10,128], index: 4, kind: output, shape index: {1}]
  %5 = xla_tuple %s3, %s4
  %s6 = sld [smem:[#allocation0]]
  $region65: #{tpu_custom_call.1} parent=0
    _
  %s8 = ssub.s32 1, %s6
  %s9 = scalar_select 0, %s8, %s6
  $region1: #{tpu_custom_call.1} parent=0
    #allocation2 [shape = 'u8[6881280]{0}', space=vmem, size = 0x690000, scoped, tag = 'input window, operand 0']
    #allocation3 [shape = 's32[2]{0}', space=sflag, size = 0x8, scoped, tag = 'scoped memory for tpu_custom_call.1']
    #allocation4 [shape = 's32[2]{0}', space=sflag, size = 0x8, scoped, tag = 'scoped memory for tpu_custom_call.1']
    #allocation5 [shape = 'u8[491520]{0}', space=vmem, size = 0x78000, scoped, tag = 'input window, operand 1, single buffered']
    #allocation6 [shape = 's32[1]{0}', space=sflag, size = 0x4, scoped, tag = 'scoped memory for tpu_custom_call.1']
    #allocation7 [shape = 'u8[512]{0}', space=vmem, size = 0x400, scoped, tag = 'input window, operand 2, single buffered']
    #allocation8 [shape = 'u8[122880]{0}', space=vmem, size = 0x1e000, scoped, tag = 'output window, operand 0']
    #allocation9 [shape = 'u8[8192]{0}', space=vmem, size = 0x2000, scoped, tag = 'output window, operand 1']
    #allocation10 [shape = 's32[2]{0}', space=sflag, size = 0x8, scoped, tag = 'scoped memory for tpu_custom_call.1']
    %10 = vsyncpa [#allocation3], 0
    %s11 = scalar_lea.sflag [#allocation3], 1
    %12 = vsyncpa %s11, 0
    %13 = vsyncpa [#allocation6], 0
    %14 = vsyncpa [#allocation4], 0
    %s15 = scalar_lea.sflag [#allocation4], 1
    %16 = vsyncpa %s15, 0
    %17 = vsyncpa [#allocation10], 0
    %s18 = scalar_lea.sflag [#allocation10], 1
    %19 = vsyncpa %s18, 0
    loop: start=0, step=1, limit=4
    $region2: #{tpu_custom_call.1} parent=1 // loop_pre_header
      _
    $region3: #{tpu_custom_call.1} parent=1 // loop_header
      %s21 = sphi 0, %s25
      %p22 = scmp.ge.s32.totalorder %s21, 4
      %s31 = sphi 0, %s33
      %s34 = sphi 0, %s31
      %s35 = sphi 0, %s34
      %s51 = sphi 0, %s35
      %s55 = sphi 0, %s55
      %s57 = sphi 0, %s55
      %s58 = sphi 0, %s57
      %s72 = sphi 0, %s58
      %s76 = sphi 0, %s76
      %s78 = sphi 0, %s76
      %s79 = sphi 0, %s78
      %s93 = sphi 0, %s79
      %s99 = sphi 0, %s101
      %s102 = sphi 0, %s99
      %s103 = sphi 0, %s102
      %s119 = sphi 0, %s103
      %s125 = sphi 0, %s127
      %s128 = sphi 0, %s125
      %s129 = sphi 0, %s128
      %s145 = sphi 0, %s129
    $region4: #{tpu_custom_call.1} parent=1 // loop_header_branch
      %24 = sbr.rel (%p22) target = $region8
    $region5: #{tpu_custom_call.1} parent=1 // loop_body
      %s26 = ssub.s32 %s21, 1
      %s27 = ssub.s32 %s21, 2
      %s28 = sadd.s32 %s21, 1
      %s29 = ssub.s32 %s21, %s28
      %p30 = scmp.eq.s32.totalorder %s29, 0
      %s32 = sadd.s32 %s31, 1
      %s33 = scalar_select %p30, %s31, %s32
      %p36 = pneg %p30
      %p37 = scmp.eq.s32.totalorder %s21, 1
      %p38 = por %p36, %p37
      %p39 = scmp.ne.s32.totalorder %s31, %s34
      %p40 = scmp.eq.s32.totalorder %s21, 0
      %p41 = por %p39, %p40
      %p42 = scmp.ne.s32.totalorder %s31, %s34
      %p43 = scmp.eq.s32.totalorder %s26, 1
      %p44 = por %p42, %p43
      %p45 = scmp.ne.s32.totalorder %s34, %s35
      %p46 = scmp.eq.s32.totalorder %s26, 0
      %p47 = por %p45, %p46
      %p48 = scmp.ne.s32.totalorder %s34, %s35
      %p49 = scmp.eq.s32.totalorder %s27, 1
      %p50 = por %p48, %p49
      %p52 = scmp.ne.s32.totalorder %s35, %s51
      %p53 = scmp.eq.s32.totalorder %s27, 0
      %p54 = por %p52, %p53
      %s56 = sadd.s32 %s55, 1
      %p59 = scmp.eq.s32.totalorder %s21, 1
      %p60 = scmp.ne.s32.totalorder %s55, %s57
      %p61 = scmp.eq.s32.totalorder %s21, 0
      %p62 = por %p60, %p61
      %p63 = scmp.ne.s32.totalorder %s55, %s57
      %p64 = scmp.eq.s32.totalorder %s26, 1
      %p65 = por %p63, %p64
      %p66 = scmp.ne.s32.totalorder %s57, %s58
      %p67 = scmp.eq.s32.totalorder %s26, 0
      %p68 = por %p66, %p67
      %p69 = scmp.ne.s32.totalorder %s57, %s58
      %p70 = scmp.eq.s32.totalorder %s27, 1
      %p71 = por %p69, %p70
      %p73 = scmp.ne.s32.totalorder %s58, %s72
      %p74 = scmp.eq.s32.totalorder %s27, 0
      %p75 = por %p73, %p74
      %s77 = sadd.s32 %s76, 1
      %p80 = scmp.eq.s32.totalorder %s21, 1
      %p81 = scmp.ne.s32.totalorder %s76, %s78
      %p82 = scmp.eq.s32.totalorder %s21, 0
      %p83 = por %p81, %p82
      %p84 = scmp.ne.s32.totalorder %s76, %s78
      %p85 = scmp.eq.s32.totalorder %s26, 1
      %p86 = por %p84, %p85
      %p87 = scmp.ne.s32.totalorder %s78, %s79
      %p88 = scmp.eq.s32.totalorder %s26, 0
      %p89 = por %p87, %p88
      %p90 = scmp.ne.s32.totalorder %s78, %s79
      %p91 = scmp.eq.s32.totalorder %s27, 1
      %p92 = por %p90, %p91
      %p94 = scmp.ne.s32.totalorder %s79, %s93
      %p95 = scmp.eq.s32.totalorder %s27, 0
      %p96 = por %p94, %p95
      %s97 = ssub.s32 %s21, %s28
      %p98 = scmp.eq.s32.totalorder %s97, 0
      %s100 = sadd.s32 %s99, 1
      %s101 = scalar_select %p98, %s99, %s100
      %p104 = pneg %p98
      %p105 = scmp.eq.s32.totalorder %s21, 1
      %p106 = por %p104, %p105
      %p107 = scmp.ne.s32.totalorder %s99, %s102
      %p108 = scmp.eq.s32.totalorder %s21, 0
      %p109 = por %p107, %p108
      %p110 = scmp.ne.s32.totalorder %s99, %s102
      %p111 = scmp.eq.s32.totalorder %s26, 1
      %p112 = por %p110, %p111
      %p113 = scmp.ne.s32.totalorder %s102, %s103
      %p114 = scmp.eq.s32.totalorder %s26, 0
      %p115 = por %p113, %p114
      %p116 = scmp.ne.s32.totalorder %s102, %s103
      %p117 = scmp.eq.s32.totalorder %s27, 1
      %p118 = por %p116, %p117
      %p120 = scmp.ne.s32.totalorder %s103, %s119
      %p121 = scmp.eq.s32.totalorder %s27, 0
      %p122 = por %p120, %p121
      %s123 = ssub.s32 %s21, %s28
      %p124 = scmp.eq.s32.totalorder %s123, 0
      %s126 = sadd.s32 %s125, 1
      %s127 = scalar_select %p124, %s125, %s126
      %p130 = pneg %p124
      %p131 = scmp.eq.s32.totalorder %s21, 1
      %p132 = por %p130, %p131
      %p133 = scmp.ne.s32.totalorder %s125, %s128
      %p134 = scmp.eq.s32.totalorder %s21, 0
      %p135 = por %p133, %p134
      %p136 = scmp.ne.s32.totalorder %s125, %s128
      %p137 = scmp.eq.s32.totalorder %s26, 1
      %p138 = por %p136, %p137
      %p139 = scmp.ne.s32.totalorder %s128, %s129
      %p140 = scmp.eq.s32.totalorder %s26, 0
      %p141 = por %p139, %p140
      %p142 = scmp.ne.s32.totalorder %s128, %s129
      %p143 = scmp.eq.s32.totalorder %s27, 1
      %p144 = por %p142, %p143
      %p146 = scmp.ne.s32.totalorder %s129, %s145
      %p147 = scmp.eq.s32.totalorder %s27, 0
      %p148 = por %p146, %p147
      %p149 = scmp.le.s32.totalorder 1, %s21
      %p150 = scmp.lt.s32.totalorder %s21, 3
      %p151 = pnand %p149, %p150
      %p152 = pneg %p151
      // Predicated region
      $region9: #{tpu_custom_call.1} parent=5 // pred_check
        _
      $region10: #{tpu_custom_call.1} parent=5 // pred_check_branch
        %154 = sbr.rel (%p151) target = $region12
      $region11: #{tpu_custom_call.1} parent=5 // pred_region
        %s155 = ssub.s32 %s21, 1
        // Predicated region
        $region13: #{tpu_custom_call.1} parent=11 // pred_check
          %p156 = pneg %p68
        $region14: #{tpu_custom_call.1} parent=11 // pred_check_branch
          %158 = sbr.rel (%p156) target = $region16
        $region15: #{tpu_custom_call.1} parent=11 // pred_region
          %s160 = ssub.s32 15360, 15360
          %161 = vsyncadd [#allocation6], %s160
          %s162 = sshll.u32 [#allocation5], 4
          %s163 = int_to_ptr.vmem [resolvable:$true] %s162
          %168 = dma.hbm_to_vmem [thread:$0]  %s1, 15360, %s163, [#allocation6], 64, 64, 4
        $region16: #{tpu_custom_call.1} parent=11 // pred_fallthru
          _
        // Predicated region
        $region17: #{tpu_custom_call.1} parent=11 // pred_check
          %p169 = pneg %p89
        $region18: #{tpu_custom_call.1} parent=11 // pred_check_branch
          %171 = sbr.rel (%p169) target = $region20
        $region19: #{tpu_custom_call.1} parent=11 // pred_region
          %s173 = ssub.s32 16, 16
          %174 = vsyncadd [#allocation6], %s173
          %s176 = sshll.u32 [#allocation7], 4
          %s177 = int_to_ptr.vmem [resolvable:$true] %s176
          %179 = dma.hbm_to_vmem [thread:$0]  %s2, 16, %s177, [#allocation6]
        $region20: #{tpu_custom_call.1} parent=11 // pred_fallthru
          _
      $region12: #{tpu_custom_call.1} parent=5 // pred_fallthru
        _
      %p180 = scmp.lt.s32.totalorder %s21, 2
      // Predicated region
      $region21: #{tpu_custom_call.1} parent=5 // pred_check
        %p181 = pneg %p180
      $region22: #{tpu_custom_call.1} parent=5 // pred_check_branch
        %183 = sbr.rel (%p181) target = $region24
      $region23: #{tpu_custom_call.1} parent=5 // pred_region
        // Predicated region
        $region25: #{tpu_custom_call.1} parent=23 // pred_check
          %p184 = pneg %p41
        $region26: #{tpu_custom_call.1} parent=23 // pred_check_branch
          %186 = sbr.rel (%p184) target = $region28
        $region27: #{tpu_custom_call.1} parent=23 // pred_region
          %s187 = sand.u32 %s31, 1
          %s188 = scalar_lea.sflag [#allocation3], %s187
          %s189 = sand.u32 %s31, 1
          %s190 = smul.addr %s189, 6720
          %s191 = scalar_lea.vmem [#allocation2], %s190
          %s192 = smul.u32 8, %s21
          %s193 = ssub.s32 10, %s192
          %p194 = scmp.lt.s32.totalorder %s193, 8
          %s195 = scalar_select %p194, %s193, 8
          %s196 = smul.u32 128, %s195
          %s197 = smul.u32 %s196, 7
          %s198 = smul.u32 %s197, 15
          %s200 = ssub.s32 107520, %s198
          %201 = vsyncadd %s188, %s200
          %p202 = scmp.ne.s32.totalorder 0, %s198
          %s203 = smul.addr %s192, 105
          %s204 = smul.addr %s203, 128
          %s205 = scalar_lea.hbm %s0, %s204
          %s206 = smul.u32 %s195, 7
          %s207 = smul.u32 120, %s206
          %s208 = sshll.u32 %s191, 4
          %s209 = int_to_ptr.vmem [resolvable:$true] %s208
          %s210 = sshll.u32 %s207, 4
          %214 = dma.hbm_to_vmem [thread:$0]  (%p202), %s205, %s210, %s209, %s188, 1920, 1920, 120
        $region28: #{tpu_custom_call.1} parent=23 // pred_fallthru
          _
      $region24: #{tpu_custom_call.1} parent=5 // pred_fallthru
        _
      %p215 = scmp.le.s32.totalorder 1, %s21
      %p216 = scmp.lt.s32.totalorder %s21, 3
      %p217 = pnand %p215, %p216
      %p218 = pneg %p217
      // Predicated region
      $region29: #{tpu_custom_call.1} parent=5 // pred_check
        _
      $region30: #{tpu_custom_call.1} parent=5 // pred_check_branch
        %220 = sbr.rel (%p217) target = $region32
      $region31: #{tpu_custom_call.1} parent=5 // pred_region
        %s221 = ssub.s32 %s21, 1
        %s222 = sand.u32 %s34, 1
        %s223 = scalar_lea.sflag [#allocation3], %s222
        %s224 = sand.u32 %s34, 1
        %s225 = smul.addr %s224, 6720
        %s226 = scalar_lea.vmem [#allocation2], %s225
        // Predicated region
        $region33: #{tpu_custom_call.1} parent=31 // pred_check
          %p227 = pneg %p47
        $region34: #{tpu_custom_call.1} parent=31 // pred_check_branch
          %229 = sbr.rel (%p227) target = $region36
        $region35: #{tpu_custom_call.1} parent=31 // pred_region
          %230 = dma.done %s223, 107520
        $region36: #{tpu_custom_call.1} parent=31 // pred_fallthru
          _
        // Predicated region
        $region37: #{tpu_custom_call.1} parent=31 // pred_check
          %p231 = pneg %p68
        $region38: #{tpu_custom_call.1} parent=31 // pred_check_branch
          %233 = sbr.rel (%p231) target = $region40
        $region39: #{tpu_custom_call.1} parent=31 // pred_region
          %234 = dma.done [#allocation6], 15360
        $region40: #{tpu_custom_call.1} parent=31 // pred_fallthru
          _
        // Predicated region
        $region41: #{tpu_custom_call.1} parent=31 // pred_check
          %p235 = pneg %p89
        $region42: #{tpu_custom_call.1} parent=31 // pred_check_branch
          %237 = sbr.rel (%p235) target = $region44
        $region43: #{tpu_custom_call.1} parent=31 // pred_region
          %238 = dma.done [#allocation6], 16
        $region44: #{tpu_custom_call.1} parent=31 // pred_fallthru
          _
        %s239 = sand.u32 %s34, 1
        %s240 = scalar_lea.sflag [#allocation3], %s239
        %s241 = sand.u32 %s34, 1
        %s242 = smul.addr %s241, 6720
        %s243 = scalar_lea.vmem [#allocation2], %s242
        %p244 = pneg %p47
        %p245 = pneg %p44
        %p246 = pneg %p68
        %p247 = pneg %p65
        %p248 = pneg %p89
        %p249 = pneg %p86
        %p250 = pneg %p115
        %p251 = pneg %p112
        %s252 = sand.u32 %s102, 1
        %s253 = scalar_lea.sflag [#allocation4], %s252
        %s254 = sand.u32 %s102, 1
        %s255 = smul.addr %s254, 120
        %s256 = scalar_lea.vmem [#allocation8], %s255
        %p257 = pneg %p141
        %p258 = pneg %p138
        %s259 = sand.u32 %s128, 1
        %s260 = scalar_lea.sflag [#allocation10], %s259
        %s261 = sand.u32 %s128, 1
        %s262 = smul.addr %s261, 8
        %s263 = scalar_lea.vmem [#allocation9], %s262
        %s264 = smul.u32 8, %s26
        %s265 = ssub.s32 10, %s264
        %p266 = scmp.lt.s32.totalorder %s265, 8
        %s267 = scalar_select %p266, %s265, 8
        %s268 = smul.u32 128, %s267
        %s269 = smul.u32 %s268, 7
        %s270 = smul.u32 %s269, 15
        %v272 = vld [vmem:[%s226] sm:$0xff]
        %v273 = vld [vmem:[%s226 + $0x8] sm:$0xff]
        %v274 = vld [vmem:[%s226 + $0x10] sm:$0xff]
        %v275 = vld [vmem:[%s226 + $0x18] sm:$0xff]
        %v276 = vld [vmem:[%s226 + $0x20] sm:$0xff]
        %v277 = vld [vmem:[%s226 + $0x28] sm:$0xff]
        %v278 = vld [vmem:[%s226 + $0x30] sm:$0xff]
        %v279 = vld [vmem:[%s226 + $0x38] sm:$0xff]
        %v280 = vld [vmem:[%s226 + $0x40] sm:$0xff]
        %v281 = vld [vmem:[%s226 + $0x48] sm:$0xff]
        %v282 = vld [vmem:[%s226 + $0x50] sm:$0xff]
        %v283 = vld [vmem:[%s226 + $0x58] sm:$0xff]
        %v284 = vld [vmem:[%s226 + $0x60] sm:$0xff]
        %v285 = vld [vmem:[%s226 + $0x68] sm:$0xff]
        %v286 = vld [vmem:[%s226 + $0x70] sm:$0xff]
        %v287 = vld [vmem:[%s226 + $0x78] sm:$0xff]
        %v288 = vld [vmem:[%s226 + $0x80] sm:$0xff]
        %v289 = vld [vmem:[%s226 + $0x88] sm:$0xff]
        %v290 = vld [vmem:[%s226 + $0x90] sm:$0xff]
        %v291 = vld [vmem:[%s226 + $0x98] sm:$0xff]
        %v292 = vld [vmem:[%s226 + $0xa0] sm:$0xff]
        %v293 = vld [vmem:[%s226 + $0xa8] sm:$0xff]
        %v294 = vld [vmem:[%s226 + $0xb0] sm:$0xff]
        %v295 = vld [vmem:[%s226 + $0xb8] sm:$0xff]
        %v296 = vld [vmem:[%s226 + $0xc0] sm:$0xff]
        %v297 = vld [vmem:[%s226 + $0xc8] sm:$0xff]
        %v298 = vld [vmem:[%s226 + $0xd0] sm:$0xff]
        %v299 = vld [vmem:[%s226 + $0xd8] sm:$0xff]
        %v300 = vld [vmem:[%s226 + $0xe0] sm:$0xff]
        %v301 = vld [vmem:[%s226 + $0xe8] sm:$0xff]
        %v302 = vld [vmem:[%s226 + $0xf0] sm:$0xff]
        %v303 = vld [vmem:[%s226 + $0xf8] sm:$0xff]
        %v304 = vld [vmem:[%s226 + $0x100] sm:$0xff]
        %v305 = vld [vmem:[%s226 + $0x108] sm:$0xff]
        %v306 = vld [vmem:[%s226 + $0x110] sm:$0xff]
        %v307 = vld [vmem:[%s226 + $0x118] sm:$0xff]
        %v308 = vld [vmem:[%s226 + $0x120] sm:$0xff]
        %v309 = vld [vmem:[%s226 + $0x128] sm:$0xff]
        %v310 = vld [vmem:[%s226 + $0x130] sm:$0xff]
        %v311 = vld [vmem:[%s226 + $0x138] sm:$0xff]
        %v312 = vld [vmem:[%s226 + $0x140] sm:$0xff]
        %v313 = vld [vmem:[%s226 + $0x148] sm:$0xff]
        %v314 = vld [vmem:[%s226 + $0x150] sm:$0xff]
        %v315 = vld [vmem:[%s226 + $0x158] sm:$0xff]
        %v316 = vld [vmem:[%s226 + $0x160] sm:$0xff]
        %v317 = vld [vmem:[%s226 + $0x168] sm:$0xff]
        %v318 = vld [vmem:[%s226 + $0x170] sm:$0xff]
        %v319 = vld [vmem:[%s226 + $0x178] sm:$0xff]
        %v320 = vld [vmem:[%s226 + $0x180] sm:$0xff]
        %v321 = vld [vmem:[%s226 + $0x188] sm:$0xff]
        %v322 = vld [vmem:[%s226 + $0x190] sm:$0xff]
        %v323 = vld [vmem:[%s226 + $0x198] sm:$0xff]
        %v324 = vld [vmem:[%s226 + $0x1a0] sm:$0xff]
        %v325 = vld [vmem:[%s226 + $0x1a8] sm:$0xff]
        %v326 = vld [vmem:[%s226 + $0x1b0] sm:$0xff]
        %v327 = vld [vmem:[%s226 + $0x1b8] sm:$0xff]
        %v328 = vld [vmem:[%s226 + $0x1c0] sm:$0xff]
        %v329 = vld [vmem:[%s226 + $0x1c8] sm:$0xff]
        %v330 = vld [vmem:[%s226 + $0x1d0] sm:$0xff]
        %v331 = vld [vmem:[%s226 + $0x1d8] sm:$0xff]
        %v332 = vld [vmem:[%s226 + $0x1e0] sm:$0xff]
        %v333 = vld [vmem:[%s226 + $0x1e8] sm:$0xff]
        %v334 = vld [vmem:[%s226 + $0x1f0] sm:$0xff]
        %v335 = vld [vmem:[%s226 + $0x1f8] sm:$0xff]
        %v336 = vld [vmem:[%s226 + $0x200] sm:$0xff]
        %v337 = vld [vmem:[%s226 + $0x208] sm:$0xff]
        %v338 = vld [vmem:[%s226 + $0x210] sm:$0xff]
        %v339 = vld [vmem:[%s226 + $0x218] sm:$0xff]
        %v340 = vld [vmem:[%s226 + $0x220] sm:$0xff]
        %v341 = vld [vmem:[%s226 + $0x228] sm:$0xff]
        %v342 = vld [vmem:[%s226 + $0x230] sm:$0xff]
        %v343 = vld [vmem:[%s226 + $0x238] sm:$0xff]
        %v344 = vld [vmem:[%s226 + $0x240] sm:$0xff]
        %v345 = vld [vmem:[%s226 + $0x248] sm:$0xff]
        %v346 = vld [vmem:[%s226 + $0x250] sm:$0xff]
        %v347 = vld [vmem:[%s226 + $0x258] sm:$0xff]
        %v348 = vld [vmem:[%s226 + $0x260] sm:$0xff]
        %v349 = vld [vmem:[%s226 + $0x268] sm:$0xff]
        %v350 = vld [vmem:[%s226 + $0x270] sm:$0xff]
        %v351 = vld [vmem:[%s226 + $0x278] sm:$0xff]
        %v352 = vld [vmem:[%s226 + $0x280] sm:$0xff]
        %v353 = vld [vmem:[%s226 + $0x288] sm:$0xff]
        %v354 = vld [vmem:[%s226 + $0x290] sm:$0xff]
        %v355 = vld [vmem:[%s226 + $0x298] sm:$0xff]
        %v356 = vld [vmem:[%s226 + $0x2a0] sm:$0xff]
        %v357 = vld [vmem:[%s226 + $0x2a8] sm:$0xff]
        %v358 = vld [vmem:[%s226 + $0x2b0] sm:$0xff]
        %v359 = vld [vmem:[%s226 + $0x2b8] sm:$0xff]
        %v360 = vld [vmem:[%s226 + $0x2c0] sm:$0xff]
        %v361 = vld [vmem:[%s226 + $0x2c8] sm:$0xff]
        %v362 = vld [vmem:[%s226 + $0x2d0] sm:$0x1]
        %v363 = vld [vmem:[%s226 + $0x2d8] sm:$0x1]
        %v364 = vld [vmem:[%s226 + $0x2e0] sm:$0x1]
        %v365 = vld [vmem:[%s226 + $0x2e8] sm:$0x1]
        %v366 = vld [vmem:[%s226 + $0x2f0] sm:$0x1]
        %v367 = vld [vmem:[%s226 + $0x2f8] sm:$0x1]
        %v368 = vld [vmem:[%s226 + $0x300] sm:$0x1]
        %v369 = vld [vmem:[%s226 + $0x308] sm:$0x1]
        %v370 = vld [vmem:[%s226 + $0x310] sm:$0x1]
        %v371 = vld [vmem:[%s226 + $0x318] sm:$0x1]
        %v372 = vld [vmem:[%s226 + $0x320] sm:$0x1]
        %v373 = vld [vmem:[%s226 + $0x328] sm:$0x1]
        %v374 = vld [vmem:[%s226 + $0x330] sm:$0x1]
        %v375 = vld [vmem:[%s226 + $0x338] sm:$0x1]
        %v376 = vld [vmem:[%s226 + $0x340] sm:$0x1]
        %v377 = vld [vmem:[%s226 + $0x348] sm:$0xff]
        %v378 = vld [vmem:[%s226 + $0x350] sm:$0xff]
        %v379 = vld [vmem:[%s226 + $0x358] sm:$0xff]
        %v380 = vld [vmem:[%s226 + $0x360] sm:$0xff]
        %v381 = vld [vmem:[%s226 + $0x368] sm:$0xff]
        %v382 = vld [vmem:[%s226 + $0x370] sm:$0xff]
        %v383 = vld [vmem:[%s226 + $0x378] sm:$0xff]
        %v384 = vld [vmem:[%s226 + $0x380] sm:$0xff]
        %v385 = vld [vmem:[%s226 + $0x388] sm:$0xff]
        %v386 = vld [vmem:[%s226 + $0x390] sm:$0xff]
        %v387 = vld [vmem:[%s226 + $0x398] sm:$0xff]
        %v388 = vld [vmem:[%s226 + $0x3a0] sm:$0xff]
        %v389 = vld [vmem:[%s226 + $0x3a8] sm:$0xff]
        %v390 = vld [vmem:[%s226 + $0x3b0] sm:$0xff]
        %v391 = vld [vmem:[%s226 + $0x3b8] sm:$0xff]
        %v392 = vld [vmem:[%s226 + $0x3c0] sm:$0xff]
        %v393 = vld [vmem:[%s226 + $0x3c8] sm:$0xff]
        %v394 = vld [vmem:[%s226 + $0x3d0] sm:$0xff]
        %v395 = vld [vmem:[%s226 + $0x3d8] sm:$0xff]
        %v396 = vld [vmem:[%s226 + $0x3e0] sm:$0xff]
        %v397 = vld [vmem:[%s226 + $0x3e8] sm:$0xff]
        %v398 = vld [vmem:[%s226 + $0x3f0] sm:$0xff]
        %v399 = vld [vmem:[%s226 + $0x3f8] sm:$0xff]
        %v400 = vld [vmem:[%s226 + $0x400] sm:$0xff]
        %v401 = vld [vmem:[%s226 + $0x408] sm:$0xff]
        %v402 = vld [vmem:[%s226 + $0x410] sm:$0xff]
        %v403 = vld [vmem:[%s226 + $0x418] sm:$0xff]
        %v404 = vld [vmem:[%s226 + $0x420] sm:$0xff]
        %v405 = vld [vmem:[%s226 + $0x428] sm:$0xff]
        %v406 = vld [vmem:[%s226 + $0x430] sm:$0xff]
        %v407 = vld [vmem:[%s226 + $0x438] sm:$0xff]
        %v408 = vld [vmem:[%s226 + $0x440] sm:$0xff]
        %v409 = vld [vmem:[%s226 + $0x448] sm:$0xff]
        %v410 = vld [vmem:[%s226 + $0x450] sm:$0xff]
        %v411 = vld [vmem:[%s226 + $0x458] sm:$0xff]
        %v412 = vld [vmem:[%s226 + $0x460] sm:$0xff]
        %v413 = vld [vmem:[%s226 + $0x468] sm:$0xff]
        %v414 = vld [vmem:[%s226 + $0x470] sm:$0xff]
        %v415 = vld [vmem:[%s226 + $0x478] sm:$0xff]
        %v416 = vld [vmem:[%s226 + $0x480] sm:$0xff]
        %v417 = vld [vmem:[%s226 + $0x488] sm:$0xff]
        %v418 = vld [vmem:[%s226 + $0x490] sm:$0xff]
        %v419 = vld [vmem:[%s226 + $0x498] sm:$0xff]
        %v420 = vld [vmem:[%s226 + $0x4a0] sm:$0xff]
        %v421 = vld [vmem:[%s226 + $0x4a8] sm:$0xff]
        %v422 = vld [vmem:[%s226 + $0x4b0] sm:$0xff]
        %v423 = vld [vmem:[%s226 + $0x4b8] sm:$0xff]
        %v424 = vld [vmem:[%s226 + $0x4c0] sm:$0xff]
        %v425 = vld [vmem:[%s226 + $0x4c8] sm:$0xff]
        %v426 = vld [vmem:[%s226 + $0x4d0] sm:$0xff]
        %v427 = vld [vmem:[%s226 + $0x4d8] sm:$0xff]
        %v428 = vld [vmem:[%s226 + $0x4e0] sm:$0xff]
        %v429 = vld [vmem:[%s226 + $0x4e8] sm:$0xff]
        %v430 = vld [vmem:[%s226 + $0x4f0] sm:$0xff]
        %v431 = vld [vmem:[%s226 + $0x4f8] sm:$0xff]
        %v432 = vld [vmem:[%s226 + $0x500] sm:$0xff]
        %v433 = vld [vmem:[%s226 + $0x508] sm:$0xff]
        %v434 = vld [vmem:[%s226 + $0x510] sm:$0xff]
        %v435 = vld [vmem:[%s226 + $0x518] sm:$0xff]
        %v436 = vld [vmem:[%s226 + $0x520] sm:$0xff]
        %v437 = vld [vmem:[%s226 + $0x528] sm:$0xff]
        %v438 = vld [vmem:[%s226 + $0x530] sm:$0xff]
        %v439 = vld [vmem:[%s226 + $0x538] sm:$0xff]
        %v440 = vld [vmem:[%s226 + $0x540] sm:$0xff]
        %v441 = vld [vmem:[%s226 + $0x548] sm:$0xff]
        %v442 = vld [vmem:[%s226 + $0x550] sm:$0xff]
        %v443 = vld [vmem:[%s226 + $0x558] sm:$0xff]
        %v444 = vld [vmem:[%s226 + $0x560] sm:$0xff]
        %v445 = vld [vmem:[%s226 + $0x568] sm:$0xff]
        %v446 = vld [vmem:[%s226 + $0x570] sm:$0xff]
        %v447 = vld [vmem:[%s226 + $0x578] sm:$0xff]
        %v448 = vld [vmem:[%s226 + $0x580] sm:$0xff]
        %v449 = vld [vmem:[%s226 + $0x588] sm:$0xff]
        %v450 = vld [vmem:[%s226 + $0x590] sm:$0xff]
        %v451 = vld [vmem:[%s226 + $0x598] sm:$0xff]
        %v452 = vld [vmem:[%s226 + $0x5a0] sm:$0xff]
        %v453 = vld [vmem:[%s226 + $0x5a8] sm:$0xff]
        %v454 = vld [vmem:[%s226 + $0x5b0] sm:$0xff]
        %v455 = vld [vmem:[%s226 + $0x5b8] sm:$0xff]
        %v456 = vld [vmem:[%s226 + $0x5c0] sm:$0xff]
        %v457 = vld [vmem:[%s226 + $0x5c8] sm:$0xff]
        %v458 = vld [vmem:[%s226 + $0x5d0] sm:$0xff]
        %v459 = vld [vmem:[%s226 + $0x5d8] sm:$0xff]
        %v460 = vld [vmem:[%s226 + $0x5e0] sm:$0xff]
        %v461 = vld [vmem:[%s226 + $0x5e8] sm:$0xff]
        %v462 = vld [vmem:[%s226 + $0x5f0] sm:$0xff]
        %v463 = vld [vmem:[%s226 + $0x5f8] sm:$0xff]
        %v464 = vld [vmem:[%s226 + $0x600] sm:$0xff]
        %v465 = vld [vmem:[%s226 + $0x608] sm:$0xff]
        %v466 = vld [vmem:[%s226 + $0x610] sm:$0xff]
        %v467 = vld [vmem:[%s226 + $0x618] sm:$0x1]
        %v468 = vld [vmem:[%s226 + $0x620] sm:$0x1]
        %v469 = vld [vmem:[%s226 + $0x628] sm:$0x1]
        %v470 = vld [vmem:[%s226 + $0x630] sm:$0x1]
        %v471 = vld [vmem:[%s226 + $0x638] sm:$0x1]
        %v472 = vld [vmem:[%s226 + $0x640] sm:$0x1]
        %v473 = vld [vmem:[%s226 + $0x648] sm:$0x1]
        %v474 = vld [vmem:[%s226 + $0x650] sm:$0x1]
        %v475 = vld [vmem:[%s226 + $0x658] sm:$0x1]
        %v476 = vld [vmem:[%s226 + $0x660] sm:$0x1]
        %v477 = vld [vmem:[%s226 + $0x668] sm:$0x1]
        %v478 = vld [vmem:[%s226 + $0x670] sm:$0x1]
        %v479 = vld [vmem:[%s226 + $0x678] sm:$0x1]
        %v480 = vld [vmem:[%s226 + $0x680] sm:$0x1]
        %v481 = vld [vmem:[%s226 + $0x688] sm:$0x1]
        %v482 = vld [vmem:[%s226 + $0x690] sm:$0xff]
        %v483 = vld [vmem:[%s226 + $0x698] sm:$0xff]
        %v484 = vld [vmem:[%s226 + $0x6a0] sm:$0xff]
        %v485 = vld [vmem:[%s226 + $0x6a8] sm:$0xff]
        %v486 = vld [vmem:[%s226 + $0x6b0] sm:$0xff]
        %v487 = vld [vmem:[%s226 + $0x6b8] sm:$0xff]
        %v488 = vld [vmem:[%s226 + $0x6c0] sm:$0xff]
        %v489 = vld [vmem:[%s226 + $0x6c8] sm:$0xff]
        %v490 = vld [vmem:[%s226 + $0x6d0] sm:$0xff]
        %v491 = vld [vmem:[%s226 + $0x6d8] sm:$0xff]
        %v492 = vld [vmem:[%s226 + $0x6e0] sm:$0xff]
        %v493 = vld [vmem:[%s226 + $0x6e8] sm:$0xff]
        %v494 = vld [vmem:[%s226 + $0x6f0] sm:$0xff]
        %v495 = vld [vmem:[%s226 + $0x6f8] sm:$0xff]
        %v496 = vld [vmem:[%s226 + $0x700] sm:$0xff]
        %v497 = vld [vmem:[%s226 + $0x708] sm:$0xff]
        %v498 = vld [vmem:[%s226 + $0x710] sm:$0xff]
        %v499 = vld [vmem:[%s226 + $0x718] sm:$0xff]
        %v500 = vld [vmem:[%s226 + $0x720] sm:$0xff]
        %v501 = vld [vmem:[%s226 + $0x728] sm:$0xff]
        %v502 = vld [vmem:[%s226 + $0x730] sm:$0xff]
        %v503 = vld [vmem:[%s226 + $0x738] sm:$0xff]
        %v504 = vld [vmem:[%s226 + $0x740] sm:$0xff]
        %v505 = vld [vmem:[%s226 + $0x748] sm:$0xff]
        %v506 = vld [vmem:[%s226 + $0x750] sm:$0xff]
        %v507 = vld [vmem:[%s226 + $0x758] sm:$0xff]
        %v508 = vld [vmem:[%s226 + $0x760] sm:$0xff]
        %v509 = vld [vmem:[%s226 + $0x768] sm:$0xff]
        %v510 = vld [vmem:[%s226 + $0x770] sm:$0xff]
        %v511 = vld [vmem:[%s226 + $0x778] sm:$0xff]
        %v512 = vld [vmem:[%s226 + $0x780] sm:$0xff]
        %v513 = vld [vmem:[%s226 + $0x788] sm:$0xff]
        %v514 = vld [vmem:[%s226 + $0x790] sm:$0xff]
        %v515 = vld [vmem:[%s226 + $0x798] sm:$0xff]
        %v516 = vld [vmem:[%s226 + $0x7a0] sm:$0xff]
        %v517 = vld [vmem:[%s226 + $0x7a8] sm:$0xff]
        %v518 = vld [vmem:[%s226 + $0x7b0] sm:$0xff]
        %v519 = vld [vmem:[%s226 + $0x7b8] sm:$0xff]
        %v520 = vld [vmem:[%s226 + $0x7c0] sm:$0xff]
        %v521 = vld [vmem:[%s226 + $0x7c8] sm:$0xff]
        %v522 = vld [vmem:[%s226 + $0x7d0] sm:$0xff]
        %v523 = vld [vmem:[%s226 + $0x7d8] sm:$0xff]
        %v524 = vld [vmem:[%s226 + $0x7e0] sm:$0xff]
        %v525 = vld [vmem:[%s226 + $0x7e8] sm:$0xff]
        %v526 = vld [vmem:[%s226 + $0x7f0] sm:$0xff]
        %v527 = vld [vmem:[%s226 + $0x7f8] sm:$0xff]
        %v528 = vld [vmem:[%s226 + $0x800] sm:$0xff]
        %v529 = vld [vmem:[%s226 + $0x808] sm:$0xff]
        %v530 = vld [vmem:[%s226 + $0x810] sm:$0xff]
        %v531 = vld [vmem:[%s226 + $0x818] sm:$0xff]
        %v532 = vld [vmem:[%s226 + $0x820] sm:$0xff]
        %v533 = vld [vmem:[%s226 + $0x828] sm:$0xff]
        %v534 = vld [vmem:[%s226 + $0x830] sm:$0xff]
        %v535 = vld [vmem:[%s226 + $0x838] sm:$0xff]
        %v536 = vld [vmem:[%s226 + $0x840] sm:$0xff]
        %v537 = vld [vmem:[%s226 + $0x848] sm:$0xff]
        %v538 = vld [vmem:[%s226 + $0x850] sm:$0xff]
        %v539 = vld [vmem:[%s226 + $0x858] sm:$0xff]
        %v540 = vld [vmem:[%s226 + $0x860] sm:$0xff]
        %v541 = vld [vmem:[%s226 + $0x868] sm:$0xff]
        %v542 = vld [vmem:[%s226 + $0x870] sm:$0xff]
        %v543 = vld [vmem:[%s226 + $0x878] sm:$0xff]
        %v544 = vld [vmem:[%s226 + $0x880] sm:$0xff]
        %v545 = vld [vmem:[%s226 + $0x888] sm:$0xff]
        %v546 = vld [vmem:[%s226 + $0x890] sm:$0xff]
        %v547 = vld [vmem:[%s226 + $0x898] sm:$0xff]
        %v548 = vld [vmem:[%s226 + $0x8a0] sm:$0xff]
        %v549 = vld [vmem:[%s226 + $0x8a8] sm:$0xff]
        %v550 = vld [vmem:[%s226 + $0x8b0] sm:$0xff]
        %v551 = vld [vmem:[%s226 + $0x8b8] sm:$0xff]
        %v552 = vld [vmem:[%s226 + $0x8c0] sm:$0xff]
        %v553 = vld [vmem:[%s226 + $0x8c8] sm:$0xff]
        %v554 = vld [vmem:[%s226 + $0x8d0] sm:$0xff]
        %v555 = vld [vmem:[%s226 + $0x8d8] sm:$0xff]
        %v556 = vld [vmem:[%s226 + $0x8e0] sm:$0xff]
        %v557 = vld [vmem:[%s226 + $0x8e8] sm:$0xff]
        %v558 = vld [vmem:[%s226 + $0x8f0] sm:$0xff]
        %v559 = vld [vmem:[%s226 + $0x8f8] sm:$0xff]
        %v560 = vld [vmem:[%s226 + $0x900] sm:$0xff]
        %v561 = vld [vmem:[%s226 + $0x908] sm:$0xff]
        %v562 = vld [vmem:[%s226 + $0x910] sm:$0xff]
        %v563 = vld [vmem:[%s226 + $0x918] sm:$0xff]
        %v564 = vld [vmem:[%s226 + $0x920] sm:$0xff]
        %v565 = vld [vmem:[%s226 + $0x928] sm:$0xff]
        %v566 = vld [vmem:[%s226 + $0x930] sm:$0xff]
        %v567 = vld [vmem:[%s226 + $0x938] sm:$0xff]
        %v568 = vld [vmem:[%s226 + $0x940] sm:$0xff]
        %v569 = vld [vmem:[%s226 + $0x948] sm:$0xff]
        %v570 = vld [vmem:[%s226 + $0x950] sm:$0xff]
        %v571 = vld [vmem:[%s226 + $0x958] sm:$0xff]
        %v572 = vld [vmem:[%s226 + $0x960] sm:$0x1]
        %v573 = vld [vmem:[%s226 + $0x968] sm:$0x1]
        %v574 = vld [vmem:[%s226 + $0x970] sm:$0x1]
        %v575 = vld [vmem:[%s226 + $0x978] sm:$0x1]
        %v576 = vld [vmem:[%s226 + $0x980] sm:$0x1]
        %v577 = vld [vmem:[%s226 + $0x988] sm:$0x1]
        %v578 = vld [vmem:[%s226 + $0x990] sm:$0x1]
        %v579 = vld [vmem:[%s226 + $0x998] sm:$0x1]
        %v580 = vld [vmem:[%s226 + $0x9a0] sm:$0x1]
        %v581 = vld [vmem:[%s226 + $0x9a8] sm:$0x1]
        %v582 = vld [vmem:[%s226 + $0x9b0] sm:$0x1]
        %v583 = vld [vmem:[%s226 + $0x9b8] sm:$0x1]
        %v584 = vld [vmem:[%s226 + $0x9c0] sm:$0x1]
        %v585 = vld [vmem:[%s226 + $0x9c8] sm:$0x1]
        %v586 = vld [vmem:[%s226 + $0x9d0] sm:$0x1]
        %v587 = vld [vmem:[%s226 + $0x9d8] sm:$0xff]
        %v588 = vld [vmem:[%s226 + $0x9e0] sm:$0xff]
        %v589 = vld [vmem:[%s226 + $0x9e8] sm:$0xff]
        %v590 = vld [vmem:[%s226 + $0x9f0] sm:$0xff]
        %v591 = vld [vmem:[%s226 + $0x9f8] sm:$0xff]
        %v592 = vld [vmem:[%s226 + $0xa00] sm:$0xff]
        %v593 = vld [vmem:[%s226 + $0xa08] sm:$0xff]
        %v594 = vld [vmem:[%s226 + $0xa10] sm:$0xff]
        %v595 = vld [vmem:[%s226 + $0xa18] sm:$0xff]
        %v596 = vld [vmem:[%s226 + $0xa20] sm:$0xff]
        %v597 = vld [vmem:[%s226 + $0xa28] sm:$0xff]
        %v598 = vld [vmem:[%s226 + $0xa30] sm:$0xff]
        %v599 = vld [vmem:[%s226 + $0xa38] sm:$0xff]
        %v600 = vld [vmem:[%s226 + $0xa40] sm:$0xff]
        %v601 = vld [vmem:[%s226 + $0xa48] sm:$0xff]
        %v602 = vld [vmem:[%s226 + $0xa50] sm:$0xff]
        %v603 = vld [vmem:[%s226 + $0xa58] sm:$0xff]
        %v604 = vld [vmem:[%s226 + $0xa60] sm:$0xff]
        %v605 = vld [vmem:[%s226 + $0xa68] sm:$0xff]
        %v606 = vld [vmem:[%s226 + $0xa70] sm:$0xff]
        %v607 = vld [vmem:[%s226 + $0xa78] sm:$0xff]
        %v608 = vld [vmem:[%s226 + $0xa80] sm:$0xff]
        %v609 = vld [vmem:[%s226 + $0xa88] sm:$0xff]
        %v610 = vld [vmem:[%s226 + $0xa90] sm:$0xff]
        %v611 = vld [vmem:[%s226 + $0xa98] sm:$0xff]
        %v612 = vld [vmem:[%s226 + $0xaa0] sm:$0xff]
        %v613 = vld [vmem:[%s226 + $0xaa8] sm:$0xff]
        %v614 = vld [vmem:[%s226 + $0xab0] sm:$0xff]
        %v615 = vld [vmem:[%s226 + $0xab8] sm:$0xff]
        %v616 = vld [vmem:[%s226 + $0xac0] sm:$0xff]
        %v617 = vld [vmem:[%s226 + $0xac8] sm:$0xff]
        %v618 = vld [vmem:[%s226 + $0xad0] sm:$0xff]
        %v619 = vld [vmem:[%s226 + $0xad8] sm:$0xff]
        %v620 = vld [vmem:[%s226 + $0xae0] sm:$0xff]
        %v621 = vld [vmem:[%s226 + $0xae8] sm:$0xff]
        %v622 = vld [vmem:[%s226 + $0xaf0] sm:$0xff]
        %v623 = vld [vmem:[%s226 + $0xaf8] sm:$0xff]
        %v624 = vld [vmem:[%s226 + $0xb00] sm:$0xff]
        %v625 = vld [vmem:[%s226 + $0xb08] sm:$0xff]
        %v626 = vld [vmem:[%s226 + $0xb10] sm:$0xff]
        %v627 = vld [vmem:[%s226 + $0xb18] sm:$0xff]
        %v628 = vld [vmem:[%s226 + $0xb20] sm:$0xff]
        %v629 = vld [vmem:[%s226 + $0xb28] sm:$0xff]
        %v630 = vld [vmem:[%s226 + $0xb30] sm:$0xff]
        %v631 = vld [vmem:[%s226 + $0xb38] sm:$0xff]
        %v632 = vld [vmem:[%s226 + $0xb40] sm:$0xff]
        %v633 = vld [vmem:[%s226 + $0xb48] sm:$0xff]
        %v634 = vld [vmem:[%s226 + $0xb50] sm:$0xff]
        %v635 = vld [vmem:[%s226 + $0xb58] sm:$0xff]
        %v636 = vld [vmem:[%s226 + $0xb60] sm:$0xff]
        %v637 = vld [vmem:[%s226 + $0xb68] sm:$0xff]
        %v638 = vld [vmem:[%s226 + $0xb70] sm:$0xff]
        %v639 = vld [vmem:[%s226 + $0xb78] sm:$0xff]
        %v640 = vld [vmem:[%s226 + $0xb80] sm:$0xff]
        %v641 = vld [vmem:[%s226 + $0xb88] sm:$0xff]
        %v642 = vld [vmem:[%s226 + $0xb90] sm:$0xff]
        %v643 = vld [vmem:[%s226 + $0xb98] sm:$0xff]
        %v644 = vld [vmem:[%s226 + $0xba0] sm:$0xff]
        %v645 = vld [vmem:[%s226 + $0xba8] sm:$0xff]
        %v646 = vld [vmem:[%s226 + $0xbb0] sm:$0xff]
        %v647 = vld [vmem:[%s226 + $0xbb8] sm:$0xff]
        %v648 = vld [vmem:[%s226 + $0xbc0] sm:$0xff]
        %v649 = vld [vmem:[%s226 + $0xbc8] sm:$0xff]
        %v650 = vld [vmem:[%s226 + $0xbd0] sm:$0xff]
        %v651 = vld [vmem:[%s226 + $0xbd8] sm:$0xff]
        %v652 = vld [vmem:[%s226 + $0xbe0] sm:$0xff]
        %v653 = vld [vmem:[%s226 + $0xbe8] sm:$0xff]
        %v654 = vld [vmem:[%s226 + $0xbf0] sm:$0xff]
        %v655 = vld [vmem:[%s226 + $0xbf8] sm:$0xff]
        %v656 = vld [vmem:[%s226 + $0xc00] sm:$0xff]
        %v657 = vld [vmem:[%s226 + $0xc08] sm:$0xff]
        %v658 = vld [vmem:[%s226 + $0xc10] sm:$0xff]
        %v659 = vld [vmem:[%s226 + $0xc18] sm:$0xff]
        %v660 = vld [vmem:[%s226 + $0xc20] sm:$0xff]
        %v661 = vld [vmem:[%s226 + $0xc28] sm:$0xff]
        %v662 = vld [vmem:[%s226 + $0xc30] sm:$0xff]
        %v663 = vld [vmem:[%s226 + $0xc38] sm:$0xff]
        %v664 = vld [vmem:[%s226 + $0xc40] sm:$0xff]
        %v665 = vld [vmem:[%s226 + $0xc48] sm:$0xff]
        %v666 = vld [vmem:[%s226 + $0xc50] sm:$0xff]
        %v667 = vld [vmem:[%s226 + $0xc58] sm:$0xff]
        %v668 = vld [vmem:[%s226 + $0xc60] sm:$0xff]
        %v669 = vld [vmem:[%s226 + $0xc68] sm:$0xff]
        %v670 = vld [vmem:[%s226 + $0xc70] sm:$0xff]
        %v671 = vld [vmem:[%s226 + $0xc78] sm:$0xff]
        %v672 = vld [vmem:[%s226 + $0xc80] sm:$0xff]
        %v673 = vld [vmem:[%s226 + $0xc88] sm:$0xff]
        %v674 = vld [vmem:[%s226 + $0xc90] sm:$0xff]
        %v675 = vld [vmem:[%s226 + $0xc98] sm:$0xff]
        %v676 = vld [vmem:[%s226 + $0xca0] sm:$0xff]
        %v677 = vld [vmem:[%s226 + $0xca8] sm:$0x1]
        %v678 = vld [vmem:[%s226 + $0xcb0] sm:$0x1]
        %v679 = vld [vmem:[%s226 + $0xcb8] sm:$0x1]
        %v680 = vld [vmem:[%s226 + $0xcc0] sm:$0x1]
        %v681 = vld [vmem:[%s226 + $0xcc8] sm:$0x1]
        %v682 = vld [vmem:[%s226 + $0xcd0] sm:$0x1]
        %v683 = vld [vmem:[%s226 + $0xcd8] sm:$0x1]
        %v684 = vld [vmem:[%s226 + $0xce0] sm:$0x1]
        %v685 = vld [vmem:[%s226 + $0xce8] sm:$0x1]
        %v686 = vld [vmem:[%s226 + $0xcf0] sm:$0x1]
        %v687 = vld [vmem:[%s226 + $0xcf8] sm:$0x1]
        %v688 = vld [vmem:[%s226 + $0xd00] sm:$0x1]
        %v689 = vld [vmem:[%s226 + $0xd08] sm:$0x1]
        %v690 = vld [vmem:[%s226 + $0xd10] sm:$0x1]
        %v691 = vld [vmem:[%s226 + $0xd18] sm:$0x1]
        %v692 = vld [vmem:[%s226 + $0xd20] sm:$0xff]
        %v693 = vld [vmem:[%s226 + $0xd28] sm:$0xff]
        %v694 = vld [vmem:[%s226 + $0xd30] sm:$0xff]
        %v695 = vld [vmem:[%s226 + $0xd38] sm:$0xff]
        %v696 = vld [vmem:[%s226 + $0xd40] sm:$0xff]
        %v697 = vld [vmem:[%s226 + $0xd48] sm:$0xff]
        %v698 = vld [vmem:[%s226 + $0xd50] sm:$0xff]
        %v699 = vld [vmem:[%s226 + $0xd58] sm:$0xff]
        %v700 = vld [vmem:[%s226 + $0xd60] sm:$0xff]
        %v701 = vld [vmem:[%s226 + $0xd68] sm:$0xff]
        %v702 = vld [vmem:[%s226 + $0xd70] sm:$0xff]
        %v703 = vld [vmem:[%s226 + $0xd78] sm:$0xff]
        %v704 = vld [vmem:[%s226 + $0xd80] sm:$0xff]
        %v705 = vld [vmem:[%s226 + $0xd88] sm:$0xff]
        %v706 = vld [vmem:[%s226 + $0xd90] sm:$0xff]
        %v707 = vld [vmem:[%s226 + $0xd98] sm:$0xff]
        %v708 = vld [vmem:[%s226 + $0xda0] sm:$0xff]
        %v709 = vld [vmem:[%s226 + $0xda8] sm:$0xff]
        %v710 = vld [vmem:[%s226 + $0xdb0] sm:$0xff]
        %v711 = vld [vmem:[%s226 + $0xdb8] sm:$0xff]
        %v712 = vld [vmem:[%s226 + $0xdc0] sm:$0xff]
        %v713 = vld [vmem:[%s226 + $0xdc8] sm:$0xff]
        %v714 = vld [vmem:[%s226 + $0xdd0] sm:$0xff]
        %v715 = vld [vmem:[%s226 + $0xdd8] sm:$0xff]
        %v716 = vld [vmem:[%s226 + $0xde0] sm:$0xff]
        %v717 = vld [vmem:[%s226 + $0xde8] sm:$0xff]
        %v718 = vld [vmem:[%s226 + $0xdf0] sm:$0xff]
        %v719 = vld [vmem:[%s226 + $0xdf8] sm:$0xff]
        %v720 = vld [vmem:[%s226 + $0xe00] sm:$0xff]
        %v721 = vld [vmem:[%s226 + $0xe08] sm:$0xff]
        %v722 = vld [vmem:[%s226 + $0xe10] sm:$0xff]
        %v723 = vld [vmem:[%s226 + $0xe18] sm:$0xff]
        %v724 = vld [vmem:[%s226 + $0xe20] sm:$0xff]
        %v725 = vld [vmem:[%s226 + $0xe28] sm:$0xff]
        %v726 = vld [vmem:[%s226 + $0xe30] sm:$0xff]
        %v727 = vld [vmem:[%s226 + $0xe38] sm:$0xff]
        %v728 = vld [vmem:[%s226 + $0xe40] sm:$0xff]
        %v729 = vld [vmem:[%s226 + $0xe48] sm:$0xff]
        %v730 = vld [vmem:[%s226 + $0xe50] sm:$0xff]
        %v731 = vld [vmem:[%s226 + $0xe58] sm:$0xff]
        %v732 = vld [vmem:[%s226 + $0xe60] sm:$0xff]
        %v733 = vld [vmem:[%s226 + $0xe68] sm:$0xff]
        %v734 = vld [vmem:[%s226 + $0xe70] sm:$0xff]
        %v735 = vld [vmem:[%s226 + $0xe78] sm:$0xff]
        %v736 = vld [vmem:[%s226 + $0xe80] sm:$0xff]
        %v737 = vld [vmem:[%s226 + $0xe88] sm:$0xff]
        %v738 = vld [vmem:[%s226 + $0xe90] sm:$0xff]
        %v739 = vld [vmem:[%s226 + $0xe98] sm:$0xff]
        %v740 = vld [vmem:[%s226 + $0xea0] sm:$0xff]
        %v741 = vld [vmem:[%s226 + $0xea8] sm:$0xff]
        %v742 = vld [vmem:[%s226 + $0xeb0] sm:$0xff]
        %v743 = vld [vmem:[%s226 + $0xeb8] sm:$0xff]
        %v744 = vld [vmem:[%s226 + $0xec0] sm:$0xff]
        %v745 = vld [vmem:[%s226 + $0xec8] sm:$0xff]
        %v746 = vld [vmem:[%s226 + $0xed0] sm:$0xff]
        %v747 = vld [vmem:[%s226 + $0xed8] sm:$0xff]
        %v748 = vld [vmem:[%s226 + $0xee0] sm:$0xff]
        %v749 = vld [vmem:[%s226 + $0xee8] sm:$0xff]
        %v750 = vld [vmem:[%s226 + $0xef0] sm:$0xff]
        %v751 = vld [vmem:[%s226 + $0xef8] sm:$0xff]
        %v752 = vld [vmem:[%s226 + $0xf00] sm:$0xff]
        %v753 = vld [vmem:[%s226 + $0xf08] sm:$0xff]
        %v754 = vld [vmem:[%s226 + $0xf10] sm:$0xff]
        %v755 = vld [vmem:[%s226 + $0xf18] sm:$0xff]
        %v756 = vld [vmem:[%s226 + $0xf20] sm:$0xff]
        %v757 = vld [vmem:[%s226 + $0xf28] sm:$0xff]
        %v758 = vld [vmem:[%s226 + $0xf30] sm:$0xff]
        %v759 = vld [vmem:[%s226 + $0xf38] sm:$0xff]
        %v760 = vld [vmem:[%s226 + $0xf40] sm:$0xff]
        %v761 = vld [vmem:[%s226 + $0xf48] sm:$0xff]
        %v762 = vld [vmem:[%s226 + $0xf50] sm:$0xff]
        %v763 = vld [vmem:[%s226 + $0xf58] sm:$0xff]
        %v764 = vld [vmem:[%s226 + $0xf60] sm:$0xff]
        %v765 = vld [vmem:[%s226 + $0xf68] sm:$0xff]
        %v766 = vld [vmem:[%s226 + $0xf70] sm:$0xff]
        %v767 = vld [vmem:[%s226 + $0xf78] sm:$0xff]
        %v768 = vld [vmem:[%s226 + $0xf80] sm:$0xff]
        %v769 = vld [vmem:[%s226 + $0xf88] sm:$0xff]
        %v770 = vld [vmem:[%s226 + $0xf90] sm:$0xff]
        %v771 = vld [vmem:[%s226 + $0xf98] sm:$0xff]
        %v772 = vld [vmem:[%s226 + $0xfa0] sm:$0xff]
        %v773 = vld [vmem:[%s226 + $0xfa8] sm:$0xff]
        %v774 = vld [vmem:[%s226 + $0xfb0] sm:$0xff]
        %v775 = vld [vmem:[%s226 + $0xfb8] sm:$0xff]
        %v776 = vld [vmem:[%s226 + $0xfc0] sm:$0xff]
        %v777 = vld [vmem:[%s226 + $0xfc8] sm:$0xff]
        %v778 = vld [vmem:[%s226 + $0xfd0] sm:$0xff]
        %v779 = vld [vmem:[%s226 + $0xfd8] sm:$0xff]
        %v780 = vld [vmem:[%s226 + $0xfe0] sm:$0xff]
        %v781 = vld [vmem:[%s226 + $0xfe8] sm:$0xff]
        %v782 = vld [vmem:[%s226 + $0xff0] sm:$0x1]
        %v783 = vld [vmem:[%s226 + $0xff8] sm:$0x1]
        %v784 = vld [vmem:[%s226 + $0x1000] sm:$0x1]
        %v785 = vld [vmem:[%s226 + $0x1008] sm:$0x1]
        %v786 = vld [vmem:[%s226 + $0x1010] sm:$0x1]
        %v787 = vld [vmem:[%s226 + $0x1018] sm:$0x1]
        %v788 = vld [vmem:[%s226 + $0x1020] sm:$0x1]
        %v789 = vld [vmem:[%s226 + $0x1028] sm:$0x1]
        %v790 = vld [vmem:[%s226 + $0x1030] sm:$0x1]
        %v791 = vld [vmem:[%s226 + $0x1038] sm:$0x1]
        %v792 = vld [vmem:[%s226 + $0x1040] sm:$0x1]
        %v793 = vld [vmem:[%s226 + $0x1048] sm:$0x1]
        %v794 = vld [vmem:[%s226 + $0x1050] sm:$0x1]
        %v795 = vld [vmem:[%s226 + $0x1058] sm:$0x1]
        %v796 = vld [vmem:[%s226 + $0x1060] sm:$0x1]
        %v797 = vld [vmem:[%s226 + $0x1068] sm:$0xff]
        %v798 = vld [vmem:[%s226 + $0x1070] sm:$0xff]
        %v799 = vld [vmem:[%s226 + $0x1078] sm:$0xff]
        %v800 = vld [vmem:[%s226 + $0x1080] sm:$0xff]
        %v801 = vld [vmem:[%s226 + $0x1088] sm:$0xff]
        %v802 = vld [vmem:[%s226 + $0x1090] sm:$0xff]
        %v803 = vld [vmem:[%s226 + $0x1098] sm:$0xff]
        %v804 = vld [vmem:[%s226 + $0x10a0] sm:$0xff]
        %v805 = vld [vmem:[%s226 + $0x10a8] sm:$0xff]
        %v806 = vld [vmem:[%s226 + $0x10b0] sm:$0xff]
        %v807 = vld [vmem:[%s226 + $0x10b8] sm:$0xff]
        %v808 = vld [vmem:[%s226 + $0x10c0] sm:$0xff]
        %v809 = vld [vmem:[%s226 + $0x10c8] sm:$0xff]
        %v810 = vld [vmem:[%s226 + $0x10d0] sm:$0xff]
        %v811 = vld [vmem:[%s226 + $0x10d8] sm:$0xff]
        %v812 = vld [vmem:[%s226 + $0x10e0] sm:$0xff]
        %v813 = vld [vmem:[%s226 + $0x10e8] sm:$0xff]
        %v814 = vld [vmem:[%s226 + $0x10f0] sm:$0xff]
        %v815 = vld [vmem:[%s226 + $0x10f8] sm:$0xff]
        %v816 = vld [vmem:[%s226 + $0x1100] sm:$0xff]
        %v817 = vld [vmem:[%s226 + $0x1108] sm:$0xff]
        %v818 = vld [vmem:[%s226 + $0x1110] sm:$0xff]
        %v819 = vld [vmem:[%s226 + $0x1118] sm:$0xff]
        %v820 = vld [vmem:[%s226 + $0x1120] sm:$0xff]
        %v821 = vld [vmem:[%s226 + $0x1128] sm:$0xff]
        %v822 = vld [vmem:[%s226 + $0x1130] sm:$0xff]
        %v823 = vld [vmem:[%s226 + $0x1138] sm:$0xff]
        %v824 = vld [vmem:[%s226 + $0x1140] sm:$0xff]
        %v825 = vld [vmem:[%s226 + $0x1148] sm:$0xff]
        %v826 = vld [vmem:[%s226 + $0x1150] sm:$0xff]
        %v827 = vld [vmem:[%s226 + $0x1158] sm:$0xff]
        %v828 = vld [vmem:[%s226 + $0x1160] sm:$0xff]
        %v829 = vld [vmem:[%s226 + $0x1168] sm:$0xff]
        %v830 = vld [vmem:[%s226 + $0x1170] sm:$0xff]
        %v831 = vld [vmem:[%s226 + $0x1178] sm:$0xff]
        %v832 = vld [vmem:[%s226 + $0x1180] sm:$0xff]
        %v833 = vld [vmem:[%s226 + $0x1188] sm:$0xff]
        %v834 = vld [vmem:[%s226 + $0x1190] sm:$0xff]
        %v835 = vld [vmem:[%s226 + $0x1198] sm:$0xff]
        %v836 = vld [vmem:[%s226 + $0x11a0] sm:$0xff]
        %v837 = vld [vmem:[%s226 + $0x11a8] sm:$0xff]
        %v838 = vld [vmem:[%s226 + $0x11b0] sm:$0xff]
        %v839 = vld [vmem:[%s226 + $0x11b8] sm:$0xff]
        %v840 = vld [vmem:[%s226 + $0x11c0] sm:$0xff]
        %v841 = vld [vmem:[%s226 + $0x11c8] sm:$0xff]
        %v842 = vld [vmem:[%s226 + $0x11d0] sm:$0xff]
        %v843 = vld [vmem:[%s226 + $0x11d8] sm:$0xff]
        %v844 = vld [vmem:[%s226 + $0x11e0] sm:$0xff]
        %v845 = vld [vmem:[%s226 + $0x11e8] sm:$0xff]
        %v846 = vld [vmem:[%s226 + $0x11f0] sm:$0xff]
        %v847 = vld [vmem:[%s226 + $0x11f8] sm:$0xff]
        %v848 = vld [vmem:[%s226 + $0x1200] sm:$0xff]
        %v849 = vld [vmem:[%s226 + $0x1208] sm:$0xff]
        %v850 = vld [vmem:[%s226 + $0x1210] sm:$0xff]
        %v851 = vld [vmem:[%s226 + $0x1218] sm:$0xff]
        %v852 = vld [vmem:[%s226 + $0x1220] sm:$0xff]
        %v853 = vld [vmem:[%s226 + $0x1228] sm:$0xff]
        %v854 = vld [vmem:[%s226 + $0x1230] sm:$0xff]
        %v855 = vld [vmem:[%s226 + $0x1238] sm:$0xff]
        %v856 = vld [vmem:[%s226 + $0x1240] sm:$0xff]
        %v857 = vld [vmem:[%s226 + $0x1248] sm:$0xff]
        %v858 = vld [vmem:[%s226 + $0x1250] sm:$0xff]
        %v859 = vld [vmem:[%s226 + $0x1258] sm:$0xff]
        %v860 = vld [vmem:[%s226 + $0x1260] sm:$0xff]
        %v861 = vld [vmem:[%s226 + $0x1268] sm:$0xff]
        %v862 = vld [vmem:[%s226 + $0x1270] sm:$0xff]
        %v863 = vld [vmem:[%s226 + $0x1278] sm:$0xff]
        %v864 = vld [vmem:[%s226 + $0x1280] sm:$0xff]
        %v865 = vld [vmem:[%s226 + $0x1288] sm:$0xff]
        %v866 = vld [vmem:[%s226 + $0x1290] sm:$0xff]
        %v867 = vld [vmem:[%s226 + $0x1298] sm:$0xff]
        %v868 = vld [vmem:[%s226 + $0x12a0] sm:$0xff]
        %v869 = vld [vmem:[%s226 + $0x12a8] sm:$0xff]
        %v870 = vld [vmem:[%s226 + $0x12b0] sm:$0xff]
        %v871 = vld [vmem:[%s226 + $0x12b8] sm:$0xff]
        %v872 = vld [vmem:[%s226 + $0x12c0] sm:$0xff]
        %v873 = vld [vmem:[%s226 + $0x12c8] sm:$0xff]
        %v874 = vld [vmem:[%s226 + $0x12d0] sm:$0xff]
        %v875 = vld [vmem:[%s226 + $0x12d8] sm:$0xff]
        %v876 = vld [vmem:[%s226 + $0x12e0] sm:$0xff]
        %v877 = vld [vmem:[%s226 + $0x12e8] sm:$0xff]
        %v878 = vld [vmem:[%s226 + $0x12f0] sm:$0xff]
        %v879 = vld [vmem:[%s226 + $0x12f8] sm:$0xff]
        %v880 = vld [vmem:[%s226 + $0x1300] sm:$0xff]
        %v881 = vld [vmem:[%s226 + $0x1308] sm:$0xff]
        %v882 = vld [vmem:[%s226 + $0x1310] sm:$0xff]
        %v883 = vld [vmem:[%s226 + $0x1318] sm:$0xff]
        %v884 = vld [vmem:[%s226 + $0x1320] sm:$0xff]
        %v885 = vld [vmem:[%s226 + $0x1328] sm:$0xff]
        %v886 = vld [vmem:[%s226 + $0x1330] sm:$0xff]
        %v887 = vld [vmem:[%s226 + $0x1338] sm:$0x1]
        %v888 = vld [vmem:[%s226 + $0x1340] sm:$0x1]
        %v889 = vld [vmem:[%s226 + $0x1348] sm:$0x1]
        %v890 = vld [vmem:[%s226 + $0x1350] sm:$0x1]
        %v891 = vld [vmem:[%s226 + $0x1358] sm:$0x1]
        %v892 = vld [vmem:[%s226 + $0x1360] sm:$0x1]
        %v893 = vld [vmem:[%s226 + $0x1368] sm:$0x1]
        %v894 = vld [vmem:[%s226 + $0x1370] sm:$0x1]
        %v895 = vld [vmem:[%s226 + $0x1378] sm:$0x1]
        %v896 = vld [vmem:[%s226 + $0x1380] sm:$0x1]
        %v897 = vld [vmem:[%s226 + $0x1388] sm:$0x1]
        %v898 = vld [vmem:[%s226 + $0x1390] sm:$0x1]
        %v899 = vld [vmem:[%s226 + $0x1398] sm:$0x1]
        %v900 = vld [vmem:[%s226 + $0x13a0] sm:$0x1]
        %v901 = vld [vmem:[%s226 + $0x13a8] sm:$0x1]
        %v902 = vld [vmem:[%s226 + $0x13b0] sm:$0xff]
        %v903 = vld [vmem:[%s226 + $0x13b8] sm:$0xff]
        %v904 = vld [vmem:[%s226 + $0x13c0] sm:$0xff]
        %v905 = vld [vmem:[%s226 + $0x13c8] sm:$0xff]
        %v906 = vld [vmem:[%s226 + $0x13d0] sm:$0xff]
        %v907 = vld [vmem:[%s226 + $0x13d8] sm:$0xff]
        %v908 = vld [vmem:[%s226 + $0x13e0] sm:$0xff]
        %v909 = vld [vmem:[%s226 + $0x13e8] sm:$0xff]
        %v910 = vld [vmem:[%s226 + $0x13f0] sm:$0xff]
        %v911 = vld [vmem:[%s226 + $0x13f8] sm:$0xff]
        %v912 = vld [vmem:[%s226 + $0x1400] sm:$0xff]
        %v913 = vld [vmem:[%s226 + $0x1408] sm:$0xff]
        %v914 = vld [vmem:[%s226 + $0x1410] sm:$0xff]
        %v915 = vld [vmem:[%s226 + $0x1418] sm:$0xff]
        %v916 = vld [vmem:[%s226 + $0x1420] sm:$0xff]
        %v917 = vld [vmem:[%s226 + $0x1428] sm:$0xff]
        %v918 = vld [vmem:[%s226 + $0x1430] sm:$0xff]
        %v919 = vld [vmem:[%s226 + $0x1438] sm:$0xff]
        %v920 = vld [vmem:[%s226 + $0x1440] sm:$0xff]
        %v921 = vld [vmem:[%s226 + $0x1448] sm:$0xff]
        %v922 = vld [vmem:[%s226 + $0x1450] sm:$0xff]
        %v923 = vld [vmem:[%s226 + $0x1458] sm:$0xff]
        %v924 = vld [vmem:[%s226 + $0x1460] sm:$0xff]
        %v925 = vld [vmem:[%s226 + $0x1468] sm:$0xff]
        %v926 = vld [vmem:[%s226 + $0x1470] sm:$0xff]
        %v927 = vld [vmem:[%s226 + $0x1478] sm:$0xff]
        %v928 = vld [vmem:[%s226 + $0x1480] sm:$0xff]
        %v929 = vld [vmem:[%s226 + $0x1488] sm:$0xff]
        %v930 = vld [vmem:[%s226 + $0x1490] sm:$0xff]
        %v931 = vld [vmem:[%s226 + $0x1498] sm:$0xff]
        %v932 = vld [vmem:[%s226 + $0x14a0] sm:$0xff]
        %v933 = vld [vmem:[%s226 + $0x14a8] sm:$0xff]
        %v934 = vld [vmem:[%s226 + $0x14b0] sm:$0xff]
        %v935 = vld [vmem:[%s226 + $0x14b8] sm:$0xff]
        %v936 = vld [vmem:[%s226 + $0x14c0] sm:$0xff]
        %v937 = vld [vmem:[%s226 + $0x14c8] sm:$0xff]
        %v938 = vld [vmem:[%s226 + $0x14d0] sm:$0xff]
        %v939 = vld [vmem:[%s226 + $0x14d8] sm:$0xff]
        %v940 = vld [vmem:[%s226 + $0x14e0] sm:$0xff]
        %v941 = vld [vmem:[%s226 + $0x14e8] sm:$0xff]
        %v942 = vld [vmem:[%s226 + $0x14f0] sm:$0xff]
        %v943 = vld [vmem:[%s226 + $0x14f8] sm:$0xff]
        %v944 = vld [vmem:[%s226 + $0x1500] sm:$0xff]
        %v945 = vld [vmem:[%s226 + $0x1508] sm:$0xff]
        %v946 = vld [vmem:[%s226 + $0x1510] sm:$0xff]
        %v947 = vld [vmem:[%s226 + $0x1518] sm:$0xff]
        %v948 = vld [vmem:[%s226 + $0x1520] sm:$0xff]
        %v949 = vld [vmem:[%s226 + $0x1528] sm:$0xff]
        %v950 = vld [vmem:[%s226 + $0x1530] sm:$0xff]
        %v951 = vld [vmem:[%s226 + $0x1538] sm:$0xff]
        %v952 = vld [vmem:[%s226 + $0x1540] sm:$0xff]
        %v953 = vld [vmem:[%s226 + $0x1548] sm:$0xff]
        %v954 = vld [vmem:[%s226 + $0x1550] sm:$0xff]
        %v955 = vld [vmem:[%s226 + $0x1558] sm:$0xff]
        %v956 = vld [vmem:[%s226 + $0x1560] sm:$0xff]
        %v957 = vld [vmem:[%s226 + $0x1568] sm:$0xff]
        %v958 = vld [vmem:[%s226 + $0x1570] sm:$0xff]
        %v959 = vld [vmem:[%s226 + $0x1578] sm:$0xff]
        %v960 = vld [vmem:[%s226 + $0x1580] sm:$0xff]
        %v961 = vld [vmem:[%s226 + $0x1588] sm:$0xff]
        %v962 = vld [vmem:[%s226 + $0x1590] sm:$0xff]
        %v963 = vld [vmem:[%s226 + $0x1598] sm:$0xff]
        %v964 = vld [vmem:[%s226 + $0x15a0] sm:$0xff]
        %v965 = vld [vmem:[%s226 + $0x15a8] sm:$0xff]
        %v966 = vld [vmem:[%s226 + $0x15b0] sm:$0xff]
        %v967 = vld [vmem:[%s226 + $0x15b8] sm:$0xff]
        %v968 = vld [vmem:[%s226 + $0x15c0] sm:$0xff]
        %v969 = vld [vmem:[%s226 + $0x15c8] sm:$0xff]
        %v970 = vld [vmem:[%s226 + $0x15d0] sm:$0xff]
        %v971 = vld [vmem:[%s226 + $0x15d8] sm:$0xff]
        %v972 = vld [vmem:[%s226 + $0x15e0] sm:$0xff]
        %v973 = vld [vmem:[%s226 + $0x15e8] sm:$0xff]
        %v974 = vld [vmem:[%s226 + $0x15f0] sm:$0xff]
        %v975 = vld [vmem:[%s226 + $0x15f8] sm:$0xff]
        %v976 = vld [vmem:[%s226 + $0x1600] sm:$0xff]
        %v977 = vld [vmem:[%s226 + $0x1608] sm:$0xff]
        %v978 = vld [vmem:[%s226 + $0x1610] sm:$0xff]
        %v979 = vld [vmem:[%s226 + $0x1618] sm:$0xff]
        %v980 = vld [vmem:[%s226 + $0x1620] sm:$0xff]
        %v981 = vld [vmem:[%s226 + $0x1628] sm:$0xff]
        %v982 = vld [vmem:[%s226 + $0x1630] sm:$0xff]
        %v983 = vld [vmem:[%s226 + $0x1638] sm:$0xff]
        %v984 = vld [vmem:[%s226 + $0x1640] sm:$0xff]
        %v985 = vld [vmem:[%s226 + $0x1648] sm:$0xff]
        %v986 = vld [vmem:[%s226 + $0x1650] sm:$0xff]
        %v987 = vld [vmem:[%s226 + $0x1658] sm:$0xff]
        %v988 = vld [vmem:[%s226 + $0x1660] sm:$0xff]
        %v989 = vld [vmem:[%s226 + $0x1668] sm:$0xff]
        %v990 = vld [vmem:[%s226 + $0x1670] sm:$0xff]
        %v991 = vld [vmem:[%s226 + $0x1678] sm:$0xff]
        %v992 = vld [vmem:[%s226 + $0x1680] sm:$0x1]
        %v993 = vld [vmem:[%s226 + $0x1688] sm:$0x1]
        %v994 = vld [vmem:[%s226 + $0x1690] sm:$0x1]
        %v995 = vld [vmem:[%s226 + $0x1698] sm:$0x1]
        %v996 = vld [vmem:[%s226 + $0x16a0] sm:$0x1]
        %v997 = vld [vmem:[%s226 + $0x16a8] sm:$0x1]
        %v998 = vld [vmem:[%s226 + $0x16b0] sm:$0x1]
        %v999 = vld [vmem:[%s226 + $0x16b8] sm:$0x1]
        %v1000 = vld [vmem:[%s226 + $0x16c0] sm:$0x1]
        %v1001 = vld [vmem:[%s226 + $0x16c8] sm:$0x1]
        %v1002 = vld [vmem:[%s226 + $0x16d0] sm:$0x1]
        %v1003 = vld [vmem:[%s226 + $0x16d8] sm:$0x1]
        %v1004 = vld [vmem:[%s226 + $0x16e0] sm:$0x1]
        %v1005 = vld [vmem:[%s226 + $0x16e8] sm:$0x1]
        %v1006 = vld [vmem:[%s226 + $0x16f0] sm:$0x1]
        %v1007 = vld [vmem:[%s226 + $0x16f8] sm:$0xff]
        %v1008 = vld [vmem:[%s226 + $0x1700] sm:$0xff]
        %v1009 = vld [vmem:[%s226 + $0x1708] sm:$0xff]
        %v1010 = vld [vmem:[%s226 + $0x1710] sm:$0xff]
        %v1011 = vld [vmem:[%s226 + $0x1718] sm:$0xff]
        %v1012 = vld [vmem:[%s226 + $0x1720] sm:$0xff]
        %v1013 = vld [vmem:[%s226 + $0x1728] sm:$0xff]
        %v1014 = vld [vmem:[%s226 + $0x1730] sm:$0xff]
        %v1015 = vld [vmem:[%s226 + $0x1738] sm:$0xff]
        %v1016 = vld [vmem:[%s226 + $0x1740] sm:$0xff]
        %v1017 = vld [vmem:[%s226 + $0x1748] sm:$0xff]
        %v1018 = vld [vmem:[%s226 + $0x1750] sm:$0xff]
        %v1019 = vld [vmem:[%s226 + $0x1758] sm:$0xff]
        %v1020 = vld [vmem:[%s226 + $0x1760] sm:$0xff]
        %v1021 = vld [vmem:[%s226 + $0x1768] sm:$0xff]
        %v1022 = vld [vmem:[%s226 + $0x1770] sm:$0xff]
        %v1023 = vld [vmem:[%s226 + $0x1778] sm:$0xff]
        %v1024 = vld [vmem:[%s226 + $0x1780] sm:$0xff]
        %v1025 = vld [vmem:[%s226 + $0x1788] sm:$0xff]
        %v1026 = vld [vmem:[%s226 + $0x1790] sm:$0xff]
        %v1027 = vld [vmem:[%s226 + $0x1798] sm:$0xff]
        %v1028 = vld [vmem:[%s226 + $0x17a0] sm:$0xff]
        %v1029 = vld [vmem:[%s226 + $0x17a8] sm:$0xff]
        %v1030 = vld [vmem:[%s226 + $0x17b0] sm:$0xff]
        %v1031 = vld [vmem:[%s226 + $0x17b8] sm:$0xff]
        %v1032 = vld [vmem:[%s226 + $0x17c0] sm:$0xff]
        %v1033 = vld [vmem:[%s226 + $0x17c8] sm:$0xff]
        %v1034 = vld [vmem:[%s226 + $0x17d0] sm:$0xff]
        %v1035 = vld [vmem:[%s226 + $0x17d8] sm:$0xff]
        %v1036 = vld [vmem:[%s226 + $0x17e0] sm:$0xff]
        %v1037 = vld [vmem:[%s226 + $0x17e8] sm:$0xff]
        %v1038 = vld [vmem:[%s226 + $0x17f0] sm:$0xff]
        %v1039 = vld [vmem:[%s226 + $0x17f8] sm:$0xff]
        %v1040 = vld [vmem:[%s226 + $0x1800] sm:$0xff]
        %v1041 = vld [vmem:[%s226 + $0x1808] sm:$0xff]
        %v1042 = vld [vmem:[%s226 + $0x1810] sm:$0xff]
        %v1043 = vld [vmem:[%s226 + $0x1818] sm:$0xff]
        %v1044 = vld [vmem:[%s226 + $0x1820] sm:$0xff]
        %v1045 = vld [vmem:[%s226 + $0x1828] sm:$0xff]
        %v1046 = vld [vmem:[%s226 + $0x1830] sm:$0xff]
        %v1047 = vld [vmem:[%s226 + $0x1838] sm:$0xff]
        %v1048 = vld [vmem:[%s226 + $0x1840] sm:$0xff]
        %v1049 = vld [vmem:[%s226 + $0x1848] sm:$0xff]
        %v1050 = vld [vmem:[%s226 + $0x1850] sm:$0xff]
        %v1051 = vld [vmem:[%s226 + $0x1858] sm:$0xff]
        %v1052 = vld [vmem:[%s226 + $0x1860] sm:$0xff]
        %v1053 = vld [vmem:[%s226 + $0x1868] sm:$0xff]
        %v1054 = vld [vmem:[%s226 + $0x1870] sm:$0xff]
        %v1055 = vld [vmem:[%s226 + $0x1878] sm:$0xff]
        %v1056 = vld [vmem:[%s226 + $0x1880] sm:$0xff]
        %v1057 = vld [vmem:[%s226 + $0x1888] sm:$0xff]
        %v1058 = vld [vmem:[%s226 + $0x1890] sm:$0xff]
        %v1059 = vld [vmem:[%s226 + $0x1898] sm:$0xff]
        %v1060 = vld [vmem:[%s226 + $0x18a0] sm:$0xff]
        %v1061 = vld [vmem:[%s226 + $0x18a8] sm:$0xff]
        %v1062 = vld [vmem:[%s226 + $0x18b0] sm:$0xff]
        %v1063 = vld [vmem:[%s226 + $0x18b8] sm:$0xff]
        %v1064 = vld [vmem:[%s226 + $0x18c0] sm:$0xff]
        %v1065 = vld [vmem:[%s226 + $0x18c8] sm:$0xff]
        %v1066 = vld [vmem:[%s226 + $0x18d0] sm:$0xff]
        %v1067 = vld [vmem:[%s226 + $0x18d8] sm:$0xff]
        %v1068 = vld [vmem:[%s226 + $0x18e0] sm:$0xff]
        %v1069 = vld [vmem:[%s226 + $0x18e8] sm:$0xff]
        %v1070 = vld [vmem:[%s226 + $0x18f0] sm:$0xff]
        %v1071 = vld [vmem:[%s226 + $0x18f8] sm:$0xff]
        %v1072 = vld [vmem:[%s226 + $0x1900] sm:$0xff]
        %v1073 = vld [vmem:[%s226 + $0x1908] sm:$0xff]
        %v1074 = vld [vmem:[%s226 + $0x1910] sm:$0xff]
        %v1075 = vld [vmem:[%s226 + $0x1918] sm:$0xff]
        %v1076 = vld [vmem:[%s226 + $0x1920] sm:$0xff]
        %v1077 = vld [vmem:[%s226 + $0x1928] sm:$0xff]
        %v1078 = vld [vmem:[%s226 + $0x1930] sm:$0xff]
        %v1079 = vld [vmem:[%s226 + $0x1938] sm:$0xff]
        %v1080 = vld [vmem:[%s226 + $0x1940] sm:$0xff]
        %v1081 = vld [vmem:[%s226 + $0x1948] sm:$0xff]
        %v1082 = vld [vmem:[%s226 + $0x1950] sm:$0xff]
        %v1083 = vld [vmem:[%s226 + $0x1958] sm:$0xff]
        %v1084 = vld [vmem:[%s226 + $0x1960] sm:$0xff]
        %v1085 = vld [vmem:[%s226 + $0x1968] sm:$0xff]
        %v1086 = vld [vmem:[%s226 + $0x1970] sm:$0xff]
        %v1087 = vld [vmem:[%s226 + $0x1978] sm:$0xff]
        %v1088 = vld [vmem:[%s226 + $0x1980] sm:$0xff]
        %v1089 = vld [vmem:[%s226 + $0x1988] sm:$0xff]
        %v1090 = vld [vmem:[%s226 + $0x1990] sm:$0xff]
        %v1091 = vld [vmem:[%s226 + $0x1998] sm:$0xff]
        %v1092 = vld [vmem:[%s226 + $0x19a0] sm:$0xff]
        %v1093 = vld [vmem:[%s226 + $0x19a8] sm:$0xff]
        %v1094 = vld [vmem:[%s226 + $0x19b0] sm:$0xff]
        %v1095 = vld [vmem:[%s226 + $0x19b8] sm:$0xff]
        %v1096 = vld [vmem:[%s226 + $0x19c0] sm:$0xff]
        %v1097 = vld [vmem:[%s226 + $0x19c8] sm:$0x1]
        %v1098 = vld [vmem:[%s226 + $0x19d0] sm:$0x1]
        %v1099 = vld [vmem:[%s226 + $0x19d8] sm:$0x1]
        %v1100 = vld [vmem:[%s226 + $0x19e0] sm:$0x1]
        %v1101 = vld [vmem:[%s226 + $0x19e8] sm:$0x1]
        %v1102 = vld [vmem:[%s226 + $0x19f0] sm:$0x1]
        %v1103 = vld [vmem:[%s226 + $0x19f8] sm:$0x1]
        %v1104 = vld [vmem:[%s226 + $0x1a00] sm:$0x1]
        %v1105 = vld [vmem:[%s226 + $0x1a08] sm:$0x1]
        %v1106 = vld [vmem:[%s226 + $0x1a10] sm:$0x1]
        %v1107 = vld [vmem:[%s226 + $0x1a18] sm:$0x1]
        %v1108 = vld [vmem:[%s226 + $0x1a20] sm:$0x1]
        %v1109 = vld [vmem:[%s226 + $0x1a28] sm:$0x1]
        %v1110 = vld [vmem:[%s226 + $0x1a30] sm:$0x1]
        %v1111 = vld [vmem:[%s226 + $0x1a38] sm:$0x1]
        %v1112 = vadd.f32 %v272, %v287
        %v1113 = vadd.f32 %v1112, %v302
        %v1114 = vadd.f32 %v1113, %v317
        %v1115 = vadd.f32 %v1114, %v332
        %v1116 = vadd.f32 %v1115, %v347
        %vm1117 = vcmask 1040384
        %v1118 = vsel %vm1117, %v362, 0.0
        %v1119 = vadd.f32 %v1116, %v1118
        %v1120 = vrot.slane %v1119, 4
        %v1121 = vadd.f32 %v1119, %v1120
        %v1122 = vrot.slane %v1121, 2
        %v1123 = vadd.f32 %v1121, %v1122
        %v1124 = vrot.slane %v1123, 1
        %v1125 = vadd.f32 %v1123, %v1124
        %v1126 = vadd.f32 %v273, %v288
        %v1127 = vadd.f32 %v1126, %v303
        %v1128 = vadd.f32 %v1127, %v318
        %v1129 = vadd.f32 %v1128, %v333
        %v1130 = vadd.f32 %v1129, %v348
        %v1131 = vsel %vm1117, %v363, 0.0
        %v1132 = vadd.f32 %v1130, %v1131
        %v1133 = vrot.slane %v1132, 4
        %v1134 = vadd.f32 %v1132, %v1133
        %v1135 = vrot.slane %v1134, 2
        %v1136 = vadd.f32 %v1134, %v1135
        %v1137 = vrot.slane %v1136, 1
        %v1138 = vadd.f32 %v1136, %v1137
        %v1139 = vadd.f32 %v274, %v289
        %v1140 = vadd.f32 %v1139, %v304
        %v1141 = vadd.f32 %v1140, %v319
        %v1142 = vadd.f32 %v1141, %v334
        %v1143 = vadd.f32 %v1142, %v349
        %v1144 = vsel %vm1117, %v364, 0.0
        %v1145 = vadd.f32 %v1143, %v1144
        %v1146 = vrot.slane %v1145, 4
        %v1147 = vadd.f32 %v1145, %v1146
        %v1148 = vrot.slane %v1147, 2
        %v1149 = vadd.f32 %v1147, %v1148
        %v1150 = vrot.slane %v1149, 1
        %v1151 = vadd.f32 %v1149, %v1150
        %v1152 = vadd.f32 %v275, %v290
        %v1153 = vadd.f32 %v1152, %v305
        %v1154 = vadd.f32 %v1153, %v320
        %v1155 = vadd.f32 %v1154, %v335
        %v1156 = vadd.f32 %v1155, %v350
        %v1157 = vsel %vm1117, %v365, 0.0
        %v1158 = vadd.f32 %v1156, %v1157
        %v1159 = vrot.slane %v1158, 4
        %v1160 = vadd.f32 %v1158, %v1159
        %v1161 = vrot.slane %v1160, 2
        %v1162 = vadd.f32 %v1160, %v1161
        %v1163 = vrot.slane %v1162, 1
        %v1164 = vadd.f32 %v1162, %v1163
        %v1165 = vadd.f32 %v276, %v291
        %v1166 = vadd.f32 %v1165, %v306
        %v1167 = vadd.f32 %v1166, %v321
        %v1168 = vadd.f32 %v1167, %v336
        %v1169 = vadd.f32 %v1168, %v351
        %v1170 = vsel %vm1117, %v366, 0.0
        %v1171 = vadd.f32 %v1169, %v1170
        %v1172 = vrot.slane %v1171, 4
        %v1173 = vadd.f32 %v1171, %v1172
        %v1174 = vrot.slane %v1173, 2
        %v1175 = vadd.f32 %v1173, %v1174
        %v1176 = vrot.slane %v1175, 1
        %v1177 = vadd.f32 %v1175, %v1176
        %v1178 = vadd.f32 %v277, %v292
        %v1179 = vadd.f32 %v1178, %v307
        %v1180 = vadd.f32 %v1179, %v322
        %v1181 = vadd.f32 %v1180, %v337
        %v1182 = vadd.f32 %v1181, %v352
        %v1183 = vsel %vm1117, %v367, 0.0
        %v1184 = vadd.f32 %v1182, %v1183
        %v1185 = vrot.slane %v1184, 4
        %v1186 = vadd.f32 %v1184, %v1185
        %v1187 = vrot.slane %v1186, 2
        %v1188 = vadd.f32 %v1186, %v1187
        %v1189 = vrot.slane %v1188, 1
        %v1190 = vadd.f32 %v1188, %v1189
        %v1191 = vadd.f32 %v278, %v293
        %v1192 = vadd.f32 %v1191, %v308
        %v1193 = vadd.f32 %v1192, %v323
        %v1194 = vadd.f32 %v1193, %v338
        %v1195 = vadd.f32 %v1194, %v353
        %v1196 = vsel %vm1117, %v368, 0.0
        %v1197 = vadd.f32 %v1195, %v1196
        %v1198 = vrot.slane %v1197, 4
        %v1199 = vadd.f32 %v1197, %v1198
        %v1200 = vrot.slane %v1199, 2
        %v1201 = vadd.f32 %v1199, %v1200
        %v1202 = vrot.slane %v1201, 1
        %v1203 = vadd.f32 %v1201, %v1202
        %v1204 = vadd.f32 %v279, %v294
        %v1205 = vadd.f32 %v1204, %v309
        %v1206 = vadd.f32 %v1205, %v324
        %v1207 = vadd.f32 %v1206, %v339
        %v1208 = vadd.f32 %v1207, %v354
        %v1209 = vsel %vm1117, %v369, 0.0
        %v1210 = vadd.f32 %v1208, %v1209
        %v1211 = vrot.slane %v1210, 4
        %v1212 = vadd.f32 %v1210, %v1211
        %v1213 = vrot.slane %v1212, 2
        %v1214 = vadd.f32 %v1212, %v1213
        %v1215 = vrot.slane %v1214, 1
        %v1216 = vadd.f32 %v1214, %v1215
        %v1217 = vadd.f32 %v280, %v295
        %v1218 = vadd.f32 %v1217, %v310
        %v1219 = vadd.f32 %v1218, %v325
        %v1220 = vadd.f32 %v1219, %v340
        %v1221 = vadd.f32 %v1220, %v355
        %v1222 = vsel %vm1117, %v370, 0.0
        %v1223 = vadd.f32 %v1221, %v1222
        %v1224 = vrot.slane %v1223, 4
        %v1225 = vadd.f32 %v1223, %v1224
        %v1226 = vrot.slane %v1225, 2
        %v1227 = vadd.f32 %v1225, %v1226
        %v1228 = vrot.slane %v1227, 1
        %v1229 = vadd.f32 %v1227, %v1228
        %v1230 = vadd.f32 %v281, %v296
        %v1231 = vadd.f32 %v1230, %v311
        %v1232 = vadd.f32 %v1231, %v326
        %v1233 = vadd.f32 %v1232, %v341
        %v1234 = vadd.f32 %v1233, %v356
        %v1235 = vsel %vm1117, %v371, 0.0
        %v1236 = vadd.f32 %v1234, %v1235
        %v1237 = vrot.slane %v1236, 4
        %v1238 = vadd.f32 %v1236, %v1237
        %v1239 = vrot.slane %v1238, 2
        %v1240 = vadd.f32 %v1238, %v1239
        %v1241 = vrot.slane %v1240, 1
        %v1242 = vadd.f32 %v1240, %v1241
        %v1243 = vadd.f32 %v282, %v297
        %v1244 = vadd.f32 %v1243, %v312
        %v1245 = vadd.f32 %v1244, %v327
        %v1246 = vadd.f32 %v1245, %v342
        %v1247 = vadd.f32 %v1246, %v357
        %v1248 = vsel %vm1117, %v372, 0.0
        %v1249 = vadd.f32 %v1247, %v1248
        %v1250 = vrot.slane %v1249, 4
        %v1251 = vadd.f32 %v1249, %v1250
        %v1252 = vrot.slane %v1251, 2
        %v1253 = vadd.f32 %v1251, %v1252
        %v1254 = vrot.slane %v1253, 1
        %v1255 = vadd.f32 %v1253, %v1254
        %v1256 = vadd.f32 %v283, %v298
        %v1257 = vadd.f32 %v1256, %v313
        %v1258 = vadd.f32 %v1257, %v328
        %v1259 = vadd.f32 %v1258, %v343
        %v1260 = vadd.f32 %v1259, %v358
        %v1261 = vsel %vm1117, %v373, 0.0
        %v1262 = vadd.f32 %v1260, %v1261
        %v1263 = vrot.slane %v1262, 4
        %v1264 = vadd.f32 %v1262, %v1263
        %v1265 = vrot.slane %v1264, 2
        %v1266 = vadd.f32 %v1264, %v1265
        %v1267 = vrot.slane %v1266, 1
        %v1268 = vadd.f32 %v1266, %v1267
        %v1269 = vadd.f32 %v284, %v299
        %v1270 = vadd.f32 %v1269, %v314
        %v1271 = vadd.f32 %v1270, %v329
        %v1272 = vadd.f32 %v1271, %v344
        %v1273 = vadd.f32 %v1272, %v359
        %v1274 = vsel %vm1117, %v374, 0.0
        %v1275 = vadd.f32 %v1273, %v1274
        %v1276 = vrot.slane %v1275, 4
        %v1277 = vadd.f32 %v1275, %v1276
        %v1278 = vrot.slane %v1277, 2
        %v1279 = vadd.f32 %v1277, %v1278
        %v1280 = vrot.slane %v1279, 1
        %v1281 = vadd.f32 %v1279, %v1280
        %v1282 = vadd.f32 %v285, %v300
        %v1283 = vadd.f32 %v1282, %v315
        %v1284 = vadd.f32 %v1283, %v330
        %v1285 = vadd.f32 %v1284, %v345
        %v1286 = vadd.f32 %v1285, %v360
        %v1287 = vsel %vm1117, %v375, 0.0
        %v1288 = vadd.f32 %v1286, %v1287
        %v1289 = vrot.slane %v1288, 4
        %v1290 = vadd.f32 %v1288, %v1289
        %v1291 = vrot.slane %v1290, 2
        %v1292 = vadd.f32 %v1290, %v1291
        %v1293 = vrot.slane %v1292, 1
        %v1294 = vadd.f32 %v1292, %v1293
        %v1295 = vadd.f32 %v286, %v301
        %v1296 = vadd.f32 %v1295, %v316
        %v1297 = vadd.f32 %v1296, %v331
        %v1298 = vadd.f32 %v1297, %v346
        %v1299 = vadd.f32 %v1298, %v361
        %v1300 = vsel %vm1117, %v376, 0.0
        %v1301 = vadd.f32 %v1299, %v1300
        %v1302 = vrot.slane %v1301, 4
        %v1303 = vadd.f32 %v1301, %v1302
        %v1304 = vrot.slane %v1303, 2
        %v1305 = vadd.f32 %v1303, %v1304
        %v1306 = vrot.slane %v1305, 1
        %v1307 = vadd.f32 %v1305, %v1306
        %v1308 = vadd.f32 %v377, %v392
        %v1309 = vadd.f32 %v1308, %v407
        %v1310 = vadd.f32 %v1309, %v422
        %v1311 = vadd.f32 %v1310, %v437
        %v1312 = vadd.f32 %v1311, %v452
        %v1313 = vsel %vm1117, %v467, 0.0
        %v1314 = vadd.f32 %v1312, %v1313
        %v1315 = vrot.slane %v1314, 4
        %v1316 = vadd.f32 %v1314, %v1315
        %v1317 = vrot.slane %v1316, 2
        %v1318 = vadd.f32 %v1316, %v1317
        %v1319 = vrot.slane %v1318, 1
        %v1320 = vadd.f32 %v1318, %v1319
        %v1321 = vadd.f32 %v378, %v393
        %v1322 = vadd.f32 %v1321, %v408
        %v1323 = vadd.f32 %v1322, %v423
        %v1324 = vadd.f32 %v1323, %v438
        %v1325 = vadd.f32 %v1324, %v453
        %v1326 = vsel %vm1117, %v468, 0.0
        %v1327 = vadd.f32 %v1325, %v1326
        %v1328 = vrot.slane %v1327, 4
        %v1329 = vadd.f32 %v1327, %v1328
        %v1330 = vrot.slane %v1329, 2
        %v1331 = vadd.f32 %v1329, %v1330
        %v1332 = vrot.slane %v1331, 1
        %v1333 = vadd.f32 %v1331, %v1332
        %v1334 = vadd.f32 %v379, %v394
        %v1335 = vadd.f32 %v1334, %v409
        %v1336 = vadd.f32 %v1335, %v424
        %v1337 = vadd.f32 %v1336, %v439
        %v1338 = vadd.f32 %v1337, %v454
        %v1339 = vsel %vm1117, %v469, 0.0
        %v1340 = vadd.f32 %v1338, %v1339
        %v1341 = vrot.slane %v1340, 4
        %v1342 = vadd.f32 %v1340, %v1341
        %v1343 = vrot.slane %v1342, 2
        %v1344 = vadd.f32 %v1342, %v1343
        %v1345 = vrot.slane %v1344, 1
        %v1346 = vadd.f32 %v1344, %v1345
        %v1347 = vadd.f32 %v380, %v395
        %v1348 = vadd.f32 %v1347, %v410
        %v1349 = vadd.f32 %v1348, %v425
        %v1350 = vadd.f32 %v1349, %v440
        %v1351 = vadd.f32 %v1350, %v455
        %v1352 = vsel %vm1117, %v470, 0.0
        %v1353 = vadd.f32 %v1351, %v1352
        %v1354 = vrot.slane %v1353, 4
        %v1355 = vadd.f32 %v1353, %v1354
        %v1356 = vrot.slane %v1355, 2
        %v1357 = vadd.f32 %v1355, %v1356
        %v1358 = vrot.slane %v1357, 1
        %v1359 = vadd.f32 %v1357, %v1358
        %v1360 = vadd.f32 %v381, %v396
        %v1361 = vadd.f32 %v1360, %v411
        %v1362 = vadd.f32 %v1361, %v426
        %v1363 = vadd.f32 %v1362, %v441
        %v1364 = vadd.f32 %v1363, %v456
        %v1365 = vsel %vm1117, %v471, 0.0
        %v1366 = vadd.f32 %v1364, %v1365
        %v1367 = vrot.slane %v1366, 4
        %v1368 = vadd.f32 %v1366, %v1367
        %v1369 = vrot.slane %v1368, 2
        %v1370 = vadd.f32 %v1368, %v1369
        %v1371 = vrot.slane %v1370, 1
        %v1372 = vadd.f32 %v1370, %v1371
        %v1373 = vadd.f32 %v382, %v397
        %v1374 = vadd.f32 %v1373, %v412
        %v1375 = vadd.f32 %v1374, %v427
        %v1376 = vadd.f32 %v1375, %v442
        %v1377 = vadd.f32 %v1376, %v457
        %v1378 = vsel %vm1117, %v472, 0.0
        %v1379 = vadd.f32 %v1377, %v1378
        %v1380 = vrot.slane %v1379, 4
        %v1381 = vadd.f32 %v1379, %v1380
        %v1382 = vrot.slane %v1381, 2
        %v1383 = vadd.f32 %v1381, %v1382
        %v1384 = vrot.slane %v1383, 1
        %v1385 = vadd.f32 %v1383, %v1384
        %v1386 = vadd.f32 %v383, %v398
        %v1387 = vadd.f32 %v1386, %v413
        %v1388 = vadd.f32 %v1387, %v428
        %v1389 = vadd.f32 %v1388, %v443
        %v1390 = vadd.f32 %v1389, %v458
        %v1391 = vsel %vm1117, %v473, 0.0
        %v1392 = vadd.f32 %v1390, %v1391
        %v1393 = vrot.slane %v1392, 4
        %v1394 = vadd.f32 %v1392, %v1393
        %v1395 = vrot.slane %v1394, 2
        %v1396 = vadd.f32 %v1394, %v1395
        %v1397 = vrot.slane %v1396, 1
        %v1398 = vadd.f32 %v1396, %v1397
        %v1399 = vadd.f32 %v384, %v399
        %v1400 = vadd.f32 %v1399, %v414
        %v1401 = vadd.f32 %v1400, %v429
        %v1402 = vadd.f32 %v1401, %v444
        %v1403 = vadd.f32 %v1402, %v459
        %v1404 = vsel %vm1117, %v474, 0.0
        %v1405 = vadd.f32 %v1403, %v1404
        %v1406 = vrot.slane %v1405, 4
        %v1407 = vadd.f32 %v1405, %v1406
        %v1408 = vrot.slane %v1407, 2
        %v1409 = vadd.f32 %v1407, %v1408
        %v1410 = vrot.slane %v1409, 1
        %v1411 = vadd.f32 %v1409, %v1410
        %v1412 = vadd.f32 %v385, %v400
        %v1413 = vadd.f32 %v1412, %v415
        %v1414 = vadd.f32 %v1413, %v430
        %v1415 = vadd.f32 %v1414, %v445
        %v1416 = vadd.f32 %v1415, %v460
        %v1417 = vsel %vm1117, %v475, 0.0
        %v1418 = vadd.f32 %v1416, %v1417
        %v1419 = vrot.slane %v1418, 4
        %v1420 = vadd.f32 %v1418, %v1419
        %v1421 = vrot.slane %v1420, 2
        %v1422 = vadd.f32 %v1420, %v1421
        %v1423 = vrot.slane %v1422, 1
        %v1424 = vadd.f32 %v1422, %v1423
        %v1425 = vadd.f32 %v386, %v401
        %v1426 = vadd.f32 %v1425, %v416
        %v1427 = vadd.f32 %v1426, %v431
        %v1428 = vadd.f32 %v1427, %v446
        %v1429 = vadd.f32 %v1428, %v461
        %v1430 = vsel %vm1117, %v476, 0.0
        %v1431 = vadd.f32 %v1429, %v1430
        %v1432 = vrot.slane %v1431, 4
        %v1433 = vadd.f32 %v1431, %v1432
        %v1434 = vrot.slane %v1433, 2
        %v1435 = vadd.f32 %v1433, %v1434
        %v1436 = vrot.slane %v1435, 1
        %v1437 = vadd.f32 %v1435, %v1436
        %v1438 = vadd.f32 %v387, %v402
        %v1439 = vadd.f32 %v1438, %v417
        %v1440 = vadd.f32 %v1439, %v432
        %v1441 = vadd.f32 %v1440, %v447
        %v1442 = vadd.f32 %v1441, %v462
        %v1443 = vsel %vm1117, %v477, 0.0
        %v1444 = vadd.f32 %v1442, %v1443
        %v1445 = vrot.slane %v1444, 4
        %v1446 = vadd.f32 %v1444, %v1445
        %v1447 = vrot.slane %v1446, 2
        %v1448 = vadd.f32 %v1446, %v1447
        %v1449 = vrot.slane %v1448, 1
        %v1450 = vadd.f32 %v1448, %v1449
        %v1451 = vadd.f32 %v388, %v403
        %v1452 = vadd.f32 %v1451, %v418
        %v1453 = vadd.f32 %v1452, %v433
        %v1454 = vadd.f32 %v1453, %v448
        %v1455 = vadd.f32 %v1454, %v463
        %v1456 = vsel %vm1117, %v478, 0.0
        %v1457 = vadd.f32 %v1455, %v1456
        %v1458 = vrot.slane %v1457, 4
        %v1459 = vadd.f32 %v1457, %v1458
        %v1460 = vrot.slane %v1459, 2
        %v1461 = vadd.f32 %v1459, %v1460
        %v1462 = vrot.slane %v1461, 1
        %v1463 = vadd.f32 %v1461, %v1462
        %v1464 = vadd.f32 %v389, %v404
        %v1465 = vadd.f32 %v1464, %v419
        %v1466 = vadd.f32 %v1465, %v434
        %v1467 = vadd.f32 %v1466, %v449
        %v1468 = vadd.f32 %v1467, %v464
        %v1469 = vsel %vm1117, %v479, 0.0
        %v1470 = vadd.f32 %v1468, %v1469
        %v1471 = vrot.slane %v1470, 4
        %v1472 = vadd.f32 %v1470, %v1471
        %v1473 = vrot.slane %v1472, 2
        %v1474 = vadd.f32 %v1472, %v1473
        %v1475 = vrot.slane %v1474, 1
        %v1476 = vadd.f32 %v1474, %v1475
        %v1477 = vadd.f32 %v390, %v405
        %v1478 = vadd.f32 %v1477, %v420
        %v1479 = vadd.f32 %v1478, %v435
        %v1480 = vadd.f32 %v1479, %v450
        %v1481 = vadd.f32 %v1480, %v465
        %v1482 = vsel %vm1117, %v480, 0.0
        %v1483 = vadd.f32 %v1481, %v1482
        %v1484 = vrot.slane %v1483, 4
        %v1485 = vadd.f32 %v1483, %v1484
        %v1486 = vrot.slane %v1485, 2
        %v1487 = vadd.f32 %v1485, %v1486
        %v1488 = vrot.slane %v1487, 1
        %v1489 = vadd.f32 %v1487, %v1488
        %v1490 = vadd.f32 %v391, %v406
        %v1491 = vadd.f32 %v1490, %v421
        %v1492 = vadd.f32 %v1491, %v436
        %v1493 = vadd.f32 %v1492, %v451
        %v1494 = vadd.f32 %v1493, %v466
        %v1495 = vsel %vm1117, %v481, 0.0
        %v1496 = vadd.f32 %v1494, %v1495
        %v1497 = vrot.slane %v1496, 4
        %v1498 = vadd.f32 %v1496, %v1497
        %v1499 = vrot.slane %v1498, 2
        %v1500 = vadd.f32 %v1498, %v1499
        %v1501 = vrot.slane %v1500, 1
        %v1502 = vadd.f32 %v1500, %v1501
        %v1503 = vadd.f32 %v482, %v497
        %v1504 = vadd.f32 %v1503, %v512
        %v1505 = vadd.f32 %v1504, %v527
        %v1506 = vadd.f32 %v1505, %v542
        %v1507 = vadd.f32 %v1506, %v557
        %v1508 = vsel %vm1117, %v572, 0.0
        %v1509 = vadd.f32 %v1507, %v1508
        %v1510 = vrot.slane %v1509, 4
        %v1511 = vadd.f32 %v1509, %v1510
        %v1512 = vrot.slane %v1511, 2
        %v1513 = vadd.f32 %v1511, %v1512
        %v1514 = vrot.slane %v1513, 1
        %v1515 = vadd.f32 %v1513, %v1514
        %v1516 = vadd.f32 %v483, %v498
        %v1517 = vadd.f32 %v1516, %v513
        %v1518 = vadd.f32 %v1517, %v528
        %v1519 = vadd.f32 %v1518, %v543
        %v1520 = vadd.f32 %v1519, %v558
        %v1521 = vsel %vm1117, %v573, 0.0
        %v1522 = vadd.f32 %v1520, %v1521
        %v1523 = vrot.slane %v1522, 4
        %v1524 = vadd.f32 %v1522, %v1523
        %v1525 = vrot.slane %v1524, 2
        %v1526 = vadd.f32 %v1524, %v1525
        %v1527 = vrot.slane %v1526, 1
        %v1528 = vadd.f32 %v1526, %v1527
        %v1529 = vadd.f32 %v484, %v499
        %v1530 = vadd.f32 %v1529, %v514
        %v1531 = vadd.f32 %v1530, %v529
        %v1532 = vadd.f32 %v1531, %v544
        %v1533 = vadd.f32 %v1532, %v559
        %v1534 = vsel %vm1117, %v574, 0.0
        %v1535 = vadd.f32 %v1533, %v1534
        %v1536 = vrot.slane %v1535, 4
        %v1537 = vadd.f32 %v1535, %v1536
        %v1538 = vrot.slane %v1537, 2
        %v1539 = vadd.f32 %v1537, %v1538
        %v1540 = vrot.slane %v1539, 1
        %v1541 = vadd.f32 %v1539, %v1540
        %v1542 = vadd.f32 %v485, %v500
        %v1543 = vadd.f32 %v1542, %v515
        %v1544 = vadd.f32 %v1543, %v530
        %v1545 = vadd.f32 %v1544, %v545
        %v1546 = vadd.f32 %v1545, %v560
        %v1547 = vsel %vm1117, %v575, 0.0
        %v1548 = vadd.f32 %v1546, %v1547
        %v1549 = vrot.slane %v1548, 4
        %v1550 = vadd.f32 %v1548, %v1549
        %v1551 = vrot.slane %v1550, 2
        %v1552 = vadd.f32 %v1550, %v1551
        %v1553 = vrot.slane %v1552, 1
        %v1554 = vadd.f32 %v1552, %v1553
        %v1555 = vadd.f32 %v486, %v501
        %v1556 = vadd.f32 %v1555, %v516
        %v1557 = vadd.f32 %v1556, %v531
        %v1558 = vadd.f32 %v1557, %v546
        %v1559 = vadd.f32 %v1558, %v561
        %v1560 = vsel %vm1117, %v576, 0.0
        %v1561 = vadd.f32 %v1559, %v1560
        %v1562 = vrot.slane %v1561, 4
        %v1563 = vadd.f32 %v1561, %v1562
        %v1564 = vrot.slane %v1563, 2
        %v1565 = vadd.f32 %v1563, %v1564
        %v1566 = vrot.slane %v1565, 1
        %v1567 = vadd.f32 %v1565, %v1566
        %v1568 = vadd.f32 %v487, %v502
        %v1569 = vadd.f32 %v1568, %v517
        %v1570 = vadd.f32 %v1569, %v532
        %v1571 = vadd.f32 %v1570, %v547
        %v1572 = vadd.f32 %v1571, %v562
        %v1573 = vsel %vm1117, %v577, 0.0
        %v1574 = vadd.f32 %v1572, %v1573
        %v1575 = vrot.slane %v1574, 4
        %v1576 = vadd.f32 %v1574, %v1575
        %v1577 = vrot.slane %v1576, 2
        %v1578 = vadd.f32 %v1576, %v1577
        %v1579 = vrot.slane %v1578, 1
        %v1580 = vadd.f32 %v1578, %v1579
        %v1581 = vadd.f32 %v488, %v503
        %v1582 = vadd.f32 %v1581, %v518
        %v1583 = vadd.f32 %v1582, %v533
        %v1584 = vadd.f32 %v1583, %v548
        %v1585 = vadd.f32 %v1584, %v563
        %v1586 = vsel %vm1117, %v578, 0.0
        %v1587 = vadd.f32 %v1585, %v1586
        %v1588 = vrot.slane %v1587, 4
        %v1589 = vadd.f32 %v1587, %v1588
        %v1590 = vrot.slane %v1589, 2
        %v1591 = vadd.f32 %v1589, %v1590
        %v1592 = vrot.slane %v1591, 1
        %v1593 = vadd.f32 %v1591, %v1592
        %v1594 = vadd.f32 %v489, %v504
        %v1595 = vadd.f32 %v1594, %v519
        %v1596 = vadd.f32 %v1595, %v534
        %v1597 = vadd.f32 %v1596, %v549
        %v1598 = vadd.f32 %v1597, %v564
        %v1599 = vsel %vm1117, %v579, 0.0
        %v1600 = vadd.f32 %v1598, %v1599
        %v1601 = vrot.slane %v1600, 4
        %v1602 = vadd.f32 %v1600, %v1601
        %v1603 = vrot.slane %v1602, 2
        %v1604 = vadd.f32 %v1602, %v1603
        %v1605 = vrot.slane %v1604, 1
        %v1606 = vadd.f32 %v1604, %v1605
        %v1607 = vadd.f32 %v490, %v505
        %v1608 = vadd.f32 %v1607, %v520
        %v1609 = vadd.f32 %v1608, %v535
        %v1610 = vadd.f32 %v1609, %v550
        %v1611 = vadd.f32 %v1610, %v565
        %v1612 = vsel %vm1117, %v580, 0.0
        %v1613 = vadd.f32 %v1611, %v1612
        %v1614 = vrot.slane %v1613, 4
        %v1615 = vadd.f32 %v1613, %v1614
        %v1616 = vrot.slane %v1615, 2
        %v1617 = vadd.f32 %v1615, %v1616
        %v1618 = vrot.slane %v1617, 1
        %v1619 = vadd.f32 %v1617, %v1618
        %v1620 = vadd.f32 %v491, %v506
        %v1621 = vadd.f32 %v1620, %v521
        %v1622 = vadd.f32 %v1621, %v536
        %v1623 = vadd.f32 %v1622, %v551
        %v1624 = vadd.f32 %v1623, %v566
        %v1625 = vsel %vm1117, %v581, 0.0
        %v1626 = vadd.f32 %v1624, %v1625
        %v1627 = vrot.slane %v1626, 4
        %v1628 = vadd.f32 %v1626, %v1627
        %v1629 = vrot.slane %v1628, 2
        %v1630 = vadd.f32 %v1628, %v1629
        %v1631 = vrot.slane %v1630, 1
        %v1632 = vadd.f32 %v1630, %v1631
        %v1633 = vadd.f32 %v492, %v507
        %v1634 = vadd.f32 %v1633, %v522
        %v1635 = vadd.f32 %v1634, %v537
        %v1636 = vadd.f32 %v1635, %v552
        %v1637 = vadd.f32 %v1636, %v567
        %v1638 = vsel %vm1117, %v582, 0.0
        %v1639 = vadd.f32 %v1637, %v1638
        %v1640 = vrot.slane %v1639, 4
        %v1641 = vadd.f32 %v1639, %v1640
        %v1642 = vrot.slane %v1641, 2
        %v1643 = vadd.f32 %v1641, %v1642
        %v1644 = vrot.slane %v1643, 1
        %v1645 = vadd.f32 %v1643, %v1644
        %v1646 = vadd.f32 %v493, %v508
        %v1647 = vadd.f32 %v1646, %v523
        %v1648 = vadd.f32 %v1647, %v538
        %v1649 = vadd.f32 %v1648, %v553
        %v1650 = vadd.f32 %v1649, %v568
        %v1651 = vsel %vm1117, %v583, 0.0
        %v1652 = vadd.f32 %v1650, %v1651
        %v1653 = vrot.slane %v1652, 4
        %v1654 = vadd.f32 %v1652, %v1653
        %v1655 = vrot.slane %v1654, 2
        %v1656 = vadd.f32 %v1654, %v1655
        %v1657 = vrot.slane %v1656, 1
        %v1658 = vadd.f32 %v1656, %v1657
        %v1659 = vadd.f32 %v494, %v509
        %v1660 = vadd.f32 %v1659, %v524
        %v1661 = vadd.f32 %v1660, %v539
        %v1662 = vadd.f32 %v1661, %v554
        %v1663 = vadd.f32 %v1662, %v569
        %v1664 = vsel %vm1117, %v584, 0.0
        %v1665 = vadd.f32 %v1663, %v1664
        %v1666 = vrot.slane %v1665, 4
        %v1667 = vadd.f32 %v1665, %v1666
        %v1668 = vrot.slane %v1667, 2
        %v1669 = vadd.f32 %v1667, %v1668
        %v1670 = vrot.slane %v1669, 1
        %v1671 = vadd.f32 %v1669, %v1670
        %v1672 = vadd.f32 %v495, %v510
        %v1673 = vadd.f32 %v1672, %v525
        %v1674 = vadd.f32 %v1673, %v540
        %v1675 = vadd.f32 %v1674, %v555
        %v1676 = vadd.f32 %v1675, %v570
        %v1677 = vsel %vm1117, %v585, 0.0
        %v1678 = vadd.f32 %v1676, %v1677
        %v1679 = vrot.slane %v1678, 4
        %v1680 = vadd.f32 %v1678, %v1679
        %v1681 = vrot.slane %v1680, 2
        %v1682 = vadd.f32 %v1680, %v1681
        %v1683 = vrot.slane %v1682, 1
        %v1684 = vadd.f32 %v1682, %v1683
        %v1685 = vadd.f32 %v496, %v511
        %v1686 = vadd.f32 %v1685, %v526
        %v1687 = vadd.f32 %v1686, %v541
        %v1688 = vadd.f32 %v1687, %v556
        %v1689 = vadd.f32 %v1688, %v571
        %v1690 = vsel %vm1117, %v586, 0.0
        %v1691 = vadd.f32 %v1689, %v1690
        %v1692 = vrot.slane %v1691, 4
        %v1693 = vadd.f32 %v1691, %v1692
        %v1694 = vrot.slane %v1693, 2
        %v1695 = vadd.f32 %v1693, %v1694
        %v1696 = vrot.slane %v1695, 1
        %v1697 = vadd.f32 %v1695, %v1696
        %v1698 = vadd.f32 %v587, %v602
        %v1699 = vadd.f32 %v1698, %v617
        %v1700 = vadd.f32 %v1699, %v632
        %v1701 = vadd.f32 %v1700, %v647
        %v1702 = vadd.f32 %v1701, %v662
        %v1703 = vsel %vm1117, %v677, 0.0
        %v1704 = vadd.f32 %v1702, %v1703
        %v1705 = vrot.slane %v1704, 4
        %v1706 = vadd.f32 %v1704, %v1705
        %v1707 = vrot.slane %v1706, 2
        %v1708 = vadd.f32 %v1706, %v1707
        %v1709 = vrot.slane %v1708, 1
        %v1710 = vadd.f32 %v1708, %v1709
        %v1711 = vadd.f32 %v588, %v603
        %v1712 = vadd.f32 %v1711, %v618
        %v1713 = vadd.f32 %v1712, %v633
        %v1714 = vadd.f32 %v1713, %v648
        %v1715 = vadd.f32 %v1714, %v663
        %v1716 = vsel %vm1117, %v678, 0.0
        %v1717 = vadd.f32 %v1715, %v1716
        %v1718 = vrot.slane %v1717, 4
        %v1719 = vadd.f32 %v1717, %v1718
        %v1720 = vrot.slane %v1719, 2
        %v1721 = vadd.f32 %v1719, %v1720
        %v1722 = vrot.slane %v1721, 1
        %v1723 = vadd.f32 %v1721, %v1722
        %v1724 = vadd.f32 %v589, %v604
        %v1725 = vadd.f32 %v1724, %v619
        %v1726 = vadd.f32 %v1725, %v634
        %v1727 = vadd.f32 %v1726, %v649
        %v1728 = vadd.f32 %v1727, %v664
        %v1729 = vsel %vm1117, %v679, 0.0
        %v1730 = vadd.f32 %v1728, %v1729
        %v1731 = vrot.slane %v1730, 4
        %v1732 = vadd.f32 %v1730, %v1731
        %v1733 = vrot.slane %v1732, 2
        %v1734 = vadd.f32 %v1732, %v1733
        %v1735 = vrot.slane %v1734, 1
        %v1736 = vadd.f32 %v1734, %v1735
        %v1737 = vadd.f32 %v590, %v605
        %v1738 = vadd.f32 %v1737, %v620
        %v1739 = vadd.f32 %v1738, %v635
        %v1740 = vadd.f32 %v1739, %v650
        %v1741 = vadd.f32 %v1740, %v665
        %v1742 = vsel %vm1117, %v680, 0.0
        %v1743 = vadd.f32 %v1741, %v1742
        %v1744 = vrot.slane %v1743, 4
        %v1745 = vadd.f32 %v1743, %v1744
        %v1746 = vrot.slane %v1745, 2
        %v1747 = vadd.f32 %v1745, %v1746
        %v1748 = vrot.slane %v1747, 1
        %v1749 = vadd.f32 %v1747, %v1748
        %v1750 = vadd.f32 %v591, %v606
        %v1751 = vadd.f32 %v1750, %v621
        %v1752 = vadd.f32 %v1751, %v636
        %v1753 = vadd.f32 %v1752, %v651
        %v1754 = vadd.f32 %v1753, %v666
        %v1755 = vsel %vm1117, %v681, 0.0
        %v1756 = vadd.f32 %v1754, %v1755
        %v1757 = vrot.slane %v1756, 4
        %v1758 = vadd.f32 %v1756, %v1757
        %v1759 = vrot.slane %v1758, 2
        %v1760 = vadd.f32 %v1758, %v1759
        %v1761 = vrot.slane %v1760, 1
        %v1762 = vadd.f32 %v1760, %v1761
        %v1763 = vadd.f32 %v592, %v607
        %v1764 = vadd.f32 %v1763, %v622
        %v1765 = vadd.f32 %v1764, %v637
        %v1766 = vadd.f32 %v1765, %v652
        %v1767 = vadd.f32 %v1766, %v667
        %v1768 = vsel %vm1117, %v682, 0.0
        %v1769 = vadd.f32 %v1767, %v1768
        %v1770 = vrot.slane %v1769, 4
        %v1771 = vadd.f32 %v1769, %v1770
        %v1772 = vrot.slane %v1771, 2
        %v1773 = vadd.f32 %v1771, %v1772
        %v1774 = vrot.slane %v1773, 1
        %v1775 = vadd.f32 %v1773, %v1774
        %v1776 = vadd.f32 %v593, %v608
        %v1777 = vadd.f32 %v1776, %v623
        %v1778 = vadd.f32 %v1777, %v638
        %v1779 = vadd.f32 %v1778, %v653
        %v1780 = vadd.f32 %v1779, %v668
        %v1781 = vsel %vm1117, %v683, 0.0
        %v1782 = vadd.f32 %v1780, %v1781
        %v1783 = vrot.slane %v1782, 4
        %v1784 = vadd.f32 %v1782, %v1783
        %v1785 = vrot.slane %v1784, 2
        %v1786 = vadd.f32 %v1784, %v1785
        %v1787 = vrot.slane %v1786, 1
        %v1788 = vadd.f32 %v1786, %v1787
        %v1789 = vadd.f32 %v594, %v609
        %v1790 = vadd.f32 %v1789, %v624
        %v1791 = vadd.f32 %v1790, %v639
        %v1792 = vadd.f32 %v1791, %v654
        %v1793 = vadd.f32 %v1792, %v669
        %v1794 = vsel %vm1117, %v684, 0.0
        %v1795 = vadd.f32 %v1793, %v1794
        %v1796 = vrot.slane %v1795, 4
        %v1797 = vadd.f32 %v1795, %v1796
        %v1798 = vrot.slane %v1797, 2
        %v1799 = vadd.f32 %v1797, %v1798
        %v1800 = vrot.slane %v1799, 1
        %v1801 = vadd.f32 %v1799, %v1800
        %v1802 = vadd.f32 %v595, %v610
        %v1803 = vadd.f32 %v1802, %v625
        %v1804 = vadd.f32 %v1803, %v640
        %v1805 = vadd.f32 %v1804, %v655
        %v1806 = vadd.f32 %v1805, %v670
        %v1807 = vsel %vm1117, %v685, 0.0
        %v1808 = vadd.f32 %v1806, %v1807
        %v1809 = vrot.slane %v1808, 4
        %v1810 = vadd.f32 %v1808, %v1809
        %v1811 = vrot.slane %v1810, 2
        %v1812 = vadd.f32 %v1810, %v1811
        %v1813 = vrot.slane %v1812, 1
        %v1814 = vadd.f32 %v1812, %v1813
        %v1815 = vadd.f32 %v596, %v611
        %v1816 = vadd.f32 %v1815, %v626
        %v1817 = vadd.f32 %v1816, %v641
        %v1818 = vadd.f32 %v1817, %v656
        %v1819 = vadd.f32 %v1818, %v671
        %v1820 = vsel %vm1117, %v686, 0.0
        %v1821 = vadd.f32 %v1819, %v1820
        %v1822 = vrot.slane %v1821, 4
        %v1823 = vadd.f32 %v1821, %v1822
        %v1824 = vrot.slane %v1823, 2
        %v1825 = vadd.f32 %v1823, %v1824
        %v1826 = vrot.slane %v1825, 1
        %v1827 = vadd.f32 %v1825, %v1826
        %v1828 = vadd.f32 %v597, %v612
        %v1829 = vadd.f32 %v1828, %v627
        %v1830 = vadd.f32 %v1829, %v642
        %v1831 = vadd.f32 %v1830, %v657
        %v1832 = vadd.f32 %v1831, %v672
        %v1833 = vsel %vm1117, %v687, 0.0
        %v1834 = vadd.f32 %v1832, %v1833
        %v1835 = vrot.slane %v1834, 4
        %v1836 = vadd.f32 %v1834, %v1835
        %v1837 = vrot.slane %v1836, 2
        %v1838 = vadd.f32 %v1836, %v1837
        %v1839 = vrot.slane %v1838, 1
        %v1840 = vadd.f32 %v1838, %v1839
        %v1841 = vadd.f32 %v598, %v613
        %v1842 = vadd.f32 %v1841, %v628
        %v1843 = vadd.f32 %v1842, %v643
        %v1844 = vadd.f32 %v1843, %v658
        %v1845 = vadd.f32 %v1844, %v673
        %v1846 = vsel %vm1117, %v688, 0.0
        %v1847 = vadd.f32 %v1845, %v1846
        %v1848 = vrot.slane %v1847, 4
        %v1849 = vadd.f32 %v1847, %v1848
        %v1850 = vrot.slane %v1849, 2
        %v1851 = vadd.f32 %v1849, %v1850
        %v1852 = vrot.slane %v1851, 1
        %v1853 = vadd.f32 %v1851, %v1852
        %v1854 = vadd.f32 %v599, %v614
        %v1855 = vadd.f32 %v1854, %v629
        %v1856 = vadd.f32 %v1855, %v644
        %v1857 = vadd.f32 %v1856, %v659
        %v1858 = vadd.f32 %v1857, %v674
        %v1859 = vsel %vm1117, %v689, 0.0
        %v1860 = vadd.f32 %v1858, %v1859
        %v1861 = vrot.slane %v1860, 4
        %v1862 = vadd.f32 %v1860, %v1861
        %v1863 = vrot.slane %v1862, 2
        %v1864 = vadd.f32 %v1862, %v1863
        %v1865 = vrot.slane %v1864, 1
        %v1866 = vadd.f32 %v1864, %v1865
        %v1867 = vadd.f32 %v600, %v615
        %v1868 = vadd.f32 %v1867, %v630
        %v1869 = vadd.f32 %v1868, %v645
        %v1870 = vadd.f32 %v1869, %v660
        %v1871 = vadd.f32 %v1870, %v675
        %v1872 = vsel %vm1117, %v690, 0.0
        %v1873 = vadd.f32 %v1871, %v1872
        %v1874 = vrot.slane %v1873, 4
        %v1875 = vadd.f32 %v1873, %v1874
        %v1876 = vrot.slane %v1875, 2
        %v1877 = vadd.f32 %v1875, %v1876
        %v1878 = vrot.slane %v1877, 1
        %v1879 = vadd.f32 %v1877, %v1878
        %v1880 = vadd.f32 %v601, %v616
        %v1881 = vadd.f32 %v1880, %v631
        %v1882 = vadd.f32 %v1881, %v646
        %v1883 = vadd.f32 %v1882, %v661
        %v1884 = vadd.f32 %v1883, %v676
        %v1885 = vsel %vm1117, %v691, 0.0
        %v1886 = vadd.f32 %v1884, %v1885
        %v1887 = vrot.slane %v1886, 4
        %v1888 = vadd.f32 %v1886, %v1887
        %v1889 = vrot.slane %v1888, 2
        %v1890 = vadd.f32 %v1888, %v1889
        %v1891 = vrot.slane %v1890, 1
        %v1892 = vadd.f32 %v1890, %v1891
        %v1893 = vadd.f32 %v692, %v707
        %v1894 = vadd.f32 %v1893, %v722
        %v1895 = vadd.f32 %v1894, %v737
        %v1896 = vadd.f32 %v1895, %v752
        %v1897 = vadd.f32 %v1896, %v767
        %v1898 = vsel %vm1117, %v782, 0.0
        %v1899 = vadd.f32 %v1897, %v1898
        %v1900 = vrot.slane %v1899, 4
        %v1901 = vadd.f32 %v1899, %v1900
        %v1902 = vrot.slane %v1901, 2
        %v1903 = vadd.f32 %v1901, %v1902
        %v1904 = vrot.slane %v1903, 1
        %v1905 = vadd.f32 %v1903, %v1904
        %v1906 = vadd.f32 %v693, %v708
        %v1907 = vadd.f32 %v1906, %v723
        %v1908 = vadd.f32 %v1907, %v738
        %v1909 = vadd.f32 %v1908, %v753
        %v1910 = vadd.f32 %v1909, %v768
        %v1911 = vsel %vm1117, %v783, 0.0
        %v1912 = vadd.f32 %v1910, %v1911
        %v1913 = vrot.slane %v1912, 4
        %v1914 = vadd.f32 %v1912, %v1913
        %v1915 = vrot.slane %v1914, 2
        %v1916 = vadd.f32 %v1914, %v1915
        %v1917 = vrot.slane %v1916, 1
        %v1918 = vadd.f32 %v1916, %v1917
        %v1919 = vadd.f32 %v694, %v709
        %v1920 = vadd.f32 %v1919, %v724
        %v1921 = vadd.f32 %v1920, %v739
        %v1922 = vadd.f32 %v1921, %v754
        %v1923 = vadd.f32 %v1922, %v769
        %v1924 = vsel %vm1117, %v784, 0.0
        %v1925 = vadd.f32 %v1923, %v1924
        %v1926 = vrot.slane %v1925, 4
        %v1927 = vadd.f32 %v1925, %v1926
        %v1928 = vrot.slane %v1927, 2
        %v1929 = vadd.f32 %v1927, %v1928
        %v1930 = vrot.slane %v1929, 1
        %v1931 = vadd.f32 %v1929, %v1930
        %v1932 = vadd.f32 %v695, %v710
        %v1933 = vadd.f32 %v1932, %v725
        %v1934 = vadd.f32 %v1933, %v740
        %v1935 = vadd.f32 %v1934, %v755
        %v1936 = vadd.f32 %v1935, %v770
        %v1937 = vsel %vm1117, %v785, 0.0
        %v1938 = vadd.f32 %v1936, %v1937
        %v1939 = vrot.slane %v1938, 4
        %v1940 = vadd.f32 %v1938, %v1939
        %v1941 = vrot.slane %v1940, 2
        %v1942 = vadd.f32 %v1940, %v1941
        %v1943 = vrot.slane %v1942, 1
        %v1944 = vadd.f32 %v1942, %v1943
        %v1945 = vadd.f32 %v696, %v711
        %v1946 = vadd.f32 %v1945, %v726
        %v1947 = vadd.f32 %v1946, %v741
        %v1948 = vadd.f32 %v1947, %v756
        %v1949 = vadd.f32 %v1948, %v771
        %v1950 = vsel %vm1117, %v786, 0.0
        %v1951 = vadd.f32 %v1949, %v1950
        %v1952 = vrot.slane %v1951, 4
        %v1953 = vadd.f32 %v1951, %v1952
        %v1954 = vrot.slane %v1953, 2
        %v1955 = vadd.f32 %v1953, %v1954
        %v1956 = vrot.slane %v1955, 1
        %v1957 = vadd.f32 %v1955, %v1956
        %v1958 = vadd.f32 %v697, %v712
        %v1959 = vadd.f32 %v1958, %v727
        %v1960 = vadd.f32 %v1959, %v742
        %v1961 = vadd.f32 %v1960, %v757
        %v1962 = vadd.f32 %v1961, %v772
        %v1963 = vsel %vm1117, %v787, 0.0
        %v1964 = vadd.f32 %v1962, %v1963
        %v1965 = vrot.slane %v1964, 4
        %v1966 = vadd.f32 %v1964, %v1965
        %v1967 = vrot.slane %v1966, 2
        %v1968 = vadd.f32 %v1966, %v1967
        %v1969 = vrot.slane %v1968, 1
        %v1970 = vadd.f32 %v1968, %v1969
        %v1971 = vadd.f32 %v698, %v713
        %v1972 = vadd.f32 %v1971, %v728
        %v1973 = vadd.f32 %v1972, %v743
        %v1974 = vadd.f32 %v1973, %v758
        %v1975 = vadd.f32 %v1974, %v773
        %v1976 = vsel %vm1117, %v788, 0.0
        %v1977 = vadd.f32 %v1975, %v1976
        %v1978 = vrot.slane %v1977, 4
        %v1979 = vadd.f32 %v1977, %v1978
        %v1980 = vrot.slane %v1979, 2
        %v1981 = vadd.f32 %v1979, %v1980
        %v1982 = vrot.slane %v1981, 1
        %v1983 = vadd.f32 %v1981, %v1982
        %v1984 = vadd.f32 %v699, %v714
        %v1985 = vadd.f32 %v1984, %v729
        %v1986 = vadd.f32 %v1985, %v744
        %v1987 = vadd.f32 %v1986, %v759
        %v1988 = vadd.f32 %v1987, %v774
        %v1989 = vsel %vm1117, %v789, 0.0
        %v1990 = vadd.f32 %v1988, %v1989
        %v1991 = vrot.slane %v1990, 4
        %v1992 = vadd.f32 %v1990, %v1991
        %v1993 = vrot.slane %v1992, 2
        %v1994 = vadd.f32 %v1992, %v1993
        %v1995 = vrot.slane %v1994, 1
        %v1996 = vadd.f32 %v1994, %v1995
        %v1997 = vadd.f32 %v700, %v715
        %v1998 = vadd.f32 %v1997, %v730
        %v1999 = vadd.f32 %v1998, %v745
        %v2000 = vadd.f32 %v1999, %v760
        %v2001 = vadd.f32 %v2000, %v775
        %v2002 = vsel %vm1117, %v790, 0.0
        %v2003 = vadd.f32 %v2001, %v2002
        %v2004 = vrot.slane %v2003, 4
        %v2005 = vadd.f32 %v2003, %v2004
        %v2006 = vrot.slane %v2005, 2
        %v2007 = vadd.f32 %v2005, %v2006
        %v2008 = vrot.slane %v2007, 1
        %v2009 = vadd.f32 %v2007, %v2008
        %v2010 = vadd.f32 %v701, %v716
        %v2011 = vadd.f32 %v2010, %v731
        %v2012 = vadd.f32 %v2011, %v746
        %v2013 = vadd.f32 %v2012, %v761
        %v2014 = vadd.f32 %v2013, %v776
        %v2015 = vsel %vm1117, %v791, 0.0
        %v2016 = vadd.f32 %v2014, %v2015
        %v2017 = vrot.slane %v2016, 4
        %v2018 = vadd.f32 %v2016, %v2017
        %v2019 = vrot.slane %v2018, 2
        %v2020 = vadd.f32 %v2018, %v2019
        %v2021 = vrot.slane %v2020, 1
        %v2022 = vadd.f32 %v2020, %v2021
        %v2023 = vadd.f32 %v702, %v717
        %v2024 = vadd.f32 %v2023, %v732
        %v2025 = vadd.f32 %v2024, %v747
        %v2026 = vadd.f32 %v2025, %v762
        %v2027 = vadd.f32 %v2026, %v777
        %v2028 = vsel %vm1117, %v792, 0.0
        %v2029 = vadd.f32 %v2027, %v2028
        %v2030 = vrot.slane %v2029, 4
        %v2031 = vadd.f32 %v2029, %v2030
        %v2032 = vrot.slane %v2031, 2
        %v2033 = vadd.f32 %v2031, %v2032
        %v2034 = vrot.slane %v2033, 1
        %v2035 = vadd.f32 %v2033, %v2034
        %v2036 = vadd.f32 %v703, %v718
        %v2037 = vadd.f32 %v2036, %v733
        %v2038 = vadd.f32 %v2037, %v748
        %v2039 = vadd.f32 %v2038, %v763
        %v2040 = vadd.f32 %v2039, %v778
        %v2041 = vsel %vm1117, %v793, 0.0
        %v2042 = vadd.f32 %v2040, %v2041
        %v2043 = vrot.slane %v2042, 4
        %v2044 = vadd.f32 %v2042, %v2043
        %v2045 = vrot.slane %v2044, 2
        %v2046 = vadd.f32 %v2044, %v2045
        %v2047 = vrot.slane %v2046, 1
        %v2048 = vadd.f32 %v2046, %v2047
        %v2049 = vadd.f32 %v704, %v719
        %v2050 = vadd.f32 %v2049, %v734
        %v2051 = vadd.f32 %v2050, %v749
        %v2052 = vadd.f32 %v2051, %v764
        %v2053 = vadd.f32 %v2052, %v779
        %v2054 = vsel %vm1117, %v794, 0.0
        %v2055 = vadd.f32 %v2053, %v2054
        %v2056 = vrot.slane %v2055, 4
        %v2057 = vadd.f32 %v2055, %v2056
        %v2058 = vrot.slane %v2057, 2
        %v2059 = vadd.f32 %v2057, %v2058
        %v2060 = vrot.slane %v2059, 1
        %v2061 = vadd.f32 %v2059, %v2060
        %v2062 = vadd.f32 %v705, %v720
        %v2063 = vadd.f32 %v2062, %v735
        %v2064 = vadd.f32 %v2063, %v750
        %v2065 = vadd.f32 %v2064, %v765
        %v2066 = vadd.f32 %v2065, %v780
        %v2067 = vsel %vm1117, %v795, 0.0
        %v2068 = vadd.f32 %v2066, %v2067
        %v2069 = vrot.slane %v2068, 4
        %v2070 = vadd.f32 %v2068, %v2069
        %v2071 = vrot.slane %v2070, 2
        %v2072 = vadd.f32 %v2070, %v2071
        %v2073 = vrot.slane %v2072, 1
        %v2074 = vadd.f32 %v2072, %v2073
        %v2075 = vadd.f32 %v706, %v721
        %v2076 = vadd.f32 %v2075, %v736
        %v2077 = vadd.f32 %v2076, %v751
        %v2078 = vadd.f32 %v2077, %v766
        %v2079 = vadd.f32 %v2078, %v781
        %v2080 = vsel %vm1117, %v796, 0.0
        %v2081 = vadd.f32 %v2079, %v2080
        %v2082 = vrot.slane %v2081, 4
        %v2083 = vadd.f32 %v2081, %v2082
        %v2084 = vrot.slane %v2083, 2
        %v2085 = vadd.f32 %v2083, %v2084
        %v2086 = vrot.slane %v2085, 1
        %v2087 = vadd.f32 %v2085, %v2086
        %v2088 = vadd.f32 %v797, %v812
        %v2089 = vadd.f32 %v2088, %v827
        %v2090 = vadd.f32 %v2089, %v842
        %v2091 = vadd.f32 %v2090, %v857
        %v2092 = vadd.f32 %v2091, %v872
        %v2093 = vsel %vm1117, %v887, 0.0
        %v2094 = vadd.f32 %v2092, %v2093
        %v2095 = vrot.slane %v2094, 4
        %v2096 = vadd.f32 %v2094, %v2095
        %v2097 = vrot.slane %v2096, 2
        %v2098 = vadd.f32 %v2096, %v2097
        %v2099 = vrot.slane %v2098, 1
        %v2100 = vadd.f32 %v2098, %v2099
        %v2101 = vadd.f32 %v798, %v813
        %v2102 = vadd.f32 %v2101, %v828
        %v2103 = vadd.f32 %v2102, %v843
        %v2104 = vadd.f32 %v2103, %v858
        %v2105 = vadd.f32 %v2104, %v873
        %v2106 = vsel %vm1117, %v888, 0.0
        %v2107 = vadd.f32 %v2105, %v2106
        %v2108 = vrot.slane %v2107, 4
        %v2109 = vadd.f32 %v2107, %v2108
        %v2110 = vrot.slane %v2109, 2
        %v2111 = vadd.f32 %v2109, %v2110
        %v2112 = vrot.slane %v2111, 1
        %v2113 = vadd.f32 %v2111, %v2112
        %v2114 = vadd.f32 %v799, %v814
        %v2115 = vadd.f32 %v2114, %v829
        %v2116 = vadd.f32 %v2115, %v844
        %v2117 = vadd.f32 %v2116, %v859
        %v2118 = vadd.f32 %v2117, %v874
        %v2119 = vsel %vm1117, %v889, 0.0
        %v2120 = vadd.f32 %v2118, %v2119
        %v2121 = vrot.slane %v2120, 4
        %v2122 = vadd.f32 %v2120, %v2121
        %v2123 = vrot.slane %v2122, 2
        %v2124 = vadd.f32 %v2122, %v2123
        %v2125 = vrot.slane %v2124, 1
        %v2126 = vadd.f32 %v2124, %v2125
        %v2127 = vadd.f32 %v800, %v815
        %v2128 = vadd.f32 %v2127, %v830
        %v2129 = vadd.f32 %v2128, %v845
        %v2130 = vadd.f32 %v2129, %v860
        %v2131 = vadd.f32 %v2130, %v875
        %v2132 = vsel %vm1117, %v890, 0.0
        %v2133 = vadd.f32 %v2131, %v2132
        %v2134 = vrot.slane %v2133, 4
        %v2135 = vadd.f32 %v2133, %v2134
        %v2136 = vrot.slane %v2135, 2
        %v2137 = vadd.f32 %v2135, %v2136
        %v2138 = vrot.slane %v2137, 1
        %v2139 = vadd.f32 %v2137, %v2138
        %v2140 = vadd.f32 %v801, %v816
        %v2141 = vadd.f32 %v2140, %v831
        %v2142 = vadd.f32 %v2141, %v846
        %v2143 = vadd.f32 %v2142, %v861
        %v2144 = vadd.f32 %v2143, %v876
        %v2145 = vsel %vm1117, %v891, 0.0
        %v2146 = vadd.f32 %v2144, %v2145
        %v2147 = vrot.slane %v2146, 4
        %v2148 = vadd.f32 %v2146, %v2147
        %v2149 = vrot.slane %v2148, 2
        %v2150 = vadd.f32 %v2148, %v2149
        %v2151 = vrot.slane %v2150, 1
        %v2152 = vadd.f32 %v2150, %v2151
        %v2153 = vadd.f32 %v802, %v817
        %v2154 = vadd.f32 %v2153, %v832
        %v2155 = vadd.f32 %v2154, %v847
        %v2156 = vadd.f32 %v2155, %v862
        %v2157 = vadd.f32 %v2156, %v877
        %v2158 = vsel %vm1117, %v892, 0.0
        %v2159 = vadd.f32 %v2157, %v2158
        %v2160 = vrot.slane %v2159, 4
        %v2161 = vadd.f32 %v2159, %v2160
        %v2162 = vrot.slane %v2161, 2
        %v2163 = vadd.f32 %v2161, %v2162
        %v2164 = vrot.slane %v2163, 1
        %v2165 = vadd.f32 %v2163, %v2164
        %v2166 = vadd.f32 %v803, %v818
        %v2167 = vadd.f32 %v2166, %v833
        %v2168 = vadd.f32 %v2167, %v848
        %v2169 = vadd.f32 %v2168, %v863
        %v2170 = vadd.f32 %v2169, %v878
        %v2171 = vsel %vm1117, %v893, 0.0
        %v2172 = vadd.f32 %v2170, %v2171
        %v2173 = vrot.slane %v2172, 4
        %v2174 = vadd.f32 %v2172, %v2173
        %v2175 = vrot.slane %v2174, 2
        %v2176 = vadd.f32 %v2174, %v2175
        %v2177 = vrot.slane %v2176, 1
        %v2178 = vadd.f32 %v2176, %v2177
        %v2179 = vadd.f32 %v804, %v819
        %v2180 = vadd.f32 %v2179, %v834
        %v2181 = vadd.f32 %v2180, %v849
        %v2182 = vadd.f32 %v2181, %v864
        %v2183 = vadd.f32 %v2182, %v879
        %v2184 = vsel %vm1117, %v894, 0.0
        %v2185 = vadd.f32 %v2183, %v2184
        %v2186 = vrot.slane %v2185, 4
        %v2187 = vadd.f32 %v2185, %v2186
        %v2188 = vrot.slane %v2187, 2
        %v2189 = vadd.f32 %v2187, %v2188
        %v2190 = vrot.slane %v2189, 1
        %v2191 = vadd.f32 %v2189, %v2190
        %v2192 = vadd.f32 %v805, %v820
        %v2193 = vadd.f32 %v2192, %v835
        %v2194 = vadd.f32 %v2193, %v850
        %v2195 = vadd.f32 %v2194, %v865
        %v2196 = vadd.f32 %v2195, %v880
        %v2197 = vsel %vm1117, %v895, 0.0
        %v2198 = vadd.f32 %v2196, %v2197
        %v2199 = vrot.slane %v2198, 4
        %v2200 = vadd.f32 %v2198, %v2199
        %v2201 = vrot.slane %v2200, 2
        %v2202 = vadd.f32 %v2200, %v2201
        %v2203 = vrot.slane %v2202, 1
        %v2204 = vadd.f32 %v2202, %v2203
        %v2205 = vadd.f32 %v806, %v821
        %v2206 = vadd.f32 %v2205, %v836
        %v2207 = vadd.f32 %v2206, %v851
        %v2208 = vadd.f32 %v2207, %v866
        %v2209 = vadd.f32 %v2208, %v881
        %v2210 = vsel %vm1117, %v896, 0.0
        %v2211 = vadd.f32 %v2209, %v2210
        %v2212 = vrot.slane %v2211, 4
        %v2213 = vadd.f32 %v2211, %v2212
        %v2214 = vrot.slane %v2213, 2
        %v2215 = vadd.f32 %v2213, %v2214
        %v2216 = vrot.slane %v2215, 1
        %v2217 = vadd.f32 %v2215, %v2216
        %v2218 = vadd.f32 %v807, %v822
        %v2219 = vadd.f32 %v2218, %v837
        %v2220 = vadd.f32 %v2219, %v852
        %v2221 = vadd.f32 %v2220, %v867
        %v2222 = vadd.f32 %v2221, %v882
        %v2223 = vsel %vm1117, %v897, 0.0
        %v2224 = vadd.f32 %v2222, %v2223
        %v2225 = vrot.slane %v2224, 4
        %v2226 = vadd.f32 %v2224, %v2225
        %v2227 = vrot.slane %v2226, 2
        %v2228 = vadd.f32 %v2226, %v2227
        %v2229 = vrot.slane %v2228, 1
        %v2230 = vadd.f32 %v2228, %v2229
        %v2231 = vadd.f32 %v808, %v823
        %v2232 = vadd.f32 %v2231, %v838
        %v2233 = vadd.f32 %v2232, %v853
        %v2234 = vadd.f32 %v2233, %v868
        %v2235 = vadd.f32 %v2234, %v883
        %v2236 = vsel %vm1117, %v898, 0.0
        %v2237 = vadd.f32 %v2235, %v2236
        %v2238 = vrot.slane %v2237, 4
        %v2239 = vadd.f32 %v2237, %v2238
        %v2240 = vrot.slane %v2239, 2
        %v2241 = vadd.f32 %v2239, %v2240
        %v2242 = vrot.slane %v2241, 1
        %v2243 = vadd.f32 %v2241, %v2242
        %v2244 = vadd.f32 %v809, %v824
        %v2245 = vadd.f32 %v2244, %v839
        %v2246 = vadd.f32 %v2245, %v854
        %v2247 = vadd.f32 %v2246, %v869
        %v2248 = vadd.f32 %v2247, %v884
        %v2249 = vsel %vm1117, %v899, 0.0
        %v2250 = vadd.f32 %v2248, %v2249
        %v2251 = vrot.slane %v2250, 4
        %v2252 = vadd.f32 %v2250, %v2251
        %v2253 = vrot.slane %v2252, 2
        %v2254 = vadd.f32 %v2252, %v2253
        %v2255 = vrot.slane %v2254, 1
        %v2256 = vadd.f32 %v2254, %v2255
        %v2257 = vadd.f32 %v810, %v825
        %v2258 = vadd.f32 %v2257, %v840
        %v2259 = vadd.f32 %v2258, %v855
        %v2260 = vadd.f32 %v2259, %v870
        %v2261 = vadd.f32 %v2260, %v885
        %v2262 = vsel %vm1117, %v900, 0.0
        %v2263 = vadd.f32 %v2261, %v2262
        %v2264 = vrot.slane %v2263, 4
        %v2265 = vadd.f32 %v2263, %v2264
        %v2266 = vrot.slane %v2265, 2
        %v2267 = vadd.f32 %v2265, %v2266
        %v2268 = vrot.slane %v2267, 1
        %v2269 = vadd.f32 %v2267, %v2268
        %v2270 = vadd.f32 %v811, %v826
        %v2271 = vadd.f32 %v2270, %v841
        %v2272 = vadd.f32 %v2271, %v856
        %v2273 = vadd.f32 %v2272, %v871
        %v2274 = vadd.f32 %v2273, %v886
        %v2275 = vsel %vm1117, %v901, 0.0
        %v2276 = vadd.f32 %v2274, %v2275
        %v2277 = vrot.slane %v2276, 4
        %v2278 = vadd.f32 %v2276, %v2277
        %v2279 = vrot.slane %v2278, 2
        %v2280 = vadd.f32 %v2278, %v2279
        %v2281 = vrot.slane %v2280, 1
        %v2282 = vadd.f32 %v2280, %v2281
        %v2283 = vadd.f32 %v902, %v917
        %v2284 = vadd.f32 %v2283, %v932
        %v2285 = vadd.f32 %v2284, %v947
        %v2286 = vadd.f32 %v2285, %v962
        %v2287 = vadd.f32 %v2286, %v977
        %v2288 = vsel %vm1117, %v992, 0.0
        %v2289 = vadd.f32 %v2287, %v2288
        %v2290 = vrot.slane %v2289, 4
        %v2291 = vadd.f32 %v2289, %v2290
        %v2292 = vrot.slane %v2291, 2
        %v2293 = vadd.f32 %v2291, %v2292
        %v2294 = vrot.slane %v2293, 1
        %v2295 = vadd.f32 %v2293, %v2294
        %v2296 = vadd.f32 %v903, %v918
        %v2297 = vadd.f32 %v2296, %v933
        %v2298 = vadd.f32 %v2297, %v948
        %v2299 = vadd.f32 %v2298, %v963
        %v2300 = vadd.f32 %v2299, %v978
        %v2301 = vsel %vm1117, %v993, 0.0
        %v2302 = vadd.f32 %v2300, %v2301
        %v2303 = vrot.slane %v2302, 4
        %v2304 = vadd.f32 %v2302, %v2303
        %v2305 = vrot.slane %v2304, 2
        %v2306 = vadd.f32 %v2304, %v2305
        %v2307 = vrot.slane %v2306, 1
        %v2308 = vadd.f32 %v2306, %v2307
        %v2309 = vadd.f32 %v904, %v919
        %v2310 = vadd.f32 %v2309, %v934
        %v2311 = vadd.f32 %v2310, %v949
        %v2312 = vadd.f32 %v2311, %v964
        %v2313 = vadd.f32 %v2312, %v979
        %v2314 = vsel %vm1117, %v994, 0.0
        %v2315 = vadd.f32 %v2313, %v2314
        %v2316 = vrot.slane %v2315, 4
        %v2317 = vadd.f32 %v2315, %v2316
        %v2318 = vrot.slane %v2317, 2
        %v2319 = vadd.f32 %v2317, %v2318
        %v2320 = vrot.slane %v2319, 1
        %v2321 = vadd.f32 %v2319, %v2320
        %v2322 = vadd.f32 %v905, %v920
        %v2323 = vadd.f32 %v2322, %v935
        %v2324 = vadd.f32 %v2323, %v950
        %v2325 = vadd.f32 %v2324, %v965
        %v2326 = vadd.f32 %v2325, %v980
        %v2327 = vsel %vm1117, %v995, 0.0
        %v2328 = vadd.f32 %v2326, %v2327
        %v2329 = vrot.slane %v2328, 4
        %v2330 = vadd.f32 %v2328, %v2329
        %v2331 = vrot.slane %v2330, 2
        %v2332 = vadd.f32 %v2330, %v2331
        %v2333 = vrot.slane %v2332, 1
        %v2334 = vadd.f32 %v2332, %v2333
        %v2335 = vadd.f32 %v906, %v921
        %v2336 = vadd.f32 %v2335, %v936
        %v2337 = vadd.f32 %v2336, %v951
        %v2338 = vadd.f32 %v2337, %v966
        %v2339 = vadd.f32 %v2338, %v981
        %v2340 = vsel %vm1117, %v996, 0.0
        %v2341 = vadd.f32 %v2339, %v2340
        %v2342 = vrot.slane %v2341, 4
        %v2343 = vadd.f32 %v2341, %v2342
        %v2344 = vrot.slane %v2343, 2
        %v2345 = vadd.f32 %v2343, %v2344
        %v2346 = vrot.slane %v2345, 1
        %v2347 = vadd.f32 %v2345, %v2346
        %v2348 = vadd.f32 %v907, %v922
        %v2349 = vadd.f32 %v2348, %v937
        %v2350 = vadd.f32 %v2349, %v952
        %v2351 = vadd.f32 %v2350, %v967
        %v2352 = vadd.f32 %v2351, %v982
        %v2353 = vsel %vm1117, %v997, 0.0
        %v2354 = vadd.f32 %v2352, %v2353
        %v2355 = vrot.slane %v2354, 4
        %v2356 = vadd.f32 %v2354, %v2355
        %v2357 = vrot.slane %v2356, 2
        %v2358 = vadd.f32 %v2356, %v2357
        %v2359 = vrot.slane %v2358, 1
        %v2360 = vadd.f32 %v2358, %v2359
        %v2361 = vadd.f32 %v908, %v923
        %v2362 = vadd.f32 %v2361, %v938
        %v2363 = vadd.f32 %v2362, %v953
        %v2364 = vadd.f32 %v2363, %v968
        %v2365 = vadd.f32 %v2364, %v983
        %v2366 = vsel %vm1117, %v998, 0.0
        %v2367 = vadd.f32 %v2365, %v2366
        %v2368 = vrot.slane %v2367, 4
        %v2369 = vadd.f32 %v2367, %v2368
        %v2370 = vrot.slane %v2369, 2
        %v2371 = vadd.f32 %v2369, %v2370
        %v2372 = vrot.slane %v2371, 1
        %v2373 = vadd.f32 %v2371, %v2372
        %v2374 = vadd.f32 %v909, %v924
        %v2375 = vadd.f32 %v2374, %v939
        %v2376 = vadd.f32 %v2375, %v954
        %v2377 = vadd.f32 %v2376, %v969
        %v2378 = vadd.f32 %v2377, %v984
        %v2379 = vsel %vm1117, %v999, 0.0
        %v2380 = vadd.f32 %v2378, %v2379
        %v2381 = vrot.slane %v2380, 4
        %v2382 = vadd.f32 %v2380, %v2381
        %v2383 = vrot.slane %v2382, 2
        %v2384 = vadd.f32 %v2382, %v2383
        %v2385 = vrot.slane %v2384, 1
        %v2386 = vadd.f32 %v2384, %v2385
        %v2387 = vadd.f32 %v910, %v925
        %v2388 = vadd.f32 %v2387, %v940
        %v2389 = vadd.f32 %v2388, %v955
        %v2390 = vadd.f32 %v2389, %v970
        %v2391 = vadd.f32 %v2390, %v985
        %v2392 = vsel %vm1117, %v1000, 0.0
        %v2393 = vadd.f32 %v2391, %v2392
        %v2394 = vrot.slane %v2393, 4
        %v2395 = vadd.f32 %v2393, %v2394
        %v2396 = vrot.slane %v2395, 2
        %v2397 = vadd.f32 %v2395, %v2396
        %v2398 = vrot.slane %v2397, 1
        %v2399 = vadd.f32 %v2397, %v2398
        %v2400 = vadd.f32 %v911, %v926
        %v2401 = vadd.f32 %v2400, %v941
        %v2402 = vadd.f32 %v2401, %v956
        %v2403 = vadd.f32 %v2402, %v971
        %v2404 = vadd.f32 %v2403, %v986
        %v2405 = vsel %vm1117, %v1001, 0.0
        %v2406 = vadd.f32 %v2404, %v2405
        %v2407 = vrot.slane %v2406, 4
        %v2408 = vadd.f32 %v2406, %v2407
        %v2409 = vrot.slane %v2408, 2
        %v2410 = vadd.f32 %v2408, %v2409
        %v2411 = vrot.slane %v2410, 1
        %v2412 = vadd.f32 %v2410, %v2411
        %v2413 = vadd.f32 %v912, %v927
        %v2414 = vadd.f32 %v2413, %v942
        %v2415 = vadd.f32 %v2414, %v957
        %v2416 = vadd.f32 %v2415, %v972
        %v2417 = vadd.f32 %v2416, %v987
        %v2418 = vsel %vm1117, %v1002, 0.0
        %v2419 = vadd.f32 %v2417, %v2418
        %v2420 = vrot.slane %v2419, 4
        %v2421 = vadd.f32 %v2419, %v2420
        %v2422 = vrot.slane %v2421, 2
        %v2423 = vadd.f32 %v2421, %v2422
        %v2424 = vrot.slane %v2423, 1
        %v2425 = vadd.f32 %v2423, %v2424
        %v2426 = vadd.f32 %v913, %v928
        %v2427 = vadd.f32 %v2426, %v943
        %v2428 = vadd.f32 %v2427, %v958
        %v2429 = vadd.f32 %v2428, %v973
        %v2430 = vadd.f32 %v2429, %v988
        %v2431 = vsel %vm1117, %v1003, 0.0
        %v2432 = vadd.f32 %v2430, %v2431
        %v2433 = vrot.slane %v2432, 4
        %v2434 = vadd.f32 %v2432, %v2433
        %v2435 = vrot.slane %v2434, 2
        %v2436 = vadd.f32 %v2434, %v2435
        %v2437 = vrot.slane %v2436, 1
        %v2438 = vadd.f32 %v2436, %v2437
        %v2439 = vadd.f32 %v914, %v929
        %v2440 = vadd.f32 %v2439, %v944
        %v2441 = vadd.f32 %v2440, %v959
        %v2442 = vadd.f32 %v2441, %v974
        %v2443 = vadd.f32 %v2442, %v989
        %v2444 = vsel %vm1117, %v1004, 0.0
        %v2445 = vadd.f32 %v2443, %v2444
        %v2446 = vrot.slane %v2445, 4
        %v2447 = vadd.f32 %v2445, %v2446
        %v2448 = vrot.slane %v2447, 2
        %v2449 = vadd.f32 %v2447, %v2448
        %v2450 = vrot.slane %v2449, 1
        %v2451 = vadd.f32 %v2449, %v2450
        %v2452 = vadd.f32 %v915, %v930
        %v2453 = vadd.f32 %v2452, %v945
        %v2454 = vadd.f32 %v2453, %v960
        %v2455 = vadd.f32 %v2454, %v975
        %v2456 = vadd.f32 %v2455, %v990
        %v2457 = vsel %vm1117, %v1005, 0.0
        %v2458 = vadd.f32 %v2456, %v2457
        %v2459 = vrot.slane %v2458, 4
        %v2460 = vadd.f32 %v2458, %v2459
        %v2461 = vrot.slane %v2460, 2
        %v2462 = vadd.f32 %v2460, %v2461
        %v2463 = vrot.slane %v2462, 1
        %v2464 = vadd.f32 %v2462, %v2463
        %v2465 = vadd.f32 %v916, %v931
        %v2466 = vadd.f32 %v2465, %v946
        %v2467 = vadd.f32 %v2466, %v961
        %v2468 = vadd.f32 %v2467, %v976
        %v2469 = vadd.f32 %v2468, %v991
        %v2470 = vsel %vm1117, %v1006, 0.0
        %v2471 = vadd.f32 %v2469, %v2470
        %v2472 = vrot.slane %v2471, 4
        %v2473 = vadd.f32 %v2471, %v2472
        %v2474 = vrot.slane %v2473, 2
        %v2475 = vadd.f32 %v2473, %v2474
        %v2476 = vrot.slane %v2475, 1
        %v2477 = vadd.f32 %v2475, %v2476
        %v2478 = vadd.f32 %v1007, %v1022
        %v2479 = vadd.f32 %v2478, %v1037
        %v2480 = vadd.f32 %v2479, %v1052
        %v2481 = vadd.f32 %v2480, %v1067
        %v2482 = vadd.f32 %v2481, %v1082
        %v2483 = vsel %vm1117, %v1097, 0.0
        %v2484 = vadd.f32 %v2482, %v2483
        %v2485 = vrot.slane %v2484, 4
        %v2486 = vadd.f32 %v2484, %v2485
        %v2487 = vrot.slane %v2486, 2
        %v2488 = vadd.f32 %v2486, %v2487
        %v2489 = vrot.slane %v2488, 1
        %v2490 = vadd.f32 %v2488, %v2489
        %v2491 = vadd.f32 %v1008, %v1023
        %v2492 = vadd.f32 %v2491, %v1038
        %v2493 = vadd.f32 %v2492, %v1053
        %v2494 = vadd.f32 %v2493, %v1068
        %v2495 = vadd.f32 %v2494, %v1083
        %v2496 = vsel %vm1117, %v1098, 0.0
        %v2497 = vadd.f32 %v2495, %v2496
        %v2498 = vrot.slane %v2497, 4
        %v2499 = vadd.f32 %v2497, %v2498
        %v2500 = vrot.slane %v2499, 2
        %v2501 = vadd.f32 %v2499, %v2500
        %v2502 = vrot.slane %v2501, 1
        %v2503 = vadd.f32 %v2501, %v2502
        %v2504 = vadd.f32 %v1009, %v1024
        %v2505 = vadd.f32 %v2504, %v1039
        %v2506 = vadd.f32 %v2505, %v1054
        %v2507 = vadd.f32 %v2506, %v1069
        %v2508 = vadd.f32 %v2507, %v1084
        %v2509 = vsel %vm1117, %v1099, 0.0
        %v2510 = vadd.f32 %v2508, %v2509
        %v2511 = vrot.slane %v2510, 4
        %v2512 = vadd.f32 %v2510, %v2511
        %v2513 = vrot.slane %v2512, 2
        %v2514 = vadd.f32 %v2512, %v2513
        %v2515 = vrot.slane %v2514, 1
        %v2516 = vadd.f32 %v2514, %v2515
        %v2517 = vadd.f32 %v1010, %v1025
        %v2518 = vadd.f32 %v2517, %v1040
        %v2519 = vadd.f32 %v2518, %v1055
        %v2520 = vadd.f32 %v2519, %v1070
        %v2521 = vadd.f32 %v2520, %v1085
        %v2522 = vsel %vm1117, %v1100, 0.0
        %v2523 = vadd.f32 %v2521, %v2522
        %v2524 = vrot.slane %v2523, 4
        %v2525 = vadd.f32 %v2523, %v2524
        %v2526 = vrot.slane %v2525, 2
        %v2527 = vadd.f32 %v2525, %v2526
        %v2528 = vrot.slane %v2527, 1
        %v2529 = vadd.f32 %v2527, %v2528
        %v2530 = vadd.f32 %v1011, %v1026
        %v2531 = vadd.f32 %v2530, %v1041
        %v2532 = vadd.f32 %v2531, %v1056
        %v2533 = vadd.f32 %v2532, %v1071
        %v2534 = vadd.f32 %v2533, %v1086
        %v2535 = vsel %vm1117, %v1101, 0.0
        %v2536 = vadd.f32 %v2534, %v2535
        %v2537 = vrot.slane %v2536, 4
        %v2538 = vadd.f32 %v2536, %v2537
        %v2539 = vrot.slane %v2538, 2
        %v2540 = vadd.f32 %v2538, %v2539
        %v2541 = vrot.slane %v2540, 1
        %v2542 = vadd.f32 %v2540, %v2541
        %v2543 = vadd.f32 %v1012, %v1027
        %v2544 = vadd.f32 %v2543, %v1042
        %v2545 = vadd.f32 %v2544, %v1057
        %v2546 = vadd.f32 %v2545, %v1072
        %v2547 = vadd.f32 %v2546, %v1087
        %v2548 = vsel %vm1117, %v1102, 0.0
        %v2549 = vadd.f32 %v2547, %v2548
        %v2550 = vrot.slane %v2549, 4
        %v2551 = vadd.f32 %v2549, %v2550
        %v2552 = vrot.slane %v2551, 2
        %v2553 = vadd.f32 %v2551, %v2552
        %v2554 = vrot.slane %v2553, 1
        %v2555 = vadd.f32 %v2553, %v2554
        %v2556 = vadd.f32 %v1013, %v1028
        %v2557 = vadd.f32 %v2556, %v1043
        %v2558 = vadd.f32 %v2557, %v1058
        %v2559 = vadd.f32 %v2558, %v1073
        %v2560 = vadd.f32 %v2559, %v1088
        %v2561 = vsel %vm1117, %v1103, 0.0
        %v2562 = vadd.f32 %v2560, %v2561
        %v2563 = vrot.slane %v2562, 4
        %v2564 = vadd.f32 %v2562, %v2563
        %v2565 = vrot.slane %v2564, 2
        %v2566 = vadd.f32 %v2564, %v2565
        %v2567 = vrot.slane %v2566, 1
        %v2568 = vadd.f32 %v2566, %v2567
        %v2569 = vadd.f32 %v1014, %v1029
        %v2570 = vadd.f32 %v2569, %v1044
        %v2571 = vadd.f32 %v2570, %v1059
        %v2572 = vadd.f32 %v2571, %v1074
        %v2573 = vadd.f32 %v2572, %v1089
        %v2574 = vsel %vm1117, %v1104, 0.0
        %v2575 = vadd.f32 %v2573, %v2574
        %v2576 = vrot.slane %v2575, 4
        %v2577 = vadd.f32 %v2575, %v2576
        %v2578 = vrot.slane %v2577, 2
        %v2579 = vadd.f32 %v2577, %v2578
        %v2580 = vrot.slane %v2579, 1
        %v2581 = vadd.f32 %v2579, %v2580
        %v2582 = vadd.f32 %v1015, %v1030
        %v2583 = vadd.f32 %v2582, %v1045
        %v2584 = vadd.f32 %v2583, %v1060
        %v2585 = vadd.f32 %v2584, %v1075
        %v2586 = vadd.f32 %v2585, %v1090
        %v2587 = vsel %vm1117, %v1105, 0.0
        %v2588 = vadd.f32 %v2586, %v2587
        %v2589 = vrot.slane %v2588, 4
        %v2590 = vadd.f32 %v2588, %v2589
        %v2591 = vrot.slane %v2590, 2
        %v2592 = vadd.f32 %v2590, %v2591
        %v2593 = vrot.slane %v2592, 1
        %v2594 = vadd.f32 %v2592, %v2593
        %v2595 = vadd.f32 %v1016, %v1031
        %v2596 = vadd.f32 %v2595, %v1046
        %v2597 = vadd.f32 %v2596, %v1061
        %v2598 = vadd.f32 %v2597, %v1076
        %v2599 = vadd.f32 %v2598, %v1091
        %v2600 = vsel %vm1117, %v1106, 0.0
        %v2601 = vadd.f32 %v2599, %v2600
        %v2602 = vrot.slane %v2601, 4
        %v2603 = vadd.f32 %v2601, %v2602
        %v2604 = vrot.slane %v2603, 2
        %v2605 = vadd.f32 %v2603, %v2604
        %v2606 = vrot.slane %v2605, 1
        %v2607 = vadd.f32 %v2605, %v2606
        %v2608 = vadd.f32 %v1017, %v1032
        %v2609 = vadd.f32 %v2608, %v1047
        %v2610 = vadd.f32 %v2609, %v1062
        %v2611 = vadd.f32 %v2610, %v1077
        %v2612 = vadd.f32 %v2611, %v1092
        %v2613 = vsel %vm1117, %v1107, 0.0
        %v2614 = vadd.f32 %v2612, %v2613
        %v2615 = vrot.slane %v2614, 4
        %v2616 = vadd.f32 %v2614, %v2615
        %v2617 = vrot.slane %v2616, 2
        %v2618 = vadd.f32 %v2616, %v2617
        %v2619 = vrot.slane %v2618, 1
        %v2620 = vadd.f32 %v2618, %v2619
        %v2621 = vadd.f32 %v1018, %v1033
        %v2622 = vadd.f32 %v2621, %v1048
        %v2623 = vadd.f32 %v2622, %v1063
        %v2624 = vadd.f32 %v2623, %v1078
        %v2625 = vadd.f32 %v2624, %v1093
        %v2626 = vsel %vm1117, %v1108, 0.0
        %v2627 = vadd.f32 %v2625, %v2626
        %v2628 = vrot.slane %v2627, 4
        %v2629 = vadd.f32 %v2627, %v2628
        %v2630 = vrot.slane %v2629, 2
        %v2631 = vadd.f32 %v2629, %v2630
        %v2632 = vrot.slane %v2631, 1
        %v2633 = vadd.f32 %v2631, %v2632
        %v2634 = vadd.f32 %v1019, %v1034
        %v2635 = vadd.f32 %v2634, %v1049
        %v2636 = vadd.f32 %v2635, %v1064
        %v2637 = vadd.f32 %v2636, %v1079
        %v2638 = vadd.f32 %v2637, %v1094
        %v2639 = vsel %vm1117, %v1109, 0.0
        %v2640 = vadd.f32 %v2638, %v2639
        %v2641 = vrot.slane %v2640, 4
        %v2642 = vadd.f32 %v2640, %v2641
        %v2643 = vrot.slane %v2642, 2
        %v2644 = vadd.f32 %v2642, %v2643
        %v2645 = vrot.slane %v2644, 1
        %v2646 = vadd.f32 %v2644, %v2645
        %v2647 = vadd.f32 %v1020, %v1035
        %v2648 = vadd.f32 %v2647, %v1050
        %v2649 = vadd.f32 %v2648, %v1065
        %v2650 = vadd.f32 %v2649, %v1080
        %v2651 = vadd.f32 %v2650, %v1095
        %v2652 = vsel %vm1117, %v1110, 0.0
        %v2653 = vadd.f32 %v2651, %v2652
        %v2654 = vrot.slane %v2653, 4
        %v2655 = vadd.f32 %v2653, %v2654
        %v2656 = vrot.slane %v2655, 2
        %v2657 = vadd.f32 %v2655, %v2656
        %v2658 = vrot.slane %v2657, 1
        %v2659 = vadd.f32 %v2657, %v2658
        %v2660 = vadd.f32 %v1021, %v1036
        %v2661 = vadd.f32 %v2660, %v1051
        %v2662 = vadd.f32 %v2661, %v1066
        %v2663 = vadd.f32 %v2662, %v1081
        %v2664 = vadd.f32 %v2663, %v1096
        %v2665 = vsel %vm1117, %v1111, 0.0
        %v2666 = vadd.f32 %v2664, %v2665
        %v2667 = vrot.slane %v2666, 4
        %v2668 = vadd.f32 %v2666, %v2667
        %v2669 = vrot.slane %v2668, 2
        %v2670 = vadd.f32 %v2668, %v2669
        %v2671 = vrot.slane %v2670, 1
        %v2672 = vadd.f32 %v2670, %v2671
        %v2673 = vmul.f32 %v1125, 0.020408163
        %v2674 = vmul.f32 %v1138, 0.020408163
        %v2675 = vmul.f32 %v1151, 0.020408163
        %v2676 = vmul.f32 %v1164, 0.020408163
        %v2677 = vmul.f32 %v1177, 0.020408163
        %v2678 = vmul.f32 %v1190, 0.020408163
        %v2679 = vmul.f32 %v1203, 0.020408163
        %v2680 = vmul.f32 %v1216, 0.020408163
        %v2681 = vmul.f32 %v1229, 0.020408163
        %v2682 = vmul.f32 %v1242, 0.020408163
        %v2683 = vmul.f32 %v1255, 0.020408163
        %v2684 = vmul.f32 %v1268, 0.020408163
        %v2685 = vmul.f32 %v1281, 0.020408163
        %v2686 = vmul.f32 %v1294, 0.020408163
        %v2687 = vmul.f32 %v1307, 0.020408163
        %v2688 = vmul.f32 %v1320, 0.020408163
        %v2689 = vmul.f32 %v1333, 0.020408163
        %v2690 = vmul.f32 %v1346, 0.020408163
        %v2691 = vmul.f32 %v1359, 0.020408163
        %v2692 = vmul.f32 %v1372, 0.020408163
        %v2693 = vmul.f32 %v1385, 0.020408163
        %v2694 = vmul.f32 %v1398, 0.020408163
        %v2695 = vmul.f32 %v1411, 0.020408163
        %v2696 = vmul.f32 %v1424, 0.020408163
        %v2697 = vmul.f32 %v1437, 0.020408163
        %v2698 = vmul.f32 %v1450, 0.020408163
        %v2699 = vmul.f32 %v1463, 0.020408163
        %v2700 = vmul.f32 %v1476, 0.020408163
        %v2701 = vmul.f32 %v1489, 0.020408163
        %v2702 = vmul.f32 %v1502, 0.020408163
        %v2703 = vmul.f32 %v1515, 0.020408163
        %v2704 = vmul.f32 %v1528, 0.020408163
        %v2705 = vmul.f32 %v1541, 0.020408163
        %v2706 = vmul.f32 %v1554, 0.020408163
        %v2707 = vmul.f32 %v1567, 0.020408163
        %v2708 = vmul.f32 %v1580, 0.020408163
        %v2709 = vmul.f32 %v1593, 0.020408163
        %v2710 = vmul.f32 %v1606, 0.020408163
        %v2711 = vmul.f32 %v1619, 0.020408163
        %v2712 = vmul.f32 %v1632, 0.020408163
        %v2713 = vmul.f32 %v1645, 0.020408163
        %v2714 = vmul.f32 %v1658, 0.020408163
        %v2715 = vmul.f32 %v1671, 0.020408163
        %v2716 = vmul.f32 %v1684, 0.020408163
        %v2717 = vmul.f32 %v1697, 0.020408163
        %v2718 = vmul.f32 %v1710, 0.020408163
        %v2719 = vmul.f32 %v1723, 0.020408163
        %v2720 = vmul.f32 %v1736, 0.020408163
        %v2721 = vmul.f32 %v1749, 0.020408163
        %v2722 = vmul.f32 %v1762, 0.020408163
        %v2723 = vmul.f32 %v1775, 0.020408163
        %v2724 = vmul.f32 %v1788, 0.020408163
        %v2725 = vmul.f32 %v1801, 0.020408163
        %v2726 = vmul.f32 %v1814, 0.020408163
        %v2727 = vmul.f32 %v1827, 0.020408163
        %v2728 = vmul.f32 %v1840, 0.020408163
        %v2729 = vmul.f32 %v1853, 0.020408163
        %v2730 = vmul.f32 %v1866, 0.020408163
        %v2731 = vmul.f32 %v1879, 0.020408163
        %v2732 = vmul.f32 %v1892, 0.020408163
        %v2733 = vmul.f32 %v1905, 0.020408163
        %v2734 = vmul.f32 %v1918, 0.020408163
        %v2735 = vmul.f32 %v1931, 0.020408163
        %v2736 = vmul.f32 %v1944, 0.020408163
        %v2737 = vmul.f32 %v1957, 0.020408163
        %v2738 = vmul.f32 %v1970, 0.020408163
        %v2739 = vmul.f32 %v1983, 0.020408163
        %v2740 = vmul.f32 %v1996, 0.020408163
        %v2741 = vmul.f32 %v2009, 0.020408163
        %v2742 = vmul.f32 %v2022, 0.020408163
        %v2743 = vmul.f32 %v2035, 0.020408163
        %v2744 = vmul.f32 %v2048, 0.020408163
        %v2745 = vmul.f32 %v2061, 0.020408163
        %v2746 = vmul.f32 %v2074, 0.020408163
        %v2747 = vmul.f32 %v2087, 0.020408163
        %v2748 = vmul.f32 %v2100, 0.020408163
        %v2749 = vmul.f32 %v2113, 0.020408163
        %v2750 = vmul.f32 %v2126, 0.020408163
        %v2751 = vmul.f32 %v2139, 0.020408163
        %v2752 = vmul.f32 %v2152, 0.020408163
        %v2753 = vmul.f32 %v2165, 0.020408163
        %v2754 = vmul.f32 %v2178, 0.020408163
        %v2755 = vmul.f32 %v2191, 0.020408163
        %v2756 = vmul.f32 %v2204, 0.020408163
        %v2757 = vmul.f32 %v2217, 0.020408163
        %v2758 = vmul.f32 %v2230, 0.020408163
        %v2759 = vmul.f32 %v2243, 0.020408163
        %v2760 = vmul.f32 %v2256, 0.020408163
        %v2761 = vmul.f32 %v2269, 0.020408163
        %v2762 = vmul.f32 %v2282, 0.020408163
        %v2763 = vmul.f32 %v2295, 0.020408163
        %v2764 = vmul.f32 %v2308, 0.020408163
        %v2765 = vmul.f32 %v2321, 0.020408163
        %v2766 = vmul.f32 %v2334, 0.020408163
        %v2767 = vmul.f32 %v2347, 0.020408163
        %v2768 = vmul.f32 %v2360, 0.020408163
        %v2769 = vmul.f32 %v2373, 0.020408163
        %v2770 = vmul.f32 %v2386, 0.020408163
        %v2771 = vmul.f32 %v2399, 0.020408163
        %v2772 = vmul.f32 %v2412, 0.020408163
        %v2773 = vmul.f32 %v2425, 0.020408163
        %v2774 = vmul.f32 %v2438, 0.020408163
        %v2775 = vmul.f32 %v2451, 0.020408163
        %v2776 = vmul.f32 %v2464, 0.020408163
        %v2777 = vmul.f32 %v2477, 0.020408163
        %v2778 = vmul.f32 %v2490, 0.020408163
        %v2779 = vmul.f32 %v2503, 0.020408163
        %v2780 = vmul.f32 %v2516, 0.020408163
        %v2781 = vmul.f32 %v2529, 0.020408163
        %v2782 = vmul.f32 %v2542, 0.020408163
        %v2783 = vmul.f32 %v2555, 0.020408163
        %v2784 = vmul.f32 %v2568, 0.020408163
        %v2785 = vmul.f32 %v2581, 0.020408163
        %v2786 = vmul.f32 %v2594, 0.020408163
        %v2787 = vmul.f32 %v2607, 0.020408163
        %v2788 = vmul.f32 %v2620, 0.020408163
        %v2789 = vmul.f32 %v2633, 0.020408163
        %v2790 = vmul.f32 %v2646, 0.020408163
        %v2791 = vmul.f32 %v2659, 0.020408163
        %v2792 = vmul.f32 %v2672, 0.020408163
        %vm2913 = vcmask 1041409
        %v2914 = vsel %vm2913, %v2688, %v2673
        %vm2915 = vcmask 1042434
        %v2916 = vsel %vm2915, %v2703, %v2914
        %vm2917 = vcmask 1043459
        %v2918 = vsel %vm2917, %v2718, %v2916
        %vm2919 = vcmask 1044484
        %v2920 = vsel %vm2919, %v2733, %v2918
        %vm2921 = vcmask 1045509
        %v2922 = vsel %vm2921, %v2748, %v2920
        %vm2923 = vcmask 1046534
        %v2924 = vsel %vm2923, %v2763, %v2922
        %vm2925 = vcmask 1047559
        %v2926 = vsel %vm2925, %v2778, %v2924
        %v2927 = vsel %vm2913, %v2689, %v2674
        %v2928 = vsel %vm2915, %v2704, %v2927
        %v2929 = vsel %vm2917, %v2719, %v2928
        %v2930 = vsel %vm2919, %v2734, %v2929
        %v2931 = vsel %vm2921, %v2749, %v2930
        %v2932 = vsel %vm2923, %v2764, %v2931
        %v2933 = vsel %vm2925, %v2779, %v2932
        %v2934 = vsel %vm2913, %v2690, %v2675
        %v2935 = vsel %vm2915, %v2705, %v2934
        %v2936 = vsel %vm2917, %v2720, %v2935
        %v2937 = vsel %vm2919, %v2735, %v2936
        %v2938 = vsel %vm2921, %v2750, %v2937
        %v2939 = vsel %vm2923, %v2765, %v2938
        %v2940 = vsel %vm2925, %v2780, %v2939
        %v2941 = vsel %vm2913, %v2691, %v2676
        %v2942 = vsel %vm2915, %v2706, %v2941
        %v2943 = vsel %vm2917, %v2721, %v2942
        %v2944 = vsel %vm2919, %v2736, %v2943
        %v2945 = vsel %vm2921, %v2751, %v2944
        %v2946 = vsel %vm2923, %v2766, %v2945
        %v2947 = vsel %vm2925, %v2781, %v2946
        %v2948 = vsel %vm2913, %v2692, %v2677
        %v2949 = vsel %vm2915, %v2707, %v2948
        %v2950 = vsel %vm2917, %v2722, %v2949
        %v2951 = vsel %vm2919, %v2737, %v2950
        %v2952 = vsel %vm2921, %v2752, %v2951
        %v2953 = vsel %vm2923, %v2767, %v2952
        %v2954 = vsel %vm2925, %v2782, %v2953
        %v2955 = vsel %vm2913, %v2693, %v2678
        %v2956 = vsel %vm2915, %v2708, %v2955
        %v2957 = vsel %vm2917, %v2723, %v2956
        %v2958 = vsel %vm2919, %v2738, %v2957
        %v2959 = vsel %vm2921, %v2753, %v2958
        %v2960 = vsel %vm2923, %v2768, %v2959
        %v2961 = vsel %vm2925, %v2783, %v2960
        %v2962 = vsel %vm2913, %v2694, %v2679
        %v2963 = vsel %vm2915, %v2709, %v2962
        %v2964 = vsel %vm2917, %v2724, %v2963
        %v2965 = vsel %vm2919, %v2739, %v2964
        %v2966 = vsel %vm2921, %v2754, %v2965
        %v2967 = vsel %vm2923, %v2769, %v2966
        %v2968 = vsel %vm2925, %v2784, %v2967
        %v2969 = vsel %vm2913, %v2695, %v2680
        %v2970 = vsel %vm2915, %v2710, %v2969
        %v2971 = vsel %vm2917, %v2725, %v2970
        %v2972 = vsel %vm2919, %v2740, %v2971
        %v2973 = vsel %vm2921, %v2755, %v2972
        %v2974 = vsel %vm2923, %v2770, %v2973
        %v2975 = vsel %vm2925, %v2785, %v2974
        %v2976 = vsel %vm2913, %v2696, %v2681
        %v2977 = vsel %vm2915, %v2711, %v2976
        %v2978 = vsel %vm2917, %v2726, %v2977
        %v2979 = vsel %vm2919, %v2741, %v2978
        %v2980 = vsel %vm2921, %v2756, %v2979
        %v2981 = vsel %vm2923, %v2771, %v2980
        %v2982 = vsel %vm2925, %v2786, %v2981
        %v2983 = vsel %vm2913, %v2697, %v2682
        %v2984 = vsel %vm2915, %v2712, %v2983
        %v2985 = vsel %vm2917, %v2727, %v2984
        %v2986 = vsel %vm2919, %v2742, %v2985
        %v2987 = vsel %vm2921, %v2757, %v2986
        %v2988 = vsel %vm2923, %v2772, %v2987
        %v2989 = vsel %vm2925, %v2787, %v2988
        %v2990 = vsel %vm2913, %v2698, %v2683
        %v2991 = vsel %vm2915, %v2713, %v2990
        %v2992 = vsel %vm2917, %v2728, %v2991
        %v2993 = vsel %vm2919, %v2743, %v2992
        %v2994 = vsel %vm2921, %v2758, %v2993
        %v2995 = vsel %vm2923, %v2773, %v2994
        %v2996 = vsel %vm2925, %v2788, %v2995
        %v2997 = vsel %vm2913, %v2699, %v2684
        %v2998 = vsel %vm2915, %v2714, %v2997
        %v2999 = vsel %vm2917, %v2729, %v2998
        %v3000 = vsel %vm2919, %v2744, %v2999
        %v3001 = vsel %vm2921, %v2759, %v3000
        %v3002 = vsel %vm2923, %v2774, %v3001
        %v3003 = vsel %vm2925, %v2789, %v3002
        %v3004 = vsel %vm2913, %v2700, %v2685
        %v3005 = vsel %vm2915, %v2715, %v3004
        %v3006 = vsel %vm2917, %v2730, %v3005
        %v3007 = vsel %vm2919, %v2745, %v3006
        %v3008 = vsel %vm2921, %v2760, %v3007
        %v3009 = vsel %vm2923, %v2775, %v3008
        %v3010 = vsel %vm2925, %v2790, %v3009
        %v3011 = vsel %vm2913, %v2701, %v2686
        %v3012 = vsel %vm2915, %v2716, %v3011
        %v3013 = vsel %vm2917, %v2731, %v3012
        %v3014 = vsel %vm2919, %v2746, %v3013
        %v3015 = vsel %vm2921, %v2761, %v3014
        %v3016 = vsel %vm2923, %v2776, %v3015
        %v3017 = vsel %vm2925, %v2791, %v3016
        %v3018 = vsel %vm2913, %v2702, %v2687
        %v3019 = vsel %vm2915, %v2717, %v3018
        %v3020 = vsel %vm2917, %v2732, %v3019
        %v3021 = vsel %vm2919, %v2747, %v3020
        %v3022 = vsel %vm2921, %v2762, %v3021
        %v3023 = vsel %vm2923, %v2777, %v3022
        %v3024 = vsel %vm2925, %v2792, %v3023
        %3040 = vst [vmem:[%s256] sm:$0xff] %v2926
        %3041 = vst [vmem:[%s256 + $0x8] sm:$0xff] %v2933
        %3042 = vst [vmem:[%s256 + $0x10] sm:$0xff] %v2940
        %3043 = vst [vmem:[%s256 + $0x18] sm:$0xff] %v2947
        %3044 = vst [vmem:[%s256 + $0x20] sm:$0xff] %v2954
        %3045 = vst [vmem:[%s256 + $0x28] sm:$0xff] %v2961
        %3046 = vst [vmem:[%s256 + $0x30] sm:$0xff] %v2968
        %3047 = vst [vmem:[%s256 + $0x38] sm:$0xff] %v2975
        %3048 = vst [vmem:[%s256 + $0x40] sm:$0xff] %v2982
        %3049 = vst [vmem:[%s256 + $0x48] sm:$0xff] %v2989
        %3050 = vst [vmem:[%s256 + $0x50] sm:$0xff] %v2996
        %3051 = vst [vmem:[%s256 + $0x58] sm:$0xff] %v3003
        %3052 = vst [vmem:[%s256 + $0x60] sm:$0xff] %v3010
        %3053 = vst [vmem:[%s256 + $0x68] sm:$0xff] %v3017
        %3054 = vst [vmem:[%s256 + $0x70] sm:$0xff] %v3024
        %v3055 = vpack.c.bf16 %v2673, %v2673
        %v3056 = vpack.c.bf16 %v2674, %v2674
        %v3057 = vpack.c.bf16 %v2675, %v2675
        %v3058 = vpack.c.bf16 %v2676, %v2676
        %v3059 = vpack.c.bf16 %v2677, %v2677
        %v3060 = vpack.c.bf16 %v2678, %v2678
        %v3061 = vpack.c.bf16 %v2679, %v2679
        %v3062 = vpack.c.bf16 %v2680, %v2680
        %v3063 = vpack.c.bf16 %v2681, %v2681
        %v3064 = vpack.c.bf16 %v2682, %v2682
        %v3065 = vpack.c.bf16 %v2683, %v2683
        %v3066 = vpack.c.bf16 %v2684, %v2684
        %v3067 = vpack.c.bf16 %v2685, %v2685
        %v3068 = vpack.c.bf16 %v2686, %v2686
        %v3069 = vpack.c.bf16 %v2687, %v2687
        %v3070 = vpack.c.bf16 %v2688, %v2688
        %v3071 = vpack.c.bf16 %v2689, %v2689
        %v3072 = vpack.c.bf16 %v2690, %v2690
        %v3073 = vpack.c.bf16 %v2691, %v2691
        %v3074 = vpack.c.bf16 %v2692, %v2692
        %v3075 = vpack.c.bf16 %v2693, %v2693
        %v3076 = vpack.c.bf16 %v2694, %v2694
        %v3077 = vpack.c.bf16 %v2695, %v2695
        %v3078 = vpack.c.bf16 %v2696, %v2696
        %v3079 = vpack.c.bf16 %v2697, %v2697
        %v3080 = vpack.c.bf16 %v2698, %v2698
        %v3081 = vpack.c.bf16 %v2699, %v2699
        %v3082 = vpack.c.bf16 %v2700, %v2700
        %v3083 = vpack.c.bf16 %v2701, %v2701
        %v3084 = vpack.c.bf16 %v2702, %v2702
        %v3085 = vpack.c.bf16 %v2703, %v2703
        %v3086 = vpack.c.bf16 %v2704, %v2704
        %v3087 = vpack.c.bf16 %v2705, %v2705
        %v3088 = vpack.c.bf16 %v2706, %v2706
        %v3089 = vpack.c.bf16 %v2707, %v2707
        %v3090 = vpack.c.bf16 %v2708, %v2708
        %v3091 = vpack.c.bf16 %v2709, %v2709
        %v3092 = vpack.c.bf16 %v2710, %v2710
        %v3093 = vpack.c.bf16 %v2711, %v2711
        %v3094 = vpack.c.bf16 %v2712, %v2712
        %v3095 = vpack.c.bf16 %v2713, %v2713
        %v3096 = vpack.c.bf16 %v2714, %v2714
        %v3097 = vpack.c.bf16 %v2715, %v2715
        %v3098 = vpack.c.bf16 %v2716, %v2716
        %v3099 = vpack.c.bf16 %v2717, %v2717
        %v3100 = vpack.c.bf16 %v2718, %v2718
        %v3101 = vpack.c.bf16 %v2719, %v2719
        %v3102 = vpack.c.bf16 %v2720, %v2720
        %v3103 = vpack.c.bf16 %v2721, %v2721
        %v3104 = vpack.c.bf16 %v2722, %v2722
        %v3105 = vpack.c.bf16 %v2723, %v2723
        %v3106 = vpack.c.bf16 %v2724, %v2724
        %v3107 = vpack.c.bf16 %v2725, %v2725
        %v3108 = vpack.c.bf16 %v2726, %v2726
        %v3109 = vpack.c.bf16 %v2727, %v2727
        %v3110 = vpack.c.bf16 %v2728, %v2728
        %v3111 = vpack.c.bf16 %v2729, %v2729
        %v3112 = vpack.c.bf16 %v2730, %v2730
        %v3113 = vpack.c.bf16 %v2731, %v2731
        %v3114 = vpack.c.bf16 %v2732, %v2732
        %v3115 = vpack.c.bf16 %v2733, %v2733
        %v3116 = vpack.c.bf16 %v2734, %v2734
        %v3117 = vpack.c.bf16 %v2735, %v2735
        %v3118 = vpack.c.bf16 %v2736, %v2736
        %v3119 = vpack.c.bf16 %v2737, %v2737
        %v3120 = vpack.c.bf16 %v2738, %v2738
        %v3121 = vpack.c.bf16 %v2739, %v2739
        %v3122 = vpack.c.bf16 %v2740, %v2740
        %v3123 = vpack.c.bf16 %v2741, %v2741
        %v3124 = vpack.c.bf16 %v2742, %v2742
        %v3125 = vpack.c.bf16 %v2743, %v2743
        %v3126 = vpack.c.bf16 %v2744, %v2744
        %v3127 = vpack.c.bf16 %v2745, %v2745
        %v3128 = vpack.c.bf16 %v2746, %v2746
        %v3129 = vpack.c.bf16 %v2747, %v2747
        %v3130 = vpack.c.bf16 %v2748, %v2748
        %v3131 = vpack.c.bf16 %v2749, %v2749
        %v3132 = vpack.c.bf16 %v2750, %v2750
        %v3133 = vpack.c.bf16 %v2751, %v2751
        %v3134 = vpack.c.bf16 %v2752, %v2752
        %v3135 = vpack.c.bf16 %v2753, %v2753
        %v3136 = vpack.c.bf16 %v2754, %v2754
        %v3137 = vpack.c.bf16 %v2755, %v2755
        %v3138 = vpack.c.bf16 %v2756, %v2756
        %v3139 = vpack.c.bf16 %v2757, %v2757
        %v3140 = vpack.c.bf16 %v2758, %v2758
        %v3141 = vpack.c.bf16 %v2759, %v2759
        %v3142 = vpack.c.bf16 %v2760, %v2760
        %v3143 = vpack.c.bf16 %v2761, %v2761
        %v3144 = vpack.c.bf16 %v2762, %v2762
        %v3145 = vpack.c.bf16 %v2763, %v2763
        %v3146 = vpack.c.bf16 %v2764, %v2764
        %v3147 = vpack.c.bf16 %v2765, %v2765
        %v3148 = vpack.c.bf16 %v2766, %v2766
        %v3149 = vpack.c.bf16 %v2767, %v2767
        %v3150 = vpack.c.bf16 %v2768, %v2768
        %v3151 = vpack.c.bf16 %v2769, %v2769
        %v3152 = vpack.c.bf16 %v2770, %v2770
        %v3153 = vpack.c.bf16 %v2771, %v2771
        %v3154 = vpack.c.bf16 %v2772, %v2772
        %v3155 = vpack.c.bf16 %v2773, %v2773
        %v3156 = vpack.c.bf16 %v2774, %v2774
        %v3157 = vpack.c.bf16 %v2775, %v2775
        %v3158 = vpack.c.bf16 %v2776, %v2776
        %v3159 = vpack.c.bf16 %v2777, %v2777
        %v3160 = vpack.c.bf16 %v2778, %v2778
        %v3161 = vpack.c.bf16 %v2779, %v2779
        %v3162 = vpack.c.bf16 %v2780, %v2780
        %v3163 = vpack.c.bf16 %v2781, %v2781
        %v3164 = vpack.c.bf16 %v2782, %v2782
        %v3165 = vpack.c.bf16 %v2783, %v2783
        %v3166 = vpack.c.bf16 %v2784, %v2784
        %v3167 = vpack.c.bf16 %v2785, %v2785
        %v3168 = vpack.c.bf16 %v2786, %v2786
        %v3169 = vpack.c.bf16 %v2787, %v2787
        %v3170 = vpack.c.bf16 %v2788, %v2788
        %v3171 = vpack.c.bf16 %v2789, %v2789
        %v3172 = vpack.c.bf16 %v2790, %v2790
        %v3173 = vpack.c.bf16 %v2791, %v2791
        %v3174 = vpack.c.bf16 %v2792, %v2792
        %v3175 = vld [vmem:[#allocation5] sm:$0xf]
        %v3176 = vld [vmem:[#allocation5 + $0x4] sm:$0xf]
        %v3177 = vld [vmem:[#allocation5 + $0x8] sm:$0xf]
        %v3178 = vld [vmem:[#allocation5 + $0xc] sm:$0xf]
        %v3179 = vld [vmem:[#allocation5 + $0x10] sm:$0xf]
        %v3180 = vld [vmem:[#allocation5 + $0x14] sm:$0xf]
        %v3181 = vld [vmem:[#allocation5 + $0x18] sm:$0xf]
        %v3182 = vld [vmem:[#allocation5 + $0x1c] sm:$0xf]
        %v3183 = vld [vmem:[#allocation5 + $0x20] sm:$0xf]
        %v3184 = vld [vmem:[#allocation5 + $0x24] sm:$0xf]
        %v3185 = vld [vmem:[#allocation5 + $0x28] sm:$0xf]
        %v3186 = vld [vmem:[#allocation5 + $0x2c] sm:$0xf]
        %v3187 = vld [vmem:[#allocation5 + $0x30] sm:$0xf]
        %v3188 = vld [vmem:[#allocation5 + $0x34] sm:$0xf]
        %v3189 = vld [vmem:[#allocation5 + $0x38] sm:$0xf]
        %v3190 = vld [vmem:[#allocation5 + $0x3c] sm:$0xf]
        %v3191 = vld [vmem:[#allocation5 + $0x40] sm:$0xf]
        %v3192 = vld [vmem:[#allocation5 + $0x44] sm:$0xf]
        %v3193 = vld [vmem:[#allocation5 + $0x48] sm:$0xf]
        %v3194 = vld [vmem:[#allocation5 + $0x4c] sm:$0xf]
        %v3195 = vld [vmem:[#allocation5 + $0x50] sm:$0xf]
        %v3196 = vld [vmem:[#allocation5 + $0x54] sm:$0xf]
        %v3197 = vld [vmem:[#allocation5 + $0x58] sm:$0xf]
        %v3198 = vld [vmem:[#allocation5 + $0x5c] sm:$0xf]
        %v3199 = vld [vmem:[#allocation5 + $0x60] sm:$0xf]
        %v3200 = vld [vmem:[#allocation5 + $0x64] sm:$0xf]
        %v3201 = vld [vmem:[#allocation5 + $0x68] sm:$0xf]
        %v3202 = vld [vmem:[#allocation5 + $0x6c] sm:$0xf]
        %v3203 = vld [vmem:[#allocation5 + $0x70] sm:$0xf]
        %v3204 = vld [vmem:[#allocation5 + $0x74] sm:$0xf]
        %v3205 = vld [vmem:[#allocation5 + $0x78] sm:$0xf]
        %v3206 = vld [vmem:[#allocation5 + $0x7c] sm:$0xf]
        %v3207 = vld [vmem:[#allocation5 + $0x80] sm:$0xf]
        %v3208 = vld [vmem:[#allocation5 + $0x84] sm:$0xf]
        %v3209 = vld [vmem:[#allocation5 + $0x88] sm:$0xf]
        %v3210 = vld [vmem:[#allocation5 + $0x8c] sm:$0xf]
        %v3211 = vld [vmem:[#allocation5 + $0x90] sm:$0xf]
        %v3212 = vld [vmem:[#allocation5 + $0x94] sm:$0xf]
        %v3213 = vld [vmem:[#allocation5 + $0x98] sm:$0xf]
        %v3214 = vld [vmem:[#allocation5 + $0x9c] sm:$0xf]
        %v3215 = vld [vmem:[#allocation5 + $0xa0] sm:$0xf]
        %v3216 = vld [vmem:[#allocation5 + $0xa4] sm:$0xf]
        %v3217 = vld [vmem:[#allocation5 + $0xa8] sm:$0xf]
        %v3218 = vld [vmem:[#allocation5 + $0xac] sm:$0xf]
        %v3219 = vld [vmem:[#allocation5 + $0xb0] sm:$0xf]
        %v3220 = vld [vmem:[#allocation5 + $0xb4] sm:$0xf]
        %v3221 = vld [vmem:[#allocation5 + $0xb8] sm:$0xf]
        %v3222 = vld [vmem:[#allocation5 + $0xbc] sm:$0xf]
        %v3223 = vld [vmem:[#allocation5 + $0xc0] sm:$0xf]
        %v3224 = vld [vmem:[#allocation5 + $0xc4] sm:$0xf]
        %v3225 = vld [vmem:[#allocation5 + $0xc8] sm:$0xf]
        %v3226 = vld [vmem:[#allocation5 + $0xcc] sm:$0xf]
        %v3227 = vld [vmem:[#allocation5 + $0xd0] sm:$0xf]
        %v3228 = vld [vmem:[#allocation5 + $0xd4] sm:$0xf]
        %v3229 = vld [vmem:[#allocation5 + $0xd8] sm:$0xf]
        %v3230 = vld [vmem:[#allocation5 + $0xdc] sm:$0xf]
        %v3231 = vld [vmem:[#allocation5 + $0xe0] sm:$0xf]
        %v3232 = vld [vmem:[#allocation5 + $0xe4] sm:$0xf]
        %v3233 = vld [vmem:[#allocation5 + $0xe8] sm:$0xf]
        %v3234 = vld [vmem:[#allocation5 + $0xec] sm:$0xf]
        %v3235 = vld [vmem:[#allocation5 + $0xf0] sm:$0xf]
        %v3236 = vld [vmem:[#allocation5 + $0xf4] sm:$0xf]
        %v3237 = vld [vmem:[#allocation5 + $0xf8] sm:$0xf]
        %v3238 = vld [vmem:[#allocation5 + $0xfc] sm:$0xf]
        %v3239 = vld [vmem:[#allocation5 + $0x100] sm:$0xf]
        %v3240 = vld [vmem:[#allocation5 + $0x104] sm:$0xf]
        %v3241 = vld [vmem:[#allocation5 + $0x108] sm:$0xf]
        %v3242 = vld [vmem:[#allocation5 + $0x10c] sm:$0xf]
        %v3243 = vld [vmem:[#allocation5 + $0x110] sm:$0xf]
        %v3244 = vld [vmem:[#allocation5 + $0x114] sm:$0xf]
        %v3245 = vld [vmem:[#allocation5 + $0x118] sm:$0xf]
        %v3246 = vld [vmem:[#allocation5 + $0x11c] sm:$0xf]
        %v3247 = vld [vmem:[#allocation5 + $0x120] sm:$0xf]
        %v3248 = vld [vmem:[#allocation5 + $0x124] sm:$0xf]
        %v3249 = vld [vmem:[#allocation5 + $0x128] sm:$0xf]
        %v3250 = vld [vmem:[#allocation5 + $0x12c] sm:$0xf]
        %v3251 = vld [vmem:[#allocation5 + $0x130] sm:$0xf]
        %v3252 = vld [vmem:[#allocation5 + $0x134] sm:$0xf]
        %v3253 = vld [vmem:[#allocation5 + $0x138] sm:$0xf]
        %v3254 = vld [vmem:[#allocation5 + $0x13c] sm:$0xf]
        %v3255 = vld [vmem:[#allocation5 + $0x140] sm:$0xf]
        %v3256 = vld [vmem:[#allocation5 + $0x144] sm:$0xf]
        %v3257 = vld [vmem:[#allocation5 + $0x148] sm:$0xf]
        %v3258 = vld [vmem:[#allocation5 + $0x14c] sm:$0xf]
        %v3259 = vld [vmem:[#allocation5 + $0x150] sm:$0xf]
        %v3260 = vld [vmem:[#allocation5 + $0x154] sm:$0xf]
        %v3261 = vld [vmem:[#allocation5 + $0x158] sm:$0xf]
        %v3262 = vld [vmem:[#allocation5 + $0x15c] sm:$0xf]
        %v3263 = vld [vmem:[#allocation5 + $0x160] sm:$0xf]
        %v3264 = vld [vmem:[#allocation5 + $0x164] sm:$0xf]
        %v3265 = vld [vmem:[#allocation5 + $0x168] sm:$0xf]
        %v3266 = vld [vmem:[#allocation5 + $0x16c] sm:$0xf]
        %v3267 = vld [vmem:[#allocation5 + $0x170] sm:$0xf]
        %v3268 = vld [vmem:[#allocation5 + $0x174] sm:$0xf]
        %v3269 = vld [vmem:[#allocation5 + $0x178] sm:$0xf]
        %v3270 = vld [vmem:[#allocation5 + $0x17c] sm:$0xf]
        %v3271 = vld [vmem:[#allocation5 + $0x180] sm:$0xf]
        %v3272 = vld [vmem:[#allocation5 + $0x184] sm:$0xf]
        %v3273 = vld [vmem:[#allocation5 + $0x188] sm:$0xf]
        %v3274 = vld [vmem:[#allocation5 + $0x18c] sm:$0xf]
        %v3275 = vld [vmem:[#allocation5 + $0x190] sm:$0xf]
        %v3276 = vld [vmem:[#allocation5 + $0x194] sm:$0xf]
        %v3277 = vld [vmem:[#allocation5 + $0x198] sm:$0xf]
        %v3278 = vld [vmem:[#allocation5 + $0x19c] sm:$0xf]
        %v3279 = vld [vmem:[#allocation5 + $0x1a0] sm:$0xf]
        %v3280 = vld [vmem:[#allocation5 + $0x1a4] sm:$0xf]
        %v3281 = vld [vmem:[#allocation5 + $0x1a8] sm:$0xf]
        %v3282 = vld [vmem:[#allocation5 + $0x1ac] sm:$0xf]
        %v3283 = vld [vmem:[#allocation5 + $0x1b0] sm:$0xf]
        %v3284 = vld [vmem:[#allocation5 + $0x1b4] sm:$0xf]
        %v3285 = vld [vmem:[#allocation5 + $0x1b8] sm:$0xf]
        %v3286 = vld [vmem:[#allocation5 + $0x1bc] sm:$0xf]
        %v3287 = vld [vmem:[#allocation5 + $0x1c0] sm:$0xf]
        %v3288 = vld [vmem:[#allocation5 + $0x1c4] sm:$0xf]
        %v3289 = vld [vmem:[#allocation5 + $0x1c8] sm:$0xf]
        %v3290 = vld [vmem:[#allocation5 + $0x1cc] sm:$0xf]
        %v3291 = vld [vmem:[#allocation5 + $0x1d0] sm:$0xf]
        %v3292 = vld [vmem:[#allocation5 + $0x1d4] sm:$0xf]
        %v3293 = vld [vmem:[#allocation5 + $0x1d8] sm:$0xf]
        %v3294 = vld [vmem:[#allocation5 + $0x1dc] sm:$0xf]
        %v3295 = vld [vmem:[#allocation5 + $0x1e0] sm:$0xf]
        %v3296 = vld [vmem:[#allocation5 + $0x1e4] sm:$0xf]
        %v3297 = vld [vmem:[#allocation5 + $0x1e8] sm:$0xf]
        %v3298 = vld [vmem:[#allocation5 + $0x1ec] sm:$0xf]
        %v3299 = vld [vmem:[#allocation5 + $0x1f0] sm:$0xf]
        %v3300 = vld [vmem:[#allocation5 + $0x1f4] sm:$0xf]
        %v3301 = vld [vmem:[#allocation5 + $0x1f8] sm:$0xf]
        %v3302 = vld [vmem:[#allocation5 + $0x1fc] sm:$0xf]
        %v3303 = vld [vmem:[#allocation5 + $0x200] sm:$0xf]
        %v3304 = vld [vmem:[#allocation5 + $0x204] sm:$0xf]
        %v3305 = vld [vmem:[#allocation5 + $0x208] sm:$0xf]
        %v3306 = vld [vmem:[#allocation5 + $0x20c] sm:$0xf]
        %v3307 = vld [vmem:[#allocation5 + $0x210] sm:$0xf]
        %v3308 = vld [vmem:[#allocation5 + $0x214] sm:$0xf]
        %v3309 = vld [vmem:[#allocation5 + $0x218] sm:$0xf]
        %v3310 = vld [vmem:[#allocation5 + $0x21c] sm:$0xf]
        %v3311 = vld [vmem:[#allocation5 + $0x220] sm:$0xf]
        %v3312 = vld [vmem:[#allocation5 + $0x224] sm:$0xf]
        %v3313 = vld [vmem:[#allocation5 + $0x228] sm:$0xf]
        %v3314 = vld [vmem:[#allocation5 + $0x22c] sm:$0xf]
        %v3315 = vld [vmem:[#allocation5 + $0x230] sm:$0xf]
        %v3316 = vld [vmem:[#allocation5 + $0x234] sm:$0xf]
        %v3317 = vld [vmem:[#allocation5 + $0x238] sm:$0xf]
        %v3318 = vld [vmem:[#allocation5 + $0x23c] sm:$0xf]
        %v3319 = vld [vmem:[#allocation5 + $0x240] sm:$0xf]
        %v3320 = vld [vmem:[#allocation5 + $0x244] sm:$0xf]
        %v3321 = vld [vmem:[#allocation5 + $0x248] sm:$0xf]
        %v3322 = vld [vmem:[#allocation5 + $0x24c] sm:$0xf]
        %v3323 = vld [vmem:[#allocation5 + $0x250] sm:$0xf]
        %v3324 = vld [vmem:[#allocation5 + $0x254] sm:$0xf]
        %v3325 = vld [vmem:[#allocation5 + $0x258] sm:$0xf]
        %v3326 = vld [vmem:[#allocation5 + $0x25c] sm:$0xf]
        %v3327 = vld [vmem:[#allocation5 + $0x260] sm:$0xf]
        %v3328 = vld [vmem:[#allocation5 + $0x264] sm:$0xf]
        %v3329 = vld [vmem:[#allocation5 + $0x268] sm:$0xf]
        %v3330 = vld [vmem:[#allocation5 + $0x26c] sm:$0xf]
        %v3331 = vld [vmem:[#allocation5 + $0x270] sm:$0xf]
        %v3332 = vld [vmem:[#allocation5 + $0x274] sm:$0xf]
        %v3333 = vld [vmem:[#allocation5 + $0x278] sm:$0xf]
        %v3334 = vld [vmem:[#allocation5 + $0x27c] sm:$0xf]
        %v3335 = vld [vmem:[#allocation5 + $0x280] sm:$0xf]
        %v3336 = vld [vmem:[#allocation5 + $0x284] sm:$0xf]
        %v3337 = vld [vmem:[#allocation5 + $0x288] sm:$0xf]
        %v3338 = vld [vmem:[#allocation5 + $0x28c] sm:$0xf]
        %v3339 = vld [vmem:[#allocation5 + $0x290] sm:$0xf]
        %v3340 = vld [vmem:[#allocation5 + $0x294] sm:$0xf]
        %v3341 = vld [vmem:[#allocation5 + $0x298] sm:$0xf]
        %v3342 = vld [vmem:[#allocation5 + $0x29c] sm:$0xf]
        %v3343 = vld [vmem:[#allocation5 + $0x2a0] sm:$0xf]
        %v3344 = vld [vmem:[#allocation5 + $0x2a4] sm:$0xf]
        %v3345 = vld [vmem:[#allocation5 + $0x2a8] sm:$0xf]
        %v3346 = vld [vmem:[#allocation5 + $0x2ac] sm:$0xf]
        %v3347 = vld [vmem:[#allocation5 + $0x2b0] sm:$0xf]
        %v3348 = vld [vmem:[#allocation5 + $0x2b4] sm:$0xf]
        %v3349 = vld [vmem:[#allocation5 + $0x2b8] sm:$0xf]
        %v3350 = vld [vmem:[#allocation5 + $0x2bc] sm:$0xf]
        %v3351 = vld [vmem:[#allocation5 + $0x2c0] sm:$0xf]
        %v3352 = vld [vmem:[#allocation5 + $0x2c4] sm:$0xf]
        %v3353 = vld [vmem:[#allocation5 + $0x2c8] sm:$0xf]
        %v3354 = vld [vmem:[#allocation5 + $0x2cc] sm:$0xf]
        %v3355 = vld [vmem:[#allocation5 + $0x2d0] sm:$0xf]
        %v3356 = vld [vmem:[#allocation5 + $0x2d4] sm:$0xf]
        %v3357 = vld [vmem:[#allocation5 + $0x2d8] sm:$0xf]
        %v3358 = vld [vmem:[#allocation5 + $0x2dc] sm:$0xf]
        %v3359 = vld [vmem:[#allocation5 + $0x2e0] sm:$0xf]
        %v3360 = vld [vmem:[#allocation5 + $0x2e4] sm:$0xf]
        %v3361 = vld [vmem:[#allocation5 + $0x2e8] sm:$0xf]
        %v3362 = vld [vmem:[#allocation5 + $0x2ec] sm:$0xf]
        %v3363 = vld [vmem:[#allocation5 + $0x2f0] sm:$0xf]
        %v3364 = vld [vmem:[#allocation5 + $0x2f4] sm:$0xf]
        %v3365 = vld [vmem:[#allocation5 + $0x2f8] sm:$0xf]
        %v3366 = vld [vmem:[#allocation5 + $0x2fc] sm:$0xf]
        %v3367 = vld [vmem:[#allocation5 + $0x300] sm:$0xf]
        %v3368 = vld [vmem:[#allocation5 + $0x304] sm:$0xf]
        %v3369 = vld [vmem:[#allocation5 + $0x308] sm:$0xf]
        %v3370 = vld [vmem:[#allocation5 + $0x30c] sm:$0xf]
        %v3371 = vld [vmem:[#allocation5 + $0x310] sm:$0xf]
        %v3372 = vld [vmem:[#allocation5 + $0x314] sm:$0xf]
        %v3373 = vld [vmem:[#allocation5 + $0x318] sm:$0xf]
        %v3374 = vld [vmem:[#allocation5 + $0x31c] sm:$0xf]
        %v3375 = vld [vmem:[#allocation5 + $0x320] sm:$0xf]
        %v3376 = vld [vmem:[#allocation5 + $0x324] sm:$0xf]
        %v3377 = vld [vmem:[#allocation5 + $0x328] sm:$0xf]
        %v3378 = vld [vmem:[#allocation5 + $0x32c] sm:$0xf]
        %v3379 = vld [vmem:[#allocation5 + $0x330] sm:$0xf]
        %v3380 = vld [vmem:[#allocation5 + $0x334] sm:$0xf]
        %v3381 = vld [vmem:[#allocation5 + $0x338] sm:$0xf]
        %v3382 = vld [vmem:[#allocation5 + $0x33c] sm:$0xf]
        %v3383 = vld [vmem:[#allocation5 + $0x340] sm:$0xf]
        %v3384 = vld [vmem:[#allocation5 + $0x344] sm:$0xf]
        %v3385 = vld [vmem:[#allocation5 + $0x348] sm:$0xf]
        %v3386 = vld [vmem:[#allocation5 + $0x34c] sm:$0xf]
        %v3387 = vld [vmem:[#allocation5 + $0x350] sm:$0xf]
        %v3388 = vld [vmem:[#allocation5 + $0x354] sm:$0xf]
        %v3389 = vld [vmem:[#allocation5 + $0x358] sm:$0xf]
        %v3390 = vld [vmem:[#allocation5 + $0x35c] sm:$0xf]
        %v3391 = vld [vmem:[#allocation5 + $0x360] sm:$0xf]
        %v3392 = vld [vmem:[#allocation5 + $0x364] sm:$0xf]
        %v3393 = vld [vmem:[#allocation5 + $0x368] sm:$0xf]
        %v3394 = vld [vmem:[#allocation5 + $0x36c] sm:$0xf]
        %v3395 = vld [vmem:[#allocation5 + $0x370] sm:$0xf]
        %v3396 = vld [vmem:[#allocation5 + $0x374] sm:$0xf]
        %v3397 = vld [vmem:[#allocation5 + $0x378] sm:$0xf]
        %v3398 = vld [vmem:[#allocation5 + $0x37c] sm:$0xf]
        %v3399 = vld [vmem:[#allocation5 + $0x380] sm:$0xf]
        %v3400 = vld [vmem:[#allocation5 + $0x384] sm:$0xf]
        %v3401 = vld [vmem:[#allocation5 + $0x388] sm:$0xf]
        %v3402 = vld [vmem:[#allocation5 + $0x38c] sm:$0xf]
        %v3403 = vld [vmem:[#allocation5 + $0x390] sm:$0xf]
        %v3404 = vld [vmem:[#allocation5 + $0x394] sm:$0xf]
        %v3405 = vld [vmem:[#allocation5 + $0x398] sm:$0xf]
        %v3406 = vld [vmem:[#allocation5 + $0x39c] sm:$0xf]
        %v3407 = vld [vmem:[#allocation5 + $0x3a0] sm:$0xf]
        %v3408 = vld [vmem:[#allocation5 + $0x3a4] sm:$0xf]
        %v3409 = vld [vmem:[#allocation5 + $0x3a8] sm:$0xf]
        %v3410 = vld [vmem:[#allocation5 + $0x3ac] sm:$0xf]
        %v3411 = vld [vmem:[#allocation5 + $0x3b0] sm:$0xf]
        %v3412 = vld [vmem:[#allocation5 + $0x3b4] sm:$0xf]
        %v3413 = vld [vmem:[#allocation5 + $0x3b8] sm:$0xf]
        %v3414 = vld [vmem:[#allocation5 + $0x3bc] sm:$0xf]
        %v3415 = vld [vmem:[#allocation7] sm:$0x1]
        %v3417 = vlaneseq
        %v3418 = vshrl.u32 %v3417, 7
        %v3419 = vsub.s32 0, %v3418
        %v3420 = vrot.slane %v3415, %v3419
        %v3542 = vunpack.c.l.b16 %v3055
        %v3543 = vunpack.c.l.b16 %v3056
        %v3544 = vunpack.c.l.b16 %v3057
        %v3545 = vunpack.c.l.b16 %v3058
        %v3546 = vunpack.c.l.b16 %v3059
        %v3547 = vunpack.c.l.b16 %v3060
        %v3548 = vunpack.c.l.b16 %v3061
        %v3549 = vunpack.c.l.b16 %v3062
        %v3550 = vunpack.c.l.b16 %v3063
        %v3551 = vunpack.c.l.b16 %v3064
        %v3552 = vunpack.c.l.b16 %v3065
        %v3553 = vunpack.c.l.b16 %v3066
        %v3554 = vunpack.c.l.b16 %v3067
        %v3555 = vunpack.c.l.b16 %v3068
        %v3556 = vunpack.c.l.b16 %v3069
        %v3557 = vunpack.c.l.b16 %v3070
        %v3558 = vunpack.c.l.b16 %v3071
        %v3559 = vunpack.c.l.b16 %v3072
        %v3560 = vunpack.c.l.b16 %v3073
        %v3561 = vunpack.c.l.b16 %v3074
        %v3562 = vunpack.c.l.b16 %v3075
        %v3563 = vunpack.c.l.b16 %v3076
        %v3564 = vunpack.c.l.b16 %v3077
        %v3565 = vunpack.c.l.b16 %v3078
        %v3566 = vunpack.c.l.b16 %v3079
        %v3567 = vunpack.c.l.b16 %v3080
        %v3568 = vunpack.c.l.b16 %v3081
        %v3569 = vunpack.c.l.b16 %v3082
        %v3570 = vunpack.c.l.b16 %v3083
        %v3571 = vunpack.c.l.b16 %v3084
        %v3572 = vunpack.c.l.b16 %v3085
        %v3573 = vunpack.c.l.b16 %v3086
        %v3574 = vunpack.c.l.b16 %v3087
        %v3575 = vunpack.c.l.b16 %v3088
        %v3576 = vunpack.c.l.b16 %v3089
        %v3577 = vunpack.c.l.b16 %v3090
        %v3578 = vunpack.c.l.b16 %v3091
        %v3579 = vunpack.c.l.b16 %v3092
        %v3580 = vunpack.c.l.b16 %v3093
        %v3581 = vunpack.c.l.b16 %v3094
        %v3582 = vunpack.c.l.b16 %v3095
        %v3583 = vunpack.c.l.b16 %v3096
        %v3584 = vunpack.c.l.b16 %v3097
        %v3585 = vunpack.c.l.b16 %v3098
        %v3586 = vunpack.c.l.b16 %v3099
        %v3587 = vunpack.c.l.b16 %v3100
        %v3588 = vunpack.c.l.b16 %v3101
        %v3589 = vunpack.c.l.b16 %v3102
        %v3590 = vunpack.c.l.b16 %v3103
        %v3591 = vunpack.c.l.b16 %v3104
        %v3592 = vunpack.c.l.b16 %v3105
        %v3593 = vunpack.c.l.b16 %v3106
        %v3594 = vunpack.c.l.b16 %v3107
        %v3595 = vunpack.c.l.b16 %v3108
        %v3596 = vunpack.c.l.b16 %v3109
        %v3597 = vunpack.c.l.b16 %v3110
        %v3598 = vunpack.c.l.b16 %v3111
        %v3599 = vunpack.c.l.b16 %v3112
        %v3600 = vunpack.c.l.b16 %v3113
        %v3601 = vunpack.c.l.b16 %v3114
        %v3602 = vunpack.c.l.b16 %v3115
        %v3603 = vunpack.c.l.b16 %v3116
        %v3604 = vunpack.c.l.b16 %v3117
        %v3605 = vunpack.c.l.b16 %v3118
        %v3606 = vunpack.c.l.b16 %v3119
        %v3607 = vunpack.c.l.b16 %v3120
        %v3608 = vunpack.c.l.b16 %v3121
        %v3609 = vunpack.c.l.b16 %v3122
        %v3610 = vunpack.c.l.b16 %v3123
        %v3611 = vunpack.c.l.b16 %v3124
        %v3612 = vunpack.c.l.b16 %v3125
        %v3613 = vunpack.c.l.b16 %v3126
        %v3614 = vunpack.c.l.b16 %v3127
        %v3615 = vunpack.c.l.b16 %v3128
        %v3616 = vunpack.c.l.b16 %v3129
        %v3617 = vunpack.c.l.b16 %v3130
        %v3618 = vunpack.c.l.b16 %v3131
        %v3619 = vunpack.c.l.b16 %v3132
        %v3620 = vunpack.c.l.b16 %v3133
        %v3621 = vunpack.c.l.b16 %v3134
        %v3622 = vunpack.c.l.b16 %v3135
        %v3623 = vunpack.c.l.b16 %v3136
        %v3624 = vunpack.c.l.b16 %v3137
        %v3625 = vunpack.c.l.b16 %v3138
        %v3626 = vunpack.c.l.b16 %v3139
        %v3627 = vunpack.c.l.b16 %v3140
        %v3628 = vunpack.c.l.b16 %v3141
        %v3629 = vunpack.c.l.b16 %v3142
        %v3630 = vunpack.c.l.b16 %v3143
        %v3631 = vunpack.c.l.b16 %v3144
        %v3632 = vunpack.c.l.b16 %v3145
        %v3633 = vunpack.c.l.b16 %v3146
        %v3634 = vunpack.c.l.b16 %v3147
        %v3635 = vunpack.c.l.b16 %v3148
        %v3636 = vunpack.c.l.b16 %v3149
        %v3637 = vunpack.c.l.b16 %v3150
        %v3638 = vunpack.c.l.b16 %v3151
        %v3639 = vunpack.c.l.b16 %v3152
        %v3640 = vunpack.c.l.b16 %v3153
        %v3641 = vunpack.c.l.b16 %v3154
        %v3642 = vunpack.c.l.b16 %v3155
        %v3643 = vunpack.c.l.b16 %v3156
        %v3644 = vunpack.c.l.b16 %v3157
        %v3645 = vunpack.c.l.b16 %v3158
        %v3646 = vunpack.c.l.b16 %v3159
        %v3647 = vunpack.c.l.b16 %v3160
        %v3648 = vunpack.c.l.b16 %v3161
        %v3649 = vunpack.c.l.b16 %v3162
        %v3650 = vunpack.c.l.b16 %v3163
        %v3651 = vunpack.c.l.b16 %v3164
        %v3652 = vunpack.c.l.b16 %v3165
        %v3653 = vunpack.c.l.b16 %v3166
        %v3654 = vunpack.c.l.b16 %v3167
        %v3655 = vunpack.c.l.b16 %v3168
        %v3656 = vunpack.c.l.b16 %v3169
        %v3657 = vunpack.c.l.b16 %v3170
        %v3658 = vunpack.c.l.b16 %v3171
        %v3659 = vunpack.c.l.b16 %v3172
        %v3660 = vunpack.c.l.b16 %v3173
        %v3661 = vunpack.c.l.b16 %v3174
        %v3662 = vsel %vm2913, %v3557, %v3542
        %v3663 = vsel %vm2915, %v3572, %v3662
        %v3664 = vsel %vm2917, %v3587, %v3663
        %v3665 = vsel %vm2919, %v3602, %v3664
        %v3666 = vsel %vm2921, %v3617, %v3665
        %v3667 = vsel %vm2923, %v3632, %v3666
        %v3668 = vsel %vm2925, %v3647, %v3667
        %v3669 = vsel %vm2913, %v3558, %v3543
        %v3670 = vsel %vm2915, %v3573, %v3669
        %v3671 = vsel %vm2917, %v3588, %v3670
        %v3672 = vsel %vm2919, %v3603, %v3671
        %v3673 = vsel %vm2921, %v3618, %v3672
        %v3674 = vsel %vm2923, %v3633, %v3673
        %v3675 = vsel %vm2925, %v3648, %v3674
        %v3676 = vsel %vm2913, %v3559, %v3544
        %v3677 = vsel %vm2915, %v3574, %v3676
        %v3678 = vsel %vm2917, %v3589, %v3677
        %v3679 = vsel %vm2919, %v3604, %v3678
        %v3680 = vsel %vm2921, %v3619, %v3679
        %v3681 = vsel %vm2923, %v3634, %v3680
        %v3682 = vsel %vm2925, %v3649, %v3681
        %v3683 = vsel %vm2913, %v3560, %v3545
        %v3684 = vsel %vm2915, %v3575, %v3683
        %v3685 = vsel %vm2917, %v3590, %v3684
        %v3686 = vsel %vm2919, %v3605, %v3685
        %v3687 = vsel %vm2921, %v3620, %v3686
        %v3688 = vsel %vm2923, %v3635, %v3687
        %v3689 = vsel %vm2925, %v3650, %v3688
        %v3690 = vsel %vm2913, %v3561, %v3546
        %v3691 = vsel %vm2915, %v3576, %v3690
        %v3692 = vsel %vm2917, %v3591, %v3691
        %v3693 = vsel %vm2919, %v3606, %v3692
        %v3694 = vsel %vm2921, %v3621, %v3693
        %v3695 = vsel %vm2923, %v3636, %v3694
        %v3696 = vsel %vm2925, %v3651, %v3695
        %v3697 = vsel %vm2913, %v3562, %v3547
        %v3698 = vsel %vm2915, %v3577, %v3697
        %v3699 = vsel %vm2917, %v3592, %v3698
        %v3700 = vsel %vm2919, %v3607, %v3699
        %v3701 = vsel %vm2921, %v3622, %v3700
        %v3702 = vsel %vm2923, %v3637, %v3701
        %v3703 = vsel %vm2925, %v3652, %v3702
        %v3704 = vsel %vm2913, %v3563, %v3548
        %v3705 = vsel %vm2915, %v3578, %v3704
        %v3706 = vsel %vm2917, %v3593, %v3705
        %v3707 = vsel %vm2919, %v3608, %v3706
        %v3708 = vsel %vm2921, %v3623, %v3707
        %v3709 = vsel %vm2923, %v3638, %v3708
        %v3710 = vsel %vm2925, %v3653, %v3709
        %v3711 = vsel %vm2913, %v3564, %v3549
        %v3712 = vsel %vm2915, %v3579, %v3711
        %v3713 = vsel %vm2917, %v3594, %v3712
        %v3714 = vsel %vm2919, %v3609, %v3713
        %v3715 = vsel %vm2921, %v3624, %v3714
        %v3716 = vsel %vm2923, %v3639, %v3715
        %v3717 = vsel %vm2925, %v3654, %v3716
        %v3718 = vsel %vm2913, %v3565, %v3550
        %v3719 = vsel %vm2915, %v3580, %v3718
        %v3720 = vsel %vm2917, %v3595, %v3719
        %v3721 = vsel %vm2919, %v3610, %v3720
        %v3722 = vsel %vm2921, %v3625, %v3721
        %v3723 = vsel %vm2923, %v3640, %v3722
        %v3724 = vsel %vm2925, %v3655, %v3723
        %v3725 = vsel %vm2913, %v3566, %v3551
        %v3726 = vsel %vm2915, %v3581, %v3725
        %v3727 = vsel %vm2917, %v3596, %v3726
        %v3728 = vsel %vm2919, %v3611, %v3727
        %v3729 = vsel %vm2921, %v3626, %v3728
        %v3730 = vsel %vm2923, %v3641, %v3729
        %v3731 = vsel %vm2925, %v3656, %v3730
        %v3732 = vsel %vm2913, %v3567, %v3552
        %v3733 = vsel %vm2915, %v3582, %v3732
        %v3734 = vsel %vm2917, %v3597, %v3733
        %v3735 = vsel %vm2919, %v3612, %v3734
        %v3736 = vsel %vm2921, %v3627, %v3735
        %v3737 = vsel %vm2923, %v3642, %v3736
        %v3738 = vsel %vm2925, %v3657, %v3737
        %v3739 = vsel %vm2913, %v3568, %v3553
        %v3740 = vsel %vm2915, %v3583, %v3739
        %v3741 = vsel %vm2917, %v3598, %v3740
        %v3742 = vsel %vm2919, %v3613, %v3741
        %v3743 = vsel %vm2921, %v3628, %v3742
        %v3744 = vsel %vm2923, %v3643, %v3743
        %v3745 = vsel %vm2925, %v3658, %v3744
        %v3746 = vsel %vm2913, %v3569, %v3554
        %v3747 = vsel %vm2915, %v3584, %v3746
        %v3748 = vsel %vm2917, %v3599, %v3747
        %v3749 = vsel %vm2919, %v3614, %v3748
        %v3750 = vsel %vm2921, %v3629, %v3749
        %v3751 = vsel %vm2923, %v3644, %v3750
        %v3752 = vsel %vm2925, %v3659, %v3751
        %v3753 = vsel %vm2913, %v3570, %v3555
        %v3754 = vsel %vm2915, %v3585, %v3753
        %v3755 = vsel %vm2917, %v3600, %v3754
        %v3756 = vsel %vm2919, %v3615, %v3755
        %v3757 = vsel %vm2921, %v3630, %v3756
        %v3758 = vsel %vm2923, %v3645, %v3757
        %v3759 = vsel %vm2925, %v3660, %v3758
        %v3760 = vsel %vm2913, %v3571, %v3556
        %v3761 = vsel %vm2915, %v3586, %v3760
        %v3762 = vsel %vm2917, %v3601, %v3761
        %v3763 = vsel %vm2919, %v3616, %v3762
        %v3764 = vsel %vm2921, %v3631, %v3763
        %v3765 = vsel %vm2923, %v3646, %v3764
        %v3766 = vsel %vm2925, %v3661, %v3765
        %v3767 = vpack.c.b16 %v3668, %v3668
        %v3768 = vpack.c.b16 %v3675, %v3675
        %v3769 = vpack.c.b16 %v3682, %v3682
        %v3770 = vpack.c.b16 %v3689, %v3689
        %v3771 = vpack.c.b16 %v3696, %v3696
        %v3772 = vpack.c.b16 %v3703, %v3703
        %v3773 = vpack.c.b16 %v3710, %v3710
        %v3774 = vpack.c.b16 %v3717, %v3717
        %v3775 = vpack.c.b16 %v3724, %v3724
        %v3776 = vpack.c.b16 %v3731, %v3731
        %v3777 = vpack.c.b16 %v3738, %v3738
        %v3778 = vpack.c.b16 %v3745, %v3745
        %v3779 = vpack.c.b16 %v3752, %v3752
        %v3780 = vpack.c.b16 %v3759, %v3759
        %v3781 = vpack.c.b16 %v3766, %v3766
        %v4037 = vunpack.c.l.b16 %v3175
        %v4038 = vunpack.c.l.b16 %v3176
        %v4039 = vunpack.c.l.b16 %v3177
        %v4040 = vunpack.c.l.b16 %v3178
        %v4041 = vunpack.c.l.b16 %v3179
        %v4042 = vunpack.c.l.b16 %v3180
        %v4043 = vunpack.c.l.b16 %v3181
        %v4044 = vunpack.c.l.b16 %v3182
        %v4045 = vunpack.c.l.b16 %v3183
        %v4046 = vunpack.c.l.b16 %v3184
        %v4047 = vunpack.c.l.b16 %v3185
        %v4048 = vunpack.c.l.b16 %v3186
        %v4049 = vunpack.c.l.b16 %v3187
        %v4050 = vunpack.c.l.b16 %v3188
        %v4051 = vunpack.c.l.b16 %v3189
        %v4052 = vunpack.c.l.b16 %v3190
        %v4053 = vunpack.c.l.b16 %v3191
        %v4054 = vunpack.c.l.b16 %v3192
        %v4055 = vunpack.c.l.b16 %v3193
        %v4056 = vunpack.c.l.b16 %v3194
        %v4057 = vunpack.c.l.b16 %v3195
        %v4058 = vunpack.c.l.b16 %v3196
        %v4059 = vunpack.c.l.b16 %v3197
        %v4060 = vunpack.c.l.b16 %v3198
        %v4061 = vunpack.c.l.b16 %v3199
        %v4062 = vunpack.c.l.b16 %v3200
        %v4063 = vunpack.c.l.b16 %v3201
        %v4064 = vunpack.c.l.b16 %v3202
        %v4065 = vunpack.c.l.b16 %v3203
        %v4066 = vunpack.c.l.b16 %v3204
        %v4067 = vunpack.c.l.b16 %v3205
        %v4068 = vunpack.c.l.b16 %v3206
        %v4069 = vunpack.c.l.b16 %v3207
        %v4070 = vunpack.c.l.b16 %v3208
        %v4071 = vunpack.c.l.b16 %v3209
        %v4072 = vunpack.c.l.b16 %v3210
        %v4073 = vunpack.c.l.b16 %v3211
        %v4074 = vunpack.c.l.b16 %v3212
        %v4075 = vunpack.c.l.b16 %v3213
        %v4076 = vunpack.c.l.b16 %v3214
        %v4077 = vunpack.c.l.b16 %v3215
        %v4078 = vunpack.c.l.b16 %v3216
        %v4079 = vunpack.c.l.b16 %v3217
        %v4080 = vunpack.c.l.b16 %v3218
        %v4081 = vunpack.c.l.b16 %v3219
        %v4082 = vunpack.c.l.b16 %v3220
        %v4083 = vunpack.c.l.b16 %v3221
        %v4084 = vunpack.c.l.b16 %v3222
        %v4085 = vunpack.c.l.b16 %v3223
        %v4086 = vunpack.c.l.b16 %v3224
        %v4087 = vunpack.c.l.b16 %v3225
        %v4088 = vunpack.c.l.b16 %v3226
        %v4089 = vunpack.c.l.b16 %v3227
        %v4090 = vunpack.c.l.b16 %v3228
        %v4091 = vunpack.c.l.b16 %v3229
        %v4092 = vunpack.c.l.b16 %v3230
        %v4093 = vunpack.c.l.b16 %v3231
        %v4094 = vunpack.c.l.b16 %v3232
        %v4095 = vunpack.c.l.b16 %v3233
        %v4096 = vunpack.c.l.b16 %v3234
        %v4097 = vunpack.c.l.b16 %v3235
        %v4098 = vunpack.c.l.b16 %v3236
        %v4099 = vunpack.c.l.b16 %v3237
        %v4100 = vunpack.c.l.b16 %v3238
        %v4101 = vunpack.c.l.b16 %v3239
        %v4102 = vunpack.c.l.b16 %v3240
        %v4103 = vunpack.c.l.b16 %v3241
        %v4104 = vunpack.c.l.b16 %v3242
        %v4105 = vunpack.c.l.b16 %v3243
        %v4106 = vunpack.c.l.b16 %v3244
        %v4107 = vunpack.c.l.b16 %v3245
        %v4108 = vunpack.c.l.b16 %v3246
        %v4109 = vunpack.c.l.b16 %v3247
        %v4110 = vunpack.c.l.b16 %v3248
        %v4111 = vunpack.c.l.b16 %v3249
        %v4112 = vunpack.c.l.b16 %v3250
        %v4113 = vunpack.c.l.b16 %v3251
        %v4114 = vunpack.c.l.b16 %v3252
        %v4115 = vunpack.c.l.b16 %v3253
        %v4116 = vunpack.c.l.b16 %v3254
        %v4117 = vunpack.c.l.b16 %v3255
        %v4118 = vunpack.c.l.b16 %v3256
        %v4119 = vunpack.c.l.b16 %v3257
        %v4120 = vunpack.c.l.b16 %v3258
        %v4121 = vunpack.c.l.b16 %v3259
        %v4122 = vunpack.c.l.b16 %v3260
        %v4123 = vunpack.c.l.b16 %v3261
        %v4124 = vunpack.c.l.b16 %v3262
        %v4125 = vunpack.c.l.b16 %v3263
        %v4126 = vunpack.c.l.b16 %v3264
        %v4127 = vunpack.c.l.b16 %v3265
        %v4128 = vunpack.c.l.b16 %v3266
        %v4129 = vunpack.c.l.b16 %v3267
        %v4130 = vunpack.c.l.b16 %v3268
        %v4131 = vunpack.c.l.b16 %v3269
        %v4132 = vunpack.c.l.b16 %v3270
        %v4133 = vunpack.c.l.b16 %v3271
        %v4134 = vunpack.c.l.b16 %v3272
        %v4135 = vunpack.c.l.b16 %v3273
        %v4136 = vunpack.c.l.b16 %v3274
        %v4137 = vunpack.c.l.b16 %v3275
        %v4138 = vunpack.c.l.b16 %v3276
        %v4139 = vunpack.c.l.b16 %v3277
        %v4140 = vunpack.c.l.b16 %v3278
        %v4141 = vunpack.c.l.b16 %v3279
        %v4142 = vunpack.c.l.b16 %v3280
        %v4143 = vunpack.c.l.b16 %v3281
        %v4144 = vunpack.c.l.b16 %v3282
        %v4145 = vunpack.c.l.b16 %v3283
        %v4146 = vunpack.c.l.b16 %v3284
        %v4147 = vunpack.c.l.b16 %v3285
        %v4148 = vunpack.c.l.b16 %v3286
        %v4149 = vunpack.c.l.b16 %v3287
        %v4150 = vunpack.c.l.b16 %v3288
        %v4151 = vunpack.c.l.b16 %v3289
        %v4152 = vunpack.c.l.b16 %v3290
        %v4153 = vunpack.c.l.b16 %v3291
        %v4154 = vunpack.c.l.b16 %v3292
        %v4155 = vunpack.c.l.b16 %v3293
        %v4156 = vunpack.c.l.b16 %v3294
        %v4157 = vunpack.c.l.b16 %v3295
        %v4158 = vunpack.c.l.b16 %v3296
        %v4159 = vunpack.c.l.b16 %v3297
        %v4160 = vunpack.c.l.b16 %v3298
        %v4161 = vunpack.c.l.b16 %v3299
        %v4162 = vunpack.c.l.b16 %v3300
        %v4163 = vunpack.c.l.b16 %v3301
        %v4164 = vunpack.c.l.b16 %v3302
        %v4165 = vunpack.c.l.b16 %v3303
        %v4166 = vunpack.c.l.b16 %v3304
        %v4167 = vunpack.c.l.b16 %v3305
        %v4168 = vunpack.c.l.b16 %v3306
        %v4169 = vunpack.c.l.b16 %v3307
        %v4170 = vunpack.c.l.b16 %v3308
        %v4171 = vunpack.c.l.b16 %v3309
        %v4172 = vunpack.c.l.b16 %v3310
        %v4173 = vunpack.c.l.b16 %v3311
        %v4174 = vunpack.c.l.b16 %v3312
        %v4175 = vunpack.c.l.b16 %v3313
        %v4176 = vunpack.c.l.b16 %v3314
        %v4177 = vunpack.c.l.b16 %v3315
        %v4178 = vunpack.c.l.b16 %v3316
        %v4179 = vunpack.c.l.b16 %v3317
        %v4180 = vunpack.c.l.b16 %v3318
        %v4181 = vunpack.c.l.b16 %v3319
        %v4182 = vunpack.c.l.b16 %v3320
        %v4183 = vunpack.c.l.b16 %v3321
        %v4184 = vunpack.c.l.b16 %v3322
        %v4185 = vunpack.c.l.b16 %v3323
        %v4186 = vunpack.c.l.b16 %v3324
        %v4187 = vunpack.c.l.b16 %v3325
        %v4188 = vunpack.c.l.b16 %v3326
        %v4189 = vunpack.c.l.b16 %v3327
        %v4190 = vunpack.c.l.b16 %v3328
        %v4191 = vunpack.c.l.b16 %v3329
        %v4192 = vunpack.c.l.b16 %v3330
        %v4193 = vunpack.c.l.b16 %v3331
        %v4194 = vunpack.c.l.b16 %v3332
        %v4195 = vunpack.c.l.b16 %v3333
        %v4196 = vunpack.c.l.b16 %v3334
        %v4197 = vunpack.c.l.b16 %v3335
        %v4198 = vunpack.c.l.b16 %v3336
        %v4199 = vunpack.c.l.b16 %v3337
        %v4200 = vunpack.c.l.b16 %v3338
        %v4201 = vunpack.c.l.b16 %v3339
        %v4202 = vunpack.c.l.b16 %v3340
        %v4203 = vunpack.c.l.b16 %v3341
        %v4204 = vunpack.c.l.b16 %v3342
        %v4205 = vunpack.c.l.b16 %v3343
        %v4206 = vunpack.c.l.b16 %v3344
        %v4207 = vunpack.c.l.b16 %v3345
        %v4208 = vunpack.c.l.b16 %v3346
        %v4209 = vunpack.c.l.b16 %v3347
        %v4210 = vunpack.c.l.b16 %v3348
        %v4211 = vunpack.c.l.b16 %v3349
        %v4212 = vunpack.c.l.b16 %v3350
        %v4213 = vunpack.c.l.b16 %v3351
        %v4214 = vunpack.c.l.b16 %v3352
        %v4215 = vunpack.c.l.b16 %v3353
        %v4216 = vunpack.c.l.b16 %v3354
        %v4217 = vunpack.c.l.b16 %v3355
        %v4218 = vunpack.c.l.b16 %v3356
        %v4219 = vunpack.c.l.b16 %v3357
        %v4220 = vunpack.c.l.b16 %v3358
        %v4221 = vunpack.c.l.b16 %v3359
        %v4222 = vunpack.c.l.b16 %v3360
        %v4223 = vunpack.c.l.b16 %v3361
        %v4224 = vunpack.c.l.b16 %v3362
        %v4225 = vunpack.c.l.b16 %v3363
        %v4226 = vunpack.c.l.b16 %v3364
        %v4227 = vunpack.c.l.b16 %v3365
        %v4228 = vunpack.c.l.b16 %v3366
        %v4229 = vunpack.c.l.b16 %v3367
        %v4230 = vunpack.c.l.b16 %v3368
        %v4231 = vunpack.c.l.b16 %v3369
        %v4232 = vunpack.c.l.b16 %v3370
        %v4233 = vunpack.c.l.b16 %v3371
        %v4234 = vunpack.c.l.b16 %v3372
        %v4235 = vunpack.c.l.b16 %v3373
        %v4236 = vunpack.c.l.b16 %v3374
        %v4237 = vunpack.c.l.b16 %v3375
        %v4238 = vunpack.c.l.b16 %v3376
        %v4239 = vunpack.c.l.b16 %v3377
        %v4240 = vunpack.c.l.b16 %v3378
        %v4241 = vunpack.c.l.b16 %v3379
        %v4242 = vunpack.c.l.b16 %v3380
        %v4243 = vunpack.c.l.b16 %v3381
        %v4244 = vunpack.c.l.b16 %v3382
        %v4245 = vunpack.c.l.b16 %v3383
        %v4246 = vunpack.c.l.b16 %v3384
        %v4247 = vunpack.c.l.b16 %v3385
        %v4248 = vunpack.c.l.b16 %v3386
        %v4249 = vunpack.c.l.b16 %v3387
        %v4250 = vunpack.c.l.b16 %v3388
        %v4251 = vunpack.c.l.b16 %v3389
        %v4252 = vunpack.c.l.b16 %v3390
        %v4253 = vunpack.c.l.b16 %v3391
        %v4254 = vunpack.c.l.b16 %v3392
        %v4255 = vunpack.c.l.b16 %v3393
        %v4256 = vunpack.c.l.b16 %v3394
        %v4257 = vunpack.c.l.b16 %v3395
        %v4258 = vunpack.c.l.b16 %v3396
        %v4259 = vunpack.c.l.b16 %v3397
        %v4260 = vunpack.c.l.b16 %v3398
        %v4261 = vunpack.c.l.b16 %v3399
        %v4262 = vunpack.c.l.b16 %v3400
        %v4263 = vunpack.c.l.b16 %v3401
        %v4264 = vunpack.c.l.b16 %v3402
        %v4265 = vunpack.c.l.b16 %v3403
        %v4266 = vunpack.c.l.b16 %v3404
        %v4267 = vunpack.c.l.b16 %v3405
        %v4268 = vunpack.c.l.b16 %v3406
        %v4269 = vunpack.c.l.b16 %v3407
        %v4270 = vunpack.c.l.b16 %v3408
        %v4271 = vunpack.c.l.b16 %v3409
        %v4272 = vunpack.c.l.b16 %v3410
        %v4273 = vunpack.c.l.b16 %v3411
        %v4274 = vunpack.c.l.b16 %v3412
        %v4275 = vunpack.c.l.b16 %v3413
        %v4276 = vunpack.c.l.b16 %v3414
        %v4277 = vpack.c.b16 %v4038, %v4037
        %v4278 = vpack.c.b16 %v4040, %v4039
        %v4279 = vpack.c.b16 %v4042, %v4041
        %v4280 = vpack.c.b16 %v4044, %v4043
        %v4281 = vpack.c.b16 %v4046, %v4045
        %v4282 = vpack.c.b16 %v4048, %v4047
        %v4283 = vpack.c.b16 %v4050, %v4049
        %v4284 = vpack.c.b16 %v4052, %v4051
        %v4285 = vpack.c.b16 %v4054, %v4053
        %v4286 = vpack.c.b16 %v4056, %v4055
        %v4287 = vpack.c.b16 %v4058, %v4057
        %v4288 = vpack.c.b16 %v4060, %v4059
        %v4289 = vpack.c.b16 %v4062, %v4061
        %v4290 = vpack.c.b16 %v4064, %v4063
        %v4291 = vpack.c.b16 %v4066, %v4065
        %v4292 = vpack.c.b16 %v4068, %v4067
        %v4293 = vpack.c.b16 %v4070, %v4069
        %v4294 = vpack.c.b16 %v4072, %v4071
        %v4295 = vpack.c.b16 %v4074, %v4073
        %v4296 = vpack.c.b16 %v4076, %v4075
        %v4297 = vpack.c.b16 %v4078, %v4077
        %v4298 = vpack.c.b16 %v4080, %v4079
        %v4299 = vpack.c.b16 %v4082, %v4081
        %v4300 = vpack.c.b16 %v4084, %v4083
        %v4301 = vpack.c.b16 %v4086, %v4085
        %v4302 = vpack.c.b16 %v4088, %v4087
        %v4303 = vpack.c.b16 %v4090, %v4089
        %v4304 = vpack.c.b16 %v4092, %v4091
        %v4305 = vpack.c.b16 %v4094, %v4093
        %v4306 = vpack.c.b16 %v4096, %v4095
        %v4307 = vpack.c.b16 %v4098, %v4097
        %v4308 = vpack.c.b16 %v4100, %v4099
        %v4309 = vpack.c.b16 %v4102, %v4101
        %v4310 = vpack.c.b16 %v4104, %v4103
        %v4311 = vpack.c.b16 %v4106, %v4105
        %v4312 = vpack.c.b16 %v4108, %v4107
        %v4313 = vpack.c.b16 %v4110, %v4109
        %v4314 = vpack.c.b16 %v4112, %v4111
        %v4315 = vpack.c.b16 %v4114, %v4113
        %v4316 = vpack.c.b16 %v4116, %v4115
        %v4317 = vpack.c.b16 %v4118, %v4117
        %v4318 = vpack.c.b16 %v4120, %v4119
        %v4319 = vpack.c.b16 %v4122, %v4121
        %v4320 = vpack.c.b16 %v4124, %v4123
        %v4321 = vpack.c.b16 %v4126, %v4125
        %v4322 = vpack.c.b16 %v4128, %v4127
        %v4323 = vpack.c.b16 %v4130, %v4129
        %v4324 = vpack.c.b16 %v4132, %v4131
        %v4325 = vpack.c.b16 %v4134, %v4133
        %v4326 = vpack.c.b16 %v4136, %v4135
        %v4327 = vpack.c.b16 %v4138, %v4137
        %v4328 = vpack.c.b16 %v4140, %v4139
        %v4329 = vpack.c.b16 %v4142, %v4141
        %v4330 = vpack.c.b16 %v4144, %v4143
        %v4331 = vpack.c.b16 %v4146, %v4145
        %v4332 = vpack.c.b16 %v4148, %v4147
        %v4333 = vpack.c.b16 %v4150, %v4149
        %v4334 = vpack.c.b16 %v4152, %v4151
        %v4335 = vpack.c.b16 %v4154, %v4153
        %v4336 = vpack.c.b16 %v4156, %v4155
        %v4337 = vpack.c.b16 %v4158, %v4157
        %v4338 = vpack.c.b16 %v4160, %v4159
        %v4339 = vpack.c.b16 %v4162, %v4161
        %v4340 = vpack.c.b16 %v4164, %v4163
        %v4341 = vpack.c.b16 %v4166, %v4165
        %v4342 = vpack.c.b16 %v4168, %v4167
        %v4343 = vpack.c.b16 %v4170, %v4169
        %v4344 = vpack.c.b16 %v4172, %v4171
        %v4345 = vpack.c.b16 %v4174, %v4173
        %v4346 = vpack.c.b16 %v4176, %v4175
        %v4347 = vpack.c.b16 %v4178, %v4177
        %v4348 = vpack.c.b16 %v4180, %v4179
        %v4349 = vpack.c.b16 %v4182, %v4181
        %v4350 = vpack.c.b16 %v4184, %v4183
        %v4351 = vpack.c.b16 %v4186, %v4185
        %v4352 = vpack.c.b16 %v4188, %v4187
        %v4353 = vpack.c.b16 %v4190, %v4189
        %v4354 = vpack.c.b16 %v4192, %v4191
        %v4355 = vpack.c.b16 %v4194, %v4193
        %v4356 = vpack.c.b16 %v4196, %v4195
        %v4357 = vpack.c.b16 %v4198, %v4197
        %v4358 = vpack.c.b16 %v4200, %v4199
        %v4359 = vpack.c.b16 %v4202, %v4201
        %v4360 = vpack.c.b16 %v4204, %v4203
        %v4361 = vpack.c.b16 %v4206, %v4205
        %v4362 = vpack.c.b16 %v4208, %v4207
        %v4363 = vpack.c.b16 %v4210, %v4209
        %v4364 = vpack.c.b16 %v4212, %v4211
        %v4365 = vpack.c.b16 %v4214, %v4213
        %v4366 = vpack.c.b16 %v4216, %v4215
        %v4367 = vpack.c.b16 %v4218, %v4217
        %v4368 = vpack.c.b16 %v4220, %v4219
        %v4369 = vpack.c.b16 %v4222, %v4221
        %v4370 = vpack.c.b16 %v4224, %v4223
        %v4371 = vpack.c.b16 %v4226, %v4225
        %v4372 = vpack.c.b16 %v4228, %v4227
        %v4373 = vpack.c.b16 %v4230, %v4229
        %v4374 = vpack.c.b16 %v4232, %v4231
        %v4375 = vpack.c.b16 %v4234, %v4233
        %v4376 = vpack.c.b16 %v4236, %v4235
        %v4377 = vpack.c.b16 %v4238, %v4237
        %v4378 = vpack.c.b16 %v4240, %v4239
        %v4379 = vpack.c.b16 %v4242, %v4241
        %v4380 = vpack.c.b16 %v4244, %v4243
        %v4381 = vpack.c.b16 %v4246, %v4245
        %v4382 = vpack.c.b16 %v4248, %v4247
        %v4383 = vpack.c.b16 %v4250, %v4249
        %v4384 = vpack.c.b16 %v4252, %v4251
        %v4385 = vpack.c.b16 %v4254, %v4253
        %v4386 = vpack.c.b16 %v4256, %v4255
        %v4387 = vpack.c.b16 %v4258, %v4257
        %v4388 = vpack.c.b16 %v4260, %v4259
        %v4389 = vpack.c.b16 %v4262, %v4261
        %v4390 = vpack.c.b16 %v4264, %v4263
        %v4391 = vpack.c.b16 %v4266, %v4265
        %v4392 = vpack.c.b16 %v4268, %v4267
        %v4393 = vpack.c.b16 %v4270, %v4269
        %v4394 = vpack.c.b16 %v4272, %v4271
        %v4395 = vpack.c.b16 %v4274, %v4273
        %v4396 = vpack.c.b16 %v4276, %v4275
        %4517 = vmatprep.subr.bf16.mxu0 0
        %4518 = vmatpush1.bf16.msra.mxu0 %v4277
        %4519 = vmatprep.subr.bf16.mxu0 0
        %4520 = vmatpush1.bf16.msra.mxu0 %v4278
        %4521 = vmatprep.subr.bf16.mxu0 0
        %4522 = vmatpush1.bf16.msra.mxu0 %v4279
        %4523 = vmatprep.subr.bf16.mxu0 0
        %4524 = vmatpush1.bf16.msra.mxu0 %v4280
        %4525 = vmatprep.subr.bf16.mxu0 0
        %4526 = vmatpush1.bf16.msra.mxu0 %v4281
        %4527 = vmatprep.subr.bf16.mxu0 0
        %4528 = vmatpush1.bf16.msra.mxu0 %v4282
        %4529 = vmatprep.subr.bf16.mxu0 0
        %4530 = vmatpush1.bf16.msra.mxu0 %v4283
        %4531 = vmatprep.subr.bf16.mxu0 0
        %4532 = vmatpush1.bf16.msra.mxu0 %v4284
        %4533 = vmatprep.subr.bf16.mxu0 0
        %4534 = vmatpush1.bf16.msra.mxu0 %v4285
        %4535 = vmatprep.subr.bf16.mxu0 0
        %4536 = vmatpush1.bf16.msra.mxu0 %v4286
        %4537 = vmatprep.subr.bf16.mxu0 0
        %4538 = vmatpush1.bf16.msra.mxu0 %v4287
        %4539 = vmatprep.subr.bf16.mxu0 0
        %4540 = vmatpush1.bf16.msra.mxu0 %v4288
        %4541 = vmatprep.subr.bf16.mxu0 0
        %4542 = vmatpush1.bf16.msra.mxu0 %v4289
        %4543 = vmatprep.subr.bf16.mxu0 0
        %4544 = vmatpush1.bf16.msra.mxu0 %v4290
        %4545 = vmatprep.subr.bf16.mxu0 0
        %4546 = vmatpush1.bf16.msra.mxu0 %v4291
        %4547 = vmatprep.subr.bf16.mxu0 0
        %4548 = vmatpush1.bf16.msra.mxu0 %v4292
        %4549 = vmatprep.mubr.bf16.mxu0 %v3768
        %4550 = vmatmul.mubr.bf16.gmra.mrb[0].mxu0 %v3767
        %v4551 = vpop.f32.mrb[0].mxu0
        %v4552 = vadd.f32 %v3420, %v4551
        %v4553 = vpop.f32.mrb[0].mxu0
        %v4554 = vpop.f32.mrb[0].mxu0
        %v4555 = vpop.f32.mrb[0].mxu0
        %4556 = vdwg.mxu0
        %4557 = vmatprep.subr.bf16.mxu0 0
        %4558 = vmatpush1.bf16.msra.mxu0 %v4293
        %4559 = vmatprep.subr.bf16.mxu0 0
        %4560 = vmatpush1.bf16.msra.mxu0 %v4294
        %4561 = vmatprep.subr.bf16.mxu0 0
        %4562 = vmatpush1.bf16.msra.mxu0 %v4295
        %4563 = vmatprep.subr.bf16.mxu0 0
        %4564 = vmatpush1.bf16.msra.mxu0 %v4296
        %4565 = vmatprep.subr.bf16.mxu0 0
        %4566 = vmatpush1.bf16.msra.mxu0 %v4297
        %4567 = vmatprep.subr.bf16.mxu0 0
        %4568 = vmatpush1.bf16.msra.mxu0 %v4298
        %4569 = vmatprep.subr.bf16.mxu0 0
        %4570 = vmatpush1.bf16.msra.mxu0 %v4299
        %4571 = vmatprep.subr.bf16.mxu0 0
        %4572 = vmatpush1.bf16.msra.mxu0 %v4300
        %4573 = vmatprep.subr.bf16.mxu0 0
        %4574 = vmatpush1.bf16.msra.mxu0 %v4301
        %4575 = vmatprep.subr.bf16.mxu0 0
        %4576 = vmatpush1.bf16.msra.mxu0 %v4302
        %4577 = vmatprep.subr.bf16.mxu0 0
        %4578 = vmatpush1.bf16.msra.mxu0 %v4303
        %4579 = vmatprep.subr.bf16.mxu0 0
        %4580 = vmatpush1.bf16.msra.mxu0 %v4304
        %4581 = vmatprep.subr.bf16.mxu0 0
        %4582 = vmatpush1.bf16.msra.mxu0 %v4305
        %4583 = vmatprep.subr.bf16.mxu0 0
        %4584 = vmatpush1.bf16.msra.mxu0 %v4306
        %4585 = vmatprep.subr.bf16.mxu0 0
        %4586 = vmatpush1.bf16.msra.mxu0 %v4307
        %4587 = vmatprep.subr.bf16.mxu0 0
        %4588 = vmatpush1.bf16.msra.mxu0 %v4308
        %4589 = vmatprep.mubr.bf16.mxu0 %v3770
        %4590 = vmatmul.mubr.bf16.gmra.mrb[0].mxu0 %v3769
        %v4591 = vpop.f32.mrb[0].mxu0
        %v4592 = vadd.f32 %v4552, %v4591
        %v4593 = vpop.f32.mrb[0].mxu0
        %v4594 = vpop.f32.mrb[0].mxu0
        %v4595 = vpop.f32.mrb[0].mxu0
        %4596 = vdwg.mxu0
        %4597 = vmatprep.subr.bf16.mxu0 0
        %4598 = vmatpush1.bf16.msra.mxu0 %v4309
        %4599 = vmatprep.subr.bf16.mxu0 0
        %4600 = vmatpush1.bf16.msra.mxu0 %v4310
        %4601 = vmatprep.subr.bf16.mxu0 0
        %4602 = vmatpush1.bf16.msra.mxu0 %v4311
        %4603 = vmatprep.subr.bf16.mxu0 0
        %4604 = vmatpush1.bf16.msra.mxu0 %v4312
        %4605 = vmatprep.subr.bf16.mxu0 0
        %4606 = vmatpush1.bf16.msra.mxu0 %v4313
        %4607 = vmatprep.subr.bf16.mxu0 0
        %4608 = vmatpush1.bf16.msra.mxu0 %v4314
        %4609 = vmatprep.subr.bf16.mxu0 0
        %4610 = vmatpush1.bf16.msra.mxu0 %v4315
        %4611 = vmatprep.subr.bf16.mxu0 0
        %4612 = vmatpush1.bf16.msra.mxu0 %v4316
        %4613 = vmatprep.subr.bf16.mxu0 0
        %4614 = vmatpush1.bf16.msra.mxu0 %v4317
        %4615 = vmatprep.subr.bf16.mxu0 0
        %4616 = vmatpush1.bf16.msra.mxu0 %v4318
        %4617 = vmatprep.subr.bf16.mxu0 0
        %4618 = vmatpush1.bf16.msra.mxu0 %v4319
        %4619 = vmatprep.subr.bf16.mxu0 0
        %4620 = vmatpush1.bf16.msra.mxu0 %v4320
        %4621 = vmatprep.subr.bf16.mxu0 0
        %4622 = vmatpush1.bf16.msra.mxu0 %v4321
        %4623 = vmatprep.subr.bf16.mxu0 0
        %4624 = vmatpush1.bf16.msra.mxu0 %v4322
        %4625 = vmatprep.subr.bf16.mxu0 0
        %4626 = vmatpush1.bf16.msra.mxu0 %v4323
        %4627 = vmatprep.subr.bf16.mxu0 0
        %4628 = vmatpush1.bf16.msra.mxu0 %v4324
        %4629 = vmatprep.mubr.bf16.mxu0 %v3772
        %4630 = vmatmul.mubr.bf16.gmra.mrb[0].mxu0 %v3771
        %v4631 = vpop.f32.mrb[0].mxu0
        %v4632 = vadd.f32 %v4592, %v4631
        %v4633 = vpop.f32.mrb[0].mxu0
        %v4634 = vpop.f32.mrb[0].mxu0
        %v4635 = vpop.f32.mrb[0].mxu0
        %4636 = vdwg.mxu0
        %4637 = vmatprep.subr.bf16.mxu0 0
        %4638 = vmatpush1.bf16.msra.mxu0 %v4325
        %4639 = vmatprep.subr.bf16.mxu0 0
        %4640 = vmatpush1.bf16.msra.mxu0 %v4326
        %4641 = vmatprep.subr.bf16.mxu0 0
        %4642 = vmatpush1.bf16.msra.mxu0 %v4327
        %4643 = vmatprep.subr.bf16.mxu0 0
        %4644 = vmatpush1.bf16.msra.mxu0 %v4328
        %4645 = vmatprep.subr.bf16.mxu0 0
        %4646 = vmatpush1.bf16.msra.mxu0 %v4329
        %4647 = vmatprep.subr.bf16.mxu0 0
        %4648 = vmatpush1.bf16.msra.mxu0 %v4330
        %4649 = vmatprep.subr.bf16.mxu0 0
        %4650 = vmatpush1.bf16.msra.mxu0 %v4331
        %4651 = vmatprep.subr.bf16.mxu0 0
        %4652 = vmatpush1.bf16.msra.mxu0 %v4332
        %4653 = vmatprep.subr.bf16.mxu0 0
        %4654 = vmatpush1.bf16.msra.mxu0 %v4333
        %4655 = vmatprep.subr.bf16.mxu0 0
        %4656 = vmatpush1.bf16.msra.mxu0 %v4334
        %4657 = vmatprep.subr.bf16.mxu0 0
        %4658 = vmatpush1.bf16.msra.mxu0 %v4335
        %4659 = vmatprep.subr.bf16.mxu0 0
        %4660 = vmatpush1.bf16.msra.mxu0 %v4336
        %4661 = vmatprep.subr.bf16.mxu0 0
        %4662 = vmatpush1.bf16.msra.mxu0 %v4337
        %4663 = vmatprep.subr.bf16.mxu0 0
        %4664 = vmatpush1.bf16.msra.mxu0 %v4338
        %4665 = vmatprep.subr.bf16.mxu0 0
        %4666 = vmatpush1.bf16.msra.mxu0 %v4339
        %4667 = vmatprep.subr.bf16.mxu0 0
        %4668 = vmatpush1.bf16.msra.mxu0 %v4340
        %4669 = vmatprep.mubr.bf16.mxu0 %v3774
        %4670 = vmatmul.mubr.bf16.gmra.mrb[0].mxu0 %v3773
        %v4671 = vpop.f32.mrb[0].mxu0
        %v4672 = vadd.f32 %v4632, %v4671
        %v4673 = vpop.f32.mrb[0].mxu0
        %v4674 = vpop.f32.mrb[0].mxu0
        %v4675 = vpop.f32.mrb[0].mxu0
        %4676 = vdwg.mxu0
        %4677 = vmatprep.subr.bf16.mxu0 0
        %4678 = vmatpush1.bf16.msra.mxu0 %v4341
        %4679 = vmatprep.subr.bf16.mxu0 0
        %4680 = vmatpush1.bf16.msra.mxu0 %v4342
        %4681 = vmatprep.subr.bf16.mxu0 0
        %4682 = vmatpush1.bf16.msra.mxu0 %v4343
        %4683 = vmatprep.subr.bf16.mxu0 0
        %4684 = vmatpush1.bf16.msra.mxu0 %v4344
        %4685 = vmatprep.subr.bf16.mxu0 0
        %4686 = vmatpush1.bf16.msra.mxu0 %v4345
        %4687 = vmatprep.subr.bf16.mxu0 0
        %4688 = vmatpush1.bf16.msra.mxu0 %v4346
        %4689 = vmatprep.subr.bf16.mxu0 0
        %4690 = vmatpush1.bf16.msra.mxu0 %v4347
        %4691 = vmatprep.subr.bf16.mxu0 0
        %4692 = vmatpush1.bf16.msra.mxu0 %v4348
        %4693 = vmatprep.subr.bf16.mxu0 0
        %4694 = vmatpush1.bf16.msra.mxu0 %v4349
        %4695 = vmatprep.subr.bf16.mxu0 0
        %4696 = vmatpush1.bf16.msra.mxu0 %v4350
        %4697 = vmatprep.subr.bf16.mxu0 0
        %4698 = vmatpush1.bf16.msra.mxu0 %v4351
        %4699 = vmatprep.subr.bf16.mxu0 0
        %4700 = vmatpush1.bf16.msra.mxu0 %v4352
        %4701 = vmatprep.subr.bf16.mxu0 0
        %4702 = vmatpush1.bf16.msra.mxu0 %v4353
        %4703 = vmatprep.subr.bf16.mxu0 0
        %4704 = vmatpush1.bf16.msra.mxu0 %v4354
        %4705 = vmatprep.subr.bf16.mxu0 0
        %4706 = vmatpush1.bf16.msra.mxu0 %v4355
        %4707 = vmatprep.subr.bf16.mxu0 0
        %4708 = vmatpush1.bf16.msra.mxu0 %v4356
        %4709 = vmatprep.mubr.bf16.mxu0 %v3776
        %4710 = vmatmul.mubr.bf16.gmra.mrb[0].mxu0 %v3775
        %v4711 = vpop.f32.mrb[0].mxu0
        %v4712 = vadd.f32 %v4672, %v4711
        %v4713 = vpop.f32.mrb[0].mxu0
        %v4714 = vpop.f32.mrb[0].mxu0
        %v4715 = vpop.f32.mrb[0].mxu0
        %4716 = vdwg.mxu0
        %4717 = vmatprep.subr.bf16.mxu0 0
        %4718 = vmatpush1.bf16.msra.mxu0 %v4357
        %4719 = vmatprep.subr.bf16.mxu0 0
        %4720 = vmatpush1.bf16.msra.mxu0 %v4358
        %4721 = vmatprep.subr.bf16.mxu0 0
        %4722 = vmatpush1.bf16.msra.mxu0 %v4359
        %4723 = vmatprep.subr.bf16.mxu0 0
        %4724 = vmatpush1.bf16.msra.mxu0 %v4360
        %4725 = vmatprep.subr.bf16.mxu0 0
        %4726 = vmatpush1.bf16.msra.mxu0 %v4361
        %4727 = vmatprep.subr.bf16.mxu0 0
        %4728 = vmatpush1.bf16.msra.mxu0 %v4362
        %4729 = vmatprep.subr.bf16.mxu0 0
        %4730 = vmatpush1.bf16.msra.mxu0 %v4363
        %4731 = vmatprep.subr.bf16.mxu0 0
        %4732 = vmatpush1.bf16.msra.mxu0 %v4364
        %4733 = vmatprep.subr.bf16.mxu0 0
        %4734 = vmatpush1.bf16.msra.mxu0 %v4365
        %4735 = vmatprep.subr.bf16.mxu0 0
        %4736 = vmatpush1.bf16.msra.mxu0 %v4366
        %4737 = vmatprep.subr.bf16.mxu0 0
        %4738 = vmatpush1.bf16.msra.mxu0 %v4367
        %4739 = vmatprep.subr.bf16.mxu0 0
        %4740 = vmatpush1.bf16.msra.mxu0 %v4368
        %4741 = vmatprep.subr.bf16.mxu0 0
        %4742 = vmatpush1.bf16.msra.mxu0 %v4369
        %4743 = vmatprep.subr.bf16.mxu0 0
        %4744 = vmatpush1.bf16.msra.mxu0 %v4370
        %4745 = vmatprep.subr.bf16.mxu0 0
        %4746 = vmatpush1.bf16.msra.mxu0 %v4371
        %4747 = vmatprep.subr.bf16.mxu0 0
        %4748 = vmatpush1.bf16.msra.mxu0 %v4372
        %4749 = vmatprep.mubr.bf16.mxu0 %v3778
        %4750 = vmatmul.mubr.bf16.gmra.mrb[0].mxu0 %v3777
        %v4751 = vpop.f32.mrb[0].mxu0
        %v4752 = vadd.f32 %v4712, %v4751
        %v4753 = vpop.f32.mrb[0].mxu0
        %v4754 = vpop.f32.mrb[0].mxu0
        %v4755 = vpop.f32.mrb[0].mxu0
        %4756 = vdwg.mxu0
        %4757 = vmatprep.subr.bf16.mxu0 0
        %4758 = vmatpush1.bf16.msra.mxu0 %v4373
        %4759 = vmatprep.subr.bf16.mxu0 0
        %4760 = vmatpush1.bf16.msra.mxu0 %v4374
        %4761 = vmatprep.subr.bf16.mxu0 0
        %4762 = vmatpush1.bf16.msra.mxu0 %v4375
        %4763 = vmatprep.subr.bf16.mxu0 0
        %4764 = vmatpush1.bf16.msra.mxu0 %v4376
        %4765 = vmatprep.subr.bf16.mxu0 0
        %4766 = vmatpush1.bf16.msra.mxu0 %v4377
        %4767 = vmatprep.subr.bf16.mxu0 0
        %4768 = vmatpush1.bf16.msra.mxu0 %v4378
        %4769 = vmatprep.subr.bf16.mxu0 0
        %4770 = vmatpush1.bf16.msra.mxu0 %v4379
        %4771 = vmatprep.subr.bf16.mxu0 0
        %4772 = vmatpush1.bf16.msra.mxu0 %v4380
        %4773 = vmatprep.subr.bf16.mxu0 0
        %4774 = vmatpush1.bf16.msra.mxu0 %v4381
        %4775 = vmatprep.subr.bf16.mxu0 0
        %4776 = vmatpush1.bf16.msra.mxu0 %v4382
        %4777 = vmatprep.subr.bf16.mxu0 0
        %4778 = vmatpush1.bf16.msra.mxu0 %v4383
        %4779 = vmatprep.subr.bf16.mxu0 0
        %4780 = vmatpush1.bf16.msra.mxu0 %v4384
        %4781 = vmatprep.subr.bf16.mxu0 0
        %4782 = vmatpush1.bf16.msra.mxu0 %v4385
        %4783 = vmatprep.subr.bf16.mxu0 0
        %4784 = vmatpush1.bf16.msra.mxu0 %v4386
        %4785 = vmatprep.subr.bf16.mxu0 0
        %4786 = vmatpush1.bf16.msra.mxu0 %v4387
        %4787 = vmatprep.subr.bf16.mxu0 0
        %4788 = vmatpush1.bf16.msra.mxu0 %v4388
        %4789 = vmatprep.mubr.bf16.mxu0 %v3780
        %4790 = vmatmul.mubr.bf16.gmra.mrb[0].mxu0 %v3779
        %v4791 = vpop.f32.mrb[0].mxu0
        %v4792 = vadd.f32 %v4752, %v4791
        %v4793 = vpop.f32.mrb[0].mxu0
        %v4794 = vpop.f32.mrb[0].mxu0
        %v4795 = vpop.f32.mrb[0].mxu0
        %4796 = vdwg.mxu0
        %4797 = vmatprep.subr.bf16.mxu0 0
        %4798 = vmatpush1.bf16.msra.mxu0 %v4389
        %4799 = vmatprep.subr.bf16.mxu0 0
        %4800 = vmatpush1.bf16.msra.mxu0 %v4390
        %4801 = vmatprep.subr.bf16.mxu0 0
        %4802 = vmatpush1.bf16.msra.mxu0 %v4391
        %4803 = vmatprep.subr.bf16.mxu0 0
        %4804 = vmatpush1.bf16.msra.mxu0 %v4392
        %4805 = vmatprep.subr.bf16.mxu0 0
        %4806 = vmatpush1.bf16.msra.mxu0 %v4393
        %4807 = vmatprep.subr.bf16.mxu0 0
        %4808 = vmatpush1.bf16.msra.mxu0 %v4394
        %4809 = vmatprep.subr.bf16.mxu0 0
        %4810 = vmatpush1.bf16.msra.mxu0 %v4395
        %4811 = vmatprep.subr.bf16.mxu0 0
        %4812 = vmatpush1.bf16.msra.mxu0 %v4396
        %4813 = vmatprep.subr.bf16.mxu0 0
        %4814 = vmatpush1.bf16.msra.mxu0 0
        %4815 = vmatprep.subr.bf16.mxu0 0
        %4816 = vmatpush1.bf16.msra.mxu0 0
        %4817 = vmatprep.subr.bf16.mxu0 0
        %4818 = vmatpush1.bf16.msra.mxu0 0
        %4819 = vmatprep.subr.bf16.mxu0 0
        %4820 = vmatpush1.bf16.msra.mxu0 0
        %4821 = vmatprep.subr.bf16.mxu0 0
        %4822 = vmatpush1.bf16.msra.mxu0 0
        %4823 = vmatprep.subr.bf16.mxu0 0
        %4824 = vmatpush1.bf16.msra.mxu0 0
        %4825 = vmatprep.subr.bf16.mxu0 0
        %4826 = vmatpush1.bf16.msra.mxu0 0
        %4827 = vmatprep.subr.bf16.mxu0 0
        %4828 = vmatpush1.bf16.msra.mxu0 0
        %4829 = vmatprep.mubr.bf16.mxu0 0
        %4830 = vmatmul.mubr.bf16.gmra.mrb[0].mxu0 %v3781
        %v4831 = vpop.f32.mrb[0].mxu0
        %v4832 = vadd.f32 %v4792, %v4831
        %v4833 = vpop.f32.mrb[0].mxu0
        %v4834 = vpop.f32.mrb[0].mxu0
        %v4835 = vpop.f32.mrb[0].mxu0
        %4836 = vdwg.mxu0
        %4837 = vst [vmem:[%s263] sm:$0xff] %v4832
        %s4838 = sand.u32 %s102, 1
        %s4839 = scalar_lea.sflag [#allocation4], %s4838
        %s4840 = sand.u32 %s102, 1
        %s4841 = smul.addr %s4840, 120
        %s4842 = scalar_lea.vmem [#allocation8], %s4841
        %s4843 = sand.u32 %s128, 1
        %s4844 = scalar_lea.sflag [#allocation10], %s4843
        %s4845 = sand.u32 %s128, 1
        %s4846 = smul.addr %s4845, 8
        %s4847 = scalar_lea.vmem [#allocation9], %s4846
        // Predicated region
        $region45: #{tpu_custom_call.1} parent=31 // pred_check
          %p4848 = pneg %p112
        $region46: #{tpu_custom_call.1} parent=31 // pred_check_branch
          %4850 = sbr.rel (%p4848) target = $region48
        $region47: #{tpu_custom_call.1} parent=31 // pred_region
          %s4852 = ssub.s32 1920, 1920
          %4853 = vsyncadd %s4839, %s4852
          %s4854 = smul.addr %s26, 15
          %s4855 = smul.addr %s4854, 128
          %s4856 = scalar_lea.hbm %s3, %s4855
          %s4858 = sshll.u32 %s4842, 4
          %s4859 = int_to_ptr.vmem [resolvable:$true] %s4858
          %4861 = dma.vmem_to_hbm [thread:$0]  %s4859, 1920, %s4856, %s4839
        $region48: #{tpu_custom_call.1} parent=31 // pred_fallthru
          _
        // Predicated region
        $region49: #{tpu_custom_call.1} parent=31 // pred_check
          %p4862 = pneg %p138
        $region50: #{tpu_custom_call.1} parent=31 // pred_check_branch
          %4864 = sbr.rel (%p4862) target = $region52
        $region51: #{tpu_custom_call.1} parent=31 // pred_region
          %s4866 = ssub.s32 128, 128
          %4867 = vsyncadd %s4844, %s4866
          %s4868 = smul.addr %s26, 128
          %s4869 = scalar_lea.hbm %s4, %s4868
          %s4871 = sshll.u32 %s4847, 4
          %s4872 = int_to_ptr.vmem [resolvable:$true] %s4871
          %4874 = dma.vmem_to_hbm [thread:$0]  %s4872, 128, %s4869, %s4844
        $region52: #{tpu_custom_call.1} parent=31 // pred_fallthru
          _
      $region32: #{tpu_custom_call.1} parent=5 // pred_fallthru
        _
      %p4875 = scmp.le.s32.totalorder 2, %s21
      // Predicated region
      $region53: #{tpu_custom_call.1} parent=5 // pred_check
        %p4876 = pneg %p4875
      $region54: #{tpu_custom_call.1} parent=5 // pred_check_branch
        %4878 = sbr.rel (%p4876) target = $region56
      $region55: #{tpu_custom_call.1} parent=5 // pred_region
        %s4879 = ssub.s32 %s21, 2
        // Predicated region
        $region57: #{tpu_custom_call.1} parent=55 // pred_check
          %p4880 = pneg %p118
        $region58: #{tpu_custom_call.1} parent=55 // pred_check_branch
          %4882 = sbr.rel (%p4880) target = $region60
        $region59: #{tpu_custom_call.1} parent=55 // pred_region
          %s4883 = sand.u32 %s103, 1
          %s4884 = scalar_lea.sflag [#allocation4], %s4883
          %s4885 = sand.u32 %s103, 1
          %s4886 = smul.addr %s4885, 120
          %s4887 = scalar_lea.vmem [#allocation8], %s4886
          %4888 = dma.done %s4884, 1920
        $region60: #{tpu_custom_call.1} parent=55 // pred_fallthru
          _
        // Predicated region
        $region61: #{tpu_custom_call.1} parent=55 // pred_check
          %p4889 = pneg %p144
        $region62: #{tpu_custom_call.1} parent=55 // pred_check_branch
          %4891 = sbr.rel (%p4889) target = $region64
        $region63: #{tpu_custom_call.1} parent=55 // pred_region
          %s4892 = sand.u32 %s129, 1
          %s4893 = scalar_lea.sflag [#allocation10], %s4892
          %s4894 = sand.u32 %s129, 1
          %s4895 = smul.addr %s4894, 8
          %s4896 = scalar_lea.vmem [#allocation9], %s4895
          %4897 = dma.done %s4893, 128
        $region64: #{tpu_custom_call.1} parent=55 // pred_fallthru
          _
      $region56: #{tpu_custom_call.1} parent=5 // pred_fallthru
        _
    $region6: #{tpu_custom_call.1} parent=1 // loop_footer
      %s25 = sadd.s32 1, %s21
    $region7: #{tpu_custom_call.1} parent=1 // loop_footer_branch
      %20 = sbr.rel target = $region3
    $region8: #{tpu_custom_call.1} parent=1 // loop_exit
      _
    %4898 = vsyncpa [#allocation3], 1
    %s4899 = scalar_lea.sflag [#allocation3], 1
    %4900 = vsyncpa %s4899, 1
    %4901 = vsyncpa [#allocation6], 1
    %4902 = vsyncpa [#allocation4], 1
    %s4903 = scalar_lea.sflag [#allocation4], 1
    %4904 = vsyncpa %s4903, 1
    %4905 = vsyncpa [#allocation10], 1
    %s4906 = scalar_lea.sflag [#allocation10], 1
    %4907 = vsyncpa %s4906, 1

// kernel: tpu_custom_call.1
$region0: #{tpu_custom_call.1}
  #allocation0 [shape = 'u32[]', space=smem, size = 0x4, offset = 0x4, fixed_abs, tag = 'smem constant byte address 0x4 - core index']
  #allocation1 [shape = 'u32[144,128]{1,0:T(1,128)}', space=vmem, size = 0x12000, scoped, tag = 'internal scratch']
  %s0 = inlined_call_operand.hbm [shape: f32[10,49,1920], index: 0, kind: input, shape index: {}]
  %s1 = inlined_call_operand.hbm [shape: bf16[1920,128], index: 1, kind: input, shape index: {}]
  %s2 = inlined_call_operand.hbm [shape: f32[1,128], index: 2, kind: input, shape index: {}]
  %s3 = inlined_call_operand.hbm [shape: f32[10,1920], index: 3, kind: output, shape index: {0}]
  %s4 = inlined_call_operand.hbm [shape: f32[10,128], index: 4, kind: output, shape index: {1}]
  %5 = xla_tuple %s3, %s4
  %s6 = sld [smem:[#allocation0]]
  $region65: #{tpu_custom_call.1} parent=0
    _
  %s8 = ssub.s32 1, %s6
  %s9 = scalar_select 0, %s8, %s6
  $region1: #{tpu_custom_call.1} parent=0
    #allocation2 [shape = 'u8[6881280]{0}', space=vmem, size = 0x690000, scoped, tag = 'input window, operand 0']
    #allocation3 [shape = 's32[2]{0}', space=sflag, size = 0x8, scoped, tag = 'scoped memory for tpu_custom_call.1']
    #allocation4 [shape = 's32[2]{0}', space=sflag, size = 0x8, scoped, tag = 'scoped memory for tpu_custom_call.1']
    #allocation5 [shape = 'u8[491520]{0}', space=vmem, size = 0x78000, scoped, tag = 'input window, operand 1, single buffered']
    #allocation6 [shape = 's32[1]{0}', space=sflag, size = 0x4, scoped, tag = 'scoped memory for tpu_custom_call.1']
    #allocation7 [shape = 'u8[512]{0}', space=vmem, size = 0x400, scoped, tag = 'input window, operand 2, single buffered']
    #allocation8 [shape = 'u8[122880]{0}', space=vmem, size = 0x1e000, scoped, tag = 'output window, operand 0']
    #allocation9 [shape = 'u8[8192]{0}', space=vmem, size = 0x2000, scoped, tag = 'output window, operand 1']
    #allocation10 [shape = 's32[2]{0}', space=sflag, size = 0x8, scoped, tag = 'scoped memory for tpu_custom_call.1']
    %10 = vsyncpa [#allocation3], 0
    %s11 = scalar_lea.sflag [#allocation3], 1
    %12 = vsyncpa %s11, 0
    %13 = vsyncpa [#allocation6], 0
    %14 = vsyncpa [#allocation4], 0
    %s15 = scalar_lea.sflag [#allocation4], 1
    %16 = vsyncpa %s15, 0
    %17 = vsyncpa [#allocation10], 0
    %s18 = scalar_lea.sflag [#allocation10], 1
    %19 = vsyncpa %s18, 0
    loop: start=0, step=1, limit=4
    $region2: #{tpu_custom_call.1} parent=1 // loop_pre_header
      _
    $region3: #{tpu_custom_call.1} parent=1 // loop_header
      %s21 = sphi 0, %s25
      %p22 = scmp.ge.s32.totalorder %s21, 4
      %s31 = sphi 0, %s33
      %s34 = sphi 0, %s31
      %s35 = sphi 0, %s34
      %s51 = sphi 0, %s35
      %s55 = sphi 0, %s55
      %s57 = sphi 0, %s55
      %s58 = sphi 0, %s57
      %s72 = sphi 0, %s58
      %s76 = sphi 0, %s76
      %s78 = sphi 0, %s76
      %s79 = sphi 0, %s78
      %s93 = sphi 0, %s79
      %s99 = sphi 0, %s101
      %s102 = sphi 0, %s99
      %s103 = sphi 0, %s102
      %s119 = sphi 0, %s103
      %s125 = sphi 0, %s127
      %s128 = sphi 0, %s125
      %s129 = sphi 0, %s128
      %s145 = sphi 0, %s129
    $region4: #{tpu_custom_call.1} parent=1 // loop_header_branch
      %24 = sbr.rel (%p22) target = $region8
    $region5: #{tpu_custom_call.1} parent=1 // loop_body
      %s26 = ssub.s32 %s21, 1
      %s27 = ssub.s32 %s21, 2
      %s28 = sadd.s32 %s21, 1
      %s29 = ssub.s32 %s21, %s28
      %p30 = scmp.eq.s32.totalorder %s29, 0
      %s32 = sadd.s32 %s31, 1
      %s33 = scalar_select %p30, %s31, %s32
      %p36 = pneg %p30
      %p37 = scmp.eq.s32.totalorder %s21, 1
      %p38 = por %p36, %p37
      %p39 = scmp.ne.s32.totalorder %s31, %s34
      %p40 = scmp.eq.s32.totalorder %s21, 0
      %p41 = por %p39, %p40
      %p42 = scmp.ne.s32.totalorder %s31, %s34
      %p43 = scmp.eq.s32.totalorder %s26, 1
      %p44 = por %p42, %p43
      %p45 = scmp.ne.s32.totalorder %s34, %s35
      %p46 = scmp.eq.s32.totalorder %s26, 0
      %p47 = por %p45, %p46
      %p48 = scmp.ne.s32.totalorder %s34, %s35
      %p49 = scmp.eq.s32.totalorder %s27, 1
      %p50 = por %p48, %p49
      %p52 = scmp.ne.s32.totalorder %s35, %s51
      %p53 = scmp.eq.s32.totalorder %s27, 0
      %p54 = por %p52, %p53
      %s56 = sadd.s32 %s55, 1
      %p59 = scmp.eq.s32.totalorder %s21, 1
      %p60 = scmp.ne.s32.totalorder %s55, %s57
      %p61 = scmp.eq.s32.totalorder %s21, 0
      %p62 = por %p60, %p61
      %p63 = scmp.ne.s32.totalorder %s55, %s57
      %p64 = scmp.eq.s32.totalorder %s26, 1
      %p65 = por %p63, %p64
      %p66 = scmp.ne.s32.totalorder %s57, %s58
      %p67 = scmp.eq.s32.totalorder %s26, 0
      %p68 = por %p66, %p67
      %p69 = scmp.ne.s32.totalorder %s57, %s58
      %p70 = scmp.eq.s32.totalorder %s27, 1
      %p71 = por %p69, %p70
      %p73 = scmp.ne.s32.totalorder %s58, %s72
      %p74 = scmp.eq.s32.totalorder %s27, 0
      %p75 = por %p73, %p74
      %s77 = sadd.s32 %s76, 1
      %p80 = scmp.eq.s32.totalorder %s21, 1
      %p81 = scmp.ne.s32.totalorder %s76, %s78
      %p82 = scmp.eq.s32.totalorder %s21, 0
      %p83 = por %p81, %p82
      %p84 = scmp.ne.s32.totalorder %s76, %s78
      %p85 = scmp.eq.s32.totalorder %s26, 1
      %p86 = por %p84, %p85
      %p87 = scmp.ne.s32.totalorder %s78, %s79
      %p88 = scmp.eq.s32.totalorder %s26, 0
      %p89 = por %p87, %p88
      %p90 = scmp.ne.s32.totalorder %s78, %s79
      %p91 = scmp.eq.s32.totalorder %s27, 1
      %p92 = por %p90, %p91
      %p94 = scmp.ne.s32.totalorder %s79, %s93
      %p95 = scmp.eq.s32.totalorder %s27, 0
      %p96 = por %p94, %p95
      %s97 = ssub.s32 %s21, %s28
      %p98 = scmp.eq.s32.totalorder %s97, 0
      %s100 = sadd.s32 %s99, 1
      %s101 = scalar_select %p98, %s99, %s100
      %p104 = pneg %p98
      %p105 = scmp.eq.s32.totalorder %s21, 1
      %p106 = por %p104, %p105
      %p107 = scmp.ne.s32.totalorder %s99, %s102
      %p108 = scmp.eq.s32.totalorder %s21, 0
      %p109 = por %p107, %p108
      %p110 = scmp.ne.s32.totalorder %s99, %s102
      %p111 = scmp.eq.s32.totalorder %s26, 1
      %p112 = por %p110, %p111
      %p113 = scmp.ne.s32.totalorder %s102, %s103
      %p114 = scmp.eq.s32.totalorder %s26, 0
      %p115 = por %p113, %p114
      %p116 = scmp.ne.s32.totalorder %s102, %s103
      %p117 = scmp.eq.s32.totalorder %s27, 1
      %p118 = por %p116, %p117
      %p120 = scmp.ne.s32.totalorder %s103, %s119
      %p121 = scmp.eq.s32.totalorder %s27, 0
      %p122 = por %p120, %p121
      %s123 = ssub.s32 %s21, %s28
      %p124 = scmp.eq.s32.totalorder %s123, 0
      %s126 = sadd.s32 %s125, 1
      %s127 = scalar_select %p124, %s125, %s126
      %p130 = pneg %p124
      %p131 = scmp.eq.s32.totalorder %s21, 1
      %p132 = por %p130, %p131
      %p133 = scmp.ne.s32.totalorder %s125, %s128
      %p134 = scmp.eq.s32.totalorder %s21, 0
      %p135 = por %p133, %p134
      %p136 = scmp.ne.s32.totalorder %s125, %s128
      %p137 = scmp.eq.s32.totalorder %s26, 1
      %p138 = por %p136, %p137
      %p139 = scmp.ne.s32.totalorder %s128, %s129
      %p140 = scmp.eq.s32.totalorder %s26, 0
      %p141 = por %p139, %p140
      %p142 = scmp.ne.s32.totalorder %s128, %s129
      %p143 = scmp.eq.s32.totalorder %s27, 1
      %p144 = por %p142, %p143
      %p146 = scmp.ne.s32.totalorder %s129, %s145
      %p147 = scmp.eq.s32.totalorder %s27, 0
      %p148 = por %p146, %p147
      %p149 = scmp.le.s32.totalorder 1, %s21
      %p150 = scmp.lt.s32.totalorder %s21, 3
      %p151 = pnand %p149, %p150
      %p152 = pneg %p151
      // Predicated region
      $region9: #{tpu_custom_call.1} parent=5 // pred_check
        _
      $region10: #{tpu_custom_call.1} parent=5 // pred_check_branch
        %154 = sbr.rel (%p151) target = $region12
      $region11: #{tpu_custom_call.1} parent=5 // pred_region
        %s155 = ssub.s32 %s21, 1
        // Predicated region
        $region13: #{tpu_custom_call.1} parent=11 // pred_check
          %p156 = pneg %p68
        $region14: #{tpu_custom_call.1} parent=11 // pred_check_branch
          %158 = sbr.rel (%p156) target = $region16
        $region15: #{tpu_custom_call.1} parent=11 // pred_region
          %s160 = ssub.s32 15360, 15360
          %161 = vsyncadd [#allocation6], %s160
          %s162 = sshll.u32 [#allocation5], 4
          %s163 = int_to_ptr.vmem [resolvable:$true] %s162
          %168 = dma.hbm_to_vmem [thread:$0]  %s1, 15360, %s163, [#allocation6], 64, 64, 4
        $region16: #{tpu_custom_call.1} parent=11 // pred_fallthru
          _
        // Predicated region
        $region17: #{tpu_custom_call.1} parent=11 // pred_check
          %p169 = pneg %p89
        $region18: #{tpu_custom_call.1} parent=11 // pred_check_branch
          %171 = sbr.rel (%p169) target = $region20
        $region19: #{tpu_custom_call.1} parent=11 // pred_region
          %s173 = ssub.s32 16, 16
          %174 = vsyncadd [#allocation6], %s173
          %s176 = sshll.u32 [#allocation7], 4
          %s177 = int_to_ptr.vmem [resolvable:$true] %s176
          %179 = dma.hbm_to_vmem [thread:$0]  %s2, 16, %s177, [#allocation6]
        $region20: #{tpu_custom_call.1} parent=11 // pred_fallthru
          _
      $region12: #{tpu_custom_call.1} parent=5 // pred_fallthru
        _
      %p180 = scmp.lt.s32.totalorder %s21, 2
      // Predicated region
      $region21: #{tpu_custom_call.1} parent=5 // pred_check
        %p181 = pneg %p180
      $region22: #{tpu_custom_call.1} parent=5 // pred_check_branch
        %183 = sbr.rel (%p181) target = $region24
      $region23: #{tpu_custom_call.1} parent=5 // pred_region
        // Predicated region
        $region25: #{tpu_custom_call.1} parent=23 // pred_check
          %p184 = pneg %p41
        $region26: #{tpu_custom_call.1} parent=23 // pred_check_branch
          %186 = sbr.rel (%p184) target = $region28
        $region27: #{tpu_custom_call.1} parent=23 // pred_region
          %s187 = sand.u32 %s31, 1
          %s188 = scalar_lea.sflag [#allocation3], %s187
          %s189 = sand.u32 %s31, 1
          %s190 = smul.addr %s189, 6720
          %s191 = scalar_lea.vmem [#allocation2], %s190
          %s192 = smul.u32 8, %s21
          %s193 = ssub.s32 10, %s192
          %p194 = scmp.lt.s32.totalorder %s193, 8
          %s195 = scalar_select %p194, %s193, 8
          %s196 = smul.u32 128, %s195
          %s197 = smul.u32 %s196, 7
          %s198 = smul.u32 %s197, 15
          %s200 = ssub.s32 107520, %s198
          %201 = vsyncadd %s188, %s200
          %p202 = scmp.ne.s32.totalorder 0, %s198
          %s203 = smul.addr %s192, 105
          %s204 = smul.addr %s203, 128
          %s205 = scalar_lea.hbm %s0, %s204
          %s206 = smul.u32 %s195, 7
          %s207 = smul.u32 120, %s206
          %s208 = sshll.u32 %s191, 4
          %s209 = int_to_ptr.vmem [resolvable:$true] %s208
          %s210 = sshll.u32 %s207, 4
          %214 = dma.hbm_to_vmem [thread:$0]  (%p202), %s205, %s210, %s209, %s188, 1920, 1920, 120
        $region28: #{tpu_custom_call.1} parent=23 // pred_fallthru
          _
      $region24: #{tpu_custom_call.1} parent=5 // pred_fallthru
        _
      %p215 = scmp.le.s32.totalorder 1, %s21
      %p216 = scmp.lt.s32.totalorder %s21, 3
      %p217 = pnand %p215, %p216
      %p218 = pneg %p217
      // Predicated region
      $region29: #{tpu_custom_call.1} parent=5 // pred_check
        _
      $region30: #{tpu_custom_call.1} parent=5 // pred_check_branch
        %220 = sbr.rel (%p217) target = $region32
      $region31: #{tpu_custom_call.1} parent=5 // pred_region
        %s221 = ssub.s32 %s21, 1
        %s222 = sand.u32 %s34, 1
        %s223 = scalar_lea.sflag [#allocation3], %s222
        %s224 = sand.u32 %s34, 1
        %s225 = smul.addr %s224, 6720
        %s226 = scalar_lea.vmem [#allocation2], %s225
        // Predicated region
        $region33: #{tpu_custom_call.1} parent=31 // pred_check
          %p227 = pneg %p47
        $region34: #{tpu_custom_call.1} parent=31 // pred_check_branch
          %229 = sbr.rel (%p227) target = $region36
        $region35: #{tpu_custom_call.1} parent=31 // pred_region
          %230 = dma.done %s223, 107520
        $region36: #{tpu_custom_call.1} parent=31 // pred_fallthru
          _
        // Predicated region
        $region37: #{tpu_custom_call.1} parent=31 // pred_check
          %p231 = pneg %p68
        $region38: #{tpu_custom_call.1} parent=31 // pred_check_branch
          %233 = sbr.rel (%p231) target = $region40
        $region39: #{tpu_custom_call.1} parent=31 // pred_region
          %234 = dma.done [#allocation6], 15360
        $region40: #{tpu_custom_call.1} parent=31 // pred_fallthru
          _
        // Predicated region
        $region41: #{tpu_custom_call.1} parent=31 // pred_check
          %p235 = pneg %p89
        $region42: #{tpu_custom_call.1} parent=31 // pred_check_branch
          %237 = sbr.rel (%p235) target = $region44
        $region43: #{tpu_custom_call.1} parent=31 // pred_region
          %238 = dma.done [#allocation6], 16
        $region44: #{tpu_custom_call.1} parent=31 // pred_fallthru
          _
        %s239 = sand.u32 %s34, 1
        %s240 = scalar_lea.sflag [#allocation3], %s239
        %s241 = sand.u32 %s34, 1
        %s242 = smul.addr %s241, 6720
        %s243 = scalar_lea.vmem [#allocation2], %s242
        %p244 = pneg %p47
        %p245 = pneg %p44
        %p246 = pneg %p68
        %p247 = pneg %p65
        %p248 = pneg %p89
        %p249 = pneg %p86
        %p250 = pneg %p115
        %p251 = pneg %p112
        %s252 = sand.u32 %s102, 1
        %s253 = scalar_lea.sflag [#allocation4], %s252
        %s254 = sand.u32 %s102, 1
        %s255 = smul.addr %s254, 120
        %s256 = scalar_lea.vmem [#allocation8], %s255
        %p257 = pneg %p141
        %p258 = pneg %p138
        %s259 = sand.u32 %s128, 1
        %s260 = scalar_lea.sflag [#allocation10], %s259
        %s261 = sand.u32 %s128, 1
        %s262 = smul.addr %s261, 8
        %s263 = scalar_lea.vmem [#allocation9], %s262
        %s264 = smul.u32 8, %s26
        %s265 = ssub.s32 10, %s264
        %p266 = scmp.lt.s32.totalorder %s265, 8
        %s267 = scalar_select %p266, %s265, 8
        %s268 = smul.u32 128, %s267
        %s269 = smul.u32 %s268, 7
        %s270 = smul.u32 %s269, 15
        %v272 = vld [vmem:[%s226] sm:$0xff]
        %v273 = vld [vmem:[%s226 + $0x8] sm:$0xff]
        %v274 = vld [vmem:[%s226 + $0x10] sm:$0xff]
        %v275 = vld [vmem:[%s226 + $0x18] sm:$0xff]
        %v276 = vld [vmem:[%s226 + $0x20] sm:$0xff]
        %v277 = vld [vmem:[%s226 + $0x28] sm:$0xff]
        %v278 = vld [vmem:[%s226 + $0x30] sm:$0xff]
        %v279 = vld [vmem:[%s226 + $0x38] sm:$0xff]
        %v280 = vld [vmem:[%s226 + $0x40] sm:$0xff]
        %v281 = vld [vmem:[%s226 + $0x48] sm:$0xff]
        %v282 = vld [vmem:[%s226 + $0x50] sm:$0xff]
        %v283 = vld [vmem:[%s226 + $0x58] sm:$0xff]
        %v284 = vld [vmem:[%s226 + $0x60] sm:$0xff]
        %v285 = vld [vmem:[%s226 + $0x68] sm:$0xff]
        %v286 = vld [vmem:[%s226 + $0x70] sm:$0xff]
        %v287 = vld [vmem:[%s226 + $0x78] sm:$0xff]
        %v288 = vld [vmem:[%s226 + $0x80] sm:$0xff]
        %v289 = vld [vmem:[%s226 + $0x88] sm:$0xff]
        %v290 = vld [vmem:[%s226 + $0x90] sm:$0xff]
        %v291 = vld [vmem:[%s226 + $0x98] sm:$0xff]
        %v292 = vld [vmem:[%s226 + $0xa0] sm:$0xff]
        %v293 = vld [vmem:[%s226 + $0xa8] sm:$0xff]
        %v294 = vld [vmem:[%s226 + $0xb0] sm:$0xff]
        %v295 = vld [vmem:[%s226 + $0xb8] sm:$0xff]
        %v296 = vld [vmem:[%s226 + $0xc0] sm:$0xff]
        %v297 = vld [vmem:[%s226 + $0xc8] sm:$0xff]
        %v298 = vld [vmem:[%s226 + $0xd0] sm:$0xff]
        %v299 = vld [vmem:[%s226 + $0xd8] sm:$0xff]
        %v300 = vld [vmem:[%s226 + $0xe0] sm:$0xff]
        %v301 = vld [vmem:[%s226 + $0xe8] sm:$0xff]
        %v302 = vld [vmem:[%s226 + $0xf0] sm:$0xff]
        %v303 = vld [vmem:[%s226 + $0xf8] sm:$0xff]
        %v304 = vld [vmem:[%s226 + $0x100] sm:$0xff]
        %v305 = vld [vmem:[%s226 + $0x108] sm:$0xff]
        %v306 = vld [vmem:[%s226 + $0x110] sm:$0xff]
        %v307 = vld [vmem:[%s226 + $0x118] sm:$0xff]
        %v308 = vld [vmem:[%s226 + $0x120] sm:$0xff]
        %v309 = vld [vmem:[%s226 + $0x128] sm:$0xff]
        %v310 = vld [vmem:[%s226 + $0x130] sm:$0xff]
        %v311 = vld [vmem:[%s226 + $0x138] sm:$0xff]
        %v312 = vld [vmem:[%s226 + $0x140] sm:$0xff]
        %v313 = vld [vmem:[%s226 + $0x148] sm:$0xff]
        %v314 = vld [vmem:[%s226 + $0x150] sm:$0xff]
        %v315 = vld [vmem:[%s226 + $0x158] sm:$0xff]
        %v316 = vld [vmem:[%s226 + $0x160] sm:$0xff]
        %v317 = vld [vmem:[%s226 + $0x168] sm:$0xff]
        %v318 = vld [vmem:[%s226 + $0x170] sm:$0xff]
        %v319 = vld [vmem:[%s226 + $0x178] sm:$0xff]
        %v320 = vld [vmem:[%s226 + $0x180] sm:$0xff]
        %v321 = vld [vmem:[%s226 + $0x188] sm:$0xff]
        %v322 = vld [vmem:[%s226 + $0x190] sm:$0xff]
        %v323 = vld [vmem:[%s226 + $0x198] sm:$0xff]
        %v324 = vld [vmem:[%s226 + $0x1a0] sm:$0xff]
        %v325 = vld [vmem:[%s226 + $0x1a8] sm:$0xff]
        %v326 = vld [vmem:[%s226 + $0x1b0] sm:$0xff]
        %v327 = vld [vmem:[%s226 + $0x1b8] sm:$0xff]
        %v328 = vld [vmem:[%s226 + $0x1c0] sm:$0xff]
        %v329 = vld [vmem:[%s226 + $0x1c8] sm:$0xff]
        %v330 = vld [vmem:[%s226 + $0x1d0] sm:$0xff]
        %v331 = vld [vmem:[%s226 + $0x1d8] sm:$0xff]
        %v332 = vld [vmem:[%s226 + $0x1e0] sm:$0xff]
        %v333 = vld [vmem:[%s226 + $0x1e8] sm:$0xff]
        %v334 = vld [vmem:[%s226 + $0x1f0] sm:$0xff]
        %v335 = vld [vmem:[%s226 + $0x1f8] sm:$0xff]
        %v336 = vld [vmem:[%s226 + $0x200] sm:$0xff]
        %v337 = vld [vmem:[%s226 + $0x208] sm:$0xff]
        %v338 = vld [vmem:[%s226 + $0x210] sm:$0xff]
        %v339 = vld [vmem:[%s226 + $0x218] sm:$0xff]
        %v340 = vld [vmem:[%s226 + $0x220] sm:$0xff]
        %v341 = vld [vmem:[%s226 + $0x228] sm:$0xff]
        %v342 = vld [vmem:[%s226 + $0x230] sm:$0xff]
        %v343 = vld [vmem:[%s226 + $0x238] sm:$0xff]
        %v344 = vld [vmem:[%s226 + $0x240] sm:$0xff]
        %v345 = vld [vmem:[%s226 + $0x248] sm:$0xff]
        %v346 = vld [vmem:[%s226 + $0x250] sm:$0xff]
        %v347 = vld [vmem:[%s226 + $0x258] sm:$0xff]
        %v348 = vld [vmem:[%s226 + $0x260] sm:$0xff]
        %v349 = vld [vmem:[%s226 + $0x268] sm:$0xff]
        %v350 = vld [vmem:[%s226 + $0x270] sm:$0xff]
        %v351 = vld [vmem:[%s226 + $0x278] sm:$0xff]
        %v352 = vld [vmem:[%s226 + $0x280] sm:$0xff]
        %v353 = vld [vmem:[%s226 + $0x288] sm:$0xff]
        %v354 = vld [vmem:[%s226 + $0x290] sm:$0xff]
        %v355 = vld [vmem:[%s226 + $0x298] sm:$0xff]
        %v356 = vld [vmem:[%s226 + $0x2a0] sm:$0xff]
        %v357 = vld [vmem:[%s226 + $0x2a8] sm:$0xff]
        %v358 = vld [vmem:[%s226 + $0x2b0] sm:$0xff]
        %v359 = vld [vmem:[%s226 + $0x2b8] sm:$0xff]
        %v360 = vld [vmem:[%s226 + $0x2c0] sm:$0xff]
        %v361 = vld [vmem:[%s226 + $0x2c8] sm:$0xff]
        %v362 = vld [vmem:[%s226 + $0x2d0] sm:$0x1]
        %v363 = vld [vmem:[%s226 + $0x2d8] sm:$0x1]
        %v364 = vld [vmem:[%s226 + $0x2e0] sm:$0x1]
        %v365 = vld [vmem:[%s226 + $0x2e8] sm:$0x1]
        %v366 = vld [vmem:[%s226 + $0x2f0] sm:$0x1]
        %v367 = vld [vmem:[%s226 + $0x2f8] sm:$0x1]
        %v368 = vld [vmem:[%s226 + $0x300] sm:$0x1]
        %v369 = vld [vmem:[%s226 + $0x308] sm:$0x1]
        %v370 = vld [vmem:[%s226 + $0x310] sm:$0x1]
        %v371 = vld [vmem:[%s226 + $0x318] sm:$0x1]
        %v372 = vld [vmem:[%s226 + $0x320] sm:$0x1]
        %v373 = vld [vmem:[%s226 + $0x328] sm:$0x1]
        %v374 = vld [vmem:[%s226 + $0x330] sm:$0x1]
        %v375 = vld [vmem:[%s226 + $0x338] sm:$0x1]
        %v376 = vld [vmem:[%s226 + $0x340] sm:$0x1]
        %v377 = vld [vmem:[%s226 + $0x348] sm:$0xff]
        %v378 = vld [vmem:[%s226 + $0x350] sm:$0xff]
        %v379 = vld [vmem:[%s226 + $0x358] sm:$0xff]
        %v380 = vld [vmem:[%s226 + $0x360] sm:$0xff]
        %v381 = vld [vmem:[%s226 + $0x368] sm:$0xff]
        %v382 = vld [vmem:[%s226 + $0x370] sm:$0xff]
        %v383 = vld [vmem:[%s226 + $0x378] sm:$0xff]
        %v384 = vld [vmem:[%s226 + $0x380] sm:$0xff]
        %v385 = vld [vmem:[%s226 + $0x388] sm:$0xff]
        %v386 = vld [vmem:[%s226 + $0x390] sm:$0xff]
        %v387 = vld [vmem:[%s226 + $0x398] sm:$0xff]
        %v388 = vld [vmem:[%s226 + $0x3a0] sm:$0xff]
        %v389 = vld [vmem:[%s226 + $0x3a8] sm:$0xff]
        %v390 = vld [vmem:[%s226 + $0x3b0] sm:$0xff]
        %v391 = vld [vmem:[%s226 + $0x3b8] sm:$0xff]
        %v392 = vld [vmem:[%s226 + $0x3c0] sm:$0xff]
        %v393 = vld [vmem:[%s226 + $0x3c8] sm:$0xff]
        %v394 = vld [vmem:[%s226 + $0x3d0] sm:$0xff]
        %v395 = vld [vmem:[%s226 + $0x3d8] sm:$0xff]
        %v396 = vld [vmem:[%s226 + $0x3e0] sm:$0xff]
        %v397 = vld [vmem:[%s226 + $0x3e8] sm:$0xff]
        %v398 = vld [vmem:[%s226 + $0x3f0] sm:$0xff]
        %v399 = vld [vmem:[%s226 + $0x3f8] sm:$0xff]
        %v400 = vld [vmem:[%s226 + $0x400] sm:$0xff]
        %v401 = vld [vmem:[%s226 + $0x408] sm:$0xff]
        %v402 = vld [vmem:[%s226 + $0x410] sm:$0xff]
        %v403 = vld [vmem:[%s226 + $0x418] sm:$0xff]
        %v404 = vld [vmem:[%s226 + $0x420] sm:$0xff]
        %v405 = vld [vmem:[%s226 + $0x428] sm:$0xff]
        %v406 = vld [vmem:[%s226 + $0x430] sm:$0xff]
        %v407 = vld [vmem:[%s226 + $0x438] sm:$0xff]
        %v408 = vld [vmem:[%s226 + $0x440] sm:$0xff]
        %v409 = vld [vmem:[%s226 + $0x448] sm:$0xff]
        %v410 = vld [vmem:[%s226 + $0x450] sm:$0xff]
        %v411 = vld [vmem:[%s226 + $0x458] sm:$0xff]
        %v412 = vld [vmem:[%s226 + $0x460] sm:$0xff]
        %v413 = vld [vmem:[%s226 + $0x468] sm:$0xff]
        %v414 = vld [vmem:[%s226 + $0x470] sm:$0xff]
        %v415 = vld [vmem:[%s226 + $0x478] sm:$0xff]
        %v416 = vld [vmem:[%s226 + $0x480] sm:$0xff]
        %v417 = vld [vmem:[%s226 + $0x488] sm:$0xff]
        %v418 = vld [vmem:[%s226 + $0x490] sm:$0xff]
        %v419 = vld [vmem:[%s226 + $0x498] sm:$0xff]
        %v420 = vld [vmem:[%s226 + $0x4a0] sm:$0xff]
        %v421 = vld [vmem:[%s226 + $0x4a8] sm:$0xff]
        %v422 = vld [vmem:[%s226 + $0x4b0] sm:$0xff]
        %v423 = vld [vmem:[%s226 + $0x4b8] sm:$0xff]
        %v424 = vld [vmem:[%s226 + $0x4c0] sm:$0xff]
        %v425 = vld [vmem:[%s226 + $0x4c8] sm:$0xff]
        %v426 = vld [vmem:[%s226 + $0x4d0] sm:$0xff]
        %v427 = vld [vmem:[%s226 + $0x4d8] sm:$0xff]
        %v428 = vld [vmem:[%s226 + $0x4e0] sm:$0xff]
        %v429 = vld [vmem:[%s226 + $0x4e8] sm:$0xff]
        %v430 = vld [vmem:[%s226 + $0x4f0] sm:$0xff]
        %v431 = vld [vmem:[%s226 + $0x4f8] sm:$0xff]
        %v432 = vld [vmem:[%s226 + $0x500] sm:$0xff]
        %v433 = vld [vmem:[%s226 + $0x508] sm:$0xff]
        %v434 = vld [vmem:[%s226 + $0x510] sm:$0xff]
        %v435 = vld [vmem:[%s226 + $0x518] sm:$0xff]
        %v436 = vld [vmem:[%s226 + $0x520] sm:$0xff]
        %v437 = vld [vmem:[%s226 + $0x528] sm:$0xff]
        %v438 = vld [vmem:[%s226 + $0x530] sm:$0xff]
        %v439 = vld [vmem:[%s226 + $0x538] sm:$0xff]
        %v440 = vld [vmem:[%s226 + $0x540] sm:$0xff]
        %v441 = vld [vmem:[%s226 + $0x548] sm:$0xff]
        %v442 = vld [vmem:[%s226 + $0x550] sm:$0xff]
        %v443 = vld [vmem:[%s226 + $0x558] sm:$0xff]
        %v444 = vld [vmem:[%s226 + $0x560] sm:$0xff]
        %v445 = vld [vmem:[%s226 + $0x568] sm:$0xff]
        %v446 = vld [vmem:[%s226 + $0x570] sm:$0xff]
        %v447 = vld [vmem:[%s226 + $0x578] sm:$0xff]
        %v448 = vld [vmem:[%s226 + $0x580] sm:$0xff]
        %v449 = vld [vmem:[%s226 + $0x588] sm:$0xff]
        %v450 = vld [vmem:[%s226 + $0x590] sm:$0xff]
        %v451 = vld [vmem:[%s226 + $0x598] sm:$0xff]
        %v452 = vld [vmem:[%s226 + $0x5a0] sm:$0xff]
        %v453 = vld [vmem:[%s226 + $0x5a8] sm:$0xff]
        %v454 = vld [vmem:[%s226 + $0x5b0] sm:$0xff]
        %v455 = vld [vmem:[%s226 + $0x5b8] sm:$0xff]
        %v456 = vld [vmem:[%s226 + $0x5c0] sm:$0xff]
        %v457 = vld [vmem:[%s226 + $0x5c8] sm:$0xff]
        %v458 = vld [vmem:[%s226 + $0x5d0] sm:$0xff]
        %v459 = vld [vmem:[%s226 + $0x5d8] sm:$0xff]
        %v460 = vld [vmem:[%s226 + $0x5e0] sm:$0xff]
        %v461 = vld [vmem:[%s226 + $0x5e8] sm:$0xff]
        %v462 = vld [vmem:[%s226 + $0x5f0] sm:$0xff]
        %v463 = vld [vmem:[%s226 + $0x5f8] sm:$0xff]
        %v464 = vld [vmem:[%s226 + $0x600] sm:$0xff]
        %v465 = vld [vmem:[%s226 + $0x608] sm:$0xff]
        %v466 = vld [vmem:[%s226 + $0x610] sm:$0xff]
        %v467 = vld [vmem:[%s226 + $0x618] sm:$0x1]
        %v468 = vld [vmem:[%s226 + $0x620] sm:$0x1]
        %v469 = vld [vmem:[%s226 + $0x628] sm:$0x1]
        %v470 = vld [vmem:[%s226 + $0x630] sm:$0x1]
        %v471 = vld [vmem:[%s226 + $0x638] sm:$0x1]
        %v472 = vld [vmem:[%s226 + $0x640] sm:$0x1]
        %v473 = vld [vmem:[%s226 + $0x648] sm:$0x1]
        %v474 = vld [vmem:[%s226 + $0x650] sm:$0x1]
        %v475 = vld [vmem:[%s226 + $0x658] sm:$0x1]
        %v476 = vld [vmem:[%s226 + $0x660] sm:$0x1]
        %v477 = vld [vmem:[%s226 + $0x668] sm:$0x1]
        %v478 = vld [vmem:[%s226 + $0x670] sm:$0x1]
        %v479 = vld [vmem:[%s226 + $0x678] sm:$0x1]
        %v480 = vld [vmem:[%s226 + $0x680] sm:$0x1]
        %v481 = vld [vmem:[%s226 + $0x688] sm:$0x1]
        %v482 = vld [vmem:[%s226 + $0x690] sm:$0xff]
        %v483 = vld [vmem:[%s226 + $0x698] sm:$0xff]
        %v484 = vld [vmem:[%s226 + $0x6a0] sm:$0xff]
        %v485 = vld [vmem:[%s226 + $0x6a8] sm:$0xff]
        %v486 = vld [vmem:[%s226 + $0x6b0] sm:$0xff]
        %v487 = vld [vmem:[%s226 + $0x6b8] sm:$0xff]
        %v488 = vld [vmem:[%s226 + $0x6c0] sm:$0xff]
        %v489 = vld [vmem:[%s226 + $0x6c8] sm:$0xff]
        %v490 = vld [vmem:[%s226 + $0x6d0] sm:$0xff]
        %v491 = vld [vmem:[%s226 + $0x6d8] sm:$0xff]
        %v492 = vld [vmem:[%s226 + $0x6e0] sm:$0xff]
        %v493 = vld [vmem:[%s226 + $0x6e8] sm:$0xff]
        %v494 = vld [vmem:[%s226 + $0x6f0] sm:$0xff]
        %v495 = vld [vmem:[%s226 + $0x6f8] sm:$0xff]
        %v496 = vld [vmem:[%s226 + $0x700] sm:$0xff]
        %v497 = vld [vmem:[%s226 + $0x708] sm:$0xff]
        %v498 = vld [vmem:[%s226 + $0x710] sm:$0xff]
        %v499 = vld [vmem:[%s226 + $0x718] sm:$0xff]
        %v500 = vld [vmem:[%s226 + $0x720] sm:$0xff]
        %v501 = vld [vmem:[%s226 + $0x728] sm:$0xff]
        %v502 = vld [vmem:[%s226 + $0x730] sm:$0xff]
        %v503 = vld [vmem:[%s226 + $0x738] sm:$0xff]
        %v504 = vld [vmem:[%s226 + $0x740] sm:$0xff]
        %v505 = vld [vmem:[%s226 + $0x748] sm:$0xff]
        %v506 = vld [vmem:[%s226 + $0x750] sm:$0xff]
        %v507 = vld [vmem:[%s226 + $0x758] sm:$0xff]
        %v508 = vld [vmem:[%s226 + $0x760] sm:$0xff]
        %v509 = vld [vmem:[%s226 + $0x768] sm:$0xff]
        %v510 = vld [vmem:[%s226 + $0x770] sm:$0xff]
        %v511 = vld [vmem:[%s226 + $0x778] sm:$0xff]
        %v512 = vld [vmem:[%s226 + $0x780] sm:$0xff]
        %v513 = vld [vmem:[%s226 + $0x788] sm:$0xff]
        %v514 = vld [vmem:[%s226 + $0x790] sm:$0xff]
        %v515 = vld [vmem:[%s226 + $0x798] sm:$0xff]
        %v516 = vld [vmem:[%s226 + $0x7a0] sm:$0xff]
        %v517 = vld [vmem:[%s226 + $0x7a8] sm:$0xff]
        %v518 = vld [vmem:[%s226 + $0x7b0] sm:$0xff]
        %v519 = vld [vmem:[%s226 + $0x7b8] sm:$0xff]
        %v520 = vld [vmem:[%s226 + $0x7c0] sm:$0xff]
        %v521 = vld [vmem:[%s226 + $0x7c8] sm:$0xff]
        %v522 = vld [vmem:[%s226 + $0x7d0] sm:$0xff]
        %v523 = vld [vmem:[%s226 + $0x7d8] sm:$0xff]
        %v524 = vld [vmem:[%s226 + $0x7e0] sm:$0xff]
        %v525 = vld [vmem:[%s226 + $0x7e8] sm:$0xff]
        %v526 = vld [vmem:[%s226 + $0x7f0] sm:$0xff]
        %v527 = vld [vmem:[%s226 + $0x7f8] sm:$0xff]
        %v528 = vld [vmem:[%s226 + $0x800] sm:$0xff]
        %v529 = vld [vmem:[%s226 + $0x808] sm:$0xff]
        %v530 = vld [vmem:[%s226 + $0x810] sm:$0xff]
        %v531 = vld [vmem:[%s226 + $0x818] sm:$0xff]
        %v532 = vld [vmem:[%s226 + $0x820] sm:$0xff]
        %v533 = vld [vmem:[%s226 + $0x828] sm:$0xff]
        %v534 = vld [vmem:[%s226 + $0x830] sm:$0xff]
        %v535 = vld [vmem:[%s226 + $0x838] sm:$0xff]
        %v536 = vld [vmem:[%s226 + $0x840] sm:$0xff]
        %v537 = vld [vmem:[%s226 + $0x848] sm:$0xff]
        %v538 = vld [vmem:[%s226 + $0x850] sm:$0xff]
        %v539 = vld [vmem:[%s226 + $0x858] sm:$0xff]
        %v540 = vld [vmem:[%s226 + $0x860] sm:$0xff]
        %v541 = vld [vmem:[%s226 + $0x868] sm:$0xff]
        %v542 = vld [vmem:[%s226 + $0x870] sm:$0xff]
        %v543 = vld [vmem:[%s226 + $0x878] sm:$0xff]
        %v544 = vld [vmem:[%s226 + $0x880] sm:$0xff]
        %v545 = vld [vmem:[%s226 + $0x888] sm:$0xff]
        %v546 = vld [vmem:[%s226 + $0x890] sm:$0xff]
        %v547 = vld [vmem:[%s226 + $0x898] sm:$0xff]
        %v548 = vld [vmem:[%s226 + $0x8a0] sm:$0xff]
        %v549 = vld [vmem:[%s226 + $0x8a8] sm:$0xff]
        %v550 = vld [vmem:[%s226 + $0x8b0] sm:$0xff]
        %v551 = vld [vmem:[%s226 + $0x8b8] sm:$0xff]
        %v552 = vld [vmem:[%s226 + $0x8c0] sm:$0xff]
        %v553 = vld [vmem:[%s226 + $0x8c8] sm:$0xff]
        %v554 = vld [vmem:[%s226 + $0x8d0] sm:$0xff]
        %v555 = vld [vmem:[%s226 + $0x8d8] sm:$0xff]
        %v556 = vld [vmem:[%s226 + $0x8e0] sm:$0xff]
        %v557 = vld [vmem:[%s226 + $0x8e8] sm:$0xff]
        %v558 = vld [vmem:[%s226 + $0x8f0] sm:$0xff]
        %v559 = vld [vmem:[%s226 + $0x8f8] sm:$0xff]
        %v560 = vld [vmem:[%s226 + $0x900] sm:$0xff]
        %v561 = vld [vmem:[%s226 + $0x908] sm:$0xff]
        %v562 = vld [vmem:[%s226 + $0x910] sm:$0xff]
        %v563 = vld [vmem:[%s226 + $0x918] sm:$0xff]
        %v564 = vld [vmem:[%s226 + $0x920] sm:$0xff]
        %v565 = vld [vmem:[%s226 + $0x928] sm:$0xff]
        %v566 = vld [vmem:[%s226 + $0x930] sm:$0xff]
        %v567 = vld [vmem:[%s226 + $0x938] sm:$0xff]
        %v568 = vld [vmem:[%s226 + $0x940] sm:$0xff]
        %v569 = vld [vmem:[%s226 + $0x948] sm:$0xff]
        %v570 = vld [vmem:[%s226 + $0x950] sm:$0xff]
        %v571 = vld [vmem:[%s226 + $0x958] sm:$0xff]
        %v572 = vld [vmem:[%s226 + $0x960] sm:$0x1]
        %v573 = vld [vmem:[%s226 + $0x968] sm:$0x1]
        %v574 = vld [vmem:[%s226 + $0x970] sm:$0x1]
        %v575 = vld [vmem:[%s226 + $0x978] sm:$0x1]
        %v576 = vld [vmem:[%s226 + $0x980] sm:$0x1]
        %v577 = vld [vmem:[%s226 + $0x988] sm:$0x1]
        %v578 = vld [vmem:[%s226 + $0x990] sm:$0x1]
        %v579 = vld [vmem:[%s226 + $0x998] sm:$0x1]
        %v580 = vld [vmem:[%s226 + $0x9a0] sm:$0x1]
        %v581 = vld [vmem:[%s226 + $0x9a8] sm:$0x1]
        %v582 = vld [vmem:[%s226 + $0x9b0] sm:$0x1]
        %v583 = vld [vmem:[%s226 + $0x9b8] sm:$0x1]
        %v584 = vld [vmem:[%s226 + $0x9c0] sm:$0x1]
        %v585 = vld [vmem:[%s226 + $0x9c8] sm:$0x1]
        %v586 = vld [vmem:[%s226 + $0x9d0] sm:$0x1]
        %v587 = vld [vmem:[%s226 + $0x9d8] sm:$0xff]
        %v588 = vld [vmem:[%s226 + $0x9e0] sm:$0xff]
        %v589 = vld [vmem:[%s226 + $0x9e8] sm:$0xff]
        %v590 = vld [vmem:[%s226 + $0x9f0] sm:$0xff]
        %v591 = vld [vmem:[%s226 + $0x9f8] sm:$0xff]
        %v592 = vld [vmem:[%s226 + $0xa00] sm:$0xff]
        %v593 = vld [vmem:[%s226 + $0xa08] sm:$0xff]
        %v594 = vld [vmem:[%s226 + $0xa10] sm:$0xff]
        %v595 = vld [vmem:[%s226 + $0xa18] sm:$0xff]
        %v596 = vld [vmem:[%s226 + $0xa20] sm:$0xff]
        %v597 = vld [vmem:[%s226 + $0xa28] sm:$0xff]
        %v598 = vld [vmem:[%s226 + $0xa30] sm:$0xff]
        %v599 = vld [vmem:[%s226 + $0xa38] sm:$0xff]
        %v600 = vld [vmem:[%s226 + $0xa40] sm:$0xff]
        %v601 = vld [vmem:[%s226 + $0xa48] sm:$0xff]
        %v602 = vld [vmem:[%s226 + $0xa50] sm:$0xff]
        %v603 = vld [vmem:[%s226 + $0xa58] sm:$0xff]
        %v604 = vld [vmem:[%s226 + $0xa60] sm:$0xff]
        %v605 = vld [vmem:[%s226 + $0xa68] sm:$0xff]
        %v606 = vld [vmem:[%s226 + $0xa70] sm:$0xff]
        %v607 = vld [vmem:[%s226 + $0xa78] sm:$0xff]
        %v608 = vld [vmem:[%s226 + $0xa80] sm:$0xff]
        %v609 = vld [vmem:[%s226 + $0xa88] sm:$0xff]
        %v610 = vld [vmem:[%s226 + $0xa90] sm:$0xff]
        %v611 = vld [vmem:[%s226 + $0xa98] sm:$0xff]
        %v612 = vld [vmem:[%s226 + $0xaa0] sm:$0xff]
        %v613 = vld [vmem:[%s226 + $0xaa8] sm:$0xff]
        %v614 = vld [vmem:[%s226 + $0xab0] sm:$0xff]
        %v615 = vld [vmem:[%s226 + $0xab8] sm:$0xff]
        %v616 = vld [vmem:[%s226 + $0xac0] sm:$0xff]
        %v617 = vld [vmem:[%s226 + $0xac8] sm:$0xff]
        %v618 = vld [vmem:[%s226 + $0xad0] sm:$0xff]
        %v619 = vld [vmem:[%s226 + $0xad8] sm:$0xff]
        %v620 = vld [vmem:[%s226 + $0xae0] sm:$0xff]
        %v621 = vld [vmem:[%s226 + $0xae8] sm:$0xff]
        %v622 = vld [vmem:[%s226 + $0xaf0] sm:$0xff]
        %v623 = vld [vmem:[%s226 + $0xaf8] sm:$0xff]
        %v624 = vld [vmem:[%s226 + $0xb00] sm:$0xff]
        %v625 = vld [vmem:[%s226 + $0xb08] sm:$0xff]
        %v626 = vld [vmem:[%s226 + $0xb10] sm:$0xff]
        %v627 = vld [vmem:[%s226 + $0xb18] sm:$0xff]
        %v628 = vld [vmem:[%s226 + $0xb20] sm:$0xff]
        %v629 = vld [vmem:[%s226 + $0xb28] sm:$0xff]
        %v630 = vld [vmem:[%s226 + $0xb30] sm:$0xff]
        %v631 = vld [vmem:[%s226 + $0xb38] sm:$0xff]
        %v632 = vld [vmem:[%s226 + $0xb40] sm:$0xff]
        %v633 = vld [vmem:[%s226 + $0xb48] sm:$0xff]
        %v634 = vld [vmem:[%s226 + $0xb50] sm:$0xff]
        %v635 = vld [vmem:[%s226 + $0xb58] sm:$0xff]
        %v636 = vld [vmem:[%s226 + $0xb60] sm:$0xff]
        %v637 = vld [vmem:[%s226 + $0xb68] sm:$0xff]
        %v638 = vld [vmem:[%s226 + $0xb70] sm:$0xff]
        %v639 = vld [vmem:[%s226 + $0xb78] sm:$0xff]
        %v640 = vld [vmem:[%s226 + $0xb80] sm:$0xff]
        %v641 = vld [vmem:[%s226 + $0xb88] sm:$0xff]
        %v642 = vld [vmem:[%s226 + $0xb90] sm:$0xff]
        %v643 = vld [vmem:[%s226 + $0xb98] sm:$0xff]
        %v644 = vld [vmem:[%s226 + $0xba0] sm:$0xff]
        %v645 = vld [vmem:[%s226 + $0xba8] sm:$0xff]
        %v646 = vld [vmem:[%s226 + $0xbb0] sm:$0xff]
        %v647 = vld [vmem:[%s226 + $0xbb8] sm:$0xff]
        %v648 = vld [vmem:[%s226 + $0xbc0] sm:$0xff]
        %v649 = vld [vmem:[%s226 + $0xbc8] sm:$0xff]
        %v650 = vld [vmem:[%s226 + $0xbd0] sm:$0xff]
        %v651 = vld [vmem:[%s226 + $0xbd8] sm:$0xff]
        %v652 = vld [vmem:[%s226 + $0xbe0] sm:$0xff]
        %v653 = vld [vmem:[%s226 + $0xbe8] sm:$0xff]
        %v654 = vld [vmem:[%s226 + $0xbf0] sm:$0xff]
        %v655 = vld [vmem:[%s226 + $0xbf8] sm:$0xff]
        %v656 = vld [vmem:[%s226 + $0xc00] sm:$0xff]
        %v657 = vld [vmem:[%s226 + $0xc08] sm:$0xff]
        %v658 = vld [vmem:[%s226 + $0xc10] sm:$0xff]
        %v659 = vld [vmem:[%s226 + $0xc18] sm:$0xff]
        %v660 = vld [vmem:[%s226 + $0xc20] sm:$0xff]
        %v661 = vld [vmem:[%s226 + $0xc28] sm:$0xff]
        %v662 = vld [vmem:[%s226 + $0xc30] sm:$0xff]
        %v663 = vld [vmem:[%s226 + $0xc38] sm:$0xff]
        %v664 = vld [vmem:[%s226 + $0xc40] sm:$0xff]
        %v665 = vld [vmem:[%s226 + $0xc48] sm:$0xff]
        %v666 = vld [vmem:[%s226 + $0xc50] sm:$0xff]
        %v667 = vld [vmem:[%s226 + $0xc58] sm:$0xff]
        %v668 = vld [vmem:[%s226 + $0xc60] sm:$0xff]
        %v669 = vld [vmem:[%s226 + $0xc68] sm:$0xff]
        %v670 = vld [vmem:[%s226 + $0xc70] sm:$0xff]
        %v671 = vld [vmem:[%s226 + $0xc78] sm:$0xff]
        %v672 = vld [vmem:[%s226 + $0xc80] sm:$0xff]
        %v673 = vld [vmem:[%s226 + $0xc88] sm:$0xff]
        %v674 = vld [vmem:[%s226 + $0xc90] sm:$0xff]
        %v675 = vld [vmem:[%s226 + $0xc98] sm:$0xff]
        %v676 = vld [vmem:[%s226 + $0xca0] sm:$0xff]
        %v677 = vld [vmem:[%s226 + $0xca8] sm:$0x1]
        %v678 = vld [vmem:[%s226 + $0xcb0] sm:$0x1]
        %v679 = vld [vmem:[%s226 + $0xcb8] sm:$0x1]
        %v680 = vld [vmem:[%s226 + $0xcc0] sm:$0x1]
        %v681 = vld [vmem:[%s226 + $0xcc8] sm:$0x1]
        %v682 = vld [vmem:[%s226 + $0xcd0] sm:$0x1]
        %v683 = vld [vmem:[%s226 + $0xcd8] sm:$0x1]
        %v684 = vld [vmem:[%s226 + $0xce0] sm:$0x1]
        %v685 = vld [vmem:[%s226 + $0xce8] sm:$0x1]
        %v686 = vld [vmem:[%s226 + $0xcf0] sm:$0x1]
        %v687 = vld [vmem:[%s226 + $0xcf8] sm:$0x1]
        %v688 = vld [vmem:[%s226 + $0xd00] sm:$0x1]
        %v689 = vld [vmem:[%s226 + $0xd08] sm:$0x1]
        %v690 = vld [vmem:[%s226 + $0xd10] sm:$0x1]
        %v691 = vld [vmem:[%s226 + $0xd18] sm:$0x1]
        %v692 = vld [vmem:[%s226 + $0xd20] sm:$0xff]
        %v693 = vld [vmem:[%s226 + $0xd28] sm:$0xff]
        %v694 = vld [vmem:[%s226 + $0xd30] sm:$0xff]
        %v695 = vld [vmem:[%s226 + $0xd38] sm:$0xff]
        %v696 = vld [vmem:[%s226 + $0xd40] sm:$0xff]
        %v697 = vld [vmem:[%s226 + $0xd48] sm:$0xff]
        %v698 = vld [vmem:[%s226 + $0xd50] sm:$0xff]
        %v699 = vld [vmem:[%s226 + $0xd58] sm:$0xff]
        %v700 = vld [vmem:[%s226 + $0xd60] sm:$0xff]
        %v701 = vld [vmem:[%s226 + $0xd68] sm:$0xff]
        %v702 = vld [vmem:[%s226 + $0xd70] sm:$0xff]
        %v703 = vld [vmem:[%s226 + $0xd78] sm:$0xff]
        %v704 = vld [vmem:[%s226 + $0xd80] sm:$0xff]
        %v705 = vld [vmem:[%s226 + $0xd88] sm:$0xff]
        %v706 = vld [vmem:[%s226 + $0xd90] sm:$0xff]
        %v707 = vld [vmem:[%s226 + $0xd98] sm:$0xff]
        %v708 = vld [vmem:[%s226 + $0xda0] sm:$0xff]
        %v709 = vld [vmem:[%s226 + $0xda8] sm:$0xff]
        %v710 = vld [vmem:[%s226 + $0xdb0] sm:$0xff]
        %v711 = vld [vmem:[%s226 + $0xdb8] sm:$0xff]
        %v712 = vld [vmem:[%s226 + $0xdc0] sm:$0xff]
        %v713 = vld [vmem:[%s226 + $0xdc8] sm:$0xff]
        %v714 = vld [vmem:[%s226 + $0xdd0] sm:$0xff]
        %v715 = vld [vmem:[%s226 + $0xdd8] sm:$0xff]
        %v716 = vld [vmem:[%s226 + $0xde0] sm:$0xff]
        %v717 = vld [vmem:[%s226 + $0xde8] sm:$0xff]
        %v718 = vld [vmem:[%s226 + $0xdf0] sm:$0xff]
        %v719 = vld [vmem:[%s226 + $0xdf8] sm:$0xff]
        %v720 = vld [vmem:[%s226 + $0xe00] sm:$0xff]
        %v721 = vld [vmem:[%s226 + $0xe08] sm:$0xff]
        %v722 = vld [vmem:[%s226 + $0xe10] sm:$0xff]
        %v723 = vld [vmem:[%s226 + $0xe18] sm:$0xff]
        %v724 = vld [vmem:[%s226 + $0xe20] sm:$0xff]
        %v725 = vld [vmem:[%s226 + $0xe28] sm:$0xff]
        %v726 = vld [vmem:[%s226 + $0xe30] sm:$0xff]
        %v727 = vld [vmem:[%s226 + $0xe38] sm:$0xff]
        %v728 = vld [vmem:[%s226 + $0xe40] sm:$0xff]
        %v729 = vld [vmem:[%s226 + $0xe48] sm:$0xff]
        %v730 = vld [vmem:[%s226 + $0xe50] sm:$0xff]
        %v731 = vld [vmem:[%s226 + $0xe58] sm:$0xff]
        %v732 = vld [vmem:[%s226 + $0xe60] sm:$0xff]
        %v733 = vld [vmem:[%s226 + $0xe68] sm:$0xff]
        %v734 = vld [vmem:[%s226 + $0xe70] sm:$0xff]
        %v735 = vld [vmem:[%s226 + $0xe78] sm:$0xff]
        %v736 = vld [vmem:[%s226 + $0xe80] sm:$0xff]
        %v737 = vld [vmem:[%s226 + $0xe88] sm:$0xff]
        %v738 = vld [vmem:[%s226 + $0xe90] sm:$0xff]
        %v739 = vld [vmem:[%s226 + $0xe98] sm:$0xff]
        %v740 = vld [vmem:[%s226 + $0xea0] sm:$0xff]
        %v741 = vld [vmem:[%s226 + $0xea8] sm:$0xff]
        %v742 = vld [vmem:[%s226 + $0xeb0] sm:$0xff]
        %v743 = vld [vmem:[%s226 + $0xeb8] sm:$0xff]
        %v744 = vld [vmem:[%s226 + $0xec0] sm:$0xff]
        %v745 = vld [vmem:[%s226 + $0xec8] sm:$0xff]
        %v746 = vld [vmem:[%s226 + $0xed0] sm:$0xff]
        %v747 = vld [vmem:[%s226 + $0xed8] sm:$0xff]
        %v748 = vld [vmem:[%s226 + $0xee0] sm:$0xff]
        %v749 = vld [vmem:[%s226 + $0xee8] sm:$0xff]
        %v750 = vld [vmem:[%s226 + $0xef0] sm:$0xff]
        %v751 = vld [vmem:[%s226 + $0xef8] sm:$0xff]
        %v752 = vld [vmem:[%s226 + $0xf00] sm:$0xff]
        %v753 = vld [vmem:[%s226 + $0xf08] sm:$0xff]
        %v754 = vld [vmem:[%s226 + $0xf10] sm:$0xff]
        %v755 = vld [vmem:[%s226 + $0xf18] sm:$0xff]
        %v756 = vld [vmem:[%s226 + $0xf20] sm:$0xff]
        %v757 = vld [vmem:[%s226 + $0xf28] sm:$0xff]
        %v758 = vld [vmem:[%s226 + $0xf30] sm:$0xff]
        %v759 = vld [vmem:[%s226 + $0xf38] sm:$0xff]
        %v760 = vld [vmem:[%s226 + $0xf40] sm:$0xff]
        %v761 = vld [vmem:[%s226 + $0xf48] sm:$0xff]
        %v762 = vld [vmem:[%s226 + $0xf50] sm:$0xff]
        %v763 = vld [vmem:[%s226 + $0xf58] sm:$0xff]
        %v764 = vld [vmem:[%s226 + $0xf60] sm:$0xff]
        %v765 = vld [vmem:[%s226 + $0xf68] sm:$0xff]
        %v766 = vld [vmem:[%s226 + $0xf70] sm:$0xff]
        %v767 = vld [vmem:[%s226 + $0xf78] sm:$0xff]
        %v768 = vld [vmem:[%s226 + $0xf80] sm:$0xff]
        %v769 = vld [vmem:[%s226 + $0xf88] sm:$0xff]
        %v770 = vld [vmem:[%s226 + $0xf90] sm:$0xff]
        %v771 = vld [vmem:[%s226 + $0xf98] sm:$0xff]
        %v772 = vld [vmem:[%s226 + $0xfa0] sm:$0xff]
        %v773 = vld [vmem:[%s226 + $0xfa8] sm:$0xff]
        %v774 = vld [vmem:[%s226 + $0xfb0] sm:$0xff]
        %v775 = vld [vmem:[%s226 + $0xfb8] sm:$0xff]
        %v776 = vld [vmem:[%s226 + $0xfc0] sm:$0xff]
        %v777 = vld [vmem:[%s226 + $0xfc8] sm:$0xff]
        %v778 = vld [vmem:[%s226 + $0xfd0] sm:$0xff]
        %v779 = vld [vmem:[%s226 + $0xfd8] sm:$0xff]
        %v780 = vld [vmem:[%s226 + $0xfe0] sm:$0xff]
        %v781 = vld [vmem:[%s226 + $0xfe8] sm:$0xff]
        %v782 = vld [vmem:[%s226 + $0xff0] sm:$0x1]
        %v783 = vld [vmem:[%s226 + $0xff8] sm:$0x1]
        %v784 = vld [vmem:[%s226 + $0x1000] sm:$0x1]
        %v785 = vld [vmem:[%s226 + $0x1008] sm:$0x1]
        %v786 = vld [vmem:[%s226 + $0x1010] sm:$0x1]
        %v787 = vld [vmem:[%s226 + $0x1018] sm:$0x1]
        %v788 = vld [vmem:[%s226 + $0x1020] sm:$0x1]
        %v789 = vld [vmem:[%s226 + $0x1028] sm:$0x1]
        %v790 = vld [vmem:[%s226 + $0x1030] sm:$0x1]
        %v791 = vld [vmem:[%s226 + $0x1038] sm:$0x1]
        %v792 = vld [vmem:[%s226 + $0x1040] sm:$0x1]
        %v793 = vld [vmem:[%s226 + $0x1048] sm:$0x1]
        %v794 = vld [vmem:[%s226 + $0x1050] sm:$0x1]
        %v795 = vld [vmem:[%s226 + $0x1058] sm:$0x1]
        %v796 = vld [vmem:[%s226 + $0x1060] sm:$0x1]
        %v797 = vld [vmem:[%s226 + $0x1068] sm:$0xff]
        %v798 = vld [vmem:[%s226 + $0x1070] sm:$0xff]
        %v799 = vld [vmem:[%s226 + $0x1078] sm:$0xff]
        %v800 = vld [vmem:[%s226 + $0x1080] sm:$0xff]
        %v801 = vld [vmem:[%s226 + $0x1088] sm:$0xff]
        %v802 = vld [vmem:[%s226 + $0x1090] sm:$0xff]
        %v803 = vld [vmem:[%s226 + $0x1098] sm:$0xff]
        %v804 = vld [vmem:[%s226 + $0x10a0] sm:$0xff]
        %v805 = vld [vmem:[%s226 + $0x10a8] sm:$0xff]
        %v806 = vld [vmem:[%s226 + $0x10b0] sm:$0xff]
        %v807 = vld [vmem:[%s226 + $0x10b8] sm:$0xff]
        %v808 = vld [vmem:[%s226 + $0x10c0] sm:$0xff]
        %v809 = vld [vmem:[%s226 + $0x10c8] sm:$0xff]
        %v810 = vld [vmem:[%s226 + $0x10d0] sm:$0xff]
        %v811 = vld [vmem:[%s226 + $0x10d8] sm:$0xff]
        %v812 = vld [vmem:[%s226 + $0x10e0] sm:$0xff]
        %v813 = vld [vmem:[%s226 + $0x10e8] sm:$0xff]
        %v814 = vld [vmem:[%s226 + $0x10f0] sm:$0xff]
        %v815 = vld [vmem:[%s226 + $0x10f8] sm:$0xff]
        %v816 = vld [vmem:[%s226 + $0x1100] sm:$0xff]
        %v817 = vld [vmem:[%s226 + $0x1108] sm:$0xff]
        %v818 = vld [vmem:[%s226 + $0x1110] sm:$0xff]
        %v819 = vld [vmem:[%s226 + $0x1118] sm:$0xff]
        %v820 = vld [vmem:[%s226 + $0x1120] sm:$0xff]
        %v821 = vld [vmem:[%s226 + $0x1128] sm:$0xff]
        %v822 = vld [vmem:[%s226 + $0x1130] sm:$0xff]
        %v823 = vld [vmem:[%s226 + $0x1138] sm:$0xff]
        %v824 = vld [vmem:[%s226 + $0x1140] sm:$0xff]
        %v825 = vld [vmem:[%s226 + $0x1148] sm:$0xff]
        %v826 = vld [vmem:[%s226 + $0x1150] sm:$0xff]
        %v827 = vld [vmem:[%s226 + $0x1158] sm:$0xff]
        %v828 = vld [vmem:[%s226 + $0x1160] sm:$0xff]
        %v829 = vld [vmem:[%s226 + $0x1168] sm:$0xff]
        %v830 = vld [vmem:[%s226 + $0x1170] sm:$0xff]
        %v831 = vld [vmem:[%s226 + $0x1178] sm:$0xff]
        %v832 = vld [vmem:[%s226 + $0x1180] sm:$0xff]
        %v833 = vld [vmem:[%s226 + $0x1188] sm:$0xff]
        %v834 = vld [vmem:[%s226 + $0x1190] sm:$0xff]
        %v835 = vld [vmem:[%s226 + $0x1198] sm:$0xff]
        %v836 = vld [vmem:[%s226 + $0x11a0] sm:$0xff]
        %v837 = vld [vmem:[%s226 + $0x11a8] sm:$0xff]
        %v838 = vld [vmem:[%s226 + $0x11b0] sm:$0xff]
        %v839 = vld [vmem:[%s226 + $0x11b8] sm:$0xff]
        %v840 = vld [vmem:[%s226 + $0x11c0] sm:$0xff]
        %v841 = vld [vmem:[%s226 + $0x11c8] sm:$0xff]
        %v842 = vld [vmem:[%s226 + $0x11d0] sm:$0xff]
        %v843 = vld [vmem:[%s226 + $0x11d8] sm:$0xff]
        %v844 = vld [vmem:[%s226 + $0x11e0] sm:$0xff]
        %v845 = vld [vmem:[%s226 + $0x11e8] sm:$0xff]
        %v846 = vld [vmem:[%s226 + $0x11f0] sm:$0xff]
        %v847 = vld [vmem:[%s226 + $0x11f8] sm:$0xff]
        %v848 = vld [vmem:[%s226 + $0x1200] sm:$0xff]
        %v849 = vld [vmem:[%s226 + $0x1208] sm:$0xff]
        %v850 = vld [vmem:[%s226 + $0x1210] sm:$0xff]
        %v851 = vld [vmem:[%s226 + $0x1218] sm:$0xff]
        %v852 = vld [vmem:[%s226 + $0x1220] sm:$0xff]
        %v853 = vld [vmem:[%s226 + $0x1228] sm:$0xff]
        %v854 = vld [vmem:[%s226 + $0x1230] sm:$0xff]
        %v855 = vld [vmem:[%s226 + $0x1238] sm:$0xff]
        %v856 = vld [vmem:[%s226 + $0x1240] sm:$0xff]
        %v857 = vld [vmem:[%s226 + $0x1248] sm:$0xff]
        %v858 = vld [vmem:[%s226 + $0x1250] sm:$0xff]
        %v859 = vld [vmem:[%s226 + $0x1258] sm:$0xff]
        %v860 = vld [vmem:[%s226 + $0x1260] sm:$0xff]
        %v861 = vld [vmem:[%s226 + $0x1268] sm:$0xff]
        %v862 = vld [vmem:[%s226 + $0x1270] sm:$0xff]
        %v863 = vld [vmem:[%s226 + $0x1278] sm:$0xff]
        %v864 = vld [vmem:[%s226 + $0x1280] sm:$0xff]
        %v865 = vld [vmem:[%s226 + $0x1288] sm:$0xff]
        %v866 = vld [vmem:[%s226 + $0x1290] sm:$0xff]
        %v867 = vld [vmem:[%s226 + $0x1298] sm:$0xff]
        %v868 = vld [vmem:[%s226 + $0x12a0] sm:$0xff]
        %v869 = vld [vmem:[%s226 + $0x12a8] sm:$0xff]
        %v870 = vld [vmem:[%s226 + $0x12b0] sm:$0xff]
        %v871 = vld [vmem:[%s226 + $0x12b8] sm:$0xff]
        %v872 = vld [vmem:[%s226 + $0x12c0] sm:$0xff]
        %v873 = vld [vmem:[%s226 + $0x12c8] sm:$0xff]
        %v874 = vld [vmem:[%s226 + $0x12d0] sm:$0xff]
        %v875 = vld [vmem:[%s226 + $0x12d8] sm:$0xff]
        %v876 = vld [vmem:[%s226 + $0x12e0] sm:$0xff]
        %v877 = vld [vmem:[%s226 + $0x12e8] sm:$0xff]
        %v878 = vld [vmem:[%s226 + $0x12f0] sm:$0xff]
        %v879 = vld [vmem:[%s226 + $0x12f8] sm:$0xff]
        %v880 = vld [vmem:[%s226 + $0x1300] sm:$0xff]
        %v881 = vld [vmem:[%s226 + $0x1308] sm:$0xff]
        %v882 = vld [vmem:[%s226 + $0x1310] sm:$0xff]
        %v883 = vld [vmem:[%s226 + $0x1318] sm:$0xff]
        %v884 = vld [vmem:[%s226 + $0x1320] sm:$0xff]
        %v885 = vld [vmem:[%s226 + $0x1328] sm:$0xff]
        %v886 = vld [vmem:[%s226 + $0x1330] sm:$0xff]
        %v887 = vld [vmem:[%s226 + $0x1338] sm:$0x1]
        %v888 = vld [vmem:[%s226 + $0x1340] sm:$0x1]
        %v889 = vld [vmem:[%s226 + $0x1348] sm:$0x1]
        %v890 = vld [vmem:[%s226 + $0x1350] sm:$0x1]
        %v891 = vld [vmem:[%s226 + $0x1358] sm:$0x1]
        %v892 = vld [vmem:[%s226 + $0x1360] sm:$0x1]
        %v893 = vld [vmem:[%s226 + $0x1368] sm:$0x1]
        %v894 = vld [vmem:[%s226 + $0x1370] sm:$0x1]
        %v895 = vld [vmem:[%s226 + $0x1378] sm:$0x1]
        %v896 = vld [vmem:[%s226 + $0x1380] sm:$0x1]
        %v897 = vld [vmem:[%s226 + $0x1388] sm:$0x1]
        %v898 = vld [vmem:[%s226 + $0x1390] sm:$0x1]
        %v899 = vld [vmem:[%s226 + $0x1398] sm:$0x1]
        %v900 = vld [vmem:[%s226 + $0x13a0] sm:$0x1]
        %v901 = vld [vmem:[%s226 + $0x13a8] sm:$0x1]
        %v902 = vld [vmem:[%s226 + $0x13b0] sm:$0xff]
        %v903 = vld [vmem:[%s226 + $0x13b8] sm:$0xff]
        %v904 = vld [vmem:[%s226 + $0x13c0] sm:$0xff]
        %v905 = vld [vmem:[%s226 + $0x13c8] sm:$0xff]
        %v906 = vld [vmem:[%s226 + $0x13d0] sm:$0xff]
        %v907 = vld [vmem:[%s226 + $0x13d8] sm:$0xff]
        %v908 = vld [vmem:[%s226 + $0x13e0] sm:$0xff]
        %v909 = vld [vmem:[%s226 + $0x13e8] sm:$0xff]
        %v910 = vld [vmem:[%s226 + $0x13f0] sm:$0xff]
        %v911 = vld [vmem:[%s226 + $0x13f8] sm:$0xff]
        %v912 = vld [vmem:[%s226 + $0x1400] sm:$0xff]
        %v913 = vld [vmem:[%s226 + $0x1408] sm:$0xff]
        %v914 = vld [vmem:[%s226 + $0x1410] sm:$0xff]
        %v915 = vld [vmem:[%s226 + $0x1418] sm:$0xff]
        %v916 = vld [vmem:[%s226 + $0x1420] sm:$0xff]
        %v917 = vld [vmem:[%s226 + $0x1428] sm:$0xff]
        %v918 = vld [vmem:[%s226 + $0x1430] sm:$0xff]
        %v919 = vld [vmem:[%s226 + $0x1438] sm:$0xff]
        %v920 = vld [vmem:[%s226 + $0x1440] sm:$0xff]
        %v921 = vld [vmem:[%s226 + $0x1448] sm:$0xff]
        %v922 = vld [vmem:[%s226 + $0x1450] sm:$0xff]
        %v923 = vld [vmem:[%s226 + $0x1458] sm:$0xff]
        %v924 = vld [vmem:[%s226 + $0x1460] sm:$0xff]
        %v925 = vld [vmem:[%s226 + $0x1468] sm:$0xff]
        %v926 = vld [vmem:[%s226 + $0x1470] sm:$0xff]
        %v927 = vld [vmem:[%s226 + $0x1478] sm:$0xff]
        %v928 = vld [vmem:[%s226 + $0x1480] sm:$0xff]
        %v929 = vld [vmem:[%s226 + $0x1488] sm:$0xff]
        %v930 = vld [vmem:[%s226 + $0x1490] sm:$0xff]
        %v931 = vld [vmem:[%s226 + $0x1498] sm:$0xff]
        %v932 = vld [vmem:[%s226 + $0x14a0] sm:$0xff]
        %v933 = vld [vmem:[%s226 + $0x14a8] sm:$0xff]
        %v934 = vld [vmem:[%s226 + $0x14b0] sm:$0xff]
        %v935 = vld [vmem:[%s226 + $0x14b8] sm:$0xff]
        %v936 = vld [vmem:[%s226 + $0x14c0] sm:$0xff]
        %v937 = vld [vmem:[%s226 + $0x14c8] sm:$0xff]
        %v938 = vld [vmem:[%s226 + $0x14d0] sm:$0xff]
        %v939 = vld [vmem:[%s226 + $0x14d8] sm:$0xff]
        %v940 = vld [vmem:[%s226 + $0x14e0] sm:$0xff]
        %v941 = vld [vmem:[%s226 + $0x14e8] sm:$0xff]
        %v942 = vld [vmem:[%s226 + $0x14f0] sm:$0xff]
        %v943 = vld [vmem:[%s226 + $0x14f8] sm:$0xff]
        %v944 = vld [vmem:[%s226 + $0x1500] sm:$0xff]
        %v945 = vld [vmem:[%s226 + $0x1508] sm:$0xff]
        %v946 = vld [vmem:[%s226 + $0x1510] sm:$0xff]
        %v947 = vld [vmem:[%s226 + $0x1518] sm:$0xff]
        %v948 = vld [vmem:[%s226 + $0x1520] sm:$0xff]
        %v949 = vld [vmem:[%s226 + $0x1528] sm:$0xff]
        %v950 = vld [vmem:[%s226 + $0x1530] sm:$0xff]
        %v951 = vld [vmem:[%s226 + $0x1538] sm:$0xff]
        %v952 = vld [vmem:[%s226 + $0x1540] sm:$0xff]
        %v953 = vld [vmem:[%s226 + $0x1548] sm:$0xff]
        %v954 = vld [vmem:[%s226 + $0x1550] sm:$0xff]
        %v955 = vld [vmem:[%s226 + $0x1558] sm:$0xff]
        %v956 = vld [vmem:[%s226 + $0x1560] sm:$0xff]
        %v957 = vld [vmem:[%s226 + $0x1568] sm:$0xff]
        %v958 = vld [vmem:[%s226 + $0x1570] sm:$0xff]
        %v959 = vld [vmem:[%s226 + $0x1578] sm:$0xff]
        %v960 = vld [vmem:[%s226 + $0x1580] sm:$0xff]
        %v961 = vld [vmem:[%s226 + $0x1588] sm:$0xff]
        %v962 = vld [vmem:[%s226 + $0x1590] sm:$0xff]
        %v963 = vld [vmem:[%s226 + $0x1598] sm:$0xff]
        %v964 = vld [vmem:[%s226 + $0x15a0] sm:$0xff]
        %v965 = vld [vmem:[%s226 + $0x15a8] sm:$0xff]
        %v966 = vld [vmem:[%s226 + $0x15b0] sm:$0xff]
        %v967 = vld [vmem:[%s226 + $0x15b8] sm:$0xff]
        %v968 = vld [vmem:[%s226 + $0x15c0] sm:$0xff]
        %v969 = vld [vmem:[%s226 + $0x15c8] sm:$0xff]
        %v970 = vld [vmem:[%s226 + $0x15d0] sm:$0xff]
        %v971 = vld [vmem:[%s226 + $0x15d8] sm:$0xff]
        %v972 = vld [vmem:[%s226 + $0x15e0] sm:$0xff]
        %v973 = vld [vmem:[%s226 + $0x15e8] sm:$0xff]
        %v974 = vld [vmem:[%s226 + $0x15f0] sm:$0xff]
        %v975 = vld [vmem:[%s226 + $0x15f8] sm:$0xff]
        %v976 = vld [vmem:[%s226 + $0x1600] sm:$0xff]
        %v977 = vld [vmem:[%s226 + $0x1608] sm:$0xff]
        %v978 = vld [vmem:[%s226 + $0x1610] sm:$0xff]
        %v979 = vld [vmem:[%s226 + $0x1618] sm:$0xff]
        %v980 = vld [vmem:[%s226 + $0x1620] sm:$0xff]
        %v981 = vld [vmem:[%s226 + $0x1628] sm:$0xff]
        %v982 = vld [vmem:[%s226 + $0x1630] sm:$0xff]
        %v983 = vld [vmem:[%s226 + $0x1638] sm:$0xff]
        %v984 = vld [vmem:[%s226 + $0x1640] sm:$0xff]
        %v985 = vld [vmem:[%s226 + $0x1648] sm:$0xff]
        %v986 = vld [vmem:[%s226 + $0x1650] sm:$0xff]
        %v987 = vld [vmem:[%s226 + $0x1658] sm:$0xff]
        %v988 = vld [vmem:[%s226 + $0x1660] sm:$0xff]
        %v989 = vld [vmem:[%s226 + $0x1668] sm:$0xff]
        %v990 = vld [vmem:[%s226 + $0x1670] sm:$0xff]
        %v991 = vld [vmem:[%s226 + $0x1678] sm:$0xff]
        %v992 = vld [vmem:[%s226 + $0x1680] sm:$0x1]
        %v993 = vld [vmem:[%s226 + $0x1688] sm:$0x1]
        %v994 = vld [vmem:[%s226 + $0x1690] sm:$0x1]
        %v995 = vld [vmem:[%s226 + $0x1698] sm:$0x1]
        %v996 = vld [vmem:[%s226 + $0x16a0] sm:$0x1]
        %v997 = vld [vmem:[%s226 + $0x16a8] sm:$0x1]
        %v998 = vld [vmem:[%s226 + $0x16b0] sm:$0x1]
        %v999 = vld [vmem:[%s226 + $0x16b8] sm:$0x1]
        %v1000 = vld [vmem:[%s226 + $0x16c0] sm:$0x1]
        %v1001 = vld [vmem:[%s226 + $0x16c8] sm:$0x1]
        %v1002 = vld [vmem:[%s226 + $0x16d0] sm:$0x1]
        %v1003 = vld [vmem:[%s226 + $0x16d8] sm:$0x1]
        %v1004 = vld [vmem:[%s226 + $0x16e0] sm:$0x1]
        %v1005 = vld [vmem:[%s226 + $0x16e8] sm:$0x1]
        %v1006 = vld [vmem:[%s226 + $0x16f0] sm:$0x1]
        %v1007 = vld [vmem:[%s226 + $0x16f8] sm:$0xff]
        %v1008 = vld [vmem:[%s226 + $0x1700] sm:$0xff]
        %v1009 = vld [vmem:[%s226 + $0x1708] sm:$0xff]
        %v1010 = vld [vmem:[%s226 + $0x1710] sm:$0xff]
        %v1011 = vld [vmem:[%s226 + $0x1718] sm:$0xff]
        %v1012 = vld [vmem:[%s226 + $0x1720] sm:$0xff]
        %v1013 = vld [vmem:[%s226 + $0x1728] sm:$0xff]
        %v1014 = vld [vmem:[%s226 + $0x1730] sm:$0xff]
        %v1015 = vld [vmem:[%s226 + $0x1738] sm:$0xff]
        %v1016 = vld [vmem:[%s226 + $0x1740] sm:$0xff]
        %v1017 = vld [vmem:[%s226 + $0x1748] sm:$0xff]
        %v1018 = vld [vmem:[%s226 + $0x1750] sm:$0xff]
        %v1019 = vld [vmem:[%s226 + $0x1758] sm:$0xff]
        %v1020 = vld [vmem:[%s226 + $0x1760] sm:$0xff]
        %v1021 = vld [vmem:[%s226 + $0x1768] sm:$0xff]
        %v1022 = vld [vmem:[%s226 + $0x1770] sm:$0xff]
        %v1023 = vld [vmem:[%s226 + $0x1778] sm:$0xff]
        %v1024 = vld [vmem:[%s226 + $0x1780] sm:$0xff]
        %v1025 = vld [vmem:[%s226 + $0x1788] sm:$0xff]
        %v1026 = vld [vmem:[%s226 + $0x1790] sm:$0xff]
        %v1027 = vld [vmem:[%s226 + $0x1798] sm:$0xff]
        %v1028 = vld [vmem:[%s226 + $0x17a0] sm:$0xff]
        %v1029 = vld [vmem:[%s226 + $0x17a8] sm:$0xff]
        %v1030 = vld [vmem:[%s226 + $0x17b0] sm:$0xff]
        %v1031 = vld [vmem:[%s226 + $0x17b8] sm:$0xff]
        %v1032 = vld [vmem:[%s226 + $0x17c0] sm:$0xff]
        %v1033 = vld [vmem:[%s226 + $0x17c8] sm:$0xff]
        %v1034 = vld [vmem:[%s226 + $0x17d0] sm:$0xff]
        %v1035 = vld [vmem:[%s226 + $0x17d8] sm:$0xff]
        %v1036 = vld [vmem:[%s226 + $0x17e0] sm:$0xff]
        %v1037 = vld [vmem:[%s226 + $0x17e8] sm:$0xff]
        %v1038 = vld [vmem:[%s226 + $0x17f0] sm:$0xff]
        %v1039 = vld [vmem:[%s226 + $0x17f8] sm:$0xff]
        %v1040 = vld [vmem:[%s226 + $0x1800] sm:$0xff]
        %v1041 = vld [vmem:[%s226 + $0x1808] sm:$0xff]
        %v1042 = vld [vmem:[%s226 + $0x1810] sm:$0xff]
        %v1043 = vld [vmem:[%s226 + $0x1818] sm:$0xff]
        %v1044 = vld [vmem:[%s226 + $0x1820] sm:$0xff]
        %v1045 = vld [vmem:[%s226 + $0x1828] sm:$0xff]
        %v1046 = vld [vmem:[%s226 + $0x1830] sm:$0xff]
        %v1047 = vld [vmem:[%s226 + $0x1838] sm:$0xff]
        %v1048 = vld [vmem:[%s226 + $0x1840] sm:$0xff]
        %v1049 = vld [vmem:[%s226 + $0x1848] sm:$0xff]
        %v1050 = vld [vmem:[%s226 + $0x1850] sm:$0xff]
        %v1051 = vld [vmem:[%s226 + $0x1858] sm:$0xff]
        %v1052 = vld [vmem:[%s226 + $0x1860] sm:$0xff]
        %v1053 = vld [vmem:[%s226 + $0x1868] sm:$0xff]
        %v1054 = vld [vmem:[%s226 + $0x1870] sm:$0xff]
        %v1055 = vld [vmem:[%s226 + $0x1878] sm:$0xff]
        %v1056 = vld [vmem:[%s226 + $0x1880] sm:$0xff]
        %v1057 = vld [vmem:[%s226 + $0x1888] sm:$0xff]
        %v1058 = vld [vmem:[%s226 + $0x1890] sm:$0xff]
        %v1059 = vld [vmem:[%s226 + $0x1898] sm:$0xff]
        %v1060 = vld [vmem:[%s226 + $0x18a0] sm:$0xff]
        %v1061 = vld [vmem:[%s226 + $0x18a8] sm:$0xff]
        %v1062 = vld [vmem:[%s226 + $0x18b0] sm:$0xff]
        %v1063 = vld [vmem:[%s226 + $0x18b8] sm:$0xff]
        %v1064 = vld [vmem:[%s226 + $0x18c0] sm:$0xff]
        %v1065 = vld [vmem:[%s226 + $0x18c8] sm:$0xff]
        %v1066 = vld [vmem:[%s226 + $0x18d0] sm:$0xff]
        %v1067 = vld [vmem:[%s226 + $0x18d8] sm:$0xff]
        %v1068 = vld [vmem:[%s226 + $0x18e0] sm:$0xff]
        %v1069 = vld [vmem:[%s226 + $0x18e8] sm:$0xff]
        %v1070 = vld [vmem:[%s226 + $0x18f0] sm:$0xff]
        %v1071 = vld [vmem:[%s226 + $0x18f8] sm:$0xff]
        %v1072 = vld [vmem:[%s226 + $0x1900] sm:$0xff]
        %v1073 = vld [vmem:[%s226 + $0x1908] sm:$0xff]
        %v1074 = vld [vmem:[%s226 + $0x1910] sm:$0xff]
        %v1075 = vld [vmem:[%s226 + $0x1918] sm:$0xff]
        %v1076 = vld [vmem:[%s226 + $0x1920] sm:$0xff]
        %v1077 = vld [vmem:[%s226 + $0x1928] sm:$0xff]
        %v1078 = vld [vmem:[%s226 + $0x1930] sm:$0xff]
        %v1079 = vld [vmem:[%s226 + $0x1938] sm:$0xff]
        %v1080 = vld [vmem:[%s226 + $0x1940] sm:$0xff]
        %v1081 = vld [vmem:[%s226 + $0x1948] sm:$0xff]
        %v1082 = vld [vmem:[%s226 + $0x1950] sm:$0xff]
        %v1083 = vld [vmem:[%s226 + $0x1958] sm:$0xff]
        %v1084 = vld [vmem:[%s226 + $0x1960] sm:$0xff]
        %v1085 = vld [vmem:[%s226 + $0x1968] sm:$0xff]
        %v1086 = vld [vmem:[%s226 + $0x1970] sm:$0xff]
        %v1087 = vld [vmem:[%s226 + $0x1978] sm:$0xff]
        %v1088 = vld [vmem:[%s226 + $0x1980] sm:$0xff]
        %v1089 = vld [vmem:[%s226 + $0x1988] sm:$0xff]
        %v1090 = vld [vmem:[%s226 + $0x1990] sm:$0xff]
        %v1091 = vld [vmem:[%s226 + $0x1998] sm:$0xff]
        %v1092 = vld [vmem:[%s226 + $0x19a0] sm:$0xff]
        %v1093 = vld [vmem:[%s226 + $0x19a8] sm:$0xff]
        %v1094 = vld [vmem:[%s226 + $0x19b0] sm:$0xff]
        %v1095 = vld [vmem:[%s226 + $0x19b8] sm:$0xff]
        %v1096 = vld [vmem:[%s226 + $0x19c0] sm:$0xff]
        %v1097 = vld [vmem:[%s226 + $0x19c8] sm:$0x1]
        %v1098 = vld [vmem:[%s226 + $0x19d0] sm:$0x1]
        %v1099 = vld [vmem:[%s226 + $0x19d8] sm:$0x1]
        %v1100 = vld [vmem:[%s226 + $0x19e0] sm:$0x1]
        %v1101 = vld [vmem:[%s226 + $0x19e8] sm:$0x1]
        %v1102 = vld [vmem:[%s226 + $0x19f0] sm:$0x1]
        %v1103 = vld [vmem:[%s226 + $0x19f8] sm:$0x1]
        %v1104 = vld [vmem:[%s226 + $0x1a00] sm:$0x1]
        %v1105 = vld [vmem:[%s226 + $0x1a08] sm:$0x1]
        %v1106 = vld [vmem:[%s226 + $0x1a10] sm:$0x1]
        %v1107 = vld [vmem:[%s226 + $0x1a18] sm:$0x1]
        %v1108 = vld [vmem:[%s226 + $0x1a20] sm:$0x1]
        %v1109 = vld [vmem:[%s226 + $0x1a28] sm:$0x1]
        %v1110 = vld [vmem:[%s226 + $0x1a30] sm:$0x1]
        %v1111 = vld [vmem:[%s226 + $0x1a38] sm:$0x1]
        %v1112 = vadd.f32 %v272, %v287
        %v1113 = vadd.f32 %v1112, %v302
        %v1114 = vadd.f32 %v1113, %v317
        %v1115 = vadd.f32 %v1114, %v332
        %v1116 = vadd.f32 %v1115, %v347
        %vm1117 = vcmask 1040384
        %v1118 = vsel %vm1117, %v362, 0.0
        %v1119 = vadd.f32 %v1116, %v1118
        %v1120 = vrot.slane %v1119, 4
        %v1121 = vadd.f32 %v1119, %v1120
        %v1122 = vrot.slane %v1121, 2
        %v1123 = vadd.f32 %v1121, %v1122
        %v1124 = vrot.slane %v1123, 1
        %v1125 = vadd.f32 %v1123, %v1124
        %v1126 = vadd.f32 %v273, %v288
        %v1127 = vadd.f32 %v1126, %v303
        %v1128 = vadd.f32 %v1127, %v318
        %v1129 = vadd.f32 %v1128, %v333
        %v1130 = vadd.f32 %v1129, %v348
        %v1131 = vsel %vm1117, %v363, 0.0
        %v1132 = vadd.f32 %v1130, %v1131
        %v1133 = vrot.slane %v1132, 4
        %v1134 = vadd.f32 %v1132, %v1133
        %v1135 = vrot.slane %v1134, 2
        %v1136 = vadd.f32 %v1134, %v1135
        %v1137 = vrot.slane %v1136, 1
        %v1138 = vadd.f32 %v1136, %v1137
        %v1139 = vadd.f32 %v274, %v289
        %v1140 = vadd.f32 %v1139, %v304
        %v1141 = vadd.f32 %v1140, %v319
        %v1142 = vadd.f32 %v1141, %v334
        %v1143 = vadd.f32 %v1142, %v349
        %v1144 = vsel %vm1117, %v364, 0.0
        %v1145 = vadd.f32 %v1143, %v1144
        %v1146 = vrot.slane %v1145, 4
        %v1147 = vadd.f32 %v1145, %v1146
        %v1148 = vrot.slane %v1147, 2
        %v1149 = vadd.f32 %v1147, %v1148
        %v1150 = vrot.slane %v1149, 1
        %v1151 = vadd.f32 %v1149, %v1150
        %v1152 = vadd.f32 %v275, %v290
        %v1153 = vadd.f32 %v1152, %v305
        %v1154 = vadd.f32 %v1153, %v320
        %v1155 = vadd.f32 %v1154, %v335
        %v1156 = vadd.f32 %v1155, %v350
        %v1157 = vsel %vm1117, %v365, 0.0
        %v1158 = vadd.f32 %v1156, %v1157
        %v1159 = vrot.slane %v1158, 4
        %v1160 = vadd.f32 %v1158, %v1159
        %v1161 = vrot.slane %v1160, 2
        %v1162 = vadd.f32 %v1160, %v1161
        %v1163 = vrot.slane %v1162, 1
        %v1164 = vadd.f32 %v1162, %v1163
        %v1165 = vadd.f32 %v276, %v291
        %v1166 = vadd.f32 %v1165, %v306
        %v1167 = vadd.f32 %v1166, %v321
        %v1168 = vadd.f32 %v1167, %v336
        %v1169 = vadd.f32 %v1168, %v351
        %v1170 = vsel %vm1117, %v366, 0.0
        %v1171 = vadd.f32 %v1169, %v1170
        %v1172 = vrot.slane %v1171, 4
        %v1173 = vadd.f32 %v1171, %v1172
        %v1174 = vrot.slane %v1173, 2
        %v1175 = vadd.f32 %v1173, %v1174
        %v1176 = vrot.slane %v1175, 1
        %v1177 = vadd.f32 %v1175, %v1176
        %v1178 = vadd.f32 %v277, %v292
        %v1179 = vadd.f32 %v1178, %v307
        %v1180 = vadd.f32 %v1179, %v322
        %v1181 = vadd.f32 %v1180, %v337
        %v1182 = vadd.f32 %v1181, %v352
        %v1183 = vsel %vm1117, %v367, 0.0
        %v1184 = vadd.f32 %v1182, %v1183
        %v1185 = vrot.slane %v1184, 4
        %v1186 = vadd.f32 %v1184, %v1185
        %v1187 = vrot.slane %v1186, 2
        %v1188 = vadd.f32 %v1186, %v1187
        %v1189 = vrot.slane %v1188, 1
        %v1190 = vadd.f32 %v1188, %v1189
        %v1191 = vadd.f32 %v278, %v293
        %v1192 = vadd.f32 %v1191, %v308
        %v1193 = vadd.f32 %v1192, %v323
        %v1194 = vadd.f32 %v1193, %v338
        %v1195 = vadd.f32 %v1194, %v353
        %v1196 = vsel %vm1117, %v368, 0.0
        %v1197 = vadd.f32 %v1195, %v1196
        %v1198 = vrot.slane %v1197, 4
        %v1199 = vadd.f32 %v1197, %v1198
        %v1200 = vrot.slane %v1199, 2
        %v1201 = vadd.f32 %v1199, %v1200
        %v1202 = vrot.slane %v1201, 1
        %v1203 = vadd.f32 %v1201, %v1202
        %v1204 = vadd.f32 %v279, %v294
        %v1205 = vadd.f32 %v1204, %v309
        %v1206 = vadd.f32 %v1205, %v324
        %v1207 = vadd.f32 %v1206, %v339
        %v1208 = vadd.f32 %v1207, %v354
        %v1209 = vsel %vm1117, %v369, 0.0
        %v1210 = vadd.f32 %v1208, %v1209
        %v1211 = vrot.slane %v1210, 4
        %v1212 = vadd.f32 %v1210, %v1211
        %v1213 = vrot.slane %v1212, 2
        %v1214 = vadd.f32 %v1212, %v1213
        %v1215 = vrot.slane %v1214, 1
        %v1216 = vadd.f32 %v1214, %v1215
        %v1217 = vadd.f32 %v280, %v295
        %v1218 = vadd.f32 %v1217, %v310
        %v1219 = vadd.f32 %v1218, %v325
        %v1220 = vadd.f32 %v1219, %v340
        %v1221 = vadd.f32 %v1220, %v355
        %v1222 = vsel %vm1117, %v370, 0.0
        %v1223 = vadd.f32 %v1221, %v1222
        %v1224 = vrot.slane %v1223, 4
        %v1225 = vadd.f32 %v1223, %v1224
        %v1226 = vrot.slane %v1225, 2
        %v1227 = vadd.f32 %v1225, %v1226
        %v1228 = vrot.slane %v1227, 1
        %v1229 = vadd.f32 %v1227, %v1228
        %v1230 = vadd.f32 %v281, %v296
        %v1231 = vadd.f32 %v1230, %v311
        %v1232 = vadd.f32 %v1231, %v326
        %v1233 = vadd.f32 %v1232, %v341
        %v1234 = vadd.f32 %v1233, %v356
        %v1235 = vsel %vm1117, %v371, 0.0
        %v1236 = vadd.f32 %v1234, %v1235
        %v1237 = vrot.slane %v1236, 4
        %v1238 = vadd.f32 %v1236, %v1237
        %v1239 = vrot.slane %v1238, 2
        %v1240 = vadd.f32 %v1238, %v1239
        %v1241 = vrot.slane %v1240, 1
        %v1242 = vadd.f32 %v1240, %v1241
        %v1243 = vadd.f32 %v282, %v297
        %v1244 = vadd.f32 %v1243, %v312
        %v1245 = vadd.f32 %v1244, %v327
        %v1246 = vadd.f32 %v1245, %v342
        %v1247 = vadd.f32 %v1246, %v357
        %v1248 = vsel %vm1117, %v372, 0.0
        %v1249 = vadd.f32 %v1247, %v1248
        %v1250 = vrot.slane %v1249, 4
        %v1251 = vadd.f32 %v1249, %v1250
        %v1252 = vrot.slane %v1251, 2
        %v1253 = vadd.f32 %v1251, %v1252
        %v1254 = vrot.slane %v1253, 1
        %v1255 = vadd.f32 %v1253, %v1254
        %v1256 = vadd.f32 %v283, %v298
        %v1257 = vadd.f32 %v1256, %v313
        %v1258 = vadd.f32 %v1257, %v328
        %v1259 = vadd.f32 %v1258, %v343
        %v1260 = vadd.f32 %v1259, %v358
        %v1261 = vsel %vm1117, %v373, 0.0
        %v1262 = vadd.f32 %v1260, %v1261
        %v1263 = vrot.slane %v1262, 4
        %v1264 = vadd.f32 %v1262, %v1263
        %v1265 = vrot.slane %v1264, 2
        %v1266 = vadd.f32 %v1264, %v1265
        %v1267 = vrot.slane %v1266, 1
        %v1268 = vadd.f32 %v1266, %v1267
        %v1269 = vadd.f32 %v284, %v299
        %v1270 = vadd.f32 %v1269, %v314
        %v1271 = vadd.f32 %v1270, %v329
        %v1272 = vadd.f32 %v1271, %v344
        %v1273 = vadd.f32 %v1272, %v359
        %v1274 = vsel %vm1117, %v374, 0.0
        %v1275 = vadd.f32 %v1273, %v1274
        %v1276 = vrot.slane %v1275, 4
        %v1277 = vadd.f32 %v1275, %v1276
        %v1278 = vrot.slane %v1277, 2
        %v1279 = vadd.f32 %v1277, %v1278
        %v1280 = vrot.slane %v1279, 1
        %v1281 = vadd.f32 %v1279, %v1280
        %v1282 = vadd.f32 %v285, %v300
        %v1283 = vadd.f32 %v1282, %v315
        %v1284 = vadd.f32 %v1283, %v330
        %v1285 = vadd.f32 %v1284, %v345
        %v1286 = vadd.f32 %v1285, %v360
        %v1287 = vsel %vm1117, %v375, 0.0
        %v1288 = vadd.f32 %v1286, %v1287
        %v1289 = vrot.slane %v1288, 4
        %v1290 = vadd.f32 %v1288, %v1289
        %v1291 = vrot.slane %v1290, 2
        %v1292 = vadd.f32 %v1290, %v1291
        %v1293 = vrot.slane %v1292, 1
        %v1294 = vadd.f32 %v1292, %v1293
        %v1295 = vadd.f32 %v286, %v301
        %v1296 = vadd.f32 %v1295, %v316
        %v1297 = vadd.f32 %v1296, %v331
        %v1298 = vadd.f32 %v1297, %v346
        %v1299 = vadd.f32 %v1298, %v361
        %v1300 = vsel %vm1117, %v376, 0.0
        %v1301 = vadd.f32 %v1299, %v1300
        %v1302 = vrot.slane %v1301, 4
        %v1303 = vadd.f32 %v1301, %v1302
        %v1304 = vrot.slane %v1303, 2
        %v1305 = vadd.f32 %v1303, %v1304
        %v1306 = vrot.slane %v1305, 1
        %v1307 = vadd.f32 %v1305, %v1306
        %v1308 = vadd.f32 %v377, %v392
        %v1309 = vadd.f32 %v1308, %v407
        %v1310 = vadd.f32 %v1309, %v422
        %v1311 = vadd.f32 %v1310, %v437
        %v1312 = vadd.f32 %v1311, %v452
        %v1313 = vsel %vm1117, %v467, 0.0
        %v1314 = vadd.f32 %v1312, %v1313
        %v1315 = vrot.slane %v1314, 4
        %v1316 = vadd.f32 %v1314, %v1315
        %v1317 = vrot.slane %v1316, 2
        %v1318 = vadd.f32 %v1316, %v1317
        %v1319 = vrot.slane %v1318, 1
        %v1320 = vadd.f32 %v1318, %v1319
        %v1321 = vadd.f32 %v378, %v393
        %v1322 = vadd.f32 %v1321, %v408
        %v1323 = vadd.f32 %v1322, %v423
        %v1324 = vadd.f32 %v1323, %v438
        %v1325 = vadd.f32 %v1324, %v453
        %v1326 = vsel %vm1117, %v468, 0.0
        %v1327 = vadd.f32 %v1325, %v1326
        %v1328 = vrot.slane %v1327, 4
        %v1329 = vadd.f32 %v1327, %v1328
        %v1330 = vrot.slane %v1329, 2
        %v1331 = vadd.f32 %v1329, %v1330
        %v1332 = vrot.slane %v1331, 1
        %v1333 = vadd.f32 %v1331, %v1332
        %v1334 = vadd.f32 %v379, %v394
        %v1335 = vadd.f32 %v1334, %v409
        %v1336 = vadd.f32 %v1335, %v424
        %v1337 = vadd.f32 %v1336, %v439
        %v1338 = vadd.f32 %v1337, %v454
        %v1339 = vsel %vm1117, %v469, 0.0
        %v1340 = vadd.f32 %v1338, %v1339
        %v1341 = vrot.slane %v1340, 4
        %v1342 = vadd.f32 %v1340, %v1341
        %v1343 = vrot.slane %v1342, 2
        %v1344 = vadd.f32 %v1342, %v1343
        %v1345 = vrot.slane %v1344, 1
        %v1346 = vadd.f32 %v1344, %v1345
        %v1347 = vadd.f32 %v380, %v395
        %v1348 = vadd.f32 %v1347, %v410
        %v1349 = vadd.f32 %v1348, %v425
        %v1350 = vadd.f32 %v1349, %v440
        %v1351 = vadd.f32 %v1350, %v455
        %v1352 = vsel %vm1117, %v470, 0.0
        %v1353 = vadd.f32 %v1351, %v1352
        %v1354 = vrot.slane %v1353, 4
        %v1355 = vadd.f32 %v1353, %v1354
        %v1356 = vrot.slane %v1355, 2
        %v1357 = vadd.f32 %v1355, %v1356
        %v1358 = vrot.slane %v1357, 1
        %v1359 = vadd.f32 %v1357, %v1358
        %v1360 = vadd.f32 %v381, %v396
        %v1361 = vadd.f32 %v1360, %v411
        %v1362 = vadd.f32 %v1361, %v426
        %v1363 = vadd.f32 %v1362, %v441
        %v1364 = vadd.f32 %v1363, %v456
        %v1365 = vsel %vm1117, %v471, 0.0
        %v1366 = vadd.f32 %v1364, %v1365
        %v1367 = vrot.slane %v1366, 4
        %v1368 = vadd.f32 %v1366, %v1367
        %v1369 = vrot.slane %v1368, 2
        %v1370 = vadd.f32 %v1368, %v1369
        %v1371 = vrot.slane %v1370, 1
        %v1372 = vadd.f32 %v1370, %v1371
        %v1373 = vadd.f32 %v382, %v397
        %v1374 = vadd.f32 %v1373, %v412
        %v1375 = vadd.f32 %v1374, %v427
        %v1376 = vadd.f32 %v1375, %v442
        %v1377 = vadd.f32 %v1376, %v457
        %v1378 = vsel %vm1117, %v472, 0.0
        %v1379 = vadd.f32 %v1377, %v1378
        %v1380 = vrot.slane %v1379, 4
        %v1381 = vadd.f32 %v1379, %v1380
        %v1382 = vrot.slane %v1381, 2
        %v1383 = vadd.f32 %v1381, %v1382
        %v1384 = vrot.slane %v1383, 1
        %v1385 = vadd.f32 %v1383, %v1384
        %v1386 = vadd.f32 %v383, %v398
        %v1387 = vadd.f32 %v1386, %v413
        %v1388 = vadd.f32 %v1387, %v428
        %v1389 = vadd.f32 %v1388, %v443
        %v1390 = vadd.f32 %v1389, %v458
        %v1391 = vsel %vm1117, %v473, 0.0
        %v1392 = vadd.f32 %v1390, %v1391
        %v1393 = vrot.slane %v1392, 4
        %v1394 = vadd.f32 %v1392, %v1393
        %v1395 = vrot.slane %v1394, 2
        %v1396 = vadd.f32 %v1394, %v1395
        %v1397 = vrot.slane %v1396, 1
        %v1398 = vadd.f32 %v1396, %v1397
        %v1399 = vadd.f32 %v384, %v399
        %v1400 = vadd.f32 %v1399, %v414
        %v1401 = vadd.f32 %v1400, %v429
        %v1402 = vadd.f32 %v1401, %v444
        %v1403 = vadd.f32 %v1402, %v459
        %v1404 = vsel %vm1117, %v474, 0.0
        %v1405 = vadd.f32 %v1403, %v1404
        %v1406 = vrot.slane %v1405, 4
        %v1407 = vadd.f32 %v1405, %v1406
        %v1408 = vrot.slane %v1407, 2
        %v1409 = vadd.f32 %v1407, %v1408
        %v1410 = vrot.slane %v1409, 1
        %v1411 = vadd.f32 %v1409, %v1410
        %v1412 = vadd.f32 %v385, %v400
        %v1413 = vadd.f32 %v1412, %v415
        %v1414 = vadd.f32 %v1413, %v430
        %v1415 = vadd.f32 %v1414, %v445
        %v1416 = vadd.f32 %v1415, %v460
        %v1417 = vsel %vm1117, %v475, 0.0
        %v1418 = vadd.f32 %v1416, %v1417
        %v1419 = vrot.slane %v1418, 4
        %v1420 = vadd.f32 %v1418, %v1419
        %v1421 = vrot.slane %v1420, 2
        %v1422 = vadd.f32 %v1420, %v1421
        %v1423 = vrot.slane %v1422, 1
        %v1424 = vadd.f32 %v1422, %v1423
        %v1425 = vadd.f32 %v386, %v401
        %v1426 = vadd.f32 %v1425, %v416
        %v1427 = vadd.f32 %v1426, %v431
        %v1428 = vadd.f32 %v1427, %v446
        %v1429 = vadd.f32 %v1428, %v461
        %v1430 = vsel %vm1117, %v476, 0.0
        %v1431 = vadd.f32 %v1429, %v1430
        %v1432 = vrot.slane %v1431, 4
        %v1433 = vadd.f32 %v1431, %v1432
        %v1434 = vrot.slane %v1433, 2
        %v1435 = vadd.f32 %v1433, %v1434
        %v1436 = vrot.slane %v1435, 1
        %v1437 = vadd.f32 %v1435, %v1436
        %v1438 = vadd.f32 %v387, %v402
        %v1439 = vadd.f32 %v1438, %v417
        %v1440 = vadd.f32 %v1439, %v432
        %v1441 = vadd.f32 %v1440, %v447
        %v1442 = vadd.f32 %v1441, %v462
        %v1443 = vsel %vm1117, %v477, 0.0
        %v1444 = vadd.f32 %v1442, %v1443
        %v1445 = vrot.slane %v1444, 4
        %v1446 = vadd.f32 %v1444, %v1445
        %v1447 = vrot.slane %v1446, 2
        %v1448 = vadd.f32 %v1446, %v1447
        %v1449 = vrot.slane %v1448, 1
        %v1450 = vadd.f32 %v1448, %v1449
        %v1451 = vadd.f32 %v388, %v403
        %v1452 = vadd.f32 %v1451, %v418
        %v1453 = vadd.f32 %v1452, %v433
        %v1454 = vadd.f32 %v1453, %v448
        %v1455 = vadd.f32 %v1454, %v463
        %v1456 = vsel %vm1117, %v478, 0.0
        %v1457 = vadd.f32 %v1455, %v1456
        %v1458 = vrot.slane %v1457, 4
        %v1459 = vadd.f32 %v1457, %v1458
        %v1460 = vrot.slane %v1459, 2
        %v1461 = vadd.f32 %v1459, %v1460
        %v1462 = vrot.slane %v1461, 1
        %v1463 = vadd.f32 %v1461, %v1462
        %v1464 = vadd.f32 %v389, %v404
        %v1465 = vadd.f32 %v1464, %v419
        %v1466 = vadd.f32 %v1465, %v434
        %v1467 = vadd.f32 %v1466, %v449
        %v1468 = vadd.f32 %v1467, %v464
        %v1469 = vsel %vm1117, %v479, 0.0
        %v1470 = vadd.f32 %v1468, %v1469
        %v1471 = vrot.slane %v1470, 4
        %v1472 = vadd.f32 %v1470, %v1471
        %v1473 = vrot.slane %v1472, 2
        %v1474 = vadd.f32 %v1472, %v1473
        %v1475 = vrot.slane %v1474, 1
        %v1476 = vadd.f32 %v1474, %v1475
        %v1477 = vadd.f32 %v390, %v405
        %v1478 = vadd.f32 %v1477, %v420
        %v1479 = vadd.f32 %v1478, %v435
        %v1480 = vadd.f32 %v1479, %v450
        %v1481 = vadd.f32 %v1480, %v465
        %v1482 = vsel %vm1117, %v480, 0.0
        %v1483 = vadd.f32 %v1481, %v1482
        %v1484 = vrot.slane %v1483, 4
        %v1485 = vadd.f32 %v1483, %v1484
        %v1486 = vrot.slane %v1485, 2
        %v1487 = vadd.f32 %v1485, %v1486
        %v1488 = vrot.slane %v1487, 1
        %v1489 = vadd.f32 %v1487, %v1488
        %v1490 = vadd.f32 %v391, %v406
        %v1491 = vadd.f32 %v1490, %v421
        %v1492 = vadd.f32 %v1491, %v436
        %v1493 = vadd.f32 %v1492, %v451
        %v1494 = vadd.f32 %v1493, %v466
        %v1495 = vsel %vm1117, %v481, 0.0
        %v1496 = vadd.f32 %v1494, %v1495
        %v1497 = vrot.slane %v1496, 4
        %v1498 = vadd.f32 %v1496, %v1497
        %v1499 = vrot.slane %v1498, 2
        %v1500 = vadd.f32 %v1498, %v1499
        %v1501 = vrot.slane %v1500, 1
        %v1502 = vadd.f32 %v1500, %v1501
        %v1503 = vadd.f32 %v482, %v497
        %v1504 = vadd.f32 %v1503, %v512
        %v1505 = vadd.f32 %v1504, %v527
        %v1506 = vadd.f32 %v1505, %v542
        %v1507 = vadd.f32 %v1506, %v557
        %v1508 = vsel %vm1117, %v572, 0.0
        %v1509 = vadd.f32 %v1507, %v1508
        %v1510 = vrot.slane %v1509, 4
        %v1511 = vadd.f32 %v1509, %v1510
        %v1512 = vrot.slane %v1511, 2
        %v1513 = vadd.f32 %v1511, %v1512
        %v1514 = vrot.slane %v1513, 1
        %v1515 = vadd.f32 %v1513, %v1514
        %v1516 = vadd.f32 %v483, %v498
        %v1517 = vadd.f32 %v1516, %v513
        %v1518 = vadd.f32 %v1517, %v528
        %v1519 = vadd.f32 %v1518, %v543
        %v1520 = vadd.f32 %v1519, %v558
        %v1521 = vsel %vm1117, %v573, 0.0
        %v1522 = vadd.f32 %v1520, %v1521
        %v1523 = vrot.slane %v1522, 4
        %v1524 = vadd.f32 %v1522, %v1523
        %v1525 = vrot.slane %v1524, 2
        %v1526 = vadd.f32 %v1524, %v1525
        %v1527 = vrot.slane %v1526, 1
        %v1528 = vadd.f32 %v1526, %v1527
        %v1529 = vadd.f32 %v484, %v499
        %v1530 = vadd.f32 %v1529, %v514
        %v1531 = vadd.f32 %v1530, %v529
        %v1532 = vadd.f32 %v1531, %v544
        %v1533 = vadd.f32 %v1532, %v559
        %v1534 = vsel %vm1117, %v574, 0.0
        %v1535 = vadd.f32 %v1533, %v1534
        %v1536 = vrot.slane %v1535, 4
        %v1537 = vadd.f32 %v1535, %v1536
        %v1538 = vrot.slane %v1537, 2
        %v1539 = vadd.f32 %v1537, %v1538
        %v1540 = vrot.slane %v1539, 1
        %v1541 = vadd.f32 %v1539, %v1540
        %v1542 = vadd.f32 %v485, %v500
        %v1543 = vadd.f32 %v1542, %v515
        %v1544 = vadd.f32 %v1543, %v530
        %v1545 = vadd.f32 %v1544, %v545
        %v1546 = vadd.f32 %v1545, %v560
        %v1547 = vsel %vm1117, %v575, 0.0
        %v1548 = vadd.f32 %v1546, %v1547
        %v1549 = vrot.slane %v1548, 4
        %v1550 = vadd.f32 %v1548, %v1549
        %v1551 = vrot.slane %v1550, 2
        %v1552 = vadd.f32 %v1550, %v1551
        %v1553 = vrot.slane %v1552, 1
        %v1554 = vadd.f32 %v1552, %v1553
        %v1555 = vadd.f32 %v486, %v501
        %v1556 = vadd.f32 %v1555, %v516
        %v1557 = vadd.f32 %v1556, %v531
        %v1558 = vadd.f32 %v1557, %v546
        %v1559 = vadd.f32 %v1558, %v561
        %v1560 = vsel %vm1117, %v576, 0.0
        %v1561 = vadd.f32 %v1559, %v1560
        %v1562 = vrot.slane %v1561, 4
        %v1563 = vadd.f32 %v1561, %v1562
        %v1564 = vrot.slane %v1563, 2
        %v1565 = vadd.f32 %v1563, %v1564
        %v1566 = vrot.slane %v1565, 1
        %v1567 = vadd.f32 %v1565, %v1566
        %v1568 = vadd.f32 %v487, %v502
        %v1569 = vadd.f32 %v1568, %v517
        %v1570 = vadd.f32 %v1569, %v532
        %v1571 = vadd.f32 %v1570, %v547
        %v1572 = vadd.f32 %v1571, %v562
        %v1573 = vsel %vm1117, %v577, 0.0
        %v1574 = vadd.f32 %v1572, %v1573
        %v1575 = vrot.slane %v1574, 4
        %v1576 = vadd.f32 %v1574, %v1575
        %v1577 = vrot.slane %v1576, 2
        %v1578 = vadd.f32 %v1576, %v1577
        %v1579 = vrot.slane %v1578, 1
        %v1580 = vadd.f32 %v1578, %v1579
        %v1581 = vadd.f32 %v488, %v503
        %v1582 = vadd.f32 %v1581, %v518
        %v1583 = vadd.f32 %v1582, %v533
        %v1584 = vadd.f32 %v1583, %v548
        %v1585 = vadd.f32 %v1584, %v563
        %v1586 = vsel %vm1117, %v578, 0.0
        %v1587 = vadd.f32 %v1585, %v1586
        %v1588 = vrot.slane %v1587, 4
        %v1589 = vadd.f32 %v1587, %v1588
        %v1590 = vrot.slane %v1589, 2
        %v1591 = vadd.f32 %v1589, %v1590
        %v1592 = vrot.slane %v1591, 1
        %v1593 = vadd.f32 %v1591, %v1592
        %v1594 = vadd.f32 %v489, %v504
        %v1595 = vadd.f32 %v1594, %v519
        %v1596 = vadd.f32 %v1595, %v534
        %v1597 = vadd.f32 %v1596, %v549
        %v1598 = vadd.f32 %v1597, %v564
        %v1599 = vsel %vm1117, %v579, 0.0
        %v1600 = vadd.f32 %v1598, %v1599
        %v1601 = vrot.slane %v1600, 4
        %v1602 = vadd.f32 %v1600, %v1601
        %v1603 = vrot.slane %v1602, 2
        %v1604 = vadd.f32 %v1602, %v1603
        %v1605 = vrot.slane %v1604, 1
        %v1606 = vadd.f32 %v1604, %v1605
        %v1607 = vadd.f32 %v490, %v505
        %v1608 = vadd.f32 %v1607, %v520
        %v1609 = vadd.f32 %v1608, %v535
        %v1610 = vadd.f32 %v1609, %v550
        %v1611 = vadd.f32 %v1610, %v565
        %v1612 = vsel %vm1117, %v580, 0.0
        %v1613 = vadd.f32 %v1611, %v1612
        %v1614 = vrot.slane %v1613, 4
        %v1615 = vadd.f32 %v1613, %v1614
        %v1616 = vrot.slane %v1615, 2
        %v1617 = vadd.f32 %v1615, %v1616
        %v1618 = vrot.slane %v1617, 1
        %v1619 = vadd.f32 %v1617, %v1618
        %v1620 = vadd.f32 %v491, %v506
        %v1621 = vadd.f32 %v1620, %v521
        %v1622 = vadd.f32 %v1621, %v536
        %v1623 = vadd.f32 %v1622, %v551
        %v1624 = vadd.f32 %v1623, %v566
        %v1625 = vsel %vm1117, %v581, 0.0
        %v1626 = vadd.f32 %v1624, %v1625
        %v1627 = vrot.slane %v1626, 4
        %v1628 = vadd.f32 %v1626, %v1627
        %v1629 = vrot.slane %v1628, 2
        %v1630 = vadd.f32 %v1628, %v1629
        %v1631 = vrot.slane %v1630, 1
        %v1632 = vadd.f32 %v1630, %v1631
        %v1633 = vadd.f32 %v492, %v507
        %v1634 = vadd.f32 %v1633, %v522
        %v1635 = vadd.f32 %v1634, %v537
        %v1636 = vadd.f32 %v1635, %v552
        %v1637 = vadd.f32 %v1636, %v567
        %v1638 = vsel %vm1117, %v582, 0.0
        %v1639 = vadd.f32 %v1637, %v1638
        %v1640 = vrot.slane %v1639, 4
        %v1641 = vadd.f32 %v1639, %v1640
        %v1642 = vrot.slane %v1641, 2
        %v1643 = vadd.f32 %v1641, %v1642
        %v1644 = vrot.slane %v1643, 1
        %v1645 = vadd.f32 %v1643, %v1644
        %v1646 = vadd.f32 %v493, %v508
        %v1647 = vadd.f32 %v1646, %v523
        %v1648 = vadd.f32 %v1647, %v538
        %v1649 = vadd.f32 %v1648, %v553
        %v1650 = vadd.f32 %v1649, %v568
        %v1651 = vsel %vm1117, %v583, 0.0
        %v1652 = vadd.f32 %v1650, %v1651
        %v1653 = vrot.slane %v1652, 4
        %v1654 = vadd.f32 %v1652, %v1653
        %v1655 = vrot.slane %v1654, 2
        %v1656 = vadd.f32 %v1654, %v1655
        %v1657 = vrot.slane %v1656, 1
        %v1658 = vadd.f32 %v1656, %v1657
        %v1659 = vadd.f32 %v494, %v509
        %v1660 = vadd.f32 %v1659, %v524
        %v1661 = vadd.f32 %v1660, %v539
        %v1662 = vadd.f32 %v1661, %v554
        %v1663 = vadd.f32 %v1662, %v569
        %v1664 = vsel %vm1117, %v584, 0.0
        %v1665 = vadd.f32 %v1663, %v1664
        %v1666 = vrot.slane %v1665, 4
        %v1667 = vadd.f32 %v1665, %v1666
        %v1668 = vrot.slane %v1667, 2
        %v1669 = vadd.f32 %v1667, %v1668
        %v1670 = vrot.slane %v1669, 1
        %v1671 = vadd.f32 %v1669, %v1670
        %v1672 = vadd.f32 %v495, %v510
        %v1673 = vadd.f32 %v1672, %v525
        %v1674 = vadd.f32 %v1673, %v540
        %v1675 = vadd.f32 %v1674, %v555
        %v1676 = vadd.f32 %v1675, %v570
        %v1677 = vsel %vm1117, %v585, 0.0
        %v1678 = vadd.f32 %v1676, %v1677
        %v1679 = vrot.slane %v1678, 4
        %v1680 = vadd.f32 %v1678, %v1679
        %v1681 = vrot.slane %v1680, 2
        %v1682 = vadd.f32 %v1680, %v1681
        %v1683 = vrot.slane %v1682, 1
        %v1684 = vadd.f32 %v1682, %v1683
        %v1685 = vadd.f32 %v496, %v511
        %v1686 = vadd.f32 %v1685, %v526
        %v1687 = vadd.f32 %v1686, %v541
        %v1688 = vadd.f32 %v1687, %v556
        %v1689 = vadd.f32 %v1688, %v571
        %v1690 = vsel %vm1117, %v586, 0.0
        %v1691 = vadd.f32 %v1689, %v1690
        %v1692 = vrot.slane %v1691, 4
        %v1693 = vadd.f32 %v1691, %v1692
        %v1694 = vrot.slane %v1693, 2
        %v1695 = vadd.f32 %v1693, %v1694
        %v1696 = vrot.slane %v1695, 1
        %v1697 = vadd.f32 %v1695, %v1696
        %v1698 = vadd.f32 %v587, %v602
        %v1699 = vadd.f32 %v1698, %v617
        %v1700 = vadd.f32 %v1699, %v632
        %v1701 = vadd.f32 %v1700, %v647
        %v1702 = vadd.f32 %v1701, %v662
        %v1703 = vsel %vm1117, %v677, 0.0
        %v1704 = vadd.f32 %v1702, %v1703
        %v1705 = vrot.slane %v1704, 4
        %v1706 = vadd.f32 %v1704, %v1705
        %v1707 = vrot.slane %v1706, 2
        %v1708 = vadd.f32 %v1706, %v1707
        %v1709 = vrot.slane %v1708, 1
        %v1710 = vadd.f32 %v1708, %v1709
        %v1711 = vadd.f32 %v588, %v603
        %v1712 = vadd.f32 %v1711, %v618
        %v1713 = vadd.f32 %v1712, %v633
        %v1714 = vadd.f32 %v1713, %v648
        %v1715 = vadd.f32 %v1714, %v663
        %v1716 = vsel %vm1117, %v678, 0.0
        %v1717 = vadd.f32 %v1715, %v1716
        %v1718 = vrot.slane %v1717, 4
        %v1719 = vadd.f32 %v1717, %v1718
        %v1720 = vrot.slane %v1719, 2
        %v1721 = vadd.f32 %v1719, %v1720
        %v1722 = vrot.slane %v1721, 1
        %v1723 = vadd.f32 %v1721, %v1722
        %v1724 = vadd.f32 %v589, %v604
        %v1725 = vadd.f32 %v1724, %v619
        %v1726 = vadd.f32 %v1725, %v634
        %v1727 = vadd.f32 %v1726, %v649
        %v1728 = vadd.f32 %v1727, %v664
        %v1729 = vsel %vm1117, %v679, 0.0
        %v1730 = vadd.f32 %v1728, %v1729
        %v1731 = vrot.slane %v1730, 4
        %v1732 = vadd.f32 %v1730, %v1731
        %v1733 = vrot.slane %v1732, 2
        %v1734 = vadd.f32 %v1732, %v1733
        %v1735 = vrot.slane %v1734, 1
        %v1736 = vadd.f32 %v1734, %v1735
        %v1737 = vadd.f32 %v590, %v605
        %v1738 = vadd.f32 %v1737, %v620
        %v1739 = vadd.f32 %v1738, %v635
        %v1740 = vadd.f32 %v1739, %v650
        %v1741 = vadd.f32 %v1740, %v665
        %v1742 = vsel %vm1117, %v680, 0.0
        %v1743 = vadd.f32 %v1741, %v1742
        %v1744 = vrot.slane %v1743, 4
        %v1745 = vadd.f32 %v1743, %v1744
        %v1746 = vrot.slane %v1745, 2
        %v1747 = vadd.f32 %v1745, %v1746
        %v1748 = vrot.slane %v1747, 1
        %v1749 = vadd.f32 %v1747, %v1748
        %v1750 = vadd.f32 %v591, %v606
        %v1751 = vadd.f32 %v1750, %v621
        %v1752 = vadd.f32 %v1751, %v636
        %v1753 = vadd.f32 %v1752, %v651
        %v1754 = vadd.f32 %v1753, %v666
        %v1755 = vsel %vm1117, %v681, 0.0
        %v1756 = vadd.f32 %v1754, %v1755
        %v1757 = vrot.slane %v1756, 4
        %v1758 = vadd.f32 %v1756, %v1757
        %v1759 = vrot.slane %v1758, 2
        %v1760 = vadd.f32 %v1758, %v1759
        %v1761 = vrot.slane %v1760, 1
        %v1762 = vadd.f32 %v1760, %v1761
        %v1763 = vadd.f32 %v592, %v607
        %v1764 = vadd.f32 %v1763, %v622
        %v1765 = vadd.f32 %v1764, %v637
        %v1766 = vadd.f32 %v1765, %v652
        %v1767 = vadd.f32 %v1766, %v667
        %v1768 = vsel %vm1117, %v682, 0.0
        %v1769 = vadd.f32 %v1767, %v1768
        %v1770 = vrot.slane %v1769, 4
        %v1771 = vadd.f32 %v1769, %v1770
        %v1772 = vrot.slane %v1771, 2
        %v1773 = vadd.f32 %v1771, %v1772
        %v1774 = vrot.slane %v1773, 1
        %v1775 = vadd.f32 %v1773, %v1774
        %v1776 = vadd.f32 %v593, %v608
        %v1777 = vadd.f32 %v1776, %v623
        %v1778 = vadd.f32 %v1777, %v638
        %v1779 = vadd.f32 %v1778, %v653
        %v1780 = vadd.f32 %v1779, %v668
        %v1781 = vsel %vm1117, %v683, 0.0
        %v1782 = vadd.f32 %v1780, %v1781
        %v1783 = vrot.slane %v1782, 4
        %v1784 = vadd.f32 %v1782, %v1783
        %v1785 = vrot.slane %v1784, 2
        %v1786 = vadd.f32 %v1784, %v1785
        %v1787 = vrot.slane %v1786, 1
        %v1788 = vadd.f32 %v1786, %v1787
        %v1789 = vadd.f32 %v594, %v609
        %v1790 = vadd.f32 %v1789, %v624
        %v1791 = vadd.f32 %v1790, %v639
        %v1792 = vadd.f32 %v1791, %v654
        %v1793 = vadd.f32 %v1792, %v669
        %v1794 = vsel %vm1117, %v684, 0.0
        %v1795 = vadd.f32 %v1793, %v1794
        %v1796 = vrot.slane %v1795, 4
        %v1797 = vadd.f32 %v1795, %v1796
        %v1798 = vrot.slane %v1797, 2
        %v1799 = vadd.f32 %v1797, %v1798
        %v1800 = vrot.slane %v1799, 1
        %v1801 = vadd.f32 %v1799, %v1800
        %v1802 = vadd.f32 %v595, %v610
        %v1803 = vadd.f32 %v1802, %v625
        %v1804 = vadd.f32 %v1803, %v640
        %v1805 = vadd.f32 %v1804, %v655
        %v1806 = vadd.f32 %v1805, %v670
        %v1807 = vsel %vm1117, %v685, 0.0
        %v1808 = vadd.f32 %v1806, %v1807
        %v1809 = vrot.slane %v1808, 4
        %v1810 = vadd.f32 %v1808, %v1809
        %v1811 = vrot.slane %v1810, 2
        %v1812 = vadd.f32 %v1810, %v1811
        %v1813 = vrot.slane %v1812, 1
        %v1814 = vadd.f32 %v1812, %v1813
        %v1815 = vadd.f32 %v596, %v611
        %v1816 = vadd.f32 %v1815, %v626
        %v1817 = vadd.f32 %v1816, %v641
        %v1818 = vadd.f32 %v1817, %v656
        %v1819 = vadd.f32 %v1818, %v671
        %v1820 = vsel %vm1117, %v686, 0.0
        %v1821 = vadd.f32 %v1819, %v1820
        %v1822 = vrot.slane %v1821, 4
        %v1823 = vadd.f32 %v1821, %v1822
        %v1824 = vrot.slane %v1823, 2
        %v1825 = vadd.f32 %v1823, %v1824
        %v1826 = vrot.slane %v1825, 1
        %v1827 = vadd.f32 %v1825, %v1826
        %v1828 = vadd.f32 %v597, %v612
        %v1829 = vadd.f32 %v1828, %v627
        %v1830 = vadd.f32 %v1829, %v642
        %v1831 = vadd.f32 %v1830, %v657
        %v1832 = vadd.f32 %v1831, %v672
        %v1833 = vsel %vm1117, %v687, 0.0
        %v1834 = vadd.f32 %v1832, %v1833
        %v1835 = vrot.slane %v1834, 4
        %v1836 = vadd.f32 %v1834, %v1835
        %v1837 = vrot.slane %v1836, 2
        %v1838 = vadd.f32 %v1836, %v1837
        %v1839 = vrot.slane %v1838, 1
        %v1840 = vadd.f32 %v1838, %v1839
        %v1841 = vadd.f32 %v598, %v613
        %v1842 = vadd.f32 %v1841, %v628
        %v1843 = vadd.f32 %v1842, %v643
        %v1844 = vadd.f32 %v1843, %v658
        %v1845 = vadd.f32 %v1844, %v673
        %v1846 = vsel %vm1117, %v688, 0.0
        %v1847 = vadd.f32 %v1845, %v1846
        %v1848 = vrot.slane %v1847, 4
        %v1849 = vadd.f32 %v1847, %v1848
        %v1850 = vrot.slane %v1849, 2
        %v1851 = vadd.f32 %v1849, %v1850
        %v1852 = vrot.slane %v1851, 1
        %v1853 = vadd.f32 %v1851, %v1852
        %v1854 = vadd.f32 %v599, %v614
        %v1855 = vadd.f32 %v1854, %v629
        %v1856 = vadd.f32 %v1855, %v644
        %v1857 = vadd.f32 %v1856, %v659
        %v1858 = vadd.f32 %v1857, %v674
        %v1859 = vsel %vm1117, %v689, 0.0
        %v1860 = vadd.f32 %v1858, %v1859
        %v1861 = vrot.slane %v1860, 4
        %v1862 = vadd.f32 %v1860, %v1861
        %v1863 = vrot.slane %v1862, 2
        %v1864 = vadd.f32 %v1862, %v1863
        %v1865 = vrot.slane %v1864, 1
        %v1866 = vadd.f32 %v1864, %v1865
        %v1867 = vadd.f32 %v600, %v615
        %v1868 = vadd.f32 %v1867, %v630
        %v1869 = vadd.f32 %v1868, %v645
        %v1870 = vadd.f32 %v1869, %v660
        %v1871 = vadd.f32 %v1870, %v675
        %v1872 = vsel %vm1117, %v690, 0.0
        %v1873 = vadd.f32 %v1871, %v1872
        %v1874 = vrot.slane %v1873, 4
        %v1875 = vadd.f32 %v1873, %v1874
        %v1876 = vrot.slane %v1875, 2
        %v1877 = vadd.f32 %v1875, %v1876
        %v1878 = vrot.slane %v1877, 1
        %v1879 = vadd.f32 %v1877, %v1878
        %v1880 = vadd.f32 %v601, %v616
        %v1881 = vadd.f32 %v1880, %v631
        %v1882 = vadd.f32 %v1881, %v646
        %v1883 = vadd.f32 %v1882, %v661
        %v1884 = vadd.f32 %v1883, %v676
        %v1885 = vsel %vm1117, %v691, 0.0
        %v1886 = vadd.f32 %v1884, %v1885
        %v1887 = vrot.slane %v1886, 4
        %v1888 = vadd.f32 %v1886, %v1887
        %v1889 = vrot.slane %v1888, 2
        %v1890 = vadd.f32 %v1888, %v1889
        %v1891 = vrot.slane %v1890, 1
        %v1892 = vadd.f32 %v1890, %v1891
        %v1893 = vadd.f32 %v692, %v707
        %v1894 = vadd.f32 %v1893, %v722
        %v1895 = vadd.f32 %v1894, %v737
        %v1896 = vadd.f32 %v1895, %v752
        %v1897 = vadd.f32 %v1896, %v767
        %v1898 = vsel %vm1117, %v782, 0.0
        %v1899 = vadd.f32 %v1897, %v1898
        %v1900 = vrot.slane %v1899, 4
        %v1901 = vadd.f32 %v1899, %v1900
        %v1902 = vrot.slane %v1901, 2
        %v1903 = vadd.f32 %v1901, %v1902
        %v1904 = vrot.slane %v1903, 1
        %v1905 = vadd.f32 %v1903, %v1904
        %v1906 = vadd.f32 %v693, %v708
        %v1907 = vadd.f32 %v1906, %v723
        %v1908 = vadd.f32 %v1907, %v738
        %v1909 = vadd.f32 %v1908, %v753
        %v1910 = vadd.f32 %v1909, %v768
        %v1911 = vsel %vm1117, %v783, 0.0
        %v1912 = vadd.f32 %v1910, %v1911
        %v1913 = vrot.slane %v1912, 4
        %v1914 = vadd.f32 %v1912, %v1913
        %v1915 = vrot.slane %v1914, 2
        %v1916 = vadd.f32 %v1914, %v1915
        %v1917 = vrot.slane %v1916, 1
        %v1918 = vadd.f32 %v1916, %v1917
        %v1919 = vadd.f32 %v694, %v709
        %v1920 = vadd.f32 %v1919, %v724
        %v1921 = vadd.f32 %v1920, %v739
        %v1922 = vadd.f32 %v1921, %v754
        %v1923 = vadd.f32 %v1922, %v769
        %v1924 = vsel %vm1117, %v784, 0.0
        %v1925 = vadd.f32 %v1923, %v1924
        %v1926 = vrot.slane %v1925, 4
        %v1927 = vadd.f32 %v1925, %v1926
        %v1928 = vrot.slane %v1927, 2
        %v1929 = vadd.f32 %v1927, %v1928
        %v1930 = vrot.slane %v1929, 1
        %v1931 = vadd.f32 %v1929, %v1930
        %v1932 = vadd.f32 %v695, %v710
        %v1933 = vadd.f32 %v1932, %v725
        %v1934 = vadd.f32 %v1933, %v740
        %v1935 = vadd.f32 %v1934, %v755
        %v1936 = vadd.f32 %v1935, %v770
        %v1937 = vsel %vm1117, %v785, 0.0
        %v1938 = vadd.f32 %v1936, %v1937
        %v1939 = vrot.slane %v1938, 4
        %v1940 = vadd.f32 %v1938, %v1939
        %v1941 = vrot.slane %v1940, 2
        %v1942 = vadd.f32 %v1940, %v1941
        %v1943 = vrot.slane %v1942, 1
        %v1944 = vadd.f32 %v1942, %v1943
        %v1945 = vadd.f32 %v696, %v711
        %v1946 = vadd.f32 %v1945, %v726
        %v1947 = vadd.f32 %v1946, %v741
        %v1948 = vadd.f32 %v1947, %v756
        %v1949 = vadd.f32 %v1948, %v771
        %v1950 = vsel %vm1117, %v786, 0.0
        %v1951 = vadd.f32 %v1949, %v1950
        %v1952 = vrot.slane %v1951, 4
        %v1953 = vadd.f32 %v1951, %v1952
        %v1954 = vrot.slane %v1953, 2
        %v1955 = vadd.f32 %v1953, %v1954
        %v1956 = vrot.slane %v1955, 1
        %v1957 = vadd.f32 %v1955, %v1956
        %v1958 = vadd.f32 %v697, %v712
        %v1959 = vadd.f32 %v1958, %v727
        %v1960 = vadd.f32 %v1959, %v742
        %v1961 = vadd.f32 %v1960, %v757
        %v1962 = vadd.f32 %v1961, %v772
        %v1963 = vsel %vm1117, %v787, 0.0
        %v1964 = vadd.f32 %v1962, %v1963
        %v1965 = vrot.slane %v1964, 4
        %v1966 = vadd.f32 %v1964, %v1965
        %v1967 = vrot.slane %v1966, 2
        %v1968 = vadd.f32 %v1966, %v1967
        %v1969 = vrot.slane %v1968, 1
        %v1970 = vadd.f32 %v1968, %v1969
        %v1971 = vadd.f32 %v698, %v713
        %v1972 = vadd.f32 %v1971, %v728
        %v1973 = vadd.f32 %v1972, %v743
        %v1974 = vadd.f32 %v1973, %v758
        %v1975 = vadd.f32 %v1974, %v773
        %v1976 = vsel %vm1117, %v788, 0.0
        %v1977 = vadd.f32 %v1975, %v1976
        %v1978 = vrot.slane %v1977, 4
        %v1979 = vadd.f32 %v1977, %v1978
        %v1980 = vrot.slane %v1979, 2
        %v1981 = vadd.f32 %v1979, %v1980
        %v1982 = vrot.slane %v1981, 1
        %v1983 = vadd.f32 %v1981, %v1982
        %v1984 = vadd.f32 %v699, %v714
        %v1985 = vadd.f32 %v1984, %v729
        %v1986 = vadd.f32 %v1985, %v744
        %v1987 = vadd.f32 %v1986, %v759
        %v1988 = vadd.f32 %v1987, %v774
        %v1989 = vsel %vm1117, %v789, 0.0
        %v1990 = vadd.f32 %v1988, %v1989
        %v1991 = vrot.slane %v1990, 4
        %v1992 = vadd.f32 %v1990, %v1991
        %v1993 = vrot.slane %v1992, 2
        %v1994 = vadd.f32 %v1992, %v1993
        %v1995 = vrot.slane %v1994, 1
        %v1996 = vadd.f32 %v1994, %v1995
        %v1997 = vadd.f32 %v700, %v715
        %v1998 = vadd.f32 %v1997, %v730
        %v1999 = vadd.f32 %v1998, %v745
        %v2000 = vadd.f32 %v1999, %v760
        %v2001 = vadd.f32 %v2000, %v775
        %v2002 = vsel %vm1117, %v790, 0.0
        %v2003 = vadd.f32 %v2001, %v2002
        %v2004 = vrot.slane %v2003, 4
        %v2005 = vadd.f32 %v2003, %v2004
        %v2006 = vrot.slane %v2005, 2
        %v2007 = vadd.f32 %v2005, %v2006
        %v2008 = vrot.slane %v2007, 1
        %v2009 = vadd.f32 %v2007, %v2008
        %v2010 = vadd.f32 %v701, %v716
        %v2011 = vadd.f32 %v2010, %v731
        %v2012 = vadd.f32 %v2011, %v746
        %v2013 = vadd.f32 %v2012, %v761
        %v2014 = vadd.f32 %v2013, %v776
        %v2015 = vsel %vm1117, %v791, 0.0
        %v2016 = vadd.f32 %v2014, %v2015
        %v2017 = vrot.slane %v2016, 4
        %v2018 = vadd.f32 %v2016, %v2017
        %v2019 = vrot.slane %v2018, 2
        %v2020 = vadd.f32 %v2018, %v2019
        %v2021 = vrot.slane %v2020, 1
        %v2022 = vadd.f32 %v2020, %v2021
        %v2023 = vadd.f32 %v702, %v717
        %v2024 = vadd.f32 %v2023, %v732
        %v2025 = vadd.f32 %v2024, %v747
        %v2026 = vadd.f32 %v2025, %v762
        %v2027 = vadd.f32 %v2026, %v777
        %v2028 = vsel %vm1117, %v792, 0.0
        %v2029 = vadd.f32 %v2027, %v2028
        %v2030 = vrot.slane %v2029, 4
        %v2031 = vadd.f32 %v2029, %v2030
        %v2032 = vrot.slane %v2031, 2
        %v2033 = vadd.f32 %v2031, %v2032
        %v2034 = vrot.slane %v2033, 1
        %v2035 = vadd.f32 %v2033, %v2034
        %v2036 = vadd.f32 %v703, %v718
        %v2037 = vadd.f32 %v2036, %v733
        %v2038 = vadd.f32 %v2037, %v748
        %v2039 = vadd.f32 %v2038, %v763
        %v2040 = vadd.f32 %v2039, %v778
        %v2041 = vsel %vm1117, %v793, 0.0
        %v2042 = vadd.f32 %v2040, %v2041
        %v2043 = vrot.slane %v2042, 4
        %v2044 = vadd.f32 %v2042, %v2043
        %v2045 = vrot.slane %v2044, 2
        %v2046 = vadd.f32 %v2044, %v2045
        %v2047 = vrot.slane %v2046, 1
        %v2048 = vadd.f32 %v2046, %v2047
        %v2049 = vadd.f32 %v704, %v719
        %v2050 = vadd.f32 %v2049, %v734
        %v2051 = vadd.f32 %v2050, %v749
        %v2052 = vadd.f32 %v2051, %v764
        %v2053 = vadd.f32 %v2052, %v779
        %v2054 = vsel %vm1117, %v794, 0.0
        %v2055 = vadd.f32 %v2053, %v2054
        %v2056 = vrot.slane %v2055, 4
        %v2057 = vadd.f32 %v2055, %v2056
        %v2058 = vrot.slane %v2057, 2
        %v2059 = vadd.f32 %v2057, %v2058
        %v2060 = vrot.slane %v2059, 1
        %v2061 = vadd.f32 %v2059, %v2060
        %v2062 = vadd.f32 %v705, %v720
        %v2063 = vadd.f32 %v2062, %v735
        %v2064 = vadd.f32 %v2063, %v750
        %v2065 = vadd.f32 %v2064, %v765
        %v2066 = vadd.f32 %v2065, %v780
        %v2067 = vsel %vm1117, %v795, 0.0
        %v2068 = vadd.f32 %v2066, %v2067
        %v2069 = vrot.slane %v2068, 4
        %v2070 = vadd.f32 %v2068, %v2069
        %v2071 = vrot.slane %v2070, 2
        %v2072 = vadd.f32 %v2070, %v2071
        %v2073 = vrot.slane %v2072, 1
        %v2074 = vadd.f32 %v2072, %v2073
        %v2075 = vadd.f32 %v706, %v721
        %v2076 = vadd.f32 %v2075, %v736
        %v2077 = vadd.f32 %v2076, %v751
        %v2078 = vadd.f32 %v2077, %v766
        %v2079 = vadd.f32 %v2078, %v781
        %v2080 = vsel %vm1117, %v796, 0.0
        %v2081 = vadd.f32 %v2079, %v2080
        %v2082 = vrot.slane %v2081, 4
        %v2083 = vadd.f32 %v2081, %v2082
        %v2084 = vrot.slane %v2083, 2
        %v2085 = vadd.f32 %v2083, %v2084
        %v2086 = vrot.slane %v2085, 1
        %v2087 = vadd.f32 %v2085, %v2086
        %v2088 = vadd.f32 %v797, %v812
        %v2089 = vadd.f32 %v2088, %v827
        %v2090 = vadd.f32 %v2089, %v842
        %v2091 = vadd.f32 %v2090, %v857
        %v2092 = vadd.f32 %v2091, %v872
        %v2093 = vsel %vm1117, %v887, 0.0
        %v2094 = vadd.f32 %v2092, %v2093
        %v2095 = vrot.slane %v2094, 4
        %v2096 = vadd.f32 %v2094, %v2095
        %v2097 = vrot.slane %v2096, 2
        %v2098 = vadd.f32 %v2096, %v2097
        %v2099 = vrot.slane %v2098, 1
        %v2100 = vadd.f32 %v2098, %v2099
        %v2101 = vadd.f32 %v798, %v813
        %v2102 = vadd.f32 %v2101, %v828
        %v2103 = vadd.f32 %v2102, %v843
        %v2104 = vadd.f32 %v2103, %v858
        %v2105 = vadd.f32 %v2104, %v873
        %v2106 = vsel %vm1117, %v888, 0.0
        %v2107 = vadd.f32 %v2105, %v2106
        %v2108 = vrot.slane %v2107, 4
        %v2109 = vadd.f32 %v2107, %v2108
        %v2110 = vrot.slane %v2109, 2
        %v2111 = vadd.f32 %v2109, %v2110
        %v2112 = vrot.slane %v2111, 1
        %v2113 = vadd.f32 %v2111, %v2112
        %v2114 = vadd.f32 %v799, %v814
        %v2115 = vadd.f32 %v2114, %v829
        %v2116 = vadd.f32 %v2115, %v844
        %v2117 = vadd.f32 %v2116, %v859
        %v2118 = vadd.f32 %v2117, %v874
        %v2119 = vsel %vm1117, %v889, 0.0
        %v2120 = vadd.f32 %v2118, %v2119
        %v2121 = vrot.slane %v2120, 4
        %v2122 = vadd.f32 %v2120, %v2121
        %v2123 = vrot.slane %v2122, 2
        %v2124 = vadd.f32 %v2122, %v2123
        %v2125 = vrot.slane %v2124, 1
        %v2126 = vadd.f32 %v2124, %v2125
        %v2127 = vadd.f32 %v800, %v815
        %v2128 = vadd.f32 %v2127, %v830
        %v2129 = vadd.f32 %v2128, %v845
        %v2130 = vadd.f32 %v2129, %v860
        %v2131 = vadd.f32 %v2130, %v875
        %v2132 = vsel %vm1117, %v890, 0.0
        %v2133 = vadd.f32 %v2131, %v2132
        %v2134 = vrot.slane %v2133, 4
        %v2135 = vadd.f32 %v2133, %v2134
        %v2136 = vrot.slane %v2135, 2
        %v2137 = vadd.f32 %v2135, %v2136
        %v2138 = vrot.slane %v2137, 1
        %v2139 = vadd.f32 %v2137, %v2138
        %v2140 = vadd.f32 %v801, %v816
        %v2141 = vadd.f32 %v2140, %v831
        %v2142 = vadd.f32 %v2141, %v846
        %v2143 = vadd.f32 %v2142, %v861
        %v2144 = vadd.f32 %v2143, %v876
        %v2145 = vsel %vm1117, %v891, 0.0
        %v2146 = vadd.f32 %v2144, %v2145
        %v2147 = vrot.slane %v2146, 4
        %v2148 = vadd.f32 %v2146, %v2147
        %v2149 = vrot.slane %v2148, 2
        %v2150 = vadd.f32 %v2148, %v2149
        %v2151 = vrot.slane %v2150, 1
        %v2152 = vadd.f32 %v2150, %v2151
        %v2153 = vadd.f32 %v802, %v817
        %v2154 = vadd.f32 %v2153, %v832
        %v2155 = vadd.f32 %v2154, %v847
        %v2156 = vadd.f32 %v2155, %v862
        %v2157 = vadd.f32 %v2156, %v877
        %v2158 = vsel %vm1117, %v892, 0.0
        %v2159 = vadd.f32 %v2157, %v2158
        %v2160 = vrot.slane %v2159, 4
        %v2161 = vadd.f32 %v2159, %v2160
        %v2162 = vrot.slane %v2161, 2
        %v2163 = vadd.f32 %v2161, %v2162
        %v2164 = vrot.slane %v2163, 1
        %v2165 = vadd.f32 %v2163, %v2164
        %v2166 = vadd.f32 %v803, %v818
        %v2167 = vadd.f32 %v2166, %v833
        %v2168 = vadd.f32 %v2167, %v848
        %v2169 = vadd.f32 %v2168, %v863
        %v2170 = vadd.f32 %v2169, %v878
        %v2171 = vsel %vm1117, %v893, 0.0
        %v2172 = vadd.f32 %v2170, %v2171
        %v2173 = vrot.slane %v2172, 4
        %v2174 = vadd.f32 %v2172, %v2173
        %v2175 = vrot.slane %v2174, 2
        %v2176 = vadd.f32 %v2174, %v2175
        %v2177 = vrot.slane %v2176, 1
        %v2178 = vadd.f32 %v2176, %v2177
        %v2179 = vadd.f32 %v804, %v819
        %v2180 = vadd.f32 %v2179, %v834
        %v2181 = vadd.f32 %v2180, %v849
        %v2182 = vadd.f32 %v2181, %v864
        %v2183 = vadd.f32 %v2182, %v879
        %v2184 = vsel %vm1117, %v894, 0.0
        %v2185 = vadd.f32 %v2183, %v2184
        %v2186 = vrot.slane %v2185, 4
        %v2187 = vadd.f32 %v2185, %v2186
        %v2188 = vrot.slane %v2187, 2
        %v2189 = vadd.f32 %v2187, %v2188
        %v2190 = vrot.slane %v2189, 1
        %v2191 = vadd.f32 %v2189, %v2190
        %v2192 = vadd.f32 %v805, %v820
        %v2193 = vadd.f32 %v2192, %v835
        %v2194 = vadd.f32 %v2193, %v850
        %v2195 = vadd.f32 %v2194, %v865
        %v2196 = vadd.f32 %v2195, %v880
        %v2197 = vsel %vm1117, %v895, 0.0
        %v2198 = vadd.f32 %v2196, %v2197
        %v2199 = vrot.slane %v2198, 4
        %v2200 = vadd.f32 %v2198, %v2199
        %v2201 = vrot.slane %v2200, 2
        %v2202 = vadd.f32 %v2200, %v2201
        %v2203 = vrot.slane %v2202, 1
        %v2204 = vadd.f32 %v2202, %v2203
        %v2205 = vadd.f32 %v806, %v821
        %v2206 = vadd.f32 %v2205, %v836
        %v2207 = vadd.f32 %v2206, %v851
        %v2208 = vadd.f32 %v2207, %v866
        %v2209 = vadd.f32 %v2208, %v881
        %v2210 = vsel %vm1117, %v896, 0.0
        %v2211 = vadd.f32 %v2209, %v2210
        %v2212 = vrot.slane %v2211, 4
        %v2213 = vadd.f32 %v2211, %v2212
        %v2214 = vrot.slane %v2213, 2
        %v2215 = vadd.f32 %v2213, %v2214
        %v2216 = vrot.slane %v2215, 1
        %v2217 = vadd.f32 %v2215, %v2216
        %v2218 = vadd.f32 %v807, %v822
        %v2219 = vadd.f32 %v2218, %v837
        %v2220 = vadd.f32 %v2219, %v852
        %v2221 = vadd.f32 %v2220, %v867
        %v2222 = vadd.f32 %v2221, %v882
        %v2223 = vsel %vm1117, %v897, 0.0
        %v2224 = vadd.f32 %v2222, %v2223
        %v2225 = vrot.slane %v2224, 4
        %v2226 = vadd.f32 %v2224, %v2225
        %v2227 = vrot.slane %v2226, 2
        %v2228 = vadd.f32 %v2226, %v2227
        %v2229 = vrot.slane %v2228, 1
        %v2230 = vadd.f32 %v2228, %v2229
        %v2231 = vadd.f32 %v808, %v823
        %v2232 = vadd.f32 %v2231, %v838
        %v2233 = vadd.f32 %v2232, %v853
        %v2234 = vadd.f32 %v2233, %v868
        %v2235 = vadd.f32 %v2234, %v883
        %v2236 = vsel %vm1117, %v898, 0.0
        %v2237 = vadd.f32 %v2235, %v2236
        %v2238 = vrot.slane %v2237, 4
        %v2239 = vadd.f32 %v2237, %v2238
        %v2240 = vrot.slane %v2239, 2
        %v2241 = vadd.f32 %v2239, %v2240
        %v2242 = vrot.slane %v2241, 1
        %v2243 = vadd.f32 %v2241, %v2242
        %v2244 = vadd.f32 %v809, %v824
        %v2245 = vadd.f32 %v2244, %v839
        %v2246 = vadd.f32 %v2245, %v854
        %v2247 = vadd.f32 %v2246, %v869
        %v2248 = vadd.f32 %v2247, %v884
        %v2249 = vsel %vm1117, %v899, 0.0
        %v2250 = vadd.f32 %v2248, %v2249
        %v2251 = vrot.slane %v2250, 4
        %v2252 = vadd.f32 %v2250, %v2251
        %v2253 = vrot.slane %v2252, 2
        %v2254 = vadd.f32 %v2252, %v2253
        %v2255 = vrot.slane %v2254, 1
        %v2256 = vadd.f32 %v2254, %v2255
        %v2257 = vadd.f32 %v810, %v825
        %v2258 = vadd.f32 %v2257, %v840
        %v2259 = vadd.f32 %v2258, %v855
        %v2260 = vadd.f32 %v2259, %v870
        %v2261 = vadd.f32 %v2260, %v885
        %v2262 = vsel %vm1117, %v900, 0.0
        %v2263 = vadd.f32 %v2261, %v2262
        %v2264 = vrot.slane %v2263, 4
        %v2265 = vadd.f32 %v2263, %v2264
        %v2266 = vrot.slane %v2265, 2
        %v2267 = vadd.f32 %v2265, %v2266
        %v2268 = vrot.slane %v2267, 1
        %v2269 = vadd.f32 %v2267, %v2268
        %v2270 = vadd.f32 %v811, %v826
        %v2271 = vadd.f32 %v2270, %v841
        %v2272 = vadd.f32 %v2271, %v856
        %v2273 = vadd.f32 %v2272, %v871
        %v2274 = vadd.f32 %v2273, %v886
        %v2275 = vsel %vm1117, %v901, 0.0
        %v2276 = vadd.f32 %v2274, %v2275
        %v2277 = vrot.slane %v2276, 4
        %v2278 = vadd.f32 %v2276, %v2277
        %v2279 = vrot.slane %v2278, 2
        %v2280 = vadd.f32 %v2278, %v2279
        %v2281 = vrot.slane %v2280, 1
        %v2282 = vadd.f32 %v2280, %v2281
        %v2283 = vadd.f32 %v902, %v917
        %v2284 = vadd.f32 %v2283, %v932
        %v2285 = vadd.f32 %v2284, %v947
        %v2286 = vadd.f32 %v2285, %v962
        %v2287 = vadd.f32 %v2286, %v977
        %v2288 = vsel %vm1117, %v992, 0.0
        %v2289 = vadd.f32 %v2287, %v2288
        %v2290 = vrot.slane %v2289, 4
        %v2291 = vadd.f32 %v2289, %v2290
        %v2292 = vrot.slane %v2291, 2
        %v2293 = vadd.f32 %v2291, %v2292
        %v2294 = vrot.slane %v2293, 1
        %v2295 = vadd.f32 %v2293, %v2294
        %v2296 = vadd.f32 %v903, %v918
        %v2297 = vadd.f32 %v2296, %v933
        %v2298 = vadd.f32 %v2297, %v948
        %v2299 = vadd.f32 %v2298, %v963
        %v2300 = vadd.f32 %v2299, %v978
        %v2301 = vsel %vm1117, %v993, 0.0
        %v2302 = vadd.f32 %v2300, %v2301
        %v2303 = vrot.slane %v2302, 4
        %v2304 = vadd.f32 %v2302, %v2303
        %v2305 = vrot.slane %v2304, 2
        %v2306 = vadd.f32 %v2304, %v2305
        %v2307 = vrot.slane %v2306, 1
        %v2308 = vadd.f32 %v2306, %v2307
        %v2309 = vadd.f32 %v904, %v919
        %v2310 = vadd.f32 %v2309, %v934
        %v2311 = vadd.f32 %v2310, %v949
        %v2312 = vadd.f32 %v2311, %v964
        %v2313 = vadd.f32 %v2312, %v979
        %v2314 = vsel %vm1117, %v994, 0.0
        %v2315 = vadd.f32 %v2313, %v2314
        %v2316 = vrot.slane %v2315, 4
        %v2317 = vadd.f32 %v2315, %v2316
        %v2318 = vrot.slane %v2317, 2
        %v2319 = vadd.f32 %v2317, %v2318
        %v2320 = vrot.slane %v2319, 1
        %v2321 = vadd.f32 %v2319, %v2320
        %v2322 = vadd.f32 %v905, %v920
        %v2323 = vadd.f32 %v2322, %v935
        %v2324 = vadd.f32 %v2323, %v950
        %v2325 = vadd.f32 %v2324, %v965
        %v2326 = vadd.f32 %v2325, %v980
        %v2327 = vsel %vm1117, %v995, 0.0
        %v2328 = vadd.f32 %v2326, %v2327
        %v2329 = vrot.slane %v2328, 4
        %v2330 = vadd.f32 %v2328, %v2329
        %v2331 = vrot.slane %v2330, 2
        %v2332 = vadd.f32 %v2330, %v2331
        %v2333 = vrot.slane %v2332, 1
        %v2334 = vadd.f32 %v2332, %v2333
        %v2335 = vadd.f32 %v906, %v921
        %v2336 = vadd.f32 %v2335, %v936
        %v2337 = vadd.f32 %v2336, %v951
        %v2338 = vadd.f32 %v2337, %v966
        %v2339 = vadd.f32 %v2338, %v981
        %v2340 = vsel %vm1117, %v996, 0.0
        %v2341 = vadd.f32 %v2339, %v2340
        %v2342 = vrot.slane %v2341, 4
        %v2343 = vadd.f32 %v2341, %v2342
        %v2344 = vrot.slane %v2343, 2
        %v2345 = vadd.f32 %v2343, %v2344
        %v2346 = vrot.slane %v2345, 1
        %v2347 = vadd.f32 %v2345, %v2346
        %v2348 = vadd.f32 %v907, %v922
        %v2349 = vadd.f32 %v2348, %v937
        %v2350 = vadd.f32 %v2349, %v952
        %v2351 = vadd.f32 %v2350, %v967
        %v2352 = vadd.f32 %v2351, %v982
        %v2353 = vsel %vm1117, %v997, 0.0
        %v2354 = vadd.f32 %v2352, %v2353
        %v2355 = vrot.slane %v2354, 4
        %v2356 = vadd.f32 %v2354, %v2355
        %v2357 = vrot.slane %v2356, 2
        %v2358 = vadd.f32 %v2356, %v2357
        %v2359 = vrot.slane %v2358, 1
        %v2360 = vadd.f32 %v2358, %v2359
        %v2361 = vadd.f32 %v908, %v923
        %v2362 = vadd.f32 %v2361, %v938
        %v2363 = vadd.f32 %v2362, %v953
        %v2364 = vadd.f32 %v2363, %v968
        %v2365 = vadd.f32 %v2364, %v983
        %v2366 = vsel %vm1117, %v998, 0.0
        %v2367 = vadd.f32 %v2365, %v2366
        %v2368 = vrot.slane %v2367, 4
        %v2369 = vadd.f32 %v2367, %v2368
        %v2370 = vrot.slane %v2369, 2
        %v2371 = vadd.f32 %v2369, %v2370
        %v2372 = vrot.slane %v2371, 1
        %v2373 = vadd.f32 %v2371, %v2372
        %v2374 = vadd.f32 %v909, %v924
        %v2375 = vadd.f32 %v2374, %v939
        %v2376 = vadd.f32 %v2375, %v954
        %v2377 = vadd.f32 %v2376, %v969
        %v2378 = vadd.f32 %v2377, %v984
        %v2379 = vsel %vm1117, %v999, 0.0
        %v2380 = vadd.f32 %v2378, %v2379
        %v2381 = vrot.slane %v2380, 4
        %v2382 = vadd.f32 %v2380, %v2381
        %v2383 = vrot.slane %v2382, 2
        %v2384 = vadd.f32 %v2382, %v2383
        %v2385 = vrot.slane %v2384, 1
        %v2386 = vadd.f32 %v2384, %v2385
        %v2387 = vadd.f32 %v910, %v925
        %v2388 = vadd.f32 %v2387, %v940
        %v2389 = vadd.f32 %v2388, %v955
        %v2390 = vadd.f32 %v2389, %v970
        %v2391 = vadd.f32 %v2390, %v985
        %v2392 = vsel %vm1117, %v1000, 0.0
        %v2393 = vadd.f32 %v2391, %v2392
        %v2394 = vrot.slane %v2393, 4
        %v2395 = vadd.f32 %v2393, %v2394
        %v2396 = vrot.slane %v2395, 2
        %v2397 = vadd.f32 %v2395, %v2396
        %v2398 = vrot.slane %v2397, 1
        %v2399 = vadd.f32 %v2397, %v2398
        %v2400 = vadd.f32 %v911, %v926
        %v2401 = vadd.f32 %v2400, %v941
        %v2402 = vadd.f32 %v2401, %v956
        %v2403 = vadd.f32 %v2402, %v971
        %v2404 = vadd.f32 %v2403, %v986
        %v2405 = vsel %vm1117, %v1001, 0.0
        %v2406 = vadd.f32 %v2404, %v2405
        %v2407 = vrot.slane %v2406, 4
        %v2408 = vadd.f32 %v2406, %v2407
        %v2409 = vrot.slane %v2408, 2
        %v2410 = vadd.f32 %v2408, %v2409
        %v2411 = vrot.slane %v2410, 1
        %v2412 = vadd.f32 %v2410, %v2411
        %v2413 = vadd.f32 %v912, %v927
        %v2414 = vadd.f32 %v2413, %v942
        %v2415 = vadd.f32 %v2414, %v957
        %v2416 = vadd.f32 %v2415, %v972
        %v2417 = vadd.f32 %v2416, %v987
        %v2418 = vsel %vm1117, %v1002, 0.0
        %v2419 = vadd.f32 %v2417, %v2418
        %v2420 = vrot.slane %v2419, 4
        %v2421 = vadd.f32 %v2419, %v2420
        %v2422 = vrot.slane %v2421, 2
        %v2423 = vadd.f32 %v2421, %v2422
        %v2424 = vrot.slane %v2423, 1
        %v2425 = vadd.f32 %v2423, %v2424
        %v2426 = vadd.f32 %v913, %v928
        %v2427 = vadd.f32 %v2426, %v943
        %v2428 = vadd.f32 %v2427, %v958
        %v2429 = vadd.f32 %v2428, %v973
        %v2430 = vadd.f32 %v2429, %v988
        %v2431 = vsel %vm1117, %v1003, 0.0
        %v2432 = vadd.f32 %v2430, %v2431
        %v2433 = vrot.slane %v2432, 4
        %v2434 = vadd.f32 %v2432, %v2433
        %v2435 = vrot.slane %v2434, 2
        %v2436 = vadd.f32 %v2434, %v2435
        %v2437 = vrot.slane %v2436, 1
        %v2438 = vadd.f32 %v2436, %v2437
        %v2439 = vadd.f32 %v914, %v929
        %v2440 = vadd.f32 %v2439, %v944
        %v2441 = vadd.f32 %v2440, %v959
        %v2442 = vadd.f32 %v2441, %v974
        %v2443 = vadd.f32 %v2442, %v989
        %v2444 = vsel %vm1117, %v1004, 0.0
        %v2445 = vadd.f32 %v2443, %v2444
        %v2446 = vrot.slane %v2445, 4
        %v2447 = vadd.f32 %v2445, %v2446
        %v2448 = vrot.slane %v2447, 2
        %v2449 = vadd.f32 %v2447, %v2448
        %v2450 = vrot.slane %v2449, 1
        %v2451 = vadd.f32 %v2449, %v2450
        %v2452 = vadd.f32 %v915, %v930
        %v2453 = vadd.f32 %v2452, %v945
        %v2454 = vadd.f32 %v2453, %v960
        %v2455 = vadd.f32 %v2454, %v975
        %v2456 = vadd.f32 %v2455, %v990
        %v2457 = vsel %vm1117, %v1005, 0.0
        %v2458 = vadd.f32 %v2456, %v2457
        %v2459 = vrot.slane %v2458, 4
        %v2460 = vadd.f32 %v2458, %v2459
        %v2461 = vrot.slane %v2460, 2
        %v2462 = vadd.f32 %v2460, %v2461
        %v2463 = vrot.slane %v2462, 1
        %v2464 = vadd.f32 %v2462, %v2463
        %v2465 = vadd.f32 %v916, %v931
        %v2466 = vadd.f32 %v2465, %v946
        %v2467 = vadd.f32 %v2466, %v961
        %v2468 = vadd.f32 %v2467, %v976
        %v2469 = vadd.f32 %v2468, %v991
        %v2470 = vsel %vm1117, %v1006, 0.0
        %v2471 = vadd.f32 %v2469, %v2470
        %v2472 = vrot.slane %v2471, 4
        %v2473 = vadd.f32 %v2471, %v2472
        %v2474 = vrot.slane %v2473, 2
        %v2475 = vadd.f32 %v2473, %v2474
        %v2476 = vrot.slane %v2475, 1
        %v2477 = vadd.f32 %v2475, %v2476
        %v2478 = vadd.f32 %v1007, %v1022
        %v2479 = vadd.f32 %v2478, %v1037
        %v2480 = vadd.f32 %v2479, %v1052
        %v2481 = vadd.f32 %v2480, %v1067
        %v2482 = vadd.f32 %v2481, %v1082
        %v2483 = vsel %vm1117, %v1097, 0.0
        %v2484 = vadd.f32 %v2482, %v2483
        %v2485 = vrot.slane %v2484, 4
        %v2486 = vadd.f32 %v2484, %v2485
        %v2487 = vrot.slane %v2486, 2
        %v2488 = vadd.f32 %v2486, %v2487
        %v2489 = vrot.slane %v2488, 1
        %v2490 = vadd.f32 %v2488, %v2489
        %v2491 = vadd.f32 %v1008, %v1023
        %v2492 = vadd.f32 %v2491, %v1038
        %v2493 = vadd.f32 %v2492, %v1053
        %v2494 = vadd.f32 %v2493, %v1068
        %v2495 = vadd.f32 %v2494, %v1083
        %v2496 = vsel %vm1117, %v1098, 0.0
        %v2497 = vadd.f32 %v2495, %v2496
        %v2498 = vrot.slane %v2497, 4
        %v2499 = vadd.f32 %v2497, %v2498
        %v2500 = vrot.slane %v2499, 2
        %v2501 = vadd.f32 %v2499, %v2500
        %v2502 = vrot.slane %v2501, 1
        %v2503 = vadd.f32 %v2501, %v2502
        %v2504 = vadd.f32 %v1009, %v1024
        %v2505 = vadd.f32 %v2504, %v1039
        %v2506 = vadd.f32 %v2505, %v1054
        %v2507 = vadd.f32 %v2506, %v1069
        %v2508 = vadd.f32 %v2507, %v1084
        %v2509 = vsel %vm1117, %v1099, 0.0
        %v2510 = vadd.f32 %v2508, %v2509
        %v2511 = vrot.slane %v2510, 4
        %v2512 = vadd.f32 %v2510, %v2511
        %v2513 = vrot.slane %v2512, 2
        %v2514 = vadd.f32 %v2512, %v2513
        %v2515 = vrot.slane %v2514, 1
        %v2516 = vadd.f32 %v2514, %v2515
        %v2517 = vadd.f32 %v1010, %v1025
        %v2518 = vadd.f32 %v2517, %v1040
        %v2519 = vadd.f32 %v2518, %v1055
        %v2520 = vadd.f32 %v2519, %v1070
        %v2521 = vadd.f32 %v2520, %v1085
        %v2522 = vsel %vm1117, %v1100, 0.0
        %v2523 = vadd.f32 %v2521, %v2522
        %v2524 = vrot.slane %v2523, 4
        %v2525 = vadd.f32 %v2523, %v2524
        %v2526 = vrot.slane %v2525, 2
        %v2527 = vadd.f32 %v2525, %v2526
        %v2528 = vrot.slane %v2527, 1
        %v2529 = vadd.f32 %v2527, %v2528
        %v2530 = vadd.f32 %v1011, %v1026
        %v2531 = vadd.f32 %v2530, %v1041
        %v2532 = vadd.f32 %v2531, %v1056
        %v2533 = vadd.f32 %v2532, %v1071
        %v2534 = vadd.f32 %v2533, %v1086
        %v2535 = vsel %vm1117, %v1101, 0.0
        %v2536 = vadd.f32 %v2534, %v2535
        %v2537 = vrot.slane %v2536, 4
        %v2538 = vadd.f32 %v2536, %v2537
        %v2539 = vrot.slane %v2538, 2
        %v2540 = vadd.f32 %v2538, %v2539
        %v2541 = vrot.slane %v2540, 1
        %v2542 = vadd.f32 %v2540, %v2541
        %v2543 = vadd.f32 %v1012, %v1027
        %v2544 = vadd.f32 %v2543, %v1042
        %v2545 = vadd.f32 %v2544, %v1057
        %v2546 = vadd.f32 %v2545, %v1072
        %v2547 = vadd.f32 %v2546, %v1087
        %v2548 = vsel %vm1117, %v1102, 0.0
        %v2549 = vadd.f32 %v2547, %v2548
        %v2550 = vrot.slane %v2549, 4
        %v2551 = vadd.f32 %v2549, %v2550
        %v2552 = vrot.slane %v2551, 2
        %v2553 = vadd.f32 %v2551, %v2552
        %v2554 = vrot.slane %v2553, 1
        %v2555 = vadd.f32 %v2553, %v2554
        %v2556 = vadd.f32 %v1013, %v1028
        %v2557 = vadd.f32 %v2556, %v1043
        %v2558 = vadd.f32 %v2557, %v1058
        %v2559 = vadd.f32 %v2558, %v1073
        %v2560 = vadd.f32 %v2559, %v1088
        %v2561 = vsel %vm1117, %v1103, 0.0
        %v2562 = vadd.f32 %v2560, %v2561
        %v2563 = vrot.slane %v2562, 4
        %v2564 = vadd.f32 %v2562, %v2563
        %v2565 = vrot.slane %v2564, 2
        %v2566 = vadd.f32 %v2564, %v2565
        %v2567 = vrot.slane %v2566, 1
        %v2568 = vadd.f32 %v2566, %v2567
        %v2569 = vadd.f32 %v1014, %v1029
        %v2570 = vadd.f32 %v2569, %v1044
        %v2571 = vadd.f32 %v2570, %v1059
        %v2572 = vadd.f32 %v2571, %v1074
        %v2573 = vadd.f32 %v2572, %v1089
        %v2574 = vsel %vm1117, %v1104, 0.0
        %v2575 = vadd.f32 %v2573, %v2574
        %v2576 = vrot.slane %v2575, 4
        %v2577 = vadd.f32 %v2575, %v2576
        %v2578 = vrot.slane %v2577, 2
        %v2579 = vadd.f32 %v2577, %v2578
        %v2580 = vrot.slane %v2579, 1
        %v2581 = vadd.f32 %v2579, %v2580
        %v2582 = vadd.f32 %v1015, %v1030
        %v2583 = vadd.f32 %v2582, %v1045
        %v2584 = vadd.f32 %v2583, %v1060
        %v2585 = vadd.f32 %v2584, %v1075
        %v2586 = vadd.f32 %v2585, %v1090
        %v2587 = vsel %vm1117, %v1105, 0.0
        %v2588 = vadd.f32 %v2586, %v2587
        %v2589 = vrot.slane %v2588, 4
        %v2590 = vadd.f32 %v2588, %v2589
        %v2591 = vrot.slane %v2590, 2
        %v2592 = vadd.f32 %v2590, %v2591
        %v2593 = vrot.slane %v2592, 1
        %v2594 = vadd.f32 %v2592, %v2593
        %v2595 = vadd.f32 %v1016, %v1031
        %v2596 = vadd.f32 %v2595, %v1046
        %v2597 = vadd.f32 %v2596, %v1061
        %v2598 = vadd.f32 %v2597, %v1076
        %v2599 = vadd.f32 %v2598, %v1091
        %v2600 = vsel %vm1117, %v1106, 0.0
        %v2601 = vadd.f32 %v2599, %v2600
        %v2602 = vrot.slane %v2601, 4
        %v2603 = vadd.f32 %v2601, %v2602
        %v2604 = vrot.slane %v2603, 2
        %v2605 = vadd.f32 %v2603, %v2604
        %v2606 = vrot.slane %v2605, 1
        %v2607 = vadd.f32 %v2605, %v2606
        %v2608 = vadd.f32 %v1017, %v1032
        %v2609 = vadd.f32 %v2608, %v1047
        %v2610 = vadd.f32 %v2609, %v1062
        %v2611 = vadd.f32 %v2610, %v1077
        %v2612 = vadd.f32 %v2611, %v1092
        %v2613 = vsel %vm1117, %v1107, 0.0
        %v2614 = vadd.f32 %v2612, %v2613
        %v2615 = vrot.slane %v2614, 4
        %v2616 = vadd.f32 %v2614, %v2615
        %v2617 = vrot.slane %v2616, 2
        %v2618 = vadd.f32 %v2616, %v2617
        %v2619 = vrot.slane %v2618, 1
        %v2620 = vadd.f32 %v2618, %v2619
        %v2621 = vadd.f32 %v1018, %v1033
        %v2622 = vadd.f32 %v2621, %v1048
        %v2623 = vadd.f32 %v2622, %v1063
        %v2624 = vadd.f32 %v2623, %v1078
        %v2625 = vadd.f32 %v2624, %v1093
        %v2626 = vsel %vm1117, %v1108, 0.0
        %v2627 = vadd.f32 %v2625, %v2626
        %v2628 = vrot.slane %v2627, 4
        %v2629 = vadd.f32 %v2627, %v2628
        %v2630 = vrot.slane %v2629, 2
        %v2631 = vadd.f32 %v2629, %v2630
        %v2632 = vrot.slane %v2631, 1
        %v2633 = vadd.f32 %v2631, %v2632
        %v2634 = vadd.f32 %v1019, %v1034
        %v2635 = vadd.f32 %v2634, %v1049
        %v2636 = vadd.f32 %v2635, %v1064
        %v2637 = vadd.f32 %v2636, %v1079
        %v2638 = vadd.f32 %v2637, %v1094
        %v2639 = vsel %vm1117, %v1109, 0.0
        %v2640 = vadd.f32 %v2638, %v2639
        %v2641 = vrot.slane %v2640, 4
        %v2642 = vadd.f32 %v2640, %v2641
        %v2643 = vrot.slane %v2642, 2
        %v2644 = vadd.f32 %v2642, %v2643
        %v2645 = vrot.slane %v2644, 1
        %v2646 = vadd.f32 %v2644, %v2645
        %v2647 = vadd.f32 %v1020, %v1035
        %v2648 = vadd.f32 %v2647, %v1050
        %v2649 = vadd.f32 %v2648, %v1065
        %v2650 = vadd.f32 %v2649, %v1080
        %v2651 = vadd.f32 %v2650, %v1095
        %v2652 = vsel %vm1117, %v1110, 0.0
        %v2653 = vadd.f32 %v2651, %v2652
        %v2654 = vrot.slane %v2653, 4
        %v2655 = vadd.f32 %v2653, %v2654
        %v2656 = vrot.slane %v2655, 2
        %v2657 = vadd.f32 %v2655, %v2656
        %v2658 = vrot.slane %v2657, 1
        %v2659 = vadd.f32 %v2657, %v2658
        %v2660 = vadd.f32 %v1021, %v1036
        %v2661 = vadd.f32 %v2660, %v1051
        %v2662 = vadd.f32 %v2661, %v1066
        %v2663 = vadd.f32 %v2662, %v1081
        %v2664 = vadd.f32 %v2663, %v1096
        %v2665 = vsel %vm1117, %v1111, 0.0
        %v2666 = vadd.f32 %v2664, %v2665
        %v2667 = vrot.slane %v2666, 4
        %v2668 = vadd.f32 %v2666, %v2667
        %v2669 = vrot.slane %v2668, 2
        %v2670 = vadd.f32 %v2668, %v2669
        %v2671 = vrot.slane %v2670, 1
        %v2672 = vadd.f32 %v2670, %v2671
        %v2673 = vmul.f32 %v1125, 0.020408163
        %v2674 = vmul.f32 %v1138, 0.020408163
        %v2675 = vmul.f32 %v1151, 0.020408163
        %v2676 = vmul.f32 %v1164, 0.020408163
        %v2677 = vmul.f32 %v1177, 0.020408163
        %v2678 = vmul.f32 %v1190, 0.020408163
        %v2679 = vmul.f32 %v1203, 0.020408163
        %v2680 = vmul.f32 %v1216, 0.020408163
        %v2681 = vmul.f32 %v1229, 0.020408163
        %v2682 = vmul.f32 %v1242, 0.020408163
        %v2683 = vmul.f32 %v1255, 0.020408163
        %v2684 = vmul.f32 %v1268, 0.020408163
        %v2685 = vmul.f32 %v1281, 0.020408163
        %v2686 = vmul.f32 %v1294, 0.020408163
        %v2687 = vmul.f32 %v1307, 0.020408163
        %v2688 = vmul.f32 %v1320, 0.020408163
        %v2689 = vmul.f32 %v1333, 0.020408163
        %v2690 = vmul.f32 %v1346, 0.020408163
        %v2691 = vmul.f32 %v1359, 0.020408163
        %v2692 = vmul.f32 %v1372, 0.020408163
        %v2693 = vmul.f32 %v1385, 0.020408163
        %v2694 = vmul.f32 %v1398, 0.020408163
        %v2695 = vmul.f32 %v1411, 0.020408163
        %v2696 = vmul.f32 %v1424, 0.020408163
        %v2697 = vmul.f32 %v1437, 0.020408163
        %v2698 = vmul.f32 %v1450, 0.020408163
        %v2699 = vmul.f32 %v1463, 0.020408163
        %v2700 = vmul.f32 %v1476, 0.020408163
        %v2701 = vmul.f32 %v1489, 0.020408163
        %v2702 = vmul.f32 %v1502, 0.020408163
        %v2703 = vmul.f32 %v1515, 0.020408163
        %v2704 = vmul.f32 %v1528, 0.020408163
        %v2705 = vmul.f32 %v1541, 0.020408163
        %v2706 = vmul.f32 %v1554, 0.020408163
        %v2707 = vmul.f32 %v1567, 0.020408163
        %v2708 = vmul.f32 %v1580, 0.020408163
        %v2709 = vmul.f32 %v1593, 0.020408163
        %v2710 = vmul.f32 %v1606, 0.020408163
        %v2711 = vmul.f32 %v1619, 0.020408163
        %v2712 = vmul.f32 %v1632, 0.020408163
        %v2713 = vmul.f32 %v1645, 0.020408163
        %v2714 = vmul.f32 %v1658, 0.020408163
        %v2715 = vmul.f32 %v1671, 0.020408163
        %v2716 = vmul.f32 %v1684, 0.020408163
        %v2717 = vmul.f32 %v1697, 0.020408163
        %v2718 = vmul.f32 %v1710, 0.020408163
        %v2719 = vmul.f32 %v1723, 0.020408163
        %v2720 = vmul.f32 %v1736, 0.020408163
        %v2721 = vmul.f32 %v1749, 0.020408163
        %v2722 = vmul.f32 %v1762, 0.020408163
        %v2723 = vmul.f32 %v1775, 0.020408163
        %v2724 = vmul.f32 %v1788, 0.020408163
        %v2725 = vmul.f32 %v1801, 0.020408163
        %v2726 = vmul.f32 %v1814, 0.020408163
        %v2727 = vmul.f32 %v1827, 0.020408163
        %v2728 = vmul.f32 %v1840, 0.020408163
        %v2729 = vmul.f32 %v1853, 0.020408163
        %v2730 = vmul.f32 %v1866, 0.020408163
        %v2731 = vmul.f32 %v1879, 0.020408163
        %v2732 = vmul.f32 %v1892, 0.020408163
        %v2733 = vmul.f32 %v1905, 0.020408163
        %v2734 = vmul.f32 %v1918, 0.020408163
        %v2735 = vmul.f32 %v1931, 0.020408163
        %v2736 = vmul.f32 %v1944, 0.020408163
        %v2737 = vmul.f32 %v1957, 0.020408163
        %v2738 = vmul.f32 %v1970, 0.020408163
        %v2739 = vmul.f32 %v1983, 0.020408163
        %v2740 = vmul.f32 %v1996, 0.020408163
        %v2741 = vmul.f32 %v2009, 0.020408163
        %v2742 = vmul.f32 %v2022, 0.020408163
        %v2743 = vmul.f32 %v2035, 0.020408163
        %v2744 = vmul.f32 %v2048, 0.020408163
        %v2745 = vmul.f32 %v2061, 0.020408163
        %v2746 = vmul.f32 %v2074, 0.020408163
        %v2747 = vmul.f32 %v2087, 0.020408163
        %v2748 = vmul.f32 %v2100, 0.020408163
        %v2749 = vmul.f32 %v2113, 0.020408163
        %v2750 = vmul.f32 %v2126, 0.020408163
        %v2751 = vmul.f32 %v2139, 0.020408163
        %v2752 = vmul.f32 %v2152, 0.020408163
        %v2753 = vmul.f32 %v2165, 0.020408163
        %v2754 = vmul.f32 %v2178, 0.020408163
        %v2755 = vmul.f32 %v2191, 0.020408163
        %v2756 = vmul.f32 %v2204, 0.020408163
        %v2757 = vmul.f32 %v2217, 0.020408163
        %v2758 = vmul.f32 %v2230, 0.020408163
        %v2759 = vmul.f32 %v2243, 0.020408163
        %v2760 = vmul.f32 %v2256, 0.020408163
        %v2761 = vmul.f32 %v2269, 0.020408163
        %v2762 = vmul.f32 %v2282, 0.020408163
        %v2763 = vmul.f32 %v2295, 0.020408163
        %v2764 = vmul.f32 %v2308, 0.020408163
        %v2765 = vmul.f32 %v2321, 0.020408163
        %v2766 = vmul.f32 %v2334, 0.020408163
        %v2767 = vmul.f32 %v2347, 0.020408163
        %v2768 = vmul.f32 %v2360, 0.020408163
        %v2769 = vmul.f32 %v2373, 0.020408163
        %v2770 = vmul.f32 %v2386, 0.020408163
        %v2771 = vmul.f32 %v2399, 0.020408163
        %v2772 = vmul.f32 %v2412, 0.020408163
        %v2773 = vmul.f32 %v2425, 0.020408163
        %v2774 = vmul.f32 %v2438, 0.020408163
        %v2775 = vmul.f32 %v2451, 0.020408163
        %v2776 = vmul.f32 %v2464, 0.020408163
        %v2777 = vmul.f32 %v2477, 0.020408163
        %v2778 = vmul.f32 %v2490, 0.020408163
        %v2779 = vmul.f32 %v2503, 0.020408163
        %v2780 = vmul.f32 %v2516, 0.020408163
        %v2781 = vmul.f32 %v2529, 0.020408163
        %v2782 = vmul.f32 %v2542, 0.020408163
        %v2783 = vmul.f32 %v2555, 0.020408163
        %v2784 = vmul.f32 %v2568, 0.020408163
        %v2785 = vmul.f32 %v2581, 0.020408163
        %v2786 = vmul.f32 %v2594, 0.020408163
        %v2787 = vmul.f32 %v2607, 0.020408163
        %v2788 = vmul.f32 %v2620, 0.020408163
        %v2789 = vmul.f32 %v2633, 0.020408163
        %v2790 = vmul.f32 %v2646, 0.020408163
        %v2791 = vmul.f32 %v2659, 0.020408163
        %v2792 = vmul.f32 %v2672, 0.020408163
        %vm2913 = vcmask 1041409
        %v2914 = vsel %vm2913, %v2688, %v2673
        %vm2915 = vcmask 1042434
        %v2916 = vsel %vm2915, %v2703, %v2914
        %vm2917 = vcmask 1043459
        %v2918 = vsel %vm2917, %v2718, %v2916
        %vm2919 = vcmask 1044484
        %v2920 = vsel %vm2919, %v2733, %v2918
        %vm2921 = vcmask 1045509
        %v2922 = vsel %vm2921, %v2748, %v2920
        %vm2923 = vcmask 1046534
        %v2924 = vsel %vm2923, %v2763, %v2922
        %vm2925 = vcmask 1047559
        %v2926 = vsel %vm2925, %v2778, %v2924
        %v2927 = vsel %vm2913, %v2689, %v2674
        %v2928 = vsel %vm2915, %v2704, %v2927
        %v2929 = vsel %vm2917, %v2719, %v2928
        %v2930 = vsel %vm2919, %v2734, %v2929
        %v2931 = vsel %vm2921, %v2749, %v2930
        %v2932 = vsel %vm2923, %v2764, %v2931
        %v2933 = vsel %vm2925, %v2779, %v2932
        %v2934 = vsel %vm2913, %v2690, %v2675
        %v2935 = vsel %vm2915, %v2705, %v2934
        %v2936 = vsel %vm2917, %v2720, %v2935
        %v2937 = vsel %vm2919, %v2735, %v2936
        %v2938 = vsel %vm2921, %v2750, %v2937
        %v2939 = vsel %vm2923, %v2765, %v2938
        %v2940 = vsel %vm2925, %v2780, %v2939
        %v2941 = vsel %vm2913, %v2691, %v2676
        %v2942 = vsel %vm2915, %v2706, %v2941
        %v2943 = vsel %vm2917, %v2721, %v2942
        %v2944 = vsel %vm2919, %v2736, %v2943
        %v2945 = vsel %vm2921, %v2751, %v2944
        %v2946 = vsel %vm2923, %v2766, %v2945
        %v2947 = vsel %vm2925, %v2781, %v2946
        %v2948 = vsel %vm2913, %v2692, %v2677
        %v2949 = vsel %vm2915, %v2707, %v2948
        %v2950 = vsel %vm2917, %v2722, %v2949
        %v2951 = vsel %vm2919, %v2737, %v2950
        %v2952 = vsel %vm2921, %v2752, %v2951
        %v2953 = vsel %vm2923, %v2767, %v2952
        %v2954 = vsel %vm2925, %v2782, %v2953
        %v2955 = vsel %vm2913, %v2693, %v2678
        %v2956 = vsel %vm2915, %v2708, %v2955
        %v2957 = vsel %vm2917, %v2723, %v2956
        %v2958 = vsel %vm2919, %v2738, %v2957
        %v2959 = vsel %vm2921, %v2753, %v2958
        %v2960 = vsel %vm2923, %v2768, %v2959
        %v2961 = vsel %vm2925, %v2783, %v2960
        %v2962 = vsel %vm2913, %v2694, %v2679
        %v2963 = vsel %vm2915, %v2709, %v2962
        %v2964 = vsel %vm2917, %v2724, %v2963
        %v2965 = vsel %vm2919, %v2739, %v2964
        %v2966 = vsel %vm2921, %v2754, %v2965
        %v2967 = vsel %vm2923, %v2769, %v2966
        %v2968 = vsel %vm2925, %v2784, %v2967
        %v2969 = vsel %vm2913, %v2695, %v2680
        %v2970 = vsel %vm2915, %v2710, %v2969
        %v2971 = vsel %vm2917, %v2725, %v2970
        %v2972 = vsel %vm2919, %v2740, %v2971
        %v2973 = vsel %vm2921, %v2755, %v2972
        %v2974 = vsel %vm2923, %v2770, %v2973
        %v2975 = vsel %vm2925, %v2785, %v2974
        %v2976 = vsel %vm2913, %v2696, %v2681
        %v2977 = vsel %vm2915, %v2711, %v2976
        %v2978 = vsel %vm2917, %v2726, %v2977
        %v2979 = vsel %vm2919, %v2741, %v2978
        %v2980 = vsel %vm2921, %v2756, %v2979
        %v2981 = vsel %vm2923, %v2771, %v2980
        %v2982 = vsel %vm2925, %v2786, %v2981
        %v2983 = vsel %vm2913, %v2697, %v2682
        %v2984 = vsel %vm2915, %v2712, %v2983
        %v2985 = vsel %vm2917, %v2727, %v2984
        %v2986 = vsel %vm2919, %v2742, %v2985
        %v2987 = vsel %vm2921, %v2757, %v2986
        %v2988 = vsel %vm2923, %v2772, %v2987
        %v2989 = vsel %vm2925, %v2787, %v2988
        %v2990 = vsel %vm2913, %v2698, %v2683
        %v2991 = vsel %vm2915, %v2713, %v2990
        %v2992 = vsel %vm2917, %v2728, %v2991
        %v2993 = vsel %vm2919, %v2743, %v2992
        %v2994 = vsel %vm2921, %v2758, %v2993
        %v2995 = vsel %vm2923, %v2773, %v2994
        %v2996 = vsel %vm2925, %v2788, %v2995
        %v2997 = vsel %vm2913, %v2699, %v2684
        %v2998 = vsel %vm2915, %v2714, %v2997
        %v2999 = vsel %vm2917, %v2729, %v2998
        %v3000 = vsel %vm2919, %v2744, %v2999
        %v3001 = vsel %vm2921, %v2759, %v3000
        %v3002 = vsel %vm2923, %v2774, %v3001
        %v3003 = vsel %vm2925, %v2789, %v3002
        %v3004 = vsel %vm2913, %v2700, %v2685
        %v3005 = vsel %vm2915, %v2715, %v3004
        %v3006 = vsel %vm2917, %v2730, %v3005
        %v3007 = vsel %vm2919, %v2745, %v3006
        %v3008 = vsel %vm2921, %v2760, %v3007
        %v3009 = vsel %vm2923, %v2775, %v3008
        %v3010 = vsel %vm2925, %v2790, %v3009
        %v3011 = vsel %vm2913, %v2701, %v2686
        %v3012 = vsel %vm2915, %v2716, %v3011
        %v3013 = vsel %vm2917, %v2731, %v3012
        %v3014 = vsel %vm2919, %v2746, %v3013
        %v3015 = vsel %vm2921, %v2761, %v3014
        %v3016 = vsel %vm2923, %v2776, %v3015
        %v3017 = vsel %vm2925, %v2791, %v3016
        %v3018 = vsel %vm2913, %v2702, %v2687
        %v3019 = vsel %vm2915, %v2717, %v3018
        %v3020 = vsel %vm2917, %v2732, %v3019
        %v3021 = vsel %vm2919, %v2747, %v3020
        %v3022 = vsel %vm2921, %v2762, %v3021
        %v3023 = vsel %vm2923, %v2777, %v3022
        %v3024 = vsel %vm2925, %v2792, %v3023
        %3040 = vst [vmem:[%s256] sm:$0xff] %v2926
        %3041 = vst [vmem:[%s256 + $0x8] sm:$0xff] %v2933
        %3042 = vst [vmem:[%s256 + $0x10] sm:$0xff] %v2940
        %3043 = vst [vmem:[%s256 + $0x18] sm:$0xff] %v2947
        %3044 = vst [vmem:[%s256 + $0x20] sm:$0xff] %v2954
        %3045 = vst [vmem:[%s256 + $0x28] sm:$0xff] %v2961
        %3046 = vst [vmem:[%s256 + $0x30] sm:$0xff] %v2968
        %3047 = vst [vmem:[%s256 + $0x38] sm:$0xff] %v2975
        %3048 = vst [vmem:[%s256 + $0x40] sm:$0xff] %v2982
        %3049 = vst [vmem:[%s256 + $0x48] sm:$0xff] %v2989
        %3050 = vst [vmem:[%s256 + $0x50] sm:$0xff] %v2996
        %3051 = vst [vmem:[%s256 + $0x58] sm:$0xff] %v3003
        %3052 = vst [vmem:[%s256 + $0x60] sm:$0xff] %v3010
        %3053 = vst [vmem:[%s256 + $0x68] sm:$0xff] %v3017
        %3054 = vst [vmem:[%s256 + $0x70] sm:$0xff] %v3024
        %v3055 = vpack.c.bf16 %v2673, %v2673
        %v3056 = vpack.c.bf16 %v2674, %v2674
        %v3057 = vpack.c.bf16 %v2675, %v2675
        %v3058 = vpack.c.bf16 %v2676, %v2676
        %v3059 = vpack.c.bf16 %v2677, %v2677
        %v3060 = vpack.c.bf16 %v2678, %v2678
        %v3061 = vpack.c.bf16 %v2679, %v2679
        %v3062 = vpack.c.bf16 %v2680, %v2680
        %v3063 = vpack.c.bf16 %v2681, %v2681
        %v3064 = vpack.c.bf16 %v2682, %v2682
        %v3065 = vpack.c.bf16 %v2683, %v2683
        %v3066 = vpack.c.bf16 %v2684, %v2684
        %v3067 = vpack.c.bf16 %v2685, %v2685
        %v3068 = vpack.c.bf16 %v2686, %v2686
        %v3069 = vpack.c.bf16 %v2687, %v2687
        %v3070 = vpack.c.bf16 %v2688, %v2688
        %v3071 = vpack.c.bf16 %v2689, %v2689
        %v3072 = vpack.c.bf16 %v2690, %v2690
        %v3073 = vpack.c.bf16 %v2691, %v2691
        %v3074 = vpack.c.bf16 %v2692, %v2692
        %v3075 = vpack.c.bf16 %v2693, %v2693
        %v3076 = vpack.c.bf16 %v2694, %v2694
        %v3077 = vpack.c.bf16 %v2695, %v2695
        %v3078 = vpack.c.bf16 %v2696, %v2696
        %v3079 = vpack.c.bf16 %v2697, %v2697
        %v3080 = vpack.c.bf16 %v2698, %v2698
        %v3081 = vpack.c.bf16 %v2699, %v2699
        %v3082 = vpack.c.bf16 %v2700, %v2700
        %v3083 = vpack.c.bf16 %v2701, %v2701
        %v3084 = vpack.c.bf16 %v2702, %v2702
        %v3085 = vpack.c.bf16 %v2703, %v2703
        %v3086 = vpack.c.bf16 %v2704, %v2704
        %v3087 = vpack.c.bf16 %v2705, %v2705
        %v3088 = vpack.c.bf16 %v2706, %v2706
        %v3089 = vpack.c.bf16 %v2707, %v2707
        %v3090 = vpack.c.bf16 %v2708, %v2708
        %v3091 = vpack.c.bf16 %v2709, %v2709
        %v3092 = vpack.c.bf16 %v2710, %v2710
        %v3093 = vpack.c.bf16 %v2711, %v2711
        %v3094 = vpack.c.bf16 %v2712, %v2712
        %v3095 = vpack.c.bf16 %v2713, %v2713
        %v3096 = vpack.c.bf16 %v2714, %v2714
        %v3097 = vpack.c.bf16 %v2715, %v2715
        %v3098 = vpack.c.bf16 %v2716, %v2716
        %v3099 = vpack.c.bf16 %v2717, %v2717
        %v3100 = vpack.c.bf16 %v2718, %v2718
        %v3101 = vpack.c.bf16 %v2719, %v2719
        %v3102 = vpack.c.bf16 %v2720, %v2720
        %v3103 = vpack.c.bf16 %v2721, %v2721
        %v3104 = vpack.c.bf16 %v2722, %v2722
        %v3105 = vpack.c.bf16 %v2723, %v2723
        %v3106 = vpack.c.bf16 %v2724, %v2724
        %v3107 = vpack.c.bf16 %v2725, %v2725
        %v3108 = vpack.c.bf16 %v2726, %v2726
        %v3109 = vpack.c.bf16 %v2727, %v2727
        %v3110 = vpack.c.bf16 %v2728, %v2728
        %v3111 = vpack.c.bf16 %v2729, %v2729
        %v3112 = vpack.c.bf16 %v2730, %v2730
        %v3113 = vpack.c.bf16 %v2731, %v2731
        %v3114 = vpack.c.bf16 %v2732, %v2732
        %v3115 = vpack.c.bf16 %v2733, %v2733
        %v3116 = vpack.c.bf16 %v2734, %v2734
        %v3117 = vpack.c.bf16 %v2735, %v2735
        %v3118 = vpack.c.bf16 %v2736, %v2736
        %v3119 = vpack.c.bf16 %v2737, %v2737
        %v3120 = vpack.c.bf16 %v2738, %v2738
        %v3121 = vpack.c.bf16 %v2739, %v2739
        %v3122 = vpack.c.bf16 %v2740, %v2740
        %v3123 = vpack.c.bf16 %v2741, %v2741
        %v3124 = vpack.c.bf16 %v2742, %v2742
        %v3125 = vpack.c.bf16 %v2743, %v2743
        %v3126 = vpack.c.bf16 %v2744, %v2744
        %v3127 = vpack.c.bf16 %v2745, %v2745
        %v3128 = vpack.c.bf16 %v2746, %v2746
        %v3129 = vpack.c.bf16 %v2747, %v2747
        %v3130 = vpack.c.bf16 %v2748, %v2748
        %v3131 = vpack.c.bf16 %v2749, %v2749
        %v3132 = vpack.c.bf16 %v2750, %v2750
        %v3133 = vpack.c.bf16 %v2751, %v2751
        %v3134 = vpack.c.bf16 %v2752, %v2752
        %v3135 = vpack.c.bf16 %v2753, %v2753
        %v3136 = vpack.c.bf16 %v2754, %v2754
        %v3137 = vpack.c.bf16 %v2755, %v2755
        %v3138 = vpack.c.bf16 %v2756, %v2756
        %v3139 = vpack.c.bf16 %v2757, %v2757
        %v3140 = vpack.c.bf16 %v2758, %v2758
        %v3141 = vpack.c.bf16 %v2759, %v2759
        %v3142 = vpack.c.bf16 %v2760, %v2760
        %v3143 = vpack.c.bf16 %v2761, %v2761
        %v3144 = vpack.c.bf16 %v2762, %v2762
        %v3145 = vpack.c.bf16 %v2763, %v2763
        %v3146 = vpack.c.bf16 %v2764, %v2764
        %v3147 = vpack.c.bf16 %v2765, %v2765
        %v3148 = vpack.c.bf16 %v2766, %v2766
        %v3149 = vpack.c.bf16 %v2767, %v2767
        %v3150 = vpack.c.bf16 %v2768, %v2768
        %v3151 = vpack.c.bf16 %v2769, %v2769
        %v3152 = vpack.c.bf16 %v2770, %v2770
        %v3153 = vpack.c.bf16 %v2771, %v2771
        %v3154 = vpack.c.bf16 %v2772, %v2772
        %v3155 = vpack.c.bf16 %v2773, %v2773
        %v3156 = vpack.c.bf16 %v2774, %v2774
        %v3157 = vpack.c.bf16 %v2775, %v2775
        %v3158 = vpack.c.bf16 %v2776, %v2776
        %v3159 = vpack.c.bf16 %v2777, %v2777
        %v3160 = vpack.c.bf16 %v2778, %v2778
        %v3161 = vpack.c.bf16 %v2779, %v2779
        %v3162 = vpack.c.bf16 %v2780, %v2780
        %v3163 = vpack.c.bf16 %v2781, %v2781
        %v3164 = vpack.c.bf16 %v2782, %v2782
        %v3165 = vpack.c.bf16 %v2783, %v2783
        %v3166 = vpack.c.bf16 %v2784, %v2784
        %v3167 = vpack.c.bf16 %v2785, %v2785
        %v3168 = vpack.c.bf16 %v2786, %v2786
        %v3169 = vpack.c.bf16 %v2787, %v2787
        %v3170 = vpack.c.bf16 %v2788, %v2788
        %v3171 = vpack.c.bf16 %v2789, %v2789
        %v3172 = vpack.c.bf16 %v2790, %v2790
        %v3173 = vpack.c.bf16 %v2791, %v2791
        %v3174 = vpack.c.bf16 %v2792, %v2792
        %v3175 = vld [vmem:[#allocation5] sm:$0xf]
        %v3176 = vld [vmem:[#allocation5 + $0x4] sm:$0xf]
        %v3177 = vld [vmem:[#allocation5 + $0x8] sm:$0xf]
        %v3178 = vld [vmem:[#allocation5 + $0xc] sm:$0xf]
        %v3179 = vld [vmem:[#allocation5 + $0x10] sm:$0xf]
        %v3180 = vld [vmem:[#allocation5 + $0x14] sm:$0xf]
        %v3181 = vld [vmem:[#allocation5 + $0x18] sm:$0xf]
        %v3182 = vld [vmem:[#allocation5 + $0x1c] sm:$0xf]
        %v3183 = vld [vmem:[#allocation5 + $0x20] sm:$0xf]
        %v3184 = vld [vmem:[#allocation5 + $0x24] sm:$0xf]
        %v3185 = vld [vmem:[#allocation5 + $0x28] sm:$0xf]
        %v3186 = vld [vmem:[#allocation5 + $0x2c] sm:$0xf]
        %v3187 = vld [vmem:[#allocation5 + $0x30] sm:$0xf]
        %v3188 = vld [vmem:[#allocation5 + $0x34] sm:$0xf]
        %v3189 = vld [vmem:[#allocation5 + $0x38] sm:$0xf]
        %v3190 = vld [vmem:[#allocation5 + $0x3c] sm:$0xf]
        %v3191 = vld [vmem:[#allocation5 + $0x40] sm:$0xf]
        %v3192 = vld [vmem:[#allocation5 + $0x44] sm:$0xf]
        %v3193 = vld [vmem:[#allocation5 + $0x48] sm:$0xf]
        %v3194 = vld [vmem:[#allocation5 + $0x4c] sm:$0xf]
        %v3195 = vld [vmem:[#allocation5 + $0x50] sm:$0xf]
        %v3196 = vld [vmem:[#allocation5 + $0x54] sm:$0xf]
        %v3197 = vld [vmem:[#allocation5 + $0x58] sm:$0xf]
        %v3198 = vld [vmem:[#allocation5 + $0x5c] sm:$0xf]
        %v3199 = vld [vmem:[#allocation5 + $0x60] sm:$0xf]
        %v3200 = vld [vmem:[#allocation5 + $0x64] sm:$0xf]
        %v3201 = vld [vmem:[#allocation5 + $0x68] sm:$0xf]
        %v3202 = vld [vmem:[#allocation5 + $0x6c] sm:$0xf]
        %v3203 = vld [vmem:[#allocation5 + $0x70] sm:$0xf]
        %v3204 = vld [vmem:[#allocation5 + $0x74] sm:$0xf]
        %v3205 = vld [vmem:[#allocation5 + $0x78] sm:$0xf]
        %v3206 = vld [vmem:[#allocation5 + $0x7c] sm:$0xf]
        %v3207 = vld [vmem:[#allocation5 + $0x80] sm:$0xf]
        %v3208 = vld [vmem:[#allocation5 + $0x84] sm:$0xf]
        %v3209 = vld [vmem:[#allocation5 + $0x88] sm:$0xf]
        %v3210 = vld [vmem:[#allocation5 + $0x8c] sm:$0xf]
        %v3211 = vld [vmem:[#allocation5 + $0x90] sm:$0xf]
        %v3212 = vld [vmem:[#allocation5 + $0x94] sm:$0xf]
        %v3213 = vld [vmem:[#allocation5 + $0x98] sm:$0xf]
        %v3214 = vld [vmem:[#allocation5 + $0x9c] sm:$0xf]
        %v3215 = vld [vmem:[#allocation5 + $0xa0] sm:$0xf]
        %v3216 = vld [vmem:[#allocation5 + $0xa4] sm:$0xf]
        %v3217 = vld [vmem:[#allocation5 + $0xa8] sm:$0xf]
        %v3218 = vld [vmem:[#allocation5 + $0xac] sm:$0xf]
        %v3219 = vld [vmem:[#allocation5 + $0xb0] sm:$0xf]
        %v3220 = vld [vmem:[#allocation5 + $0xb4] sm:$0xf]
        %v3221 = vld [vmem:[#allocation5 + $0xb8] sm:$0xf]
        %v3222 = vld [vmem:[#allocation5 + $0xbc] sm:$0xf]
        %v3223 = vld [vmem:[#allocation5 + $0xc0] sm:$0xf]
        %v3224 = vld [vmem:[#allocation5 + $0xc4] sm:$0xf]
        %v3225 = vld [vmem:[#allocation5 + $0xc8] sm:$0xf]
        %v3226 = vld [vmem:[#allocation5 + $0xcc] sm:$0xf]
        %v3227 = vld [vmem:[#allocation5 + $0xd0] sm:$0xf]
        %v3228 = vld [vmem:[#allocation5 + $0xd4] sm:$0xf]
        %v3229 = vld [vmem:[#allocation5 + $0xd8] sm:$0xf]
        %v3230 = vld [vmem:[#allocation5 + $0xdc] sm:$0xf]
        %v3231 = vld [vmem:[#allocation5 + $0xe0] sm:$0xf]
        %v3232 = vld [vmem:[#allocation5 + $0xe4] sm:$0xf]
        %v3233 = vld [vmem:[#allocation5 + $0xe8] sm:$0xf]
        %v3234 = vld [vmem:[#allocation5 + $0xec] sm:$0xf]
        %v3235 = vld [vmem:[#allocation5 + $0xf0] sm:$0xf]
        %v3236 = vld [vmem:[#allocation5 + $0xf4] sm:$0xf]
        %v3237 = vld [vmem:[#allocation5 + $0xf8] sm:$0xf]
        %v3238 = vld [vmem:[#allocation5 + $0xfc] sm:$0xf]
        %v3239 = vld [vmem:[#allocation5 + $0x100] sm:$0xf]
        %v3240 = vld [vmem:[#allocation5 + $0x104] sm:$0xf]
        %v3241 = vld [vmem:[#allocation5 + $0x108] sm:$0xf]
        %v3242 = vld [vmem:[#allocation5 + $0x10c] sm:$0xf]
        %v3243 = vld [vmem:[#allocation5 + $0x110] sm:$0xf]
        %v3244 = vld [vmem:[#allocation5 + $0x114] sm:$0xf]
        %v3245 = vld [vmem:[#allocation5 + $0x118] sm:$0xf]
        %v3246 = vld [vmem:[#allocation5 + $0x11c] sm:$0xf]
        %v3247 = vld [vmem:[#allocation5 + $0x120] sm:$0xf]
        %v3248 = vld [vmem:[#allocation5 + $0x124] sm:$0xf]
        %v3249 = vld [vmem:[#allocation5 + $0x128] sm:$0xf]
        %v3250 = vld [vmem:[#allocation5 + $0x12c] sm:$0xf]
        %v3251 = vld [vmem:[#allocation5 + $0x130] sm:$0xf]
        %v3252 = vld [vmem:[#allocation5 + $0x134] sm:$0xf]
        %v3253 = vld [vmem:[#allocation5 + $0x138] sm:$0xf]
        %v3254 = vld [vmem:[#allocation5 + $0x13c] sm:$0xf]
        %v3255 = vld [vmem:[#allocation5 + $0x140] sm:$0xf]
        %v3256 = vld [vmem:[#allocation5 + $0x144] sm:$0xf]
        %v3257 = vld [vmem:[#allocation5 + $0x148] sm:$0xf]
        %v3258 = vld [vmem:[#allocation5 + $0x14c] sm:$0xf]
        %v3259 = vld [vmem:[#allocation5 + $0x150] sm:$0xf]
        %v3260 = vld [vmem:[#allocation5 + $0x154] sm:$0xf]
        %v3261 = vld [vmem:[#allocation5 + $0x158] sm:$0xf]
        %v3262 = vld [vmem:[#allocation5 + $0x15c] sm:$0xf]
        %v3263 = vld [vmem:[#allocation5 + $0x160] sm:$0xf]
        %v3264 = vld [vmem:[#allocation5 + $0x164] sm:$0xf]
        %v3265 = vld [vmem:[#allocation5 + $0x168] sm:$0xf]
        %v3266 = vld [vmem:[#allocation5 + $0x16c] sm:$0xf]
        %v3267 = vld [vmem:[#allocation5 + $0x170] sm:$0xf]
        %v3268 = vld [vmem:[#allocation5 + $0x174] sm:$0xf]
        %v3269 = vld [vmem:[#allocation5 + $0x178] sm:$0xf]
        %v3270 = vld [vmem:[#allocation5 + $0x17c] sm:$0xf]
        %v3271 = vld [vmem:[#allocation5 + $0x180] sm:$0xf]
        %v3272 = vld [vmem:[#allocation5 + $0x184] sm:$0xf]
        %v3273 = vld [vmem:[#allocation5 + $0x188] sm:$0xf]
        %v3274 = vld [vmem:[#allocation5 + $0x18c] sm:$0xf]
        %v3275 = vld [vmem:[#allocation5 + $0x190] sm:$0xf]
        %v3276 = vld [vmem:[#allocation5 + $0x194] sm:$0xf]
        %v3277 = vld [vmem:[#allocation5 + $0x198] sm:$0xf]
        %v3278 = vld [vmem:[#allocation5 + $0x19c] sm:$0xf]
        %v3279 = vld [vmem:[#allocation5 + $0x1a0] sm:$0xf]
        %v3280 = vld [vmem:[#allocation5 + $0x1a4] sm:$0xf]
        %v3281 = vld [vmem:[#allocation5 + $0x1a8] sm:$0xf]
        %v3282 = vld [vmem:[#allocation5 + $0x1ac] sm:$0xf]
        %v3283 = vld [vmem:[#allocation5 + $0x1b0] sm:$0xf]
        %v3284 = vld [vmem:[#allocation5 + $0x1b4] sm:$0xf]
        %v3285 = vld [vmem:[#allocation5 + $0x1b8] sm:$0xf]
        %v3286 = vld [vmem:[#allocation5 + $0x1bc] sm:$0xf]
        %v3287 = vld [vmem:[#allocation5 + $0x1c0] sm:$0xf]
        %v3288 = vld [vmem:[#allocation5 + $0x1c4] sm:$0xf]
        %v3289 = vld [vmem:[#allocation5 + $0x1c8] sm:$0xf]
        %v3290 = vld [vmem:[#allocation5 + $0x1cc] sm:$0xf]
        %v3291 = vld [vmem:[#allocation5 + $0x1d0] sm:$0xf]
        %v3292 = vld [vmem:[#allocation5 + $0x1d4] sm:$0xf]
        %v3293 = vld [vmem:[#allocation5 + $0x1d8] sm:$0xf]
        %v3294 = vld [vmem:[#allocation5 + $0x1dc] sm:$0xf]
        %v3295 = vld [vmem:[#allocation5 + $0x1e0] sm:$0xf]
        %v3296 = vld [vmem:[#allocation5 + $0x1e4] sm:$0xf]
        %v3297 = vld [vmem:[#allocation5 + $0x1e8] sm:$0xf]
        %v3298 = vld [vmem:[#allocation5 + $0x1ec] sm:$0xf]
        %v3299 = vld [vmem:[#allocation5 + $0x1f0] sm:$0xf]
        %v3300 = vld [vmem:[#allocation5 + $0x1f4] sm:$0xf]
        %v3301 = vld [vmem:[#allocation5 + $0x1f8] sm:$0xf]
        %v3302 = vld [vmem:[#allocation5 + $0x1fc] sm:$0xf]
        %v3303 = vld [vmem:[#allocation5 + $0x200] sm:$0xf]
        %v3304 = vld [vmem:[#allocation5 + $0x204] sm:$0xf]
        %v3305 = vld [vmem:[#allocation5 + $0x208] sm:$0xf]
        %v3306 = vld [vmem:[#allocation5 + $0x20c] sm:$0xf]
        %v3307 = vld [vmem:[#allocation5 + $0x210] sm:$0xf]
        %v3308 = vld [vmem:[#allocation5 + $0x214] sm:$0xf]
        %v3309 = vld [vmem:[#allocation5 + $0x218] sm:$0xf]
        %v3310 = vld [vmem:[#allocation5 + $0x21c] sm:$0xf]
        %v3311 = vld [vmem:[#allocation5 + $0x220] sm:$0xf]
        %v3312 = vld [vmem:[#allocation5 + $0x224] sm:$0xf]
        %v3313 = vld [vmem:[#allocation5 + $0x228] sm:$0xf]
        %v3314 = vld [vmem:[#allocation5 + $0x22c] sm:$0xf]
        %v3315 = vld [vmem:[#allocation5 + $0x230] sm:$0xf]
        %v3316 = vld [vmem:[#allocation5 + $0x234] sm:$0xf]
        %v3317 = vld [vmem:[#allocation5 + $0x238] sm:$0xf]
        %v3318 = vld [vmem:[#allocation5 + $0x23c] sm:$0xf]
        %v3319 = vld [vmem:[#allocation5 + $0x240] sm:$0xf]
        %v3320 = vld [vmem:[#allocation5 + $0x244] sm:$0xf]
        %v3321 = vld [vmem:[#allocation5 + $0x248] sm:$0xf]
        %v3322 = vld [vmem:[#allocation5 + $0x24c] sm:$0xf]
        %v3323 = vld [vmem:[#allocation5 + $0x250] sm:$0xf]
        %v3324 = vld [vmem:[#allocation5 + $0x254] sm:$0xf]
        %v3325 = vld [vmem:[#allocation5 + $0x258] sm:$0xf]
        %v3326 = vld [vmem:[#allocation5 + $0x25c] sm:$0xf]
        %v3327 = vld [vmem:[#allocation5 + $0x260] sm:$0xf]
        %v3328 = vld [vmem:[#allocation5 + $0x264] sm:$0xf]
        %v3329 = vld [vmem:[#allocation5 + $0x268] sm:$0xf]
        %v3330 = vld [vmem:[#allocation5 + $0x26c] sm:$0xf]
        %v3331 = vld [vmem:[#allocation5 + $0x270] sm:$0xf]
        %v3332 = vld [vmem:[#allocation5 + $0x274] sm:$0xf]
        %v3333 = vld [vmem:[#allocation5 + $0x278] sm:$0xf]
        %v3334 = vld [vmem:[#allocation5 + $0x27c] sm:$0xf]
        %v3335 = vld [vmem:[#allocation5 + $0x280] sm:$0xf]
        %v3336 = vld [vmem:[#allocation5 + $0x284] sm:$0xf]
        %v3337 = vld [vmem:[#allocation5 + $0x288] sm:$0xf]
        %v3338 = vld [vmem:[#allocation5 + $0x28c] sm:$0xf]
        %v3339 = vld [vmem:[#allocation5 + $0x290] sm:$0xf]
        %v3340 = vld [vmem:[#allocation5 + $0x294] sm:$0xf]
        %v3341 = vld [vmem:[#allocation5 + $0x298] sm:$0xf]
        %v3342 = vld [vmem:[#allocation5 + $0x29c] sm:$0xf]
        %v3343 = vld [vmem:[#allocation5 + $0x2a0] sm:$0xf]
        %v3344 = vld [vmem:[#allocation5 + $0x2a4] sm:$0xf]
        %v3345 = vld [vmem:[#allocation5 + $0x2a8] sm:$0xf]
        %v3346 = vld [vmem:[#allocation5 + $0x2ac] sm:$0xf]
        %v3347 = vld [vmem:[#allocation5 + $0x2b0] sm:$0xf]
        %v3348 = vld [vmem:[#allocation5 + $0x2b4] sm:$0xf]
        %v3349 = vld [vmem:[#allocation5 + $0x2b8] sm:$0xf]
        %v3350 = vld [vmem:[#allocation5 + $0x2bc] sm:$0xf]
        %v3351 = vld [vmem:[#allocation5 + $0x2c0] sm:$0xf]
        %v3352 = vld [vmem:[#allocation5 + $0x2c4] sm:$0xf]
        %v3353 = vld [vmem:[#allocation5 + $0x2c8] sm:$0xf]
        %v3354 = vld [vmem:[#allocation5 + $0x2cc] sm:$0xf]
        %v3355 = vld [vmem:[#allocation5 + $0x2d0] sm:$0xf]
        %v3356 = vld [vmem:[#allocation5 + $0x2d4] sm:$0xf]
        %v3357 = vld [vmem:[#allocation5 + $0x2d8] sm:$0xf]
        %v3358 = vld [vmem:[#allocation5 + $0x2dc] sm:$0xf]
        %v3359 = vld [vmem:[#allocation5 + $0x2e0] sm:$0xf]
        %v3360 = vld [vmem:[#allocation5 + $0x2e4] sm:$0xf]
        %v3361 = vld [vmem:[#allocation5 + $0x2e8] sm:$0xf]
        %v3362 = vld [vmem:[#allocation5 + $0x2ec] sm:$0xf]
        %v3363 = vld [vmem:[#allocation5 + $0x2f0] sm:$0xf]
        %v3364 = vld [vmem:[#allocation5 + $0x2f4] sm:$0xf]
        %v3365 = vld [vmem:[#allocation5 + $0x2f8] sm:$0xf]
        %v3366 = vld [vmem:[#allocation5 + $0x2fc] sm:$0xf]
        %v3367 = vld [vmem:[#allocation5 + $0x300] sm:$0xf]
        %v3368 = vld [vmem:[#allocation5 + $0x304] sm:$0xf]
        %v3369 = vld [vmem:[#allocation5 + $0x308] sm:$0xf]
        %v3370 = vld [vmem:[#allocation5 + $0x30c] sm:$0xf]
        %v3371 = vld [vmem:[#allocation5 + $0x310] sm:$0xf]
        %v3372 = vld [vmem:[#allocation5 + $0x314] sm:$0xf]
        %v3373 = vld [vmem:[#allocation5 + $0x318] sm:$0xf]
        %v3374 = vld [vmem:[#allocation5 + $0x31c] sm:$0xf]
        %v3375 = vld [vmem:[#allocation5 + $0x320] sm:$0xf]
        %v3376 = vld [vmem:[#allocation5 + $0x324] sm:$0xf]
        %v3377 = vld [vmem:[#allocation5 + $0x328] sm:$0xf]
        %v3378 = vld [vmem:[#allocation5 + $0x32c] sm:$0xf]
        %v3379 = vld [vmem:[#allocation5 + $0x330] sm:$0xf]
        %v3380 = vld [vmem:[#allocation5 + $0x334] sm:$0xf]
        %v3381 = vld [vmem:[#allocation5 + $0x338] sm:$0xf]
        %v3382 = vld [vmem:[#allocation5 + $0x33c] sm:$0xf]
        %v3383 = vld [vmem:[#allocation5 + $0x340] sm:$0xf]
        %v3384 = vld [vmem:[#allocation5 + $0x344] sm:$0xf]
        %v3385 = vld [vmem:[#allocation5 + $0x348] sm:$0xf]
        %v3386 = vld [vmem:[#allocation5 + $0x34c] sm:$0xf]
        %v3387 = vld [vmem:[#allocation5 + $0x350] sm:$0xf]
        %v3388 = vld [vmem:[#allocation5 + $0x354] sm:$0xf]
        %v3389 = vld [vmem:[#allocation5 + $0x358] sm:$0xf]
        %v3390 = vld [vmem:[#allocation5 + $0x35c] sm:$0xf]
        %v3391 = vld [vmem:[#allocation5 + $0x360] sm:$0xf]
        %v3392 = vld [vmem:[#allocation5 + $0x364] sm:$0xf]
        %v3393 = vld [vmem:[#allocation5 + $0x368] sm:$0xf]
        %v3394 = vld [vmem:[#allocation5 + $0x36c] sm:$0xf]
        %v3395 = vld [vmem:[#allocation5 + $0x370] sm:$0xf]
        %v3396 = vld [vmem:[#allocation5 + $0x374] sm:$0xf]
        %v3397 = vld [vmem:[#allocation5 + $0x378] sm:$0xf]
        %v3398 = vld [vmem:[#allocation5 + $0x37c] sm:$0xf]
        %v3399 = vld [vmem:[#allocation5 + $0x380] sm:$0xf]
        %v3400 = vld [vmem:[#allocation5 + $0x384] sm:$0xf]
        %v3401 = vld [vmem:[#allocation5 + $0x388] sm:$0xf]
        %v3402 = vld [vmem:[#allocation5 + $0x38c] sm:$0xf]
        %v3403 = vld [vmem:[#allocation5 + $0x390] sm:$0xf]
        %v3404 = vld [vmem:[#allocation5 + $0x394] sm:$0xf]
        %v3405 = vld [vmem:[#allocation5 + $0x398] sm:$0xf]
        %v3406 = vld [vmem:[#allocation5 + $0x39c] sm:$0xf]
        %v3407 = vld [vmem:[#allocation5 + $0x3a0] sm:$0xf]
        %v3408 = vld [vmem:[#allocation5 + $0x3a4] sm:$0xf]
        %v3409 = vld [vmem:[#allocation5 + $0x3a8] sm:$0xf]
        %v3410 = vld [vmem:[#allocation5 + $0x3ac] sm:$0xf]
        %v3411 = vld [vmem:[#allocation5 + $0x3b0] sm:$0xf]
        %v3412 = vld [vmem:[#allocation5 + $0x3b4] sm:$0xf]
        %v3413 = vld [vmem:[#allocation5 + $0x3b8] sm:$0xf]
        %v3414 = vld [vmem:[#allocation5 + $0x3bc] sm:$0xf]
        %v3415 = vld [vmem:[#allocation7] sm:$0x1]
        %v3417 = vlaneseq
        %v3418 = vshrl.u32 %v3417, 7
        %v3419 = vsub.s32 0, %v3418
        %v3420 = vrot.slane %v3415, %v3419
        %v3542 = vunpack.c.l.b16 %v3055
        %v3543 = vunpack.c.l.b16 %v3056
        %v3544 = vunpack.c.l.b16 %v3057
        %v3545 = vunpack.c.l.b16 %v3058
        %v3546 = vunpack.c.l.b16 %v3059
        %v3547 = vunpack.c.l.b16 %v3060
        %v3548 = vunpack.c.l.b16 %v3061
        %v3549 = vunpack.c.l.b16 %v3062
        %v3550 = vunpack.c.l.b16 %v3063
        %v3551 = vunpack.c.l.b16 %v3064
        %v3552 = vunpack.c.l.b16 %v3065
        %v3553 = vunpack.c.l.b16 %v3066
        %v3554 = vunpack.c.l.b16 %v3067
        %v3555 = vunpack.c.l.b16 %v3068
        %v3556 = vunpack.c.l.b16 %v3069
        %v3557 = vunpack.c.l.b16 %v3070
        %v3558 = vunpack.c.l.b16 %v3071
        %v3559 = vunpack.c.l.b16 %v3072
        %v3560 = vunpack.c.l.b16 %v3073
        %v3561 = vunpack.c.l.b16 %v3074
        %v3562 = vunpack.c.l.b16 %v3075
        %v3563 = vunpack.c.l.b16 %v3076
        %v3564 = vunpack.c.l.b16 %v3077
        %v3565 = vunpack.c.l.b16 %v3078
        %v3566 = vunpack.c.l.b16 %v3079
        %v3567 = vunpack.c.l.b16 %v3080
        %v3568 = vunpack.c.l.b16 %v3081
        %v3569 = vunpack.c.l.b16 %v3082
        %v3570 = vunpack.c.l.b16 %v3083
        %v3571 = vunpack.c.l.b16 %v3084
        %v3572 = vunpack.c.l.b16 %v3085
        %v3573 = vunpack.c.l.b16 %v3086
        %v3574 = vunpack.c.l.b16 %v3087
        %v3575 = vunpack.c.l.b16 %v3088
        %v3576 = vunpack.c.l.b16 %v3089
        %v3577 = vunpack.c.l.b16 %v3090
        %v3578 = vunpack.c.l.b16 %v3091
        %v3579 = vunpack.c.l.b16 %v3092
        %v3580 = vunpack.c.l.b16 %v3093
        %v3581 = vunpack.c.l.b16 %v3094
        %v3582 = vunpack.c.l.b16 %v3095
        %v3583 = vunpack.c.l.b16 %v3096
        %v3584 = vunpack.c.l.b16 %v3097
        %v3585 = vunpack.c.l.b16 %v3098
        %v3586 = vunpack.c.l.b16 %v3099
        %v3587 = vunpack.c.l.b16 %v3100
        %v3588 = vunpack.c.l.b16 %v3101
        %v3589 = vunpack.c.l.b16 %v3102
        %v3590 = vunpack.c.l.b16 %v3103
        %v3591 = vunpack.c.l.b16 %v3104
        %v3592 = vunpack.c.l.b16 %v3105
        %v3593 = vunpack.c.l.b16 %v3106
        %v3594 = vunpack.c.l.b16 %v3107
        %v3595 = vunpack.c.l.b16 %v3108
        %v3596 = vunpack.c.l.b16 %v3109
        %v3597 = vunpack.c.l.b16 %v3110
        %v3598 = vunpack.c.l.b16 %v3111
        %v3599 = vunpack.c.l.b16 %v3112
        %v3600 = vunpack.c.l.b16 %v3113
        %v3601 = vunpack.c.l.b16 %v3114
        %v3602 = vunpack.c.l.b16 %v3115
        %v3603 = vunpack.c.l.b16 %v3116
        %v3604 = vunpack.c.l.b16 %v3117
        %v3605 = vunpack.c.l.b16 %v3118
        %v3606 = vunpack.c.l.b16 %v3119
        %v3607 = vunpack.c.l.b16 %v3120
        %v3608 = vunpack.c.l.b16 %v3121
        %v3609 = vunpack.c.l.b16 %v3122
        %v3610 = vunpack.c.l.b16 %v3123
        %v3611 = vunpack.c.l.b16 %v3124
        %v3612 = vunpack.c.l.b16 %v3125
        %v3613 = vunpack.c.l.b16 %v3126
        %v3614 = vunpack.c.l.b16 %v3127
        %v3615 = vunpack.c.l.b16 %v3128
        %v3616 = vunpack.c.l.b16 %v3129
        %v3617 = vunpack.c.l.b16 %v3130
        %v3618 = vunpack.c.l.b16 %v3131
        %v3619 = vunpack.c.l.b16 %v3132
        %v3620 = vunpack.c.l.b16 %v3133
        %v3621 = vunpack.c.l.b16 %v3134
        %v3622 = vunpack.c.l.b16 %v3135
        %v3623 = vunpack.c.l.b16 %v3136
        %v3624 = vunpack.c.l.b16 %v3137
        %v3625 = vunpack.c.l.b16 %v3138
        %v3626 = vunpack.c.l.b16 %v3139
        %v3627 = vunpack.c.l.b16 %v3140
        %v3628 = vunpack.c.l.b16 %v3141
        %v3629 = vunpack.c.l.b16 %v3142
        %v3630 = vunpack.c.l.b16 %v3143
        %v3631 = vunpack.c.l.b16 %v3144
        %v3632 = vunpack.c.l.b16 %v3145
        %v3633 = vunpack.c.l.b16 %v3146
        %v3634 = vunpack.c.l.b16 %v3147
        %v3635 = vunpack.c.l.b16 %v3148
        %v3636 = vunpack.c.l.b16 %v3149
        %v3637 = vunpack.c.l.b16 %v3150
        %v3638 = vunpack.c.l.b16 %v3151
        %v3639 = vunpack.c.l.b16 %v3152
        %v3640 = vunpack.c.l.b16 %v3153
        %v3641 = vunpack.c.l.b16 %v3154
        %v3642 = vunpack.c.l.b16 %v3155
        %v3643 = vunpack.c.l.b16 %v3156
        %v3644 = vunpack.c.l.b16 %v3157
        %v3645 = vunpack.c.l.b16 %v3158
        %v3646 = vunpack.c.l.b16 %v3159
        %v3647 = vunpack.c.l.b16 %v3160
        %v3648 = vunpack.c.l.b16 %v3161
        %v3649 = vunpack.c.l.b16 %v3162
        %v3650 = vunpack.c.l.b16 %v3163
        %v3651 = vunpack.c.l.b16 %v3164
        %v3652 = vunpack.c.l.b16 %v3165
        %v3653 = vunpack.c.l.b16 %v3166
        %v3654 = vunpack.c.l.b16 %v3167
        %v3655 = vunpack.c.l.b16 %v3168
        %v3656 = vunpack.c.l.b16 %v3169
        %v3657 = vunpack.c.l.b16 %v3170
        %v3658 = vunpack.c.l.b16 %v3171
        %v3659 = vunpack.c.l.b16 %v3172
        %v3660 = vunpack.c.l.b16 %v3173
        %v3661 = vunpack.c.l.b16 %v3174
        %v3662 = vsel %vm2913, %v3557, %v3542
        %v3663 = vsel %vm2915, %v3572, %v3662
        %v3664 = vsel %vm2917, %v3587, %v3663
        %v3665 = vsel %vm2919, %v3602, %v3664
        %v3666 = vsel %vm2921, %v3617, %v3665
        %v3667 = vsel %vm2923, %v3632, %v3666
        %v3668 = vsel %vm2925, %v3647, %v3667
        %v3669 = vsel %vm2913, %v3558, %v3543
        %v3670 = vsel %vm2915, %v3573, %v3669
        %v3671 = vsel %vm2917, %v3588, %v3670
        %v3672 = vsel %vm2919, %v3603, %v3671
        %v3673 = vsel %vm2921, %v3618, %v3672
        %v3674 = vsel %vm2923, %v3633, %v3673
        %v3675 = vsel %vm2925, %v3648, %v3674
        %v3676 = vsel %vm2913, %v3559, %v3544
        %v3677 = vsel %vm2915, %v3574, %v3676
        %v3678 = vsel %vm2917, %v3589, %v3677
        %v3679 = vsel %vm2919, %v3604, %v3678
        %v3680 = vsel %vm2921, %v3619, %v3679
        %v3681 = vsel %vm2923, %v3634, %v3680
        %v3682 = vsel %vm2925, %v3649, %v3681
        %v3683 = vsel %vm2913, %v3560, %v3545
        %v3684 = vsel %vm2915, %v3575, %v3683
        %v3685 = vsel %vm2917, %v3590, %v3684
        %v3686 = vsel %vm2919, %v3605, %v3685
        %v3687 = vsel %vm2921, %v3620, %v3686
        %v3688 = vsel %vm2923, %v3635, %v3687
        %v3689 = vsel %vm2925, %v3650, %v3688
        %v3690 = vsel %vm2913, %v3561, %v3546
        %v3691 = vsel %vm2915, %v3576, %v3690
        %v3692 = vsel %vm2917, %v3591, %v3691
        %v3693 = vsel %vm2919, %v3606, %v3692
        %v3694 = vsel %vm2921, %v3621, %v3693
        %v3695 = vsel %vm2923, %v3636, %v3694
        %v3696 = vsel %vm2925, %v3651, %v3695
        %v3697 = vsel %vm2913, %v3562, %v3547
        %v3698 = vsel %vm2915, %v3577, %v3697
        %v3699 = vsel %vm2917, %v3592, %v3698
        %v3700 = vsel %vm2919, %v3607, %v3699
        %v3701 = vsel %vm2921, %v3622, %v3700
        %v3702 = vsel %vm2923, %v3637, %v3701
        %v3703 = vsel %vm2925, %v3652, %v3702
        %v3704 = vsel %vm2913, %v3563, %v3548
        %v3705 = vsel %vm2915, %v3578, %v3704
        %v3706 = vsel %vm2917, %v3593, %v3705
        %v3707 = vsel %vm2919, %v3608, %v3706
        %v3708 = vsel %vm2921, %v3623, %v3707
        %v3709 = vsel %vm2923, %v3638, %v3708
        %v3710 = vsel %vm2925, %v3653, %v3709
        %v3711 = vsel %vm2913, %v3564, %v3549
        %v3712 = vsel %vm2915, %v3579, %v3711
        %v3713 = vsel %vm2917, %v3594, %v3712
        %v3714 = vsel %vm2919, %v3609, %v3713
        %v3715 = vsel %vm2921, %v3624, %v3714
        %v3716 = vsel %vm2923, %v3639, %v3715
        %v3717 = vsel %vm2925, %v3654, %v3716
        %v3718 = vsel %vm2913, %v3565, %v3550
        %v3719 = vsel %vm2915, %v3580, %v3718
        %v3720 = vsel %vm2917, %v3595, %v3719
        %v3721 = vsel %vm2919, %v3610, %v3720
        %v3722 = vsel %vm2921, %v3625, %v3721
        %v3723 = vsel %vm2923, %v3640, %v3722
        %v3724 = vsel %vm2925, %v3655, %v3723
        %v3725 = vsel %vm2913, %v3566, %v3551
        %v3726 = vsel %vm2915, %v3581, %v3725
        %v3727 = vsel %vm2917, %v3596, %v3726
        %v3728 = vsel %vm2919, %v3611, %v3727
        %v3729 = vsel %vm2921, %v3626, %v3728
        %v3730 = vsel %vm2923, %v3641, %v3729
        %v3731 = vsel %vm2925, %v3656, %v3730
        %v3732 = vsel %vm2913, %v3567, %v3552
        %v3733 = vsel %vm2915, %v3582, %v3732
        %v3734 = vsel %vm2917, %v3597, %v3733
        %v3735 = vsel %vm2919, %v3612, %v3734
        %v3736 = vsel %vm2921, %v3627, %v3735
        %v3737 = vsel %vm2923, %v3642, %v3736
        %v3738 = vsel %vm2925, %v3657, %v3737
        %v3739 = vsel %vm2913, %v3568, %v3553
        %v3740 = vsel %vm2915, %v3583, %v3739
        %v3741 = vsel %vm2917, %v3598, %v3740
        %v3742 = vsel %vm2919, %v3613, %v3741
        %v3743 = vsel %vm2921, %v3628, %v3742
        %v3744 = vsel %vm2923, %v3643, %v3743
        %v3745 = vsel %vm2925, %v3658, %v3744
        %v3746 = vsel %vm2913, %v3569, %v3554
        %v3747 = vsel %vm2915, %v3584, %v3746
        %v3748 = vsel %vm2917, %v3599, %v3747
        %v3749 = vsel %vm2919, %v3614, %v3748
        %v3750 = vsel %vm2921, %v3629, %v3749
        %v3751 = vsel %vm2923, %v3644, %v3750
        %v3752 = vsel %vm2925, %v3659, %v3751
        %v3753 = vsel %vm2913, %v3570, %v3555
        %v3754 = vsel %vm2915, %v3585, %v3753
        %v3755 = vsel %vm2917, %v3600, %v3754
        %v3756 = vsel %vm2919, %v3615, %v3755
        %v3757 = vsel %vm2921, %v3630, %v3756
        %v3758 = vsel %vm2923, %v3645, %v3757
        %v3759 = vsel %vm2925, %v3660, %v3758
        %v3760 = vsel %vm2913, %v3571, %v3556
        %v3761 = vsel %vm2915, %v3586, %v3760
        %v3762 = vsel %vm2917, %v3601, %v3761
        %v3763 = vsel %vm2919, %v3616, %v3762
        %v3764 = vsel %vm2921, %v3631, %v3763
        %v3765 = vsel %vm2923, %v3646, %v3764
        %v3766 = vsel %vm2925, %v3661, %v3765
        %v3767 = vpack.c.b16 %v3668, %v3668
        %v3768 = vpack.c.b16 %v3675, %v3675
        %v3769 = vpack.c.b16 %v3682, %v3682
        %v3770 = vpack.c.b16 %v3689, %v3689
        %v3771 = vpack.c.b16 %v3696, %v3696
        %v3772 = vpack.c.b16 %v3703, %v3703
        %v3773 = vpack.c.b16 %v3710, %v3710
        %v3774 = vpack.c.b16 %v3717, %v3717
        %v3775 = vpack.c.b16 %v3724, %v3724
        %v3776 = vpack.c.b16 %v3731, %v3731
        %v3777 = vpack.c.b16 %v3738, %v3738
        %v3778 = vpack.c.b16 %v3745, %v3745
        %v3779 = vpack.c.b16 %v3752, %v3752
        %v3780 = vpack.c.b16 %v3759, %v3759
        %v3781 = vpack.c.b16 %v3766, %v3766
        %v4037 = vunpack.c.l.b16 %v3175
        %v4038 = vunpack.c.l.b16 %v3176
        %v4039 = vunpack.c.l.b16 %v3177
        %v4040 = vunpack.c.l.b16 %v3178
        %v4041 = vunpack.c.l.b16 %v3179
        %v4042 = vunpack.c.l.b16 %v3180
        %v4043 = vunpack.c.l.b16 %v3181
        %v4044 = vunpack.c.l.b16 %v3182
        %v4045 = vunpack.c.l.b16 %v3183
        %v4046 = vunpack.c.l.b16 %v3184
        %v4047 = vunpack.c.l.b16 %v3185
        %v4048 = vunpack.c.l.b16 %v3186
        %v4049 = vunpack.c.l.b16 %v3187
        %v4050 = vunpack.c.l.b16 %v3188
        %v4051 = vunpack.c.l.b16 %v3189
        %v4052 = vunpack.c.l.b16 %v3190
        %v4053 = vunpack.c.l.b16 %v3191
        %v4054 = vunpack.c.l.b16 %v3192
        %v4055 = vunpack.c.l.b16 %v3193
        %v4056 = vunpack.c.l.b16 %v3194
        %v4057 = vunpack.c.l.b16 %v3195
        %v4058 = vunpack.c.l.b16 %v3196
        %v4059 = vunpack.c.l.b16 %v3197
        %v4060 = vunpack.c.l.b16 %v3198
        %v4061 = vunpack.c.l.b16 %v3199
        %v4062 = vunpack.c.l.b16 %v3200
        %v4063 = vunpack.c.l.b16 %v3201
        %v4064 = vunpack.c.l.b16 %v3202
        %v4065 = vunpack.c.l.b16 %v3203
        %v4066 = vunpack.c.l.b16 %v3204
        %v4067 = vunpack.c.l.b16 %v3205
        %v4068 = vunpack.c.l.b16 %v3206
        %v4069 = vunpack.c.l.b16 %v3207
        %v4070 = vunpack.c.l.b16 %v3208
        %v4071 = vunpack.c.l.b16 %v3209
        %v4072 = vunpack.c.l.b16 %v3210
        %v4073 = vunpack.c.l.b16 %v3211
        %v4074 = vunpack.c.l.b16 %v3212
        %v4075 = vunpack.c.l.b16 %v3213
        %v4076 = vunpack.c.l.b16 %v3214
        %v4077 = vunpack.c.l.b16 %v3215
        %v4078 = vunpack.c.l.b16 %v3216
        %v4079 = vunpack.c.l.b16 %v3217
        %v4080 = vunpack.c.l.b16 %v3218
        %v4081 = vunpack.c.l.b16 %v3219
        %v4082 = vunpack.c.l.b16 %v3220
        %v4083 = vunpack.c.l.b16 %v3221
        %v4084 = vunpack.c.l.b16 %v3222
        %v4085 = vunpack.c.l.b16 %v3223
        %v4086 = vunpack.c.l.b16 %v3224
        %v4087 = vunpack.c.l.b16 %v3225
        %v4088 = vunpack.c.l.b16 %v3226
        %v4089 = vunpack.c.l.b16 %v3227
        %v4090 = vunpack.c.l.b16 %v3228
        %v4091 = vunpack.c.l.b16 %v3229
        %v4092 = vunpack.c.l.b16 %v3230
        %v4093 = vunpack.c.l.b16 %v3231
        %v4094 = vunpack.c.l.b16 %v3232
        %v4095 = vunpack.c.l.b16 %v3233
        %v4096 = vunpack.c.l.b16 %v3234
        %v4097 = vunpack.c.l.b16 %v3235
        %v4098 = vunpack.c.l.b16 %v3236
        %v4099 = vunpack.c.l.b16 %v3237
        %v4100 = vunpack.c.l.b16 %v3238
        %v4101 = vunpack.c.l.b16 %v3239
        %v4102 = vunpack.c.l.b16 %v3240
        %v4103 = vunpack.c.l.b16 %v3241
        %v4104 = vunpack.c.l.b16 %v3242
        %v4105 = vunpack.c.l.b16 %v3243
        %v4106 = vunpack.c.l.b16 %v3244
        %v4107 = vunpack.c.l.b16 %v3245
        %v4108 = vunpack.c.l.b16 %v3246
        %v4109 = vunpack.c.l.b16 %v3247
        %v4110 = vunpack.c.l.b16 %v3248
        %v4111 = vunpack.c.l.b16 %v3249
        %v4112 = vunpack.c.l.b16 %v3250
        %v4113 = vunpack.c.l.b16 %v3251
        %v4114 = vunpack.c.l.b16 %v3252
        %v4115 = vunpack.c.l.b16 %v3253
        %v4116 = vunpack.c.l.b16 %v3254
        %v4117 = vunpack.c.l.b16 %v3255
        %v4118 = vunpack.c.l.b16 %v3256
        %v4119 = vunpack.c.l.b16 %v3257
        %v4120 = vunpack.c.l.b16 %v3258
        %v4121 = vunpack.c.l.b16 %v3259
        %v4122 = vunpack.c.l.b16 %v3260
        %v4123 = vunpack.c.l.b16 %v3261
        %v4124 = vunpack.c.l.b16 %v3262
        %v4125 = vunpack.c.l.b16 %v3263
        %v4126 = vunpack.c.l.b16 %v3264
        %v4127 = vunpack.c.l.b16 %v3265
        %v4128 = vunpack.c.l.b16 %v3266
        %v4129 = vunpack.c.l.b16 %v3267
        %v4130 = vunpack.c.l.b16 %v3268
        %v4131 = vunpack.c.l.b16 %v3269
        %v4132 = vunpack.c.l.b16 %v3270
        %v4133 = vunpack.c.l.b16 %v3271
        %v4134 = vunpack.c.l.b16 %v3272
        %v4135 = vunpack.c.l.b16 %v3273
        %v4136 = vunpack.c.l.b16 %v3274
        %v4137 = vunpack.c.l.b16 %v3275
        %v4138 = vunpack.c.l.b16 %v3276
        %v4139 = vunpack.c.l.b16 %v3277
        %v4140 = vunpack.c.l.b16 %v3278
        %v4141 = vunpack.c.l.b16 %v3279
        %v4142 = vunpack.c.l.b16 %v3280
        %v4143 = vunpack.c.l.b16 %v3281
        %v4144 = vunpack.c.l.b16 %v3282
        %v4145 = vunpack.c.l.b16 %v3283
        %v4146 = vunpack.c.l.b16 %v3284
        %v4147 = vunpack.c.l.b16 %v3285
        %v4148 = vunpack.c.l.b16 %v3286
        %v4149 = vunpack.c.l.b16 %v3287
        %v4150 = vunpack.c.l.b16 %v3288
        %v4151 = vunpack.c.l.b16 %v3289
        %v4152 = vunpack.c.l.b16 %v3290
        %v4153 = vunpack.c.l.b16 %v3291
        %v4154 = vunpack.c.l.b16 %v3292
        %v4155 = vunpack.c.l.b16 %v3293
        %v4156 = vunpack.c.l.b16 %v3294
        %v4157 = vunpack.c.l.b16 %v3295
        %v4158 = vunpack.c.l.b16 %v3296
        %v4159 = vunpack.c.l.b16 %v3297
        %v4160 = vunpack.c.l.b16 %v3298
        %v4161 = vunpack.c.l.b16 %v3299
        %v4162 = vunpack.c.l.b16 %v3300
        %v4163 = vunpack.c.l.b16 %v3301
        %v4164 = vunpack.c.l.b16 %v3302
        %v4165 = vunpack.c.l.b16 %v3303
        %v4166 = vunpack.c.l.b16 %v3304
        %v4167 = vunpack.c.l.b16 %v3305
        %v4168 = vunpack.c.l.b16 %v3306
        %v4169 = vunpack.c.l.b16 %v3307
        %v4170 = vunpack.c.l.b16 %v3308
        %v4171 = vunpack.c.l.b16 %v3309
        %v4172 = vunpack.c.l.b16 %v3310
        %v4173 = vunpack.c.l.b16 %v3311
        %v4174 = vunpack.c.l.b16 %v3312
        %v4175 = vunpack.c.l.b16 %v3313
        %v4176 = vunpack.c.l.b16 %v3314
        %v4177 = vunpack.c.l.b16 %v3315
        %v4178 = vunpack.c.l.b16 %v3316
        %v4179 = vunpack.c.l.b16 %v3317
        %v4180 = vunpack.c.l.b16 %v3318
        %v4181 = vunpack.c.l.b16 %v3319
        %v4182 = vunpack.c.l.b16 %v3320
        %v4183 = vunpack.c.l.b16 %v3321
        %v4184 = vunpack.c.l.b16 %v3322
        %v4185 = vunpack.c.l.b16 %v3323
        %v4186 = vunpack.c.l.b16 %v3324
        %v4187 = vunpack.c.l.b16 %v3325
        %v4188 = vunpack.c.l.b16 %v3326
        %v4189 = vunpack.c.l.b16 %v3327
        %v4190 = vunpack.c.l.b16 %v3328
        %v4191 = vunpack.c.l.b16 %v3329
        %v4192 = vunpack.c.l.b16 %v3330
        %v4193 = vunpack.c.l.b16 %v3331
        %v4194 = vunpack.c.l.b16 %v3332
        %v4195 = vunpack.c.l.b16 %v3333
        %v4196 = vunpack.c.l.b16 %v3334
        %v4197 = vunpack.c.l.b16 %v3335
        %v4198 = vunpack.c.l.b16 %v3336
        %v4199 = vunpack.c.l.b16 %v3337
        %v4200 = vunpack.c.l.b16 %v3338
        %v4201 = vunpack.c.l.b16 %v3339
        %v4202 = vunpack.c.l.b16 %v3340
        %v4203 = vunpack.c.l.b16 %v3341
        %v4204 = vunpack.c.l.b16 %v3342
        %v4205 = vunpack.c.l.b16 %v3343
        %v4206 = vunpack.c.l.b16 %v3344
        %v4207 = vunpack.c.l.b16 %v3345
        %v4208 = vunpack.c.l.b16 %v3346
        %v4209 = vunpack.c.l.b16 %v3347
        %v4210 = vunpack.c.l.b16 %v3348
        %v4211 = vunpack.c.l.b16 %v3349
        %v4212 = vunpack.c.l.b16 %v3350
        %v4213 = vunpack.c.l.b16 %v3351
        %v4214 = vunpack.c.l.b16 %v3352
        %v4215 = vunpack.c.l.b16 %v3353
        %v4216 = vunpack.c.l.b16 %v3354
        %v4217 = vunpack.c.l.b16 %v3355
        %v4218 = vunpack.c.l.b16 %v3356
        %v4219 = vunpack.c.l.b16 %v3357
        %v4220 = vunpack.c.l.b16 %v3358
        %v4221 = vunpack.c.l.b16 %v3359
        %v4222 = vunpack.c.l.b16 %v3360
        %v4223 = vunpack.c.l.b16 %v3361
        %v4224 = vunpack.c.l.b16 %v3362
        %v4225 = vunpack.c.l.b16 %v3363
        %v4226 = vunpack.c.l.b16 %v3364
        %v4227 = vunpack.c.l.b16 %v3365
        %v4228 = vunpack.c.l.b16 %v3366
        %v4229 = vunpack.c.l.b16 %v3367
        %v4230 = vunpack.c.l.b16 %v3368
        %v4231 = vunpack.c.l.b16 %v3369
        %v4232 = vunpack.c.l.b16 %v3370
        %v4233 = vunpack.c.l.b16 %v3371
        %v4234 = vunpack.c.l.b16 %v3372
        %v4235 = vunpack.c.l.b16 %v3373
        %v4236 = vunpack.c.l.b16 %v3374
        %v4237 = vunpack.c.l.b16 %v3375
        %v4238 = vunpack.c.l.b16 %v3376
        %v4239 = vunpack.c.l.b16 %v3377
        %v4240 = vunpack.c.l.b16 %v3378
        %v4241 = vunpack.c.l.b16 %v3379
        %v4242 = vunpack.c.l.b16 %v3380
        %v4243 = vunpack.c.l.b16 %v3381
        %v4244 = vunpack.c.l.b16 %v3382
        %v4245 = vunpack.c.l.b16 %v3383
        %v4246 = vunpack.c.l.b16 %v3384
        %v4247 = vunpack.c.l.b16 %v3385
        %v4248 = vunpack.c.l.b16 %v3386
        %v4249 = vunpack.c.l.b16 %v3387
        %v4250 = vunpack.c.l.b16 %v3388
        %v4251 = vunpack.c.l.b16 %v3389
        %v4252 = vunpack.c.l.b16 %v3390
        %v4253 = vunpack.c.l.b16 %v3391
        %v4254 = vunpack.c.l.b16 %v3392
        %v4255 = vunpack.c.l.b16 %v3393
        %v4256 = vunpack.c.l.b16 %v3394
        %v4257 = vunpack.c.l.b16 %v3395
        %v4258 = vunpack.c.l.b16 %v3396
        %v4259 = vunpack.c.l.b16 %v3397
        %v4260 = vunpack.c.l.b16 %v3398
        %v4261 = vunpack.c.l.b16 %v3399
        %v4262 = vunpack.c.l.b16 %v3400
        %v4263 = vunpack.c.l.b16 %v3401
        %v4264 = vunpack.c.l.b16 %v3402
        %v4265 = vunpack.c.l.b16 %v3403
        %v4266 = vunpack.c.l.b16 %v3404
        %v4267 = vunpack.c.l.b16 %v3405
        %v4268 = vunpack.c.l.b16 %v3406
        %v4269 = vunpack.c.l.b16 %v3407
        %v4270 = vunpack.c.l.b16 %v3408
        %v4271 = vunpack.c.l.b16 %v3409
        %v4272 = vunpack.c.l.b16 %v3410
        %v4273 = vunpack.c.l.b16 %v3411
        %v4274 = vunpack.c.l.b16 %v3412
        %v4275 = vunpack.c.l.b16 %v3413
        %v4276 = vunpack.c.l.b16 %v3414
        %v4277 = vpack.c.b16 %v4038, %v4037
        %v4278 = vpack.c.b16 %v4040, %v4039
        %v4279 = vpack.c.b16 %v4042, %v4041
        %v4280 = vpack.c.b16 %v4044, %v4043
        %v4281 = vpack.c.b16 %v4046, %v4045
        %v4282 = vpack.c.b16 %v4048, %v4047
        %v4283 = vpack.c.b16 %v4050, %v4049
        %v4284 = vpack.c.b16 %v4052, %v4051
        %v4285 = vpack.c.b16 %v4054, %v4053
        %v4286 = vpack.c.b16 %v4056, %v4055
        %v4287 = vpack.c.b16 %v4058, %v4057
        %v4288 = vpack.c.b16 %v4060, %v4059
        %v4289 = vpack.c.b16 %v4062, %v4061
        %v4290 = vpack.c.b16 %v4064, %v4063
        %v4291 = vpack.c.b16 %v4066, %v4065
        %v4292 = vpack.c.b16 %v4068, %v4067
        %v4293 = vpack.c.b16 %v4070, %v4069
        %v4294 = vpack.c.b16 %v4072, %v4071
        %v4295 = vpack.c.b16 %v4074, %v4073
        %v4296 = vpack.c.b16 %v4076, %v4075
        %v4297 = vpack.c.b16 %v4078, %v4077
        %v4298 = vpack.c.b16 %v4080, %v4079
        %v4299 = vpack.c.b16 %v4082, %v4081
        %v4300 = vpack.c.b16 %v4084, %v4083
        %v4301 = vpack.c.b16 %v4086, %v4085
        %v4302 = vpack.c.b16 %v4088, %v4087
        %v4303 = vpack.c.b16 %v4090, %v4089
        %v4304 = vpack.c.b16 %v4092, %v4091
        %v4305 = vpack.c.b16 %v4094, %v4093
        %v4306 = vpack.c.b16 %v4096, %v4095
        %v4307 = vpack.c.b16 %v4098, %v4097
        %v4308 = vpack.c.b16 %v4100, %v4099
        %v4309 = vpack.c.b16 %v4102, %v4101
        %v4310 = vpack.c.b16 %v4104, %v4103
        %v4311 = vpack.c.b16 %v4106, %v4105
        %v4312 = vpack.c.b16 %v4108, %v4107
        %v4313 = vpack.c.b16 %v4110, %v4109
        %v4314 = vpack.c.b16 %v4112, %v4111
        %v4315 = vpack.c.b16 %v4114, %v4113
        %v4316 = vpack.c.b16 %v4116, %v4115
        %v4317 = vpack.c.b16 %v4118, %v4117
        %v4318 = vpack.c.b16 %v4120, %v4119
        %v4319 = vpack.c.b16 %v4122, %v4121
        %v4320 = vpack.c.b16 %v4124, %v4123
        %v4321 = vpack.c.b16 %v4126, %v4125
        %v4322 = vpack.c.b16 %v4128, %v4127
        %v4323 = vpack.c.b16 %v4130, %v4129
        %v4324 = vpack.c.b16 %v4132, %v4131
        %v4325 = vpack.c.b16 %v4134, %v4133
        %v4326 = vpack.c.b16 %v4136, %v4135
        %v4327 = vpack.c.b16 %v4138, %v4137
        %v4328 = vpack.c.b16 %v4140, %v4139
        %v4329 = vpack.c.b16 %v4142, %v4141
        %v4330 = vpack.c.b16 %v4144, %v4143
        %v4331 = vpack.c.b16 %v4146, %v4145
        %v4332 = vpack.c.b16 %v4148, %v4147
        %v4333 = vpack.c.b16 %v4150, %v4149
        %v4334 = vpack.c.b16 %v4152, %v4151
        %v4335 = vpack.c.b16 %v4154, %v4153
        %v4336 = vpack.c.b16 %v4156, %v4155
        %v4337 = vpack.c.b16 %v4158, %v4157
        %v4338 = vpack.c.b16 %v4160, %v4159
        %v4339 = vpack.c.b16 %v4162, %v4161
        %v4340 = vpack.c.b16 %v4164, %v4163
        %v4341 = vpack.c.b16 %v4166, %v4165
        %v4342 = vpack.c.b16 %v4168, %v4167
        %v4343 = vpack.c.b16 %v4170, %v4169
        %v4344 = vpack.c.b16 %v4172, %v4171
        %v4345 = vpack.c.b16 %v4174, %v4173
        %v4346 = vpack.c.b16 %v4176, %v4175
        %v4347 = vpack.c.b16 %v4178, %v4177
        %v4348 = vpack.c.b16 %v4180, %v4179
        %v4349 = vpack.c.b16 %v4182, %v4181
        %v4350 = vpack.c.b16 %v4184, %v4183
        %v4351 = vpack.c.b16 %v4186, %v4185
        %v4352 = vpack.c.b16 %v4188, %v4187
        %v4353 = vpack.c.b16 %v4190, %v4189
        %v4354 = vpack.c.b16 %v4192, %v4191
        %v4355 = vpack.c.b16 %v4194, %v4193
        %v4356 = vpack.c.b16 %v4196, %v4195
        %v4357 = vpack.c.b16 %v4198, %v4197
        %v4358 = vpack.c.b16 %v4200, %v4199
        %v4359 = vpack.c.b16 %v4202, %v4201
        %v4360 = vpack.c.b16 %v4204, %v4203
        %v4361 = vpack.c.b16 %v4206, %v4205
        %v4362 = vpack.c.b16 %v4208, %v4207
        %v4363 = vpack.c.b16 %v4210, %v4209
        %v4364 = vpack.c.b16 %v4212, %v4211
        %v4365 = vpack.c.b16 %v4214, %v4213
        %v4366 = vpack.c.b16 %v4216, %v4215
        %v4367 = vpack.c.b16 %v4218, %v4217
        %v4368 = vpack.c.b16 %v4220, %v4219
        %v4369 = vpack.c.b16 %v4222, %v4221
        %v4370 = vpack.c.b16 %v4224, %v4223
        %v4371 = vpack.c.b16 %v4226, %v4225
        %v4372 = vpack.c.b16 %v4228, %v4227
        %v4373 = vpack.c.b16 %v4230, %v4229
        %v4374 = vpack.c.b16 %v4232, %v4231
        %v4375 = vpack.c.b16 %v4234, %v4233
        %v4376 = vpack.c.b16 %v4236, %v4235
        %v4377 = vpack.c.b16 %v4238, %v4237
        %v4378 = vpack.c.b16 %v4240, %v4239
        %v4379 = vpack.c.b16 %v4242, %v4241
        %v4380 = vpack.c.b16 %v4244, %v4243
        %v4381 = vpack.c.b16 %v4246, %v4245
        %v4382 = vpack.c.b16 %v4248, %v4247
        %v4383 = vpack.c.b16 %v4250, %v4249
        %v4384 = vpack.c.b16 %v4252, %v4251
        %v4385 = vpack.c.b16 %v4254, %v4253
        %v4386 = vpack.c.b16 %v4256, %v4255
        %v4387 = vpack.c.b16 %v4258, %v4257
        %v4388 = vpack.c.b16 %v4260, %v4259
        %v4389 = vpack.c.b16 %v4262, %v4261
        %v4390 = vpack.c.b16 %v4264, %v4263
        %v4391 = vpack.c.b16 %v4266, %v4265
        %v4392 = vpack.c.b16 %v4268, %v4267
        %v4393 = vpack.c.b16 %v4270, %v4269
        %v4394 = vpack.c.b16 %v4272, %v4271
        %v4395 = vpack.c.b16 %v4274, %v4273
        %v4396 = vpack.c.b16 %v4276, %v4275
        %4517 = vmatprep.subr.bf16.mxu0 0
        %4518 = vmatpush1.bf16.msra.mxu0 %v4277
        %4519 = vmatprep.subr.bf16.mxu0 0
        %4520 = vmatpush1.bf16.msra.mxu0 %v4278
        %4521 = vmatprep.subr.bf16.mxu0 0
        %4522 = vmatpush1.bf16.msra.mxu0 %v4279
        %4523 = vmatprep.subr.bf16.mxu0 0
        %4524 = vmatpush1.bf16.msra.mxu0 %v4280
        %4525 = vmatprep.subr.bf16.mxu0 0
        %4526 = vmatpush1.bf16.msra.mxu0 %v4281
        %4527 = vmatprep.subr.bf16.mxu0 0
        %4528 = vmatpush1.bf16.msra.mxu0 %v4282
        %4529 = vmatprep.subr.bf16.mxu0 0
        %4530 = vmatpush1.bf16.msra.mxu0 %v4283
        %4531 = vmatprep.subr.bf16.mxu0 0
        %4532 = vmatpush1.bf16.msra.mxu0 %v4284
        %4533 = vmatprep.subr.bf16.mxu0 0
        %4534 = vmatpush1.bf16.msra.mxu0 %v4285
        %4535 = vmatprep.subr.bf16.mxu0 0
        %4536 = vmatpush1.bf16.msra.mxu0 %v4286
        %4537 = vmatprep.subr.bf16.mxu0 0
        %4538 = vmatpush1.bf16.msra.mxu0 %v4287
        %4539 = vmatprep.subr.bf16.mxu0 0
        %4540 = vmatpush1.bf16.msra.mxu0 %v4288
        %4541 = vmatprep.subr.bf16.mxu0 0
        %4542 = vmatpush1.bf16.msra.mxu0 %v4289
        %4543 = vmatprep.subr.bf16.mxu0 0
        %4544 = vmatpush1.bf16.msra.mxu0 %v4290
        %4545 = vmatprep.subr.bf16.mxu0 0
        %4546 = vmatpush1.bf16.msra.mxu0 %v4291
        %4547 = vmatprep.subr.bf16.mxu0 0
        %4548 = vmatpush1.bf16.msra.mxu0 %v4292
        %4549 = vmatprep.mubr.bf16.mxu0 %v3768
        %4550 = vmatmul.mubr.bf16.gmra.mrb[0].mxu0 %v3767
        %v4551 = vpop.f32.mrb[0].mxu0
        %v4552 = vadd.f32 %v3420, %v4551
        %v4553 = vpop.f32.mrb[0].mxu0
        %v4554 = vpop.f32.mrb[0].mxu0
        %v4555 = vpop.f32.mrb[0].mxu0
        %4556 = vdwg.mxu0
        %4557 = vmatprep.subr.bf16.mxu0 0
        %4558 = vmatpush1.bf16.msra.mxu0 %v4293
        %4559 = vmatprep.subr.bf16.mxu0 0
        %4560 = vmatpush1.bf16.msra.mxu0 %v4294
        %4561 = vmatprep.subr.bf16.mxu0 0
        %4562 = vmatpush1.bf16.msra.mxu0 %v4295
        %4563 = vmatprep.subr.bf16.mxu0 0
        %4564 = vmatpush1.bf16.msra.mxu0 %v4296
        %4565 = vmatprep.subr.bf16.mxu0 0
        %4566 = vmatpush1.bf16.msra.mxu0 %v4297
        %4567 = vmatprep.subr.bf16.mxu0 0
        %4568 = vmatpush1.bf16.msra.mxu0 %v4298
        %4569 = vmatprep.subr.bf16.mxu0 0
        %4570 = vmatpush1.bf16.msra.mxu0 %v4299
        %4571 = vmatprep.subr.bf16.mxu0 0
        %4572 = vmatpush1.bf16.msra.mxu0 %v4300
        %4573 = vmatprep.subr.bf16.mxu0 0
        %4574 = vmatpush1.bf16.msra.mxu0 %v4301
        %4575 = vmatprep.subr.bf16.mxu0 0
        %4576 = vmatpush1.bf16.msra.mxu0 %v4302
        %4577 = vmatprep.subr.bf16.mxu0 0
        %4578 = vmatpush1.bf16.msra.mxu0 %v4303
        %4579 = vmatprep.subr.bf16.mxu0 0
        %4580 = vmatpush1.bf16.msra.mxu0 %v4304
        %4581 = vmatprep.subr.bf16.mxu0 0
        %4582 = vmatpush1.bf16.msra.mxu0 %v4305
        %4583 = vmatprep.subr.bf16.mxu0 0
        %4584 = vmatpush1.bf16.msra.mxu0 %v4306
        %4585 = vmatprep.subr.bf16.mxu0 0
        %4586 = vmatpush1.bf16.msra.mxu0 %v4307
        %4587 = vmatprep.subr.bf16.mxu0 0
        %4588 = vmatpush1.bf16.msra.mxu0 %v4308
        %4589 = vmatprep.mubr.bf16.mxu0 %v3770
        %4590 = vmatmul.mubr.bf16.gmra.mrb[0].mxu0 %v3769
        %v4591 = vpop.f32.mrb[0].mxu0
        %v4592 = vadd.f32 %v4552, %v4591
        %v4593 = vpop.f32.mrb[0].mxu0
        %v4594 = vpop.f32.mrb[0].mxu0
        %v4595 = vpop.f32.mrb[0].mxu0
        %4596 = vdwg.mxu0
        %4597 = vmatprep.subr.bf16.mxu0 0
        %4598 = vmatpush1.bf16.msra.mxu0 %v4309
        %4599 = vmatprep.subr.bf16.mxu0 0
        %4600 = vmatpush1.bf16.msra.mxu0 %v4310
        %4601 = vmatprep.subr.bf16.mxu0 0
        %4602 = vmatpush1.bf16.msra.mxu0 %v4311
        %4603 = vmatprep.subr.bf16.mxu0 0
        %4604 = vmatpush1.bf16.msra.mxu0 %v4312
        %4605 = vmatprep.subr.bf16.mxu0 0
        %4606 = vmatpush1.bf16.msra.mxu0 %v4313
        %4607 = vmatprep.subr.bf16.mxu0 0
        %4608 = vmatpush1.bf16.msra.mxu0 %v4314
        %4609 = vmatprep.subr.bf16.mxu0 0
        %4610 = vmatpush1.bf16.msra.mxu0 %v4315
        %4611 = vmatprep.subr.bf16.mxu0 0
        %4612 = vmatpush1.bf16.msra.mxu0 %v4316
        %4613 = vmatprep.subr.bf16.mxu0 0
        %4614 = vmatpush1.bf16.msra.mxu0 %v4317
        %4615 = vmatprep.subr.bf16.mxu0 0
        %4616 = vmatpush1.bf16.msra.mxu0 %v4318
        %4617 = vmatprep.subr.bf16.mxu0 0
        %4618 = vmatpush1.bf16.msra.mxu0 %v4319
        %4619 = vmatprep.subr.bf16.mxu0 0
        %4620 = vmatpush1.bf16.msra.mxu0 %v4320
        %4621 = vmatprep.subr.bf16.mxu0 0
        %4622 = vmatpush1.bf16.msra.mxu0 %v4321
        %4623 = vmatprep.subr.bf16.mxu0 0
        %4624 = vmatpush1.bf16.msra.mxu0 %v4322
        %4625 = vmatprep.subr.bf16.mxu0 0
        %4626 = vmatpush1.bf16.msra.mxu0 %v4323
        %4627 = vmatprep.subr.bf16.mxu0 0
        %4628 = vmatpush1.bf16.msra.mxu0 %v4324
        %4629 = vmatprep.mubr.bf16.mxu0 %v3772
        %4630 = vmatmul.mubr.bf16.gmra.mrb[0].mxu0 %v3771
        %v4631 = vpop.f32.mrb[0].mxu0
        %v4632 = vadd.f32 %v4592, %v4631
        %v4633 = vpop.f32.mrb[0].mxu0
        %v4634 = vpop.f32.mrb[0].mxu0
        %v4635 = vpop.f32.mrb[0].mxu0
        %4636 = vdwg.mxu0
        %4637 = vmatprep.subr.bf16.mxu0 0
        %4638 = vmatpush1.bf16.msra.mxu0 %v4325
        %4639 = vmatprep.subr.bf16.mxu0 0
        %4640 = vmatpush1.bf16.msra.mxu0 %v4326
        %4641 = vmatprep.subr.bf16.mxu0 0
        %4642 = vmatpush1.bf16.msra.mxu0 %v4327
        %4643 = vmatprep.subr.bf16.mxu0 0
        %4644 = vmatpush1.bf16.msra.mxu0 %v4328
        %4645 = vmatprep.subr.bf16.mxu0 0
        %4646 = vmatpush1.bf16.msra.mxu0 %v4329
        %4647 = vmatprep.subr.bf16.mxu0 0
        %4648 = vmatpush1.bf16.msra.mxu0 %v4330
        %4649 = vmatprep.subr.bf16.mxu0 0
        %4650 = vmatpush1.bf16.msra.mxu0 %v4331
        %4651 = vmatprep.subr.bf16.mxu0 0
        %4652 = vmatpush1.bf16.msra.mxu0 %v4332
        %4653 = vmatprep.subr.bf16.mxu0 0
        %4654 = vmatpush1.bf16.msra.mxu0 %v4333
        %4655 = vmatprep.subr.bf16.mxu0 0
        %4656 = vmatpush1.bf16.msra.mxu0 %v4334
        %4657 = vmatprep.subr.bf16.mxu0 0
        %4658 = vmatpush1.bf16.msra.mxu0 %v4335
        %4659 = vmatprep.subr.bf16.mxu0 0
        %4660 = vmatpush1.bf16.msra.mxu0 %v4336
        %4661 = vmatprep.subr.bf16.mxu0 0
        %4662 = vmatpush1.bf16.msra.mxu0 %v4337
        %4663 = vmatprep.subr.bf16.mxu0 0
        %4664 = vmatpush1.bf16.msra.mxu0 %v4338
        %4665 = vmatprep.subr.bf16.mxu0 0
        %4666 = vmatpush1.bf16.msra.mxu0 %v4339
        %4667 = vmatprep.subr.bf16.mxu0 0
        %4668 = vmatpush1.bf16.msra.mxu0 %v4340
        %4669 = vmatprep.mubr.bf16.mxu0 %v3774
        %4670 = vmatmul.mubr.bf16.gmra.mrb[0].mxu0 %v3773
        %v4671 = vpop.f32.mrb[0].mxu0
        %v4672 = vadd.f32 %v4632, %v4671
        %v4673 = vpop.f32.mrb[0].mxu0
        %v4674 = vpop.f32.mrb[0].mxu0
        %v4675 = vpop.f32.mrb[0].mxu0
        %4676 = vdwg.mxu0
        %4677 = vmatprep.subr.bf16.mxu0 0
        %4678 = vmatpush1.bf16.msra.mxu0 %v4341
        %4679 = vmatprep.subr.bf16.mxu0 0
        %4680 = vmatpush1.bf16.msra.mxu0 %v4342
        %4681 = vmatprep.subr.bf16.mxu0 0
        %4682 = vmatpush1.bf16.msra.mxu0 %v4343
        %4683 = vmatprep.subr.bf16.mxu0 0
        %4684 = vmatpush1.bf16.msra.mxu0 %v4344
        %4685 = vmatprep.subr.bf16.mxu0 0
        %4686 = vmatpush1.bf16.msra.mxu0 %v4345
        %4687 = vmatprep.subr.bf16.mxu0 0
        %4688 = vmatpush1.bf16.msra.mxu0 %v4346
        %4689 = vmatprep.subr.bf16.mxu0 0
        %4690 = vmatpush1.bf16.msra.mxu0 %v4347
        %4691 = vmatprep.subr.bf16.mxu0 0
        %4692 = vmatpush1.bf16.msra.mxu0 %v4348
        %4693 = vmatprep.subr.bf16.mxu0 0
        %4694 = vmatpush1.bf16.msra.mxu0 %v4349
        %4695 = vmatprep.subr.bf16.mxu0 0
        %4696 = vmatpush1.bf16.msra.mxu0 %v4350
        %4697 = vmatprep.subr.bf16.mxu0 0
        %4698 = vmatpush1.bf16.msra.mxu0 %v4351
        %4699 = vmatprep.subr.bf16.mxu0 0
        %4700 = vmatpush1.bf16.msra.mxu0 %v4352
        %4701 = vmatprep.subr.bf16.mxu0 0
        %4702 = vmatpush1.bf16.msra.mxu0 %v4353
        %4703 = vmatprep.subr.bf16.mxu0 0
        %4704 = vmatpush1.bf16.msra.mxu0 %v4354
        %4705 = vmatprep.subr.bf16.mxu0 0
        %4706 = vmatpush1.bf16.msra.mxu0 %v4355
        %4707 = vmatprep.subr.bf16.mxu0 0
        %4708 = vmatpush1.bf16.msra.mxu0 %v4356
        %4709 = vmatprep.mubr.bf16.mxu0 %v3776
        %4710 = vmatmul.mubr.bf16.gmra.mrb[0].mxu0 %v3775
        %v4711 = vpop.f32.mrb[0].mxu0
        %v4712 = vadd.f32 %v4672, %v4711
        %v4713 = vpop.f32.mrb[0].mxu0
        %v4714 = vpop.f32.mrb[0].mxu0
        %v4715 = vpop.f32.mrb[0].mxu0
        %4716 = vdwg.mxu0
        %4717 = vmatprep.subr.bf16.mxu0 0
        %4718 = vmatpush1.bf16.msra.mxu0 %v4357
        %4719 = vmatprep.subr.bf16.mxu0 0
        %4720 = vmatpush1.bf16.msra.mxu0 %v4358
        %4721 = vmatprep.subr.bf16.mxu0 0
        %4722 = vmatpush1.bf16.msra.mxu0 %v4359
        %4723 = vmatprep.subr.bf16.mxu0 0
        %4724 = vmatpush1.bf16.msra.mxu0 %v4360
        %4725 = vmatprep.subr.bf16.mxu0 0
        %4726 = vmatpush1.bf16.msra.mxu0 %v4361
        %4727 = vmatprep.subr.bf16.mxu0 0
        %4728 = vmatpush1.bf16.msra.mxu0 %v4362
        %4729 = vmatprep.subr.bf16.mxu0 0
        %4730 = vmatpush1.bf16.msra.mxu0 %v4363
        %4731 = vmatprep.subr.bf16.mxu0 0
        %4732 = vmatpush1.bf16.msra.mxu0 %v4364
        %4733 = vmatprep.subr.bf16.mxu0 0
        %4734 = vmatpush1.bf16.msra.mxu0 %v4365
        %4735 = vmatprep.subr.bf16.mxu0 0
        %4736 = vmatpush1.bf16.msra.mxu0 %v4366
        %4737 = vmatprep.subr.bf16.mxu0 0
        %4738 = vmatpush1.bf16.msra.mxu0 %v4367
        %4739 = vmatprep.subr.bf16.mxu0 0
        %4740 = vmatpush1.bf16.msra.mxu0 %v4368
        %4741 = vmatprep.subr.bf16.mxu0 0
        %4742 = vmatpush1.bf16.msra.mxu0 %v4369
        %4743 = vmatprep.subr.bf16.mxu0 0
        %4744 = vmatpush1.bf16.msra.mxu0 %v4370
        %4745 = vmatprep.subr.bf16.mxu0 0
        %4746 = vmatpush1.bf16.msra.mxu0 %v4371
        %4747 = vmatprep.subr.bf16.mxu0 0
        %4748 = vmatpush1.bf16.msra.mxu0 %v4372
        %4749 = vmatprep.mubr.bf16.mxu0 %v3778
        %4750 = vmatmul.mubr.bf16.gmra.mrb[0].mxu0 %v3777
        %v4751 = vpop.f32.mrb[0].mxu0
        %v4752 = vadd.f32 %v4712, %v4751
        %v4753 = vpop.f32.mrb[0].mxu0
        %v4754 = vpop.f32.mrb[0].mxu0
        %v4755 = vpop.f32.mrb[0].mxu0
        %4756 = vdwg.mxu0
        %4757 = vmatprep.subr.bf16.mxu0 0
        %4758 = vmatpush1.bf16.msra.mxu0 %v4373
        %4759 = vmatprep.subr.bf16.mxu0 0
        %4760 = vmatpush1.bf16.msra.mxu0 %v4374
        %4761 = vmatprep.subr.bf16.mxu0 0
        %4762 = vmatpush1.bf16.msra.mxu0 %v4375
        %4763 = vmatprep.subr.bf16.mxu0 0
        %4764 = vmatpush1.bf16.msra.mxu0 %v4376
        %4765 = vmatprep.subr.bf16.mxu0 0
        %4766 = vmatpush1.bf16.msra.mxu0 %v4377
        %4767 = vmatprep.subr.bf16.mxu0 0
        %4768 = vmatpush1.bf16.msra.mxu0 %v4378
        %4769 = vmatprep.subr.bf16.mxu0 0
        %4770 = vmatpush1.bf16.msra.mxu0 %v4379
        %4771 = vmatprep.subr.bf16.mxu0 0
        %4772 = vmatpush1.bf16.msra.mxu0 %v4380
        %4773 = vmatprep.subr.bf16.mxu0 0
        %4774 = vmatpush1.bf16.msra.mxu0 %v4381
        %4775 = vmatprep.subr.bf16.mxu0 0
        %4776 = vmatpush1.bf16.msra.mxu0 %v4382
        %4777 = vmatprep.subr.bf16.mxu0 0
        %4778 = vmatpush1.bf16.msra.mxu0 %v4383
        %4779 = vmatprep.subr.bf16.mxu0 0
        %4780 = vmatpush1.bf16.msra.mxu0 %v4384
        %4781 = vmatprep.subr.bf16.mxu0 0
        %4782 = vmatpush1.bf16.msra.mxu0 %v4385
        %4783 = vmatprep.subr.bf16.mxu0 0
        %4784 = vmatpush1.bf16.msra.mxu0 %v4386
        %4785 = vmatprep.subr.bf16.mxu0 0
        %4786 = vmatpush1.bf16.msra.mxu0 %v4387
        %4787 = vmatprep.subr.bf16.mxu0 0
        %4788 = vmatpush1.bf16.msra.mxu0 %v4388
        %4789 = vmatprep.mubr.bf16.mxu0 %v3780
        %4790 = vmatmul.mubr.bf16.gmra.mrb[0].mxu0 %v3779
        %v4791 = vpop.f32.mrb[0].mxu0
        %v4792 = vadd.f32 %v4752, %v4791
        %v4793 = vpop.f32.mrb[0].mxu0
        %v4794 = vpop.f32.mrb[0].mxu0
        %v4795 = vpop.f32.mrb[0].mxu0
        %4796 = vdwg.mxu0
        %4797 = vmatprep.subr.bf16.mxu0 0
        %4798 = vmatpush1.bf16.msra.mxu0 %v4389
        %4799 = vmatprep.subr.bf16.mxu0 0
        %4800 = vmatpush1.bf16.msra.mxu0 %v4390
        %4801 = vmatprep.subr.bf16.mxu0 0
        %4802 = vmatpush1.bf16.msra.mxu0 %v4391
        %4803 = vmatprep.subr.bf16.mxu0 0
        %4804 = vmatpush1.bf16.msra.mxu0 %v4392
        %4805 = vmatprep.subr.bf16.mxu0 0
        %4806 = vmatpush1.bf16.msra.mxu0 %v4393
        %4807 = vmatprep.subr.bf16.mxu0 0
        %4808 = vmatpush1.bf16.msra.mxu0 %v4394
        %4809 = vmatprep.subr.bf16.mxu0 0
        %4810 = vmatpush1.bf16.msra.mxu0 %v4395
        %4811 = vmatprep.subr.bf16.mxu0 0
        %4812 = vmatpush1.bf16.msra.mxu0 %v4396
        %4813 = vmatprep.subr.bf16.mxu0 0
        %4814 = vmatpush1.bf16.msra.mxu0 0
        %4815 = vmatprep.subr.bf16.mxu0 0
        %4816 = vmatpush1.bf16.msra.mxu0 0
        %4817 = vmatprep.subr.bf16.mxu0 0
        %4818 = vmatpush1.bf16.msra.mxu0 0
        %4819 = vmatprep.subr.bf16.mxu0 0
        %4820 = vmatpush1.bf16.msra.mxu0 0
        %4821 = vmatprep.subr.bf16.mxu0 0
        %4822 = vmatpush1.bf16.msra.mxu0 0
        %4823 = vmatprep.subr.bf16.mxu0 0
        %4824 = vmatpush1.bf16.msra.mxu0 0
        %4825 = vmatprep.subr.bf16.mxu0 0
        %4826 = vmatpush1.bf16.msra.mxu0 0
        %4827 = vmatprep.subr.bf16.mxu0 0
        %4828 = vmatpush1.bf16.msra.mxu0 0
        %4829 = vmatprep.mubr.bf16.mxu0 0
        %4830 = vmatmul.mubr.bf16.gmra.mrb[0].mxu0 %v3781
        %v4831 = vpop.f32.mrb[0].mxu0
        %v4832 = vadd.f32 %v4792, %v4831
        %v4833 = vpop.f32.mrb[0].mxu0
        %v4834 = vpop.f32.mrb[0].mxu0
        %v4835 = vpop.f32.mrb[0].mxu0
        %4836 = vdwg.mxu0
        %4837 = vst [vmem:[%s263] sm:$0xff] %v4832
        %s4838 = sand.u32 %s102, 1
        %s4839 = scalar_lea.sflag [#allocation4], %s4838
        %s4840 = sand.u32 %s102, 1
        %s4841 = smul.addr %s4840, 120
        %s4842 = scalar_lea.vmem [#allocation8], %s4841
        %s4843 = sand.u32 %s128, 1
        %s4844 = scalar_lea.sflag [#allocation10], %s4843
        %s4845 = sand.u32 %s128, 1
        %s4846 = smul.addr %s4845, 8
        %s4847 = scalar_lea.vmem [#allocation9], %s4846
        // Predicated region
        $region45: #{tpu_custom_call.1} parent=31 // pred_check
          %p4848 = pneg %p112
        $region46: #{tpu_custom_call.1} parent=31 // pred_check_branch
          %4850 = sbr.rel (%p4848) target = $region48
        $region47: #{tpu_custom_call.1} parent=31 // pred_region
          %s4852 = ssub.s32 1920, 1920
          %4853 = vsyncadd %s4839, %s4852
          %s4854 = smul.addr %s26, 15
          %s4855 = smul.addr %s4854, 128
          %s4856 = scalar_lea.hbm %s3, %s4855
          %s4858 = sshll.u32 %s4842, 4
          %s4859 = int_to_ptr.vmem [resolvable:$true] %s4858
          %4861 = dma.vmem_to_hbm [thread:$0]  %s4859, 1920, %s4856, %s4839
        $region48: #{tpu_custom_call.1} parent=31 // pred_fallthru
          _
        // Predicated region
        $region49: #{tpu_custom_call.1} parent=31 // pred_check
          %p4862 = pneg %p138
        $region50: #{tpu_custom_call.1} parent=31 // pred_check_branch
          %4864 = sbr.rel (%p4862) target = $region52
        $region51: #{tpu_custom_call.1} parent=31 // pred_region
          %s4866 = ssub.s32 128, 128
          %4867 = vsyncadd %s4844, %s4866
          %s4868 = smul.addr %s26, 128
          %s4869 = scalar_lea.hbm %s4, %s4868
          %s4871 = sshll.u32 %s4847, 4
          %s4872 = int_to_ptr.vmem [resolvable:$true] %s4871
          %4874 = dma.vmem_to_hbm [thread:$0]  %s4872, 128, %s4869, %s4844
        $region52: #{tpu_custom_call.1} parent=31 // pred_fallthru
          _
      $region32: #{tpu_custom_call.1} parent=5 // pred_fallthru
        _
      %p4875 = scmp.le.s32.totalorder 2, %s21
      // Predicated region
      $region53: #{tpu_custom_call.1} parent=5 // pred_check
        %p4876 = pneg %p4875
      $region54: #{tpu_custom_call.1} parent=5 // pred_check_branch
        %4878 = sbr.rel (%p4876) target = $region56
      $region55: #{tpu_custom_call.1} parent=5 // pred_region
        %s4879 = ssub.s32 %s21, 2
        // Predicated region
        $region57: #{tpu_custom_call.1} parent=55 // pred_check
          %p4880 = pneg %p118
        $region58: #{tpu_custom_call.1} parent=55 // pred_check_branch
          %4882 = sbr.rel (%p4880) target = $region60
        $region59: #{tpu_custom_call.1} parent=55 // pred_region
          %s4883 = sand.u32 %s103, 1
          %s4884 = scalar_lea.sflag [#allocation4], %s4883
          %s4885 = sand.u32 %s103, 1
          %s4886 = smul.addr %s4885, 120
          %s4887 = scalar_lea.vmem [#allocation8], %s4886
          %4888 = dma.done %s4884, 1920
        $region60: #{tpu_custom_call.1} parent=55 // pred_fallthru
          _
        // Predicated region
        $region61: #{tpu_custom_call.1} parent=55 // pred_check
          %p4889 = pneg %p144
        $region62: #{tpu_custom_call.1} parent=55 // pred_check_branch
          %4891 = sbr.rel (%p4889) target = $region64
        $region63: #{tpu_custom_call.1} parent=55 // pred_region
          %s4892 = sand.u32 %s129, 1
          %s4893 = scalar_lea.sflag [#allocation10], %s4892
          %s4894 = sand.u32 %s129, 1
          %s4895 = smul.addr %s4894, 8
          %s4896 = scalar_lea.vmem [#allocation9], %s4895
          %4897 = dma.done %s4893, 128
        $region64: #{tpu_custom_call.1} parent=55 // pred_fallthru
          _
      $region56: #{tpu_custom_call.1} parent=5 // pred_fallthru
        _
    $region6: #{tpu_custom_call.1} parent=1 // loop_footer
      %s25 = sadd.s32 1, %s21
    $region7: #{tpu_custom_call.1} parent=1 // loop_footer_branch
      %20 = sbr.rel target = $region3
    $region8: #{tpu_custom_call.1} parent=1 // loop_exit
      _
    %4898 = vsyncpa [#allocation3], 1
    %s4899 = scalar_lea.sflag [#allocation3], 1
    %4900 = vsyncpa %s4899, 1
    %4901 = vsyncpa [#allocation6], 1
    %4902 = vsyncpa [#allocation4], 1
    %s4903 = scalar_lea.sflag [#allocation4], 1
    %4904 = vsyncpa %s4903, 1
    %4905 = vsyncpa [#allocation10], 1
    %s4906 = scalar_lea.sflag [#allocation10], 1
    %4907 = vsyncpa %s4906, 1

</llo_original>
